<compile_context>
chip_gen: v7x
topology: tpu7x:2x2x1
jax: 0.10.0
libtpu: 0.0.40
codegen_flags: <defaults>
</compile_context>

<pallas_src>
import functools

import jax
import jax.numpy as jnp
from jax.experimental import pallas as pl
from jax.experimental.pallas import tpu as pltpu

D_IN = 784
H0, H1, H2 = 1024, 768, 512
D_OUT = 10
D_OUT_PAD = 128         # lane-dense output block; sliced back to 10 in wrapper

NEG_BIG = -1e30         # "minus infinity" bias for the padded logit columns
                        # (valid only while the softmax epilogue stays f32)


def mlp_kernel(x_ref,
               w0_ref, b0_ref,
               w1_ref, b1_ref,
               w2_ref, b2_ref,
               w3_ref, b3_ref,
               o_ref):
    # x arrives f32 and is cast to bf16 in-kernel (no separate XLA pad/cast
    # pass over x in HBM). All matmuls run bf16 on the MXU with f32
    # accumulation; bias add / ReLU / log-softmax stay f32 (v5e-safe).
    x = x_ref[...].astype(jnp.bfloat16)

    # fc0 (no activation in the original module)
    h = jnp.dot(x, w0_ref[...], preferred_element_type=jnp.float32) + b0_ref[...]

    # fc1 + relu
    h = jnp.dot(h.astype(jnp.bfloat16), w1_ref[...],
                preferred_element_type=jnp.float32) + b1_ref[...]
    h = jnp.maximum(h, 0.0)

    # fc2: weights pre-binarized to +/-1 in prepare_params (exact in bf16) + relu
    h = jnp.dot(h.astype(jnp.bfloat16), w2_ref[...],
                preferred_element_type=jnp.float32) + b2_ref[...]
    h = jnp.maximum(h, 0.0)

    # fcc -> padded logits (columns >= 10 have zero weights and bias NEG_BIG)
    logits = jnp.dot(h.astype(jnp.bfloat16), w3_ref[...],
                     preferred_element_type=jnp.float32) + b3_ref[...]

    # log_softmax over the padded lane axis (padded columns contribute exp()=0)
    m = jnp.max(logits, axis=-1, keepdims=True)
    z = logits - m
    lse = jnp.log(jnp.sum(jnp.exp(z), axis=-1, keepdims=True))
    o_ref[...] = z - lse


def _round_up(v, m):
    return ((v + m - 1) // m) * m


def _choose_block_b(B, block_b):
    """Adaptive batch tile (all static / trace-time):
       - never inflate a small batch to a full block (just round up to 8),
       - if the batch is between 1 and 2 blocks, split into 2 equal blocks so
         a v7x chip (2 TensorCores) gets >= 2 parallel grid steps."""
    b8 = _round_up(B, 8)
    blk = min(block_b, b8)
    if blk < b8 < 2 * blk:
        blk = _round_up((b8 + 1) // 2, 8)
    return blk


@functools.partial(jax.jit, static_argnames=("block_b",))
def net_forward(x, params, block_b=256):
    """x: (B, 784) f32.  params: output of prepare_params().  Returns (B, 10) f32."""
    B = x.shape[0]
    (w0, b0), (w1, b1), (w2, b2), (w3, b3) = params

    blk = _choose_block_b(B, block_b)
    B_pad = _round_up(B, blk)
    x_p = x if B_pad == B else jnp.pad(x, ((0, B_pad - B), (0, 0)))

    # Constant index maps -> weights/biases stay VMEM-resident across the grid
    # (no per-step re-DMA since the block index never changes).
    full = lambda shape: pl.BlockSpec(shape, lambda i: (0, 0))

    out = pl.pallas_call(
        mlp_kernel,
        out_shape=jax.ShapeDtypeStruct((B_pad, D_OUT_PAD), jnp.float32),
        grid_spec=pltpu.PrefetchScalarGridSpec(
            num_scalar_prefetch=0,
            grid=(B_pad // blk,),
            in_specs=[
                pl.BlockSpec((blk, D_IN), lambda i: (i, 0)),
                full((D_IN, H0)), full((1, H0)),
                full((H0, H1)), full((1, H1)),
                full((H1, H2)), full((1, H2)),
                full((H2, D_OUT_PAD)), full((1, D_OUT_PAD)),
            ],
            out_specs=pl.BlockSpec((blk, D_OUT_PAD), lambda i: (i, 0)),
        ),
        compiler_params=pltpu.CompilerParams(
            dimension_semantics=("parallel",),
            # ~4.2 MiB bf16 weights (x2 buffers) + x/out tiles + f32
            # intermediates: ~10-20 MiB even at block_b=512.  32 MiB leaves
            # scoped-VMEM headroom on v7x (64 MiB/TC).
            vmem_limit_bytes=32 * 1024 * 1024,
        ),
    )(x_p, w0, b0, w1, b1, w2, b2, w3, b3)

    return out[:B, :D_OUT]


def init_params(key):
    """Deterministic init mimicking nn.Linear's uniform(-1/sqrt(fan_in), ...)."""
    def linear(key, fan_in, fan_out):
        kw, kb = jax.random.split(key)
        bound = 1.0 / jnp.sqrt(fan_in)
        # stored as (in, out) so the kernel computes x @ W
        w = jax.random.uniform(kw, (fan_in, fan_out), jnp.float32, -bound, bound)
        b = jax.random.uniform(kb, (1, fan_out), jnp.float32, -bound, bound)
        return w, b

    k0, k1, k2, k3 = jax.random.split(key, 4)
    return (
        linear(k0, D_IN, H0),
        linear(k1, H0, H1),
        linear(k2, H1, H2),
        linear(k3, H2, D_OUT),
    )


def prepare_params(params):
    """One-time parameter transform (hoisted out of the kernel):
       - binarize fc2 weights to +/-1 (exact in bf16); note: w==0 maps to +1,
         whereas torch .sign() maps 0 -> 0 (measure-zero difference),
       - pad fcc's output 10 -> 128 (zero weight columns, NEG_BIG bias so the
         padded logits vanish under the f32 softmax),
       - cast weights to bf16 for the MXU; biases stay f32."""
    (w0, b0), (w1, b1), (w2, b2), (w3, b3) = params

    wb2 = jnp.where(w2 >= 0.0, 1.0, -1.0)
    w3p = jnp.pad(w3, ((0, 0), (0, D_OUT_PAD - D_OUT)))
    b3p = jnp.concatenate(
        [b3, jnp.full((1, D_OUT_PAD - D_OUT), NEG_BIG, jnp.float32)], axis=1)

    bf = lambda w: w.astype(jnp.bfloat16)
    return ((bf(w0), b0), (bf(w1), b1), (bf(wb2), b2), (bf(w3p), b3p))


def net_ref(x, params):
    """Pure-JAX reference of the same bf16-matmul / f32-accumulate forward."""
    (w0, b0), (w1, b1), (w2, b2), (w3, b3) = params
    dot = lambda a, b: jnp.dot(a, b, preferred_element_type=jnp.float32)
    h = dot(x.astype(jnp.bfloat16), w0) + b0
    h = jnp.maximum(dot(h.astype(jnp.bfloat16), w1) + b1, 0.0)
    h = jnp.maximum(dot(h.astype(jnp.bfloat16), w2) + b2, 0.0)
    logits = dot(h.astype(jnp.bfloat16), w3) + b3
    return jax.nn.log_softmax(logits, axis=1)[:, :D_OUT]


if __name__ == "__main__":
    key = jax.random.PRNGKey(0)
    kx, kp = jax.random.split(key)

    B = 8  # small demo batch; adaptive block_b keeps the grid at one 8-row tile
    x = jax.random.normal(kx, (B, D_IN), jnp.float32)
    params = prepare_params(init_params(kp))

    out = net_forward(x, params)
    out = jax.block_until_ready(out)
    assert out.shape == (B, D_OUT)

    ref = net_ref(x, params)
    assert jnp.allclose(out, ref, atol=2e-3, rtol=2e-3), "mismatch vs reference"
    # log_softmax rows must be normalized probabilities
    assert jnp.allclose(jnp.exp(out).sum(axis=1), 1.0, atol=1e-3), "softmax not normalized"

    # TODO(synk): BinarizeLinear_training's straight-through-estimator backward
    # (training path) is not implemented; this kernel covers the forward pass only.
    print("KERNEL_OK")
</pallas_src>

<mosaic_0001>
module attributes {stable_mosaic.version = 11 : i64} {
  func.func @mlp_kernel(%arg0: i32, %arg1: memref<8x784xf32, #tpu.memory_space<vmem>>, %arg2: memref<784x1024xbf16, #tpu.memory_space<vmem>>, %arg3: memref<1x1024xf32, #tpu.memory_space<vmem>>, %arg4: memref<1024x768xbf16, #tpu.memory_space<vmem>>, %arg5: memref<1x768xf32, #tpu.memory_space<vmem>>, %arg6: memref<768x512xbf16, #tpu.memory_space<vmem>>, %arg7: memref<1x512xf32, #tpu.memory_space<vmem>>, %arg8: memref<512x128xbf16, #tpu.memory_space<vmem>>, %arg9: memref<1x128xf32, #tpu.memory_space<vmem>>, %arg10: memref<8x128xf32, #tpu.memory_space<vmem>>) attributes {dimension_semantics = [#tpu.dimension_semantics<parallel>], iteration_bounds = array<i64: 1>, scalar_prefetch = 0 : i64, scratch_operands = 0 : i64, tpu.core_type = #tpu.core_type<tc>, window_params = [{transform_indices = @transform_0, window_bounds = array<i64: 8, 784>}, {pipeline_mode = #tpu.pipeline_mode<synchronous>, transform_indices = @transform_1, window_bounds = array<i64: 784, 1024>}, {pipeline_mode = #tpu.pipeline_mode<synchronous>, transform_indices = @transform_2, window_bounds = array<i64: 1, 1024>}, {pipeline_mode = #tpu.pipeline_mode<synchronous>, transform_indices = @transform_3, window_bounds = array<i64: 1024, 768>}, {pipeline_mode = #tpu.pipeline_mode<synchronous>, transform_indices = @transform_4, window_bounds = array<i64: 1, 768>}, {pipeline_mode = #tpu.pipeline_mode<synchronous>, transform_indices = @transform_5, window_bounds = array<i64: 768, 512>}, {pipeline_mode = #tpu.pipeline_mode<synchronous>, transform_indices = @transform_6, window_bounds = array<i64: 1, 512>}, {pipeline_mode = #tpu.pipeline_mode<synchronous>, transform_indices = @transform_7, window_bounds = array<i64: 512, 128>}, {pipeline_mode = #tpu.pipeline_mode<synchronous>, transform_indices = @transform_8, window_bounds = array<i64: 1, 128>}, {transform_indices = @transform_9, window_bounds = array<i64: 8, 128>}]} {
    %c0 = arith.constant 0 : index
    %c0_0 = arith.constant 0 : index
    %0 = vector.load %arg1[%c0, %c0_0] : memref<8x784xf32, #tpu.memory_space<vmem>>, vector<8x784xf32>
    %1 = arith.truncf %0 : vector<8x784xf32> to vector<8x784xbf16>
    %c0_1 = arith.constant 0 : index
    %c0_2 = arith.constant 0 : index
    %2 = vector.load %arg2[%c0_1, %c0_2] : memref<784x1024xbf16, #tpu.memory_space<vmem>>, vector<784x1024xbf16>
    %cst = arith.constant dense<0.000000e+00> : vector<8x1024xf32>
    %3 = tpu.matmul %1, %2, %cst {dimension_numbers = #tpu.dot_dimension_numbers<[1], [0], [0], [1], [0, 0, 1, 1], [], []>} : vector<8x784xbf16>, vector<784x1024xbf16>, vector<8x1024xf32> -> vector<8x1024xf32>
    %c0_3 = arith.constant 0 : index
    %c0_4 = arith.constant 0 : index
    %4 = vector.load %arg3[%c0_3, %c0_4] : memref<1x1024xf32, #tpu.memory_space<vmem>>, vector<1x1024xf32>
    %5 = vector.broadcast %4 : vector<1x1024xf32> to vector<8x1024xf32>
    %6 = arith.addf %3, %5 : vector<8x1024xf32>
    %7 = arith.truncf %6 : vector<8x1024xf32> to vector<8x1024xbf16>
    %c0_5 = arith.constant 0 : index
    %c0_6 = arith.constant 0 : index
    %8 = vector.load %arg4[%c0_5, %c0_6] : memref<1024x768xbf16, #tpu.memory_space<vmem>>, vector<1024x768xbf16>
    %cst_7 = arith.constant dense<0.000000e+00> : vector<8x768xf32>
    %9 = tpu.matmul %7, %8, %cst_7 {dimension_numbers = #tpu.dot_dimension_numbers<[1], [0], [0], [1], [0, 0, 1, 1], [], []>} : vector<8x1024xbf16>, vector<1024x768xbf16>, vector<8x768xf32> -> vector<8x768xf32>
    %c0_8 = arith.constant 0 : index
    %c0_9 = arith.constant 0 : index
    %10 = vector.load %arg5[%c0_8, %c0_9] : memref<1x768xf32, #tpu.memory_space<vmem>>, vector<1x768xf32>
    %11 = vector.broadcast %10 : vector<1x768xf32> to vector<8x768xf32>
    %12 = arith.addf %9, %11 : vector<8x768xf32>
    %cst_10 = arith.constant 0.000000e+00 : f32
    %13 = vector.broadcast %cst_10 : f32 to vector<8x768xf32>
    %14 = arith.maximumf %12, %13 : vector<8x768xf32>
    %15 = arith.truncf %14 : vector<8x768xf32> to vector<8x768xbf16>
    %c0_11 = arith.constant 0 : index
    %c0_12 = arith.constant 0 : index
    %16 = vector.load %arg6[%c0_11, %c0_12] : memref<768x512xbf16, #tpu.memory_space<vmem>>, vector<768x512xbf16>
    %cst_13 = arith.constant dense<0.000000e+00> : vector<8x512xf32>
    %17 = tpu.matmul %15, %16, %cst_13 {dimension_numbers = #tpu.dot_dimension_numbers<[1], [0], [0], [1], [0, 0, 1, 1], [], []>} : vector<8x768xbf16>, vector<768x512xbf16>, vector<8x512xf32> -> vector<8x512xf32>
    %c0_14 = arith.constant 0 : index
    %c0_15 = arith.constant 0 : index
    %18 = vector.load %arg7[%c0_14, %c0_15] : memref<1x512xf32, #tpu.memory_space<vmem>>, vector<1x512xf32>
    %19 = vector.broadcast %18 : vector<1x512xf32> to vector<8x512xf32>
    %20 = arith.addf %17, %19 : vector<8x512xf32>
    %cst_16 = arith.constant 0.000000e+00 : f32
    %21 = vector.broadcast %cst_16 : f32 to vector<8x512xf32>
    %22 = arith.maximumf %20, %21 : vector<8x512xf32>
    %23 = arith.truncf %22 : vector<8x512xf32> to vector<8x512xbf16>
    %c0_17 = arith.constant 0 : index
    %c0_18 = arith.constant 0 : index
    %24 = vector.load %arg8[%c0_17, %c0_18] : memref<512x128xbf16, #tpu.memory_space<vmem>>, vector<512x128xbf16>
    %cst_19 = arith.constant dense<0.000000e+00> : vector<8x128xf32>
    %25 = tpu.matmul %23, %24, %cst_19 {dimension_numbers = #tpu.dot_dimension_numbers<[1], [0], [0], [1], [0, 0, 1, 1], [], []>} : vector<8x512xbf16>, vector<512x128xbf16>, vector<8x128xf32> -> vector<8x128xf32>
    %c0_20 = arith.constant 0 : index
    %c0_21 = arith.constant 0 : index
    %26 = vector.load %arg9[%c0_20, %c0_21] : memref<1x128xf32, #tpu.memory_space<vmem>>, vector<1x128xf32>
    %27 = vector.broadcast %26 : vector<1x128xf32> to vector<8x128xf32>
    %28 = arith.addf %25, %27 : vector<8x128xf32>
    %cst_22 = arith.constant dense<0xFF800000> : vector<8xf32>
    %29 = vector.multi_reduction <maximumf>, %28, %cst_22 [1] : vector<8x128xf32> to vector<8xf32>
    %30 = vector.shape_cast %29 : vector<8xf32> to vector<8x1xf32>
    %31 = vector.broadcast %30 : vector<8x1xf32> to vector<8x128xf32>
    %32 = arith.subf %28, %31 : vector<8x128xf32>
    %33 = math.exp %32 : vector<8x128xf32>
    %cst_23 = arith.constant dense<0.000000e+00> : vector<8xf32>
    %34 = vector.multi_reduction <add>, %33, %cst_23 [1] : vector<8x128xf32> to vector<8xf32>
    %35 = vector.shape_cast %34 : vector<8xf32> to vector<8x1xf32>
    %36 = math.log %35 : vector<8x1xf32>
    %37 = vector.broadcast %36 : vector<8x1xf32> to vector<8x128xf32>
    %38 = arith.subf %32, %37 : vector<8x128xf32>
    %c0_24 = arith.constant 0 : index
    %c0_25 = arith.constant 0 : index
    %39 = vector.load %arg10[%c0_24, %c0_25] : memref<8x128xf32, #tpu.memory_space<vmem>>, vector<8x128xf32>
    tpu.vector_store %arg10[%c0_24, %c0_25], %38 {strides = array<i32>} : memref<8x128xf32, #tpu.memory_space<vmem>>, vector<8x128xf32>,
    return
  }
  func.func @transform_0(%arg0: i32) -> (i32, i32) {
    %c0_i32 = arith.constant 0 : i32
    %c0_i32_0 = arith.constant 0 : i32
    return %arg0, %c0_i32 : i32, i32
  }
  func.func @transform_1(%arg0: i32) -> (i32, i32) {
    %c0_i32 = arith.constant 0 : i32
    %c0_i32_0 = arith.constant 0 : i32
    %c0_i32_1 = arith.constant 0 : i32
    return %c0_i32, %c0_i32_0 : i32, i32
  }
  func.func @transform_2(%arg0: i32) -> (i32, i32) {
    %c0_i32 = arith.constant 0 : i32
    %c0_i32_0 = arith.constant 0 : i32
    %c0_i32_1 = arith.constant 0 : i32
    return %c0_i32, %c0_i32_0 : i32, i32
  }
  func.func @transform_3(%arg0: i32) -> (i32, i32) {
    %c0_i32 = arith.constant 0 : i32
    %c0_i32_0 = arith.constant 0 : i32
    %c0_i32_1 = arith.constant 0 : i32
    return %c0_i32, %c0_i32_0 : i32, i32
  }
  func.func @transform_4(%arg0: i32) -> (i32, i32) {
    %c0_i32 = arith.constant 0 : i32
    %c0_i32_0 = arith.constant 0 : i32
    %c0_i32_1 = arith.constant 0 : i32
    return %c0_i32, %c0_i32_0 : i32, i32
  }
  func.func @transform_5(%arg0: i32) -> (i32, i32) {
    %c0_i32 = arith.constant 0 : i32
    %c0_i32_0 = arith.constant 0 : i32
    %c0_i32_1 = arith.constant 0 : i32
    return %c0_i32, %c0_i32_0 : i32, i32
  }
  func.func @transform_6(%arg0: i32) -> (i32, i32) {
    %c0_i32 = arith.constant 0 : i32
    %c0_i32_0 = arith.constant 0 : i32
    %c0_i32_1 = arith.constant 0 : i32
    return %c0_i32, %c0_i32_0 : i32, i32
  }
  func.func @transform_7(%arg0: i32) -> (i32, i32) {
    %c0_i32 = arith.constant 0 : i32
    %c0_i32_0 = arith.constant 0 : i32
    %c0_i32_1 = arith.constant 0 : i32
    return %c0_i32, %c0_i32_0 : i32, i32
  }
  func.func @transform_8(%arg0: i32) -> (i32, i32) {
    %c0_i32 = arith.constant 0 : i32
    %c0_i32_0 = arith.constant 0 : i32
    %c0_i32_1 = arith.constant 0 : i32
    return %c0_i32, %c0_i32_0 : i32, i32
  }
  func.func @transform_9(%arg0: i32) -> (i32, i32) {
    %c0_i32 = arith.constant 0 : i32
    %c0_i32_0 = arith.constant 0 : i32
    return %arg0, %c0_i32 : i32, i32
  }
}

</mosaic_0001>

<llo_original>
// kernel: net_forward.1
$region0: #{net_forward.1}
  #allocation0 [shape = 'u32[]', space=smem, size = 0x4, offset = 0x4, fixed_abs, tag = 'smem constant byte address 0x4 - core index']
  #allocation1 [shape = 'u32[144,128]{1,0:T(1,128)}', space=vmem, size = 0x12000, scoped, tag = 'internal scratch']
  %s0 = inlined_call_operand.hbm [shape: f32[8,784], index: 0, kind: input, shape index: {}]
  %s1 = inlined_call_operand.hbm [shape: bf16[784,1024], index: 1, kind: input, shape index: {}]
  %s2 = inlined_call_operand.hbm [shape: f32[1,1024], index: 2, kind: input, shape index: {}]
  %s3 = inlined_call_operand.hbm [shape: bf16[1024,768], index: 3, kind: input, shape index: {}]
  %s4 = inlined_call_operand.hbm [shape: f32[1,768], index: 4, kind: input, shape index: {}]
  %s5 = inlined_call_operand.hbm [shape: bf16[768,512], index: 5, kind: input, shape index: {}]
  %s6 = inlined_call_operand.hbm [shape: f32[1,512], index: 6, kind: input, shape index: {}]
  %s7 = inlined_call_operand.hbm [shape: bf16[512,128], index: 7, kind: input, shape index: {}]
  %s8 = inlined_call_operand.hbm [shape: f32[1,128], index: 8, kind: input, shape index: {}]
  %s9 = inlined_call_operand.hbm [shape: f32[8,128], index: 9, kind: output, shape index: {}]
  %s10 = sld [smem:[#allocation0]]
  $region82: #{net_forward.1} parent=0
    _
  %s12 = ssub.s32 1, %s10
  %s13 = scalar_select 0, %s12, %s10
  $region1: #{net_forward.1} parent=0
    #allocation2 [shape = 'u8[28672]{0}', space=vmem, size = 0x7000, scoped, tag = 'input window, operand 0, single buffered']
    #allocation3 [shape = 's32[1]{0}', space=sflag, size = 0x4, scoped, tag = 'scoped memory for net_forward.1']
    #allocation4 [shape = 's32[1]{0}', space=sflag, size = 0x4, scoped, tag = 'scoped memory for net_forward.1']
    #allocation5 [shape = 'u8[1605632]{0}', space=vmem, size = 0x188000, scoped, tag = 'input window, operand 1, single buffered']
    #allocation6 [shape = 's32[1]{0}', space=sflag, size = 0x4, scoped, tag = 'scoped memory for net_forward.1']
    #allocation7 [shape = 'u8[4096]{0}', space=vmem, size = 0x1000, scoped, tag = 'input window, operand 2, single buffered']
    #allocation8 [shape = 'u8[1572864]{0}', space=vmem, size = 0x180000, scoped, tag = 'input window, operand 3, single buffered']
    #allocation9 [shape = 's32[1]{0}', space=sflag, size = 0x4, scoped, tag = 'scoped memory for net_forward.1']
    #allocation10 [shape = 'u8[3072]{0}', space=vmem, size = 0xc00, scoped, tag = 'input window, operand 4, single buffered']
    #allocation11 [shape = 'u8[786432]{0}', space=vmem, size = 0xc0000, scoped, tag = 'input window, operand 5, single buffered']
    #allocation12 [shape = 's32[1]{0}', space=sflag, size = 0x4, scoped, tag = 'scoped memory for net_forward.1']
    #allocation13 [shape = 'u8[2048]{0}', space=vmem, size = 0x800, scoped, tag = 'input window, operand 6, single buffered']
    #allocation14 [shape = 'u8[131072]{0}', space=vmem, size = 0x20000, scoped, tag = 'input window, operand 7, single buffered']
    #allocation15 [shape = 's32[1]{0}', space=sflag, size = 0x4, scoped, tag = 'scoped memory for net_forward.1']
    #allocation16 [shape = 'u8[512]{0}', space=vmem, size = 0x400, scoped, tag = 'input window, operand 8, single buffered']
    #allocation17 [shape = 'u8[4096]{0}', space=vmem, size = 0x1000, scoped, tag = 'output window, operand 0, single buffered']
    %14 = vsyncpa [#allocation3], 0
    %15 = vsyncpa [#allocation6], 0
    %16 = vsyncpa [#allocation9], 0
    %17 = vsyncpa [#allocation12], 0
    %18 = vsyncpa [#allocation15], 0
    %19 = vsyncpa [#allocation4], 0
    // Predicated region
    $region2: #{net_forward.1} parent=1 // pred_check
      _
    $region3: #{net_forward.1} parent=1 // pred_check_branch
      %21 = sbr.rel (0) target = $region5
    $region4: #{net_forward.1} parent=1 // pred_region
      %s23 = ssub.s32 896, 896
      %24 = vsyncadd [#allocation3], %s23
      %s26 = sshll.u32 [#allocation2], 4
      %s27 = int_to_ptr.vmem [resolvable:$true] %s26
      %29 = dma.hbm_to_vmem [thread:$0]  %s0, 896, %s27, [#allocation3]
    $region5: #{net_forward.1} parent=1 // pred_fallthru
      _
    // Predicated region
    $region6: #{net_forward.1} parent=1 // pred_check
      _
    $region7: #{net_forward.1} parent=1 // pred_check_branch
      %31 = sbr.rel (0) target = $region9
    $region8: #{net_forward.1} parent=1 // pred_region
      %s33 = ssub.s32 50176, 50176
      %34 = vsyncadd [#allocation6], %s33
      %s35 = sshll.u32 [#allocation5], 4
      %s36 = int_to_ptr.vmem [resolvable:$true] %s35
      %41 = dma.hbm_to_vmem [thread:$0]  %s1, 50176, %s36, [#allocation6], 512, 512, 32
    $region9: #{net_forward.1} parent=1 // pred_fallthru
      _
    // Predicated region
    $region10: #{net_forward.1} parent=1 // pred_check
      _
    $region11: #{net_forward.1} parent=1 // pred_check_branch
      %43 = sbr.rel (0) target = $region13
    $region12: #{net_forward.1} parent=1 // pred_region
      %s45 = ssub.s32 128, 128
      %46 = vsyncadd [#allocation6], %s45
      %s48 = sshll.u32 [#allocation7], 4
      %s49 = int_to_ptr.vmem [resolvable:$true] %s48
      %51 = dma.hbm_to_vmem [thread:$0]  %s2, 128, %s49, [#allocation6]
    $region13: #{net_forward.1} parent=1 // pred_fallthru
      _
    // Predicated region
    $region14: #{net_forward.1} parent=1 // pred_check
      _
    $region15: #{net_forward.1} parent=1 // pred_check_branch
      %53 = sbr.rel (0) target = $region17
    $region16: #{net_forward.1} parent=1 // pred_region
      %s55 = ssub.s32 49152, 49152
      %56 = vsyncadd [#allocation9], %s55
      %s57 = sshll.u32 [#allocation8], 4
      %s58 = int_to_ptr.vmem [resolvable:$true] %s57
      %63 = dma.hbm_to_vmem [thread:$0]  %s3, 49152, %s58, [#allocation9], 384, 384, 24
    $region17: #{net_forward.1} parent=1 // pred_fallthru
      _
    // Predicated region
    $region18: #{net_forward.1} parent=1 // pred_check
      _
    $region19: #{net_forward.1} parent=1 // pred_check_branch
      %65 = sbr.rel (0) target = $region21
    $region20: #{net_forward.1} parent=1 // pred_region
      %s67 = ssub.s32 96, 96
      %68 = vsyncadd [#allocation9], %s67
      %s70 = sshll.u32 [#allocation10], 4
      %s71 = int_to_ptr.vmem [resolvable:$true] %s70
      %73 = dma.hbm_to_vmem [thread:$0]  %s4, 96, %s71, [#allocation9]
    $region21: #{net_forward.1} parent=1 // pred_fallthru
      _
    // Predicated region
    $region22: #{net_forward.1} parent=1 // pred_check
      _
    $region23: #{net_forward.1} parent=1 // pred_check_branch
      %75 = sbr.rel (0) target = $region25
    $region24: #{net_forward.1} parent=1 // pred_region
      %s77 = ssub.s32 24576, 24576
      %78 = vsyncadd [#allocation12], %s77
      %s79 = sshll.u32 [#allocation11], 4
      %s80 = int_to_ptr.vmem [resolvable:$true] %s79
      %85 = dma.hbm_to_vmem [thread:$0]  %s5, 24576, %s80, [#allocation12], 256, 256, 16
    $region25: #{net_forward.1} parent=1 // pred_fallthru
      _
    // Predicated region
    $region26: #{net_forward.1} parent=1 // pred_check
      _
    $region27: #{net_forward.1} parent=1 // pred_check_branch
      %87 = sbr.rel (0) target = $region29
    $region28: #{net_forward.1} parent=1 // pred_region
      %s89 = ssub.s32 64, 64
      %90 = vsyncadd [#allocation12], %s89
      %s92 = sshll.u32 [#allocation13], 4
      %s93 = int_to_ptr.vmem [resolvable:$true] %s92
      %95 = dma.hbm_to_vmem [thread:$0]  %s6, 64, %s93, [#allocation12]
    $region29: #{net_forward.1} parent=1 // pred_fallthru
      _
    // Predicated region
    $region30: #{net_forward.1} parent=1 // pred_check
      _
    $region31: #{net_forward.1} parent=1 // pred_check_branch
      %97 = sbr.rel (0) target = $region33
    $region32: #{net_forward.1} parent=1 // pred_region
      %s99 = ssub.s32 4096, 4096
      %100 = vsyncadd [#allocation15], %s99
      %s101 = sshll.u32 [#allocation14], 4
      %s102 = int_to_ptr.vmem [resolvable:$true] %s101
      %107 = dma.hbm_to_vmem [thread:$0]  %s7, 4096, %s102, [#allocation15], 64, 64, 4
    $region33: #{net_forward.1} parent=1 // pred_fallthru
      _
    // Predicated region
    $region34: #{net_forward.1} parent=1 // pred_check
      _
    $region35: #{net_forward.1} parent=1 // pred_check_branch
      %109 = sbr.rel (0) target = $region37
    $region36: #{net_forward.1} parent=1 // pred_region
      %s111 = ssub.s32 16, 16
      %112 = vsyncadd [#allocation15], %s111
      %s114 = sshll.u32 [#allocation16], 4
      %s115 = int_to_ptr.vmem [resolvable:$true] %s114
      %117 = dma.hbm_to_vmem [thread:$0]  %s8, 16, %s115, [#allocation15]
    $region37: #{net_forward.1} parent=1 // pred_fallthru
      _
    // Predicated region
    $region38: #{net_forward.1} parent=1 // pred_check
      _
    $region39: #{net_forward.1} parent=1 // pred_check_branch
      %119 = sbr.rel (0) target = $region41
    $region40: #{net_forward.1} parent=1 // pred_region
      %120 = dma.done [#allocation3], 896
    $region41: #{net_forward.1} parent=1 // pred_fallthru
      _
    // Predicated region
    $region42: #{net_forward.1} parent=1 // pred_check
      _
    $region43: #{net_forward.1} parent=1 // pred_check_branch
      %122 = sbr.rel (0) target = $region45
    $region44: #{net_forward.1} parent=1 // pred_region
      %123 = dma.done [#allocation6], 50176
    $region45: #{net_forward.1} parent=1 // pred_fallthru
      _
    // Predicated region
    $region46: #{net_forward.1} parent=1 // pred_check
      _
    $region47: #{net_forward.1} parent=1 // pred_check_branch
      %125 = sbr.rel (0) target = $region49
    $region48: #{net_forward.1} parent=1 // pred_region
      %126 = dma.done [#allocation6], 128
    $region49: #{net_forward.1} parent=1 // pred_fallthru
      _
    // Predicated region
    $region50: #{net_forward.1} parent=1 // pred_check
      _
    $region51: #{net_forward.1} parent=1 // pred_check_branch
      %128 = sbr.rel (0) target = $region53
    $region52: #{net_forward.1} parent=1 // pred_region
      %129 = dma.done [#allocation9], 49152
    $region53: #{net_forward.1} parent=1 // pred_fallthru
      _
    // Predicated region
    $region54: #{net_forward.1} parent=1 // pred_check
      _
    $region55: #{net_forward.1} parent=1 // pred_check_branch
      %131 = sbr.rel (0) target = $region57
    $region56: #{net_forward.1} parent=1 // pred_region
      %132 = dma.done [#allocation9], 96
    $region57: #{net_forward.1} parent=1 // pred_fallthru
      _
    // Predicated region
    $region58: #{net_forward.1} parent=1 // pred_check
      _
    $region59: #{net_forward.1} parent=1 // pred_check_branch
      %134 = sbr.rel (0) target = $region61
    $region60: #{net_forward.1} parent=1 // pred_region
      %135 = dma.done [#allocation12], 24576
    $region61: #{net_forward.1} parent=1 // pred_fallthru
      _
    // Predicated region
    $region62: #{net_forward.1} parent=1 // pred_check
      _
    $region63: #{net_forward.1} parent=1 // pred_check_branch
      %137 = sbr.rel (0) target = $region65
    $region64: #{net_forward.1} parent=1 // pred_region
      %138 = dma.done [#allocation12], 64
    $region65: #{net_forward.1} parent=1 // pred_fallthru
      _
    // Predicated region
    $region66: #{net_forward.1} parent=1 // pred_check
      _
    $region67: #{net_forward.1} parent=1 // pred_check_branch
      %140 = sbr.rel (0) target = $region69
    $region68: #{net_forward.1} parent=1 // pred_region
      %141 = dma.done [#allocation15], 4096
    $region69: #{net_forward.1} parent=1 // pred_fallthru
      _
    // Predicated region
    $region70: #{net_forward.1} parent=1 // pred_check
      _
    $region71: #{net_forward.1} parent=1 // pred_check_branch
      %143 = sbr.rel (0) target = $region73
    $region72: #{net_forward.1} parent=1 // pred_region
      %144 = dma.done [#allocation15], 16
    $region73: #{net_forward.1} parent=1 // pred_fallthru
      _
    %v146 = vld [vmem:[#allocation2] sm:$0xff]
    %v147 = vld [vmem:[#allocation2 + $0x8] sm:$0xff]
    %v148 = vld [vmem:[#allocation2 + $0x10] sm:$0xff]
    %v149 = vld [vmem:[#allocation2 + $0x18] sm:$0xff]
    %v150 = vld [vmem:[#allocation2 + $0x20] sm:$0xff]
    %v151 = vld [vmem:[#allocation2 + $0x28] sm:$0xff]
    %v152 = vld [vmem:[#allocation2 + $0x30] sm:$0xff]
    %v153 = vpack.c.bf16 %v146, %v146
    %v154 = vpack.c.bf16 %v147, %v147
    %v155 = vpack.c.bf16 %v148, %v148
    %v156 = vpack.c.bf16 %v149, %v149
    %v157 = vpack.c.bf16 %v150, %v150
    %v158 = vpack.c.bf16 %v151, %v151
    %v159 = vpack.c.bf16 %v152, %v152
    %v160 = vld [vmem:[#allocation5] sm:$0xff]
    %v161 = vld [vmem:[#allocation5 + $0x8] sm:$0xff]
    %v162 = vld [vmem:[#allocation5 + $0x10] sm:$0xff]
    %v163 = vld [vmem:[#allocation5 + $0x18] sm:$0xff]
    %v164 = vld [vmem:[#allocation5 + $0x20] sm:$0xff]
    %v165 = vld [vmem:[#allocation5 + $0x28] sm:$0xff]
    %v166 = vld [vmem:[#allocation5 + $0x30] sm:$0xff]
    %v167 = vld [vmem:[#allocation5 + $0x38] sm:$0xff]
    %v168 = vld [vmem:[#allocation5 + $0x40] sm:$0xff]
    %v169 = vld [vmem:[#allocation5 + $0x48] sm:$0xff]
    %v170 = vld [vmem:[#allocation5 + $0x50] sm:$0xff]
    %v171 = vld [vmem:[#allocation5 + $0x58] sm:$0xff]
    %v172 = vld [vmem:[#allocation5 + $0x60] sm:$0xff]
    %v173 = vld [vmem:[#allocation5 + $0x68] sm:$0xff]
    %v174 = vld [vmem:[#allocation5 + $0x70] sm:$0xff]
    %v175 = vld [vmem:[#allocation5 + $0x78] sm:$0xff]
    %v176 = vld [vmem:[#allocation5 + $0x80] sm:$0xff]
    %v177 = vld [vmem:[#allocation5 + $0x88] sm:$0xff]
    %v178 = vld [vmem:[#allocation5 + $0x90] sm:$0xff]
    %v179 = vld [vmem:[#allocation5 + $0x98] sm:$0xff]
    %v180 = vld [vmem:[#allocation5 + $0xa0] sm:$0xff]
    %v181 = vld [vmem:[#allocation5 + $0xa8] sm:$0xff]
    %v182 = vld [vmem:[#allocation5 + $0xb0] sm:$0xff]
    %v183 = vld [vmem:[#allocation5 + $0xb8] sm:$0xff]
    %v184 = vld [vmem:[#allocation5 + $0xc0] sm:$0xff]
    %v185 = vld [vmem:[#allocation5 + $0xc8] sm:$0xff]
    %v186 = vld [vmem:[#allocation5 + $0xd0] sm:$0xff]
    %v187 = vld [vmem:[#allocation5 + $0xd8] sm:$0xff]
    %v188 = vld [vmem:[#allocation5 + $0xe0] sm:$0xff]
    %v189 = vld [vmem:[#allocation5 + $0xe8] sm:$0xff]
    %v190 = vld [vmem:[#allocation5 + $0xf0] sm:$0xff]
    %v191 = vld [vmem:[#allocation5 + $0xf8] sm:$0xff]
    %v192 = vld [vmem:[#allocation5 + $0x100] sm:$0xff]
    %v193 = vld [vmem:[#allocation5 + $0x108] sm:$0xff]
    %v194 = vld [vmem:[#allocation5 + $0x110] sm:$0xff]
    %v195 = vld [vmem:[#allocation5 + $0x118] sm:$0xff]
    %v196 = vld [vmem:[#allocation5 + $0x120] sm:$0xff]
    %v197 = vld [vmem:[#allocation5 + $0x128] sm:$0xff]
    %v198 = vld [vmem:[#allocation5 + $0x130] sm:$0xff]
    %v199 = vld [vmem:[#allocation5 + $0x138] sm:$0xff]
    %v200 = vld [vmem:[#allocation5 + $0x140] sm:$0xff]
    %v201 = vld [vmem:[#allocation5 + $0x148] sm:$0xff]
    %v202 = vld [vmem:[#allocation5 + $0x150] sm:$0xff]
    %v203 = vld [vmem:[#allocation5 + $0x158] sm:$0xff]
    %v204 = vld [vmem:[#allocation5 + $0x160] sm:$0xff]
    %v205 = vld [vmem:[#allocation5 + $0x168] sm:$0xff]
    %v206 = vld [vmem:[#allocation5 + $0x170] sm:$0xff]
    %v207 = vld [vmem:[#allocation5 + $0x178] sm:$0xff]
    %v208 = vld [vmem:[#allocation5 + $0x180] sm:$0xff]
    %v209 = vld [vmem:[#allocation5 + $0x188] sm:$0xff]
    %v210 = vld [vmem:[#allocation5 + $0x190] sm:$0xff]
    %v211 = vld [vmem:[#allocation5 + $0x198] sm:$0xff]
    %v212 = vld [vmem:[#allocation5 + $0x1a0] sm:$0xff]
    %v213 = vld [vmem:[#allocation5 + $0x1a8] sm:$0xff]
    %v214 = vld [vmem:[#allocation5 + $0x1b0] sm:$0xff]
    %v215 = vld [vmem:[#allocation5 + $0x1b8] sm:$0xff]
    %v216 = vld [vmem:[#allocation5 + $0x1c0] sm:$0xff]
    %v217 = vld [vmem:[#allocation5 + $0x1c8] sm:$0xff]
    %v218 = vld [vmem:[#allocation5 + $0x1d0] sm:$0xff]
    %v219 = vld [vmem:[#allocation5 + $0x1d8] sm:$0xff]
    %v220 = vld [vmem:[#allocation5 + $0x1e0] sm:$0xff]
    %v221 = vld [vmem:[#allocation5 + $0x1e8] sm:$0xff]
    %v222 = vld [vmem:[#allocation5 + $0x1f0] sm:$0xff]
    %v223 = vld [vmem:[#allocation5 + $0x1f8] sm:$0xff]
    %v224 = vld [vmem:[#allocation5 + $0x200] sm:$0xff]
    %v225 = vld [vmem:[#allocation5 + $0x208] sm:$0xff]
    %v226 = vld [vmem:[#allocation5 + $0x210] sm:$0xff]
    %v227 = vld [vmem:[#allocation5 + $0x218] sm:$0xff]
    %v228 = vld [vmem:[#allocation5 + $0x220] sm:$0xff]
    %v229 = vld [vmem:[#allocation5 + $0x228] sm:$0xff]
    %v230 = vld [vmem:[#allocation5 + $0x230] sm:$0xff]
    %v231 = vld [vmem:[#allocation5 + $0x238] sm:$0xff]
    %v232 = vld [vmem:[#allocation5 + $0x240] sm:$0xff]
    %v233 = vld [vmem:[#allocation5 + $0x248] sm:$0xff]
    %v234 = vld [vmem:[#allocation5 + $0x250] sm:$0xff]
    %v235 = vld [vmem:[#allocation5 + $0x258] sm:$0xff]
    %v236 = vld [vmem:[#allocation5 + $0x260] sm:$0xff]
    %v237 = vld [vmem:[#allocation5 + $0x268] sm:$0xff]
    %v238 = vld [vmem:[#allocation5 + $0x270] sm:$0xff]
    %v239 = vld [vmem:[#allocation5 + $0x278] sm:$0xff]
    %v240 = vld [vmem:[#allocation5 + $0x280] sm:$0xff]
    %v241 = vld [vmem:[#allocation5 + $0x288] sm:$0xff]
    %v242 = vld [vmem:[#allocation5 + $0x290] sm:$0xff]
    %v243 = vld [vmem:[#allocation5 + $0x298] sm:$0xff]
    %v244 = vld [vmem:[#allocation5 + $0x2a0] sm:$0xff]
    %v245 = vld [vmem:[#allocation5 + $0x2a8] sm:$0xff]
    %v246 = vld [vmem:[#allocation5 + $0x2b0] sm:$0xff]
    %v247 = vld [vmem:[#allocation5 + $0x2b8] sm:$0xff]
    %v248 = vld [vmem:[#allocation5 + $0x2c0] sm:$0xff]
    %v249 = vld [vmem:[#allocation5 + $0x2c8] sm:$0xff]
    %v250 = vld [vmem:[#allocation5 + $0x2d0] sm:$0xff]
    %v251 = vld [vmem:[#allocation5 + $0x2d8] sm:$0xff]
    %v252 = vld [vmem:[#allocation5 + $0x2e0] sm:$0xff]
    %v253 = vld [vmem:[#allocation5 + $0x2e8] sm:$0xff]
    %v254 = vld [vmem:[#allocation5 + $0x2f0] sm:$0xff]
    %v255 = vld [vmem:[#allocation5 + $0x2f8] sm:$0xff]
    %v256 = vld [vmem:[#allocation5 + $0x300] sm:$0xff]
    %v257 = vld [vmem:[#allocation5 + $0x308] sm:$0xff]
    %v258 = vld [vmem:[#allocation5 + $0x310] sm:$0xff]
    %v259 = vld [vmem:[#allocation5 + $0x318] sm:$0xff]
    %v260 = vld [vmem:[#allocation5 + $0x320] sm:$0xff]
    %v261 = vld [vmem:[#allocation5 + $0x328] sm:$0xff]
    %v262 = vld [vmem:[#allocation5 + $0x330] sm:$0xff]
    %v263 = vld [vmem:[#allocation5 + $0x338] sm:$0xff]
    %v264 = vld [vmem:[#allocation5 + $0x340] sm:$0xff]
    %v265 = vld [vmem:[#allocation5 + $0x348] sm:$0xff]
    %v266 = vld [vmem:[#allocation5 + $0x350] sm:$0xff]
    %v267 = vld [vmem:[#allocation5 + $0x358] sm:$0xff]
    %v268 = vld [vmem:[#allocation5 + $0x360] sm:$0xff]
    %v269 = vld [vmem:[#allocation5 + $0x368] sm:$0xff]
    %v270 = vld [vmem:[#allocation5 + $0x370] sm:$0xff]
    %v271 = vld [vmem:[#allocation5 + $0x378] sm:$0xff]
    %v272 = vld [vmem:[#allocation5 + $0x380] sm:$0xff]
    %v273 = vld [vmem:[#allocation5 + $0x388] sm:$0xff]
    %v274 = vld [vmem:[#allocation5 + $0x390] sm:$0xff]
    %v275 = vld [vmem:[#allocation5 + $0x398] sm:$0xff]
    %v276 = vld [vmem:[#allocation5 + $0x3a0] sm:$0xff]
    %v277 = vld [vmem:[#allocation5 + $0x3a8] sm:$0xff]
    %v278 = vld [vmem:[#allocation5 + $0x3b0] sm:$0xff]
    %v279 = vld [vmem:[#allocation5 + $0x3b8] sm:$0xff]
    %v280 = vld [vmem:[#allocation5 + $0x3c0] sm:$0xff]
    %v281 = vld [vmem:[#allocation5 + $0x3c8] sm:$0xff]
    %v282 = vld [vmem:[#allocation5 + $0x3d0] sm:$0xff]
    %v283 = vld [vmem:[#allocation5 + $0x3d8] sm:$0xff]
    %v284 = vld [vmem:[#allocation5 + $0x3e0] sm:$0xff]
    %v285 = vld [vmem:[#allocation5 + $0x3e8] sm:$0xff]
    %v286 = vld [vmem:[#allocation5 + $0x3f0] sm:$0xff]
    %v287 = vld [vmem:[#allocation5 + $0x3f8] sm:$0xff]
    %v288 = vld [vmem:[#allocation5 + $0x400] sm:$0xff]
    %v289 = vld [vmem:[#allocation5 + $0x408] sm:$0xff]
    %v290 = vld [vmem:[#allocation5 + $0x410] sm:$0xff]
    %v291 = vld [vmem:[#allocation5 + $0x418] sm:$0xff]
    %v292 = vld [vmem:[#allocation5 + $0x420] sm:$0xff]
    %v293 = vld [vmem:[#allocation5 + $0x428] sm:$0xff]
    %v294 = vld [vmem:[#allocation5 + $0x430] sm:$0xff]
    %v295 = vld [vmem:[#allocation5 + $0x438] sm:$0xff]
    %v296 = vld [vmem:[#allocation5 + $0x440] sm:$0xff]
    %v297 = vld [vmem:[#allocation5 + $0x448] sm:$0xff]
    %v298 = vld [vmem:[#allocation5 + $0x450] sm:$0xff]
    %v299 = vld [vmem:[#allocation5 + $0x458] sm:$0xff]
    %v300 = vld [vmem:[#allocation5 + $0x460] sm:$0xff]
    %v301 = vld [vmem:[#allocation5 + $0x468] sm:$0xff]
    %v302 = vld [vmem:[#allocation5 + $0x470] sm:$0xff]
    %v303 = vld [vmem:[#allocation5 + $0x478] sm:$0xff]
    %v304 = vld [vmem:[#allocation5 + $0x480] sm:$0xff]
    %v305 = vld [vmem:[#allocation5 + $0x488] sm:$0xff]
    %v306 = vld [vmem:[#allocation5 + $0x490] sm:$0xff]
    %v307 = vld [vmem:[#allocation5 + $0x498] sm:$0xff]
    %v308 = vld [vmem:[#allocation5 + $0x4a0] sm:$0xff]
    %v309 = vld [vmem:[#allocation5 + $0x4a8] sm:$0xff]
    %v310 = vld [vmem:[#allocation5 + $0x4b0] sm:$0xff]
    %v311 = vld [vmem:[#allocation5 + $0x4b8] sm:$0xff]
    %v312 = vld [vmem:[#allocation5 + $0x4c0] sm:$0xff]
    %v313 = vld [vmem:[#allocation5 + $0x4c8] sm:$0xff]
    %v314 = vld [vmem:[#allocation5 + $0x4d0] sm:$0xff]
    %v315 = vld [vmem:[#allocation5 + $0x4d8] sm:$0xff]
    %v316 = vld [vmem:[#allocation5 + $0x4e0] sm:$0xff]
    %v317 = vld [vmem:[#allocation5 + $0x4e8] sm:$0xff]
    %v318 = vld [vmem:[#allocation5 + $0x4f0] sm:$0xff]
    %v319 = vld [vmem:[#allocation5 + $0x4f8] sm:$0xff]
    %v320 = vld [vmem:[#allocation5 + $0x500] sm:$0xff]
    %v321 = vld [vmem:[#allocation5 + $0x508] sm:$0xff]
    %v322 = vld [vmem:[#allocation5 + $0x510] sm:$0xff]
    %v323 = vld [vmem:[#allocation5 + $0x518] sm:$0xff]
    %v324 = vld [vmem:[#allocation5 + $0x520] sm:$0xff]
    %v325 = vld [vmem:[#allocation5 + $0x528] sm:$0xff]
    %v326 = vld [vmem:[#allocation5 + $0x530] sm:$0xff]
    %v327 = vld [vmem:[#allocation5 + $0x538] sm:$0xff]
    %v328 = vld [vmem:[#allocation5 + $0x540] sm:$0xff]
    %v329 = vld [vmem:[#allocation5 + $0x548] sm:$0xff]
    %v330 = vld [vmem:[#allocation5 + $0x550] sm:$0xff]
    %v331 = vld [vmem:[#allocation5 + $0x558] sm:$0xff]
    %v332 = vld [vmem:[#allocation5 + $0x560] sm:$0xff]
    %v333 = vld [vmem:[#allocation5 + $0x568] sm:$0xff]
    %v334 = vld [vmem:[#allocation5 + $0x570] sm:$0xff]
    %v335 = vld [vmem:[#allocation5 + $0x578] sm:$0xff]
    %v336 = vld [vmem:[#allocation5 + $0x580] sm:$0xff]
    %v337 = vld [vmem:[#allocation5 + $0x588] sm:$0xff]
    %v338 = vld [vmem:[#allocation5 + $0x590] sm:$0xff]
    %v339 = vld [vmem:[#allocation5 + $0x598] sm:$0xff]
    %v340 = vld [vmem:[#allocation5 + $0x5a0] sm:$0xff]
    %v341 = vld [vmem:[#allocation5 + $0x5a8] sm:$0xff]
    %v342 = vld [vmem:[#allocation5 + $0x5b0] sm:$0xff]
    %v343 = vld [vmem:[#allocation5 + $0x5b8] sm:$0xff]
    %v344 = vld [vmem:[#allocation5 + $0x5c0] sm:$0xff]
    %v345 = vld [vmem:[#allocation5 + $0x5c8] sm:$0xff]
    %v346 = vld [vmem:[#allocation5 + $0x5d0] sm:$0xff]
    %v347 = vld [vmem:[#allocation5 + $0x5d8] sm:$0xff]
    %v348 = vld [vmem:[#allocation5 + $0x5e0] sm:$0xff]
    %v349 = vld [vmem:[#allocation5 + $0x5e8] sm:$0xff]
    %v350 = vld [vmem:[#allocation5 + $0x5f0] sm:$0xff]
    %v351 = vld [vmem:[#allocation5 + $0x5f8] sm:$0xff]
    %v352 = vld [vmem:[#allocation5 + $0x600] sm:$0xff]
    %v353 = vld [vmem:[#allocation5 + $0x608] sm:$0xff]
    %v354 = vld [vmem:[#allocation5 + $0x610] sm:$0xff]
    %v355 = vld [vmem:[#allocation5 + $0x618] sm:$0xff]
    %v356 = vld [vmem:[#allocation5 + $0x620] sm:$0xff]
    %v357 = vld [vmem:[#allocation5 + $0x628] sm:$0xff]
    %v358 = vld [vmem:[#allocation5 + $0x630] sm:$0xff]
    %v359 = vld [vmem:[#allocation5 + $0x638] sm:$0xff]
    %v360 = vld [vmem:[#allocation5 + $0x640] sm:$0xff]
    %v361 = vld [vmem:[#allocation5 + $0x648] sm:$0xff]
    %v362 = vld [vmem:[#allocation5 + $0x650] sm:$0xff]
    %v363 = vld [vmem:[#allocation5 + $0x658] sm:$0xff]
    %v364 = vld [vmem:[#allocation5 + $0x660] sm:$0xff]
    %v365 = vld [vmem:[#allocation5 + $0x668] sm:$0xff]
    %v366 = vld [vmem:[#allocation5 + $0x670] sm:$0xff]
    %v367 = vld [vmem:[#allocation5 + $0x678] sm:$0xff]
    %v368 = vld [vmem:[#allocation5 + $0x680] sm:$0xff]
    %v369 = vld [vmem:[#allocation5 + $0x688] sm:$0xff]
    %v370 = vld [vmem:[#allocation5 + $0x690] sm:$0xff]
    %v371 = vld [vmem:[#allocation5 + $0x698] sm:$0xff]
    %v372 = vld [vmem:[#allocation5 + $0x6a0] sm:$0xff]
    %v373 = vld [vmem:[#allocation5 + $0x6a8] sm:$0xff]
    %v374 = vld [vmem:[#allocation5 + $0x6b0] sm:$0xff]
    %v375 = vld [vmem:[#allocation5 + $0x6b8] sm:$0xff]
    %v376 = vld [vmem:[#allocation5 + $0x6c0] sm:$0xff]
    %v377 = vld [vmem:[#allocation5 + $0x6c8] sm:$0xff]
    %v378 = vld [vmem:[#allocation5 + $0x6d0] sm:$0xff]
    %v379 = vld [vmem:[#allocation5 + $0x6d8] sm:$0xff]
    %v380 = vld [vmem:[#allocation5 + $0x6e0] sm:$0xff]
    %v381 = vld [vmem:[#allocation5 + $0x6e8] sm:$0xff]
    %v382 = vld [vmem:[#allocation5 + $0x6f0] sm:$0xff]
    %v383 = vld [vmem:[#allocation5 + $0x6f8] sm:$0xff]
    %v384 = vld [vmem:[#allocation5 + $0x700] sm:$0xff]
    %v385 = vld [vmem:[#allocation5 + $0x708] sm:$0xff]
    %v386 = vld [vmem:[#allocation5 + $0x710] sm:$0xff]
    %v387 = vld [vmem:[#allocation5 + $0x718] sm:$0xff]
    %v388 = vld [vmem:[#allocation5 + $0x720] sm:$0xff]
    %v389 = vld [vmem:[#allocation5 + $0x728] sm:$0xff]
    %v390 = vld [vmem:[#allocation5 + $0x730] sm:$0xff]
    %v391 = vld [vmem:[#allocation5 + $0x738] sm:$0xff]
    %v392 = vld [vmem:[#allocation5 + $0x740] sm:$0xff]
    %v393 = vld [vmem:[#allocation5 + $0x748] sm:$0xff]
    %v394 = vld [vmem:[#allocation5 + $0x750] sm:$0xff]
    %v395 = vld [vmem:[#allocation5 + $0x758] sm:$0xff]
    %v396 = vld [vmem:[#allocation5 + $0x760] sm:$0xff]
    %v397 = vld [vmem:[#allocation5 + $0x768] sm:$0xff]
    %v398 = vld [vmem:[#allocation5 + $0x770] sm:$0xff]
    %v399 = vld [vmem:[#allocation5 + $0x778] sm:$0xff]
    %v400 = vld [vmem:[#allocation5 + $0x780] sm:$0xff]
    %v401 = vld [vmem:[#allocation5 + $0x788] sm:$0xff]
    %v402 = vld [vmem:[#allocation5 + $0x790] sm:$0xff]
    %v403 = vld [vmem:[#allocation5 + $0x798] sm:$0xff]
    %v404 = vld [vmem:[#allocation5 + $0x7a0] sm:$0xff]
    %v405 = vld [vmem:[#allocation5 + $0x7a8] sm:$0xff]
    %v406 = vld [vmem:[#allocation5 + $0x7b0] sm:$0xff]
    %v407 = vld [vmem:[#allocation5 + $0x7b8] sm:$0xff]
    %v408 = vld [vmem:[#allocation5 + $0x7c0] sm:$0xff]
    %v409 = vld [vmem:[#allocation5 + $0x7c8] sm:$0xff]
    %v410 = vld [vmem:[#allocation5 + $0x7d0] sm:$0xff]
    %v411 = vld [vmem:[#allocation5 + $0x7d8] sm:$0xff]
    %v412 = vld [vmem:[#allocation5 + $0x7e0] sm:$0xff]
    %v413 = vld [vmem:[#allocation5 + $0x7e8] sm:$0xff]
    %v414 = vld [vmem:[#allocation5 + $0x7f0] sm:$0xff]
    %v415 = vld [vmem:[#allocation5 + $0x7f8] sm:$0xff]
    %v416 = vld [vmem:[#allocation5 + $0x800] sm:$0xff]
    %v417 = vld [vmem:[#allocation5 + $0x808] sm:$0xff]
    %v418 = vld [vmem:[#allocation5 + $0x810] sm:$0xff]
    %v419 = vld [vmem:[#allocation5 + $0x818] sm:$0xff]
    %v420 = vld [vmem:[#allocation5 + $0x820] sm:$0xff]
    %v421 = vld [vmem:[#allocation5 + $0x828] sm:$0xff]
    %v422 = vld [vmem:[#allocation5 + $0x830] sm:$0xff]
    %v423 = vld [vmem:[#allocation5 + $0x838] sm:$0xff]
    %v424 = vld [vmem:[#allocation5 + $0x840] sm:$0xff]
    %v425 = vld [vmem:[#allocation5 + $0x848] sm:$0xff]
    %v426 = vld [vmem:[#allocation5 + $0x850] sm:$0xff]
    %v427 = vld [vmem:[#allocation5 + $0x858] sm:$0xff]
    %v428 = vld [vmem:[#allocation5 + $0x860] sm:$0xff]
    %v429 = vld [vmem:[#allocation5 + $0x868] sm:$0xff]
    %v430 = vld [vmem:[#allocation5 + $0x870] sm:$0xff]
    %v431 = vld [vmem:[#allocation5 + $0x878] sm:$0xff]
    %v432 = vld [vmem:[#allocation5 + $0x880] sm:$0xff]
    %v433 = vld [vmem:[#allocation5 + $0x888] sm:$0xff]
    %v434 = vld [vmem:[#allocation5 + $0x890] sm:$0xff]
    %v435 = vld [vmem:[#allocation5 + $0x898] sm:$0xff]
    %v436 = vld [vmem:[#allocation5 + $0x8a0] sm:$0xff]
    %v437 = vld [vmem:[#allocation5 + $0x8a8] sm:$0xff]
    %v438 = vld [vmem:[#allocation5 + $0x8b0] sm:$0xff]
    %v439 = vld [vmem:[#allocation5 + $0x8b8] sm:$0xff]
    %v440 = vld [vmem:[#allocation5 + $0x8c0] sm:$0xff]
    %v441 = vld [vmem:[#allocation5 + $0x8c8] sm:$0xff]
    %v442 = vld [vmem:[#allocation5 + $0x8d0] sm:$0xff]
    %v443 = vld [vmem:[#allocation5 + $0x8d8] sm:$0xff]
    %v444 = vld [vmem:[#allocation5 + $0x8e0] sm:$0xff]
    %v445 = vld [vmem:[#allocation5 + $0x8e8] sm:$0xff]
    %v446 = vld [vmem:[#allocation5 + $0x8f0] sm:$0xff]
    %v447 = vld [vmem:[#allocation5 + $0x8f8] sm:$0xff]
    %v448 = vld [vmem:[#allocation5 + $0x900] sm:$0xff]
    %v449 = vld [vmem:[#allocation5 + $0x908] sm:$0xff]
    %v450 = vld [vmem:[#allocation5 + $0x910] sm:$0xff]
    %v451 = vld [vmem:[#allocation5 + $0x918] sm:$0xff]
    %v452 = vld [vmem:[#allocation5 + $0x920] sm:$0xff]
    %v453 = vld [vmem:[#allocation5 + $0x928] sm:$0xff]
    %v454 = vld [vmem:[#allocation5 + $0x930] sm:$0xff]
    %v455 = vld [vmem:[#allocation5 + $0x938] sm:$0xff]
    %v456 = vld [vmem:[#allocation5 + $0x940] sm:$0xff]
    %v457 = vld [vmem:[#allocation5 + $0x948] sm:$0xff]
    %v458 = vld [vmem:[#allocation5 + $0x950] sm:$0xff]
    %v459 = vld [vmem:[#allocation5 + $0x958] sm:$0xff]
    %v460 = vld [vmem:[#allocation5 + $0x960] sm:$0xff]
    %v461 = vld [vmem:[#allocation5 + $0x968] sm:$0xff]
    %v462 = vld [vmem:[#allocation5 + $0x970] sm:$0xff]
    %v463 = vld [vmem:[#allocation5 + $0x978] sm:$0xff]
    %v464 = vld [vmem:[#allocation5 + $0x980] sm:$0xff]
    %v465 = vld [vmem:[#allocation5 + $0x988] sm:$0xff]
    %v466 = vld [vmem:[#allocation5 + $0x990] sm:$0xff]
    %v467 = vld [vmem:[#allocation5 + $0x998] sm:$0xff]
    %v468 = vld [vmem:[#allocation5 + $0x9a0] sm:$0xff]
    %v469 = vld [vmem:[#allocation5 + $0x9a8] sm:$0xff]
    %v470 = vld [vmem:[#allocation5 + $0x9b0] sm:$0xff]
    %v471 = vld [vmem:[#allocation5 + $0x9b8] sm:$0xff]
    %v472 = vld [vmem:[#allocation5 + $0x9c0] sm:$0xff]
    %v473 = vld [vmem:[#allocation5 + $0x9c8] sm:$0xff]
    %v474 = vld [vmem:[#allocation5 + $0x9d0] sm:$0xff]
    %v475 = vld [vmem:[#allocation5 + $0x9d8] sm:$0xff]
    %v476 = vld [vmem:[#allocation5 + $0x9e0] sm:$0xff]
    %v477 = vld [vmem:[#allocation5 + $0x9e8] sm:$0xff]
    %v478 = vld [vmem:[#allocation5 + $0x9f0] sm:$0xff]
    %v479 = vld [vmem:[#allocation5 + $0x9f8] sm:$0xff]
    %v480 = vld [vmem:[#allocation5 + $0xa00] sm:$0xff]
    %v481 = vld [vmem:[#allocation5 + $0xa08] sm:$0xff]
    %v482 = vld [vmem:[#allocation5 + $0xa10] sm:$0xff]
    %v483 = vld [vmem:[#allocation5 + $0xa18] sm:$0xff]
    %v484 = vld [vmem:[#allocation5 + $0xa20] sm:$0xff]
    %v485 = vld [vmem:[#allocation5 + $0xa28] sm:$0xff]
    %v486 = vld [vmem:[#allocation5 + $0xa30] sm:$0xff]
    %v487 = vld [vmem:[#allocation5 + $0xa38] sm:$0xff]
    %v488 = vld [vmem:[#allocation5 + $0xa40] sm:$0xff]
    %v489 = vld [vmem:[#allocation5 + $0xa48] sm:$0xff]
    %v490 = vld [vmem:[#allocation5 + $0xa50] sm:$0xff]
    %v491 = vld [vmem:[#allocation5 + $0xa58] sm:$0xff]
    %v492 = vld [vmem:[#allocation5 + $0xa60] sm:$0xff]
    %v493 = vld [vmem:[#allocation5 + $0xa68] sm:$0xff]
    %v494 = vld [vmem:[#allocation5 + $0xa70] sm:$0xff]
    %v495 = vld [vmem:[#allocation5 + $0xa78] sm:$0xff]
    %v496 = vld [vmem:[#allocation5 + $0xa80] sm:$0xff]
    %v497 = vld [vmem:[#allocation5 + $0xa88] sm:$0xff]
    %v498 = vld [vmem:[#allocation5 + $0xa90] sm:$0xff]
    %v499 = vld [vmem:[#allocation5 + $0xa98] sm:$0xff]
    %v500 = vld [vmem:[#allocation5 + $0xaa0] sm:$0xff]
    %v501 = vld [vmem:[#allocation5 + $0xaa8] sm:$0xff]
    %v502 = vld [vmem:[#allocation5 + $0xab0] sm:$0xff]
    %v503 = vld [vmem:[#allocation5 + $0xab8] sm:$0xff]
    %v504 = vld [vmem:[#allocation5 + $0xac0] sm:$0xff]
    %v505 = vld [vmem:[#allocation5 + $0xac8] sm:$0xff]
    %v506 = vld [vmem:[#allocation5 + $0xad0] sm:$0xff]
    %v507 = vld [vmem:[#allocation5 + $0xad8] sm:$0xff]
    %v508 = vld [vmem:[#allocation5 + $0xae0] sm:$0xff]
    %v509 = vld [vmem:[#allocation5 + $0xae8] sm:$0xff]
    %v510 = vld [vmem:[#allocation5 + $0xaf0] sm:$0xff]
    %v511 = vld [vmem:[#allocation5 + $0xaf8] sm:$0xff]
    %v512 = vld [vmem:[#allocation5 + $0xb00] sm:$0xff]
    %v513 = vld [vmem:[#allocation5 + $0xb08] sm:$0xff]
    %v514 = vld [vmem:[#allocation5 + $0xb10] sm:$0xff]
    %v515 = vld [vmem:[#allocation5 + $0xb18] sm:$0xff]
    %v516 = vld [vmem:[#allocation5 + $0xb20] sm:$0xff]
    %v517 = vld [vmem:[#allocation5 + $0xb28] sm:$0xff]
    %v518 = vld [vmem:[#allocation5 + $0xb30] sm:$0xff]
    %v519 = vld [vmem:[#allocation5 + $0xb38] sm:$0xff]
    %v520 = vld [vmem:[#allocation5 + $0xb40] sm:$0xff]
    %v521 = vld [vmem:[#allocation5 + $0xb48] sm:$0xff]
    %v522 = vld [vmem:[#allocation5 + $0xb50] sm:$0xff]
    %v523 = vld [vmem:[#allocation5 + $0xb58] sm:$0xff]
    %v524 = vld [vmem:[#allocation5 + $0xb60] sm:$0xff]
    %v525 = vld [vmem:[#allocation5 + $0xb68] sm:$0xff]
    %v526 = vld [vmem:[#allocation5 + $0xb70] sm:$0xff]
    %v527 = vld [vmem:[#allocation5 + $0xb78] sm:$0xff]
    %v528 = vld [vmem:[#allocation5 + $0xb80] sm:$0xff]
    %v529 = vld [vmem:[#allocation5 + $0xb88] sm:$0xff]
    %v530 = vld [vmem:[#allocation5 + $0xb90] sm:$0xff]
    %v531 = vld [vmem:[#allocation5 + $0xb98] sm:$0xff]
    %v532 = vld [vmem:[#allocation5 + $0xba0] sm:$0xff]
    %v533 = vld [vmem:[#allocation5 + $0xba8] sm:$0xff]
    %v534 = vld [vmem:[#allocation5 + $0xbb0] sm:$0xff]
    %v535 = vld [vmem:[#allocation5 + $0xbb8] sm:$0xff]
    %v536 = vld [vmem:[#allocation5 + $0xbc0] sm:$0xff]
    %v537 = vld [vmem:[#allocation5 + $0xbc8] sm:$0xff]
    %v538 = vld [vmem:[#allocation5 + $0xbd0] sm:$0xff]
    %v539 = vld [vmem:[#allocation5 + $0xbd8] sm:$0xff]
    %v540 = vld [vmem:[#allocation5 + $0xbe0] sm:$0xff]
    %v541 = vld [vmem:[#allocation5 + $0xbe8] sm:$0xff]
    %v542 = vld [vmem:[#allocation5 + $0xbf0] sm:$0xff]
    %v543 = vld [vmem:[#allocation5 + $0xbf8] sm:$0xff]
    %v544 = vld [vmem:[#allocation5 + $0xc00] sm:$0xff]
    %v545 = vld [vmem:[#allocation5 + $0xc08] sm:$0xff]
    %v546 = vld [vmem:[#allocation5 + $0xc10] sm:$0xff]
    %v547 = vld [vmem:[#allocation5 + $0xc18] sm:$0xff]
    %v548 = vld [vmem:[#allocation5 + $0xc20] sm:$0xff]
    %v549 = vld [vmem:[#allocation5 + $0xc28] sm:$0xff]
    %v550 = vld [vmem:[#allocation5 + $0xc30] sm:$0xff]
    %v551 = vld [vmem:[#allocation5 + $0xc38] sm:$0xff]
    %v552 = vld [vmem:[#allocation7] sm:$0xff]
    %v554 = vlaneseq
    %v555 = vshrl.u32 %v554, 7
    %v556 = vsub.s32 0, %v555
    %v557 = vrot.slane %v552, %v556
    %v558 = vlaneseq
    %v559 = vshrl.u32 %v558, 7
    %v560 = vsub.s32 1, %v559
    %v561 = vrot.slane %v552, %v560
    %v562 = vlaneseq
    %v563 = vshrl.u32 %v562, 7
    %v564 = vsub.s32 2, %v563
    %v565 = vrot.slane %v552, %v564
    %v566 = vlaneseq
    %v567 = vshrl.u32 %v566, 7
    %v568 = vsub.s32 3, %v567
    %v569 = vrot.slane %v552, %v568
    %v570 = vlaneseq
    %v571 = vshrl.u32 %v570, 7
    %v572 = vsub.s32 4, %v571
    %v573 = vrot.slane %v552, %v572
    %v574 = vlaneseq
    %v575 = vshrl.u32 %v574, 7
    %v576 = vsub.s32 5, %v575
    %v577 = vrot.slane %v552, %v576
    %v578 = vlaneseq
    %v579 = vshrl.u32 %v578, 7
    %v580 = vsub.s32 6, %v579
    %v581 = vrot.slane %v552, %v580
    %v582 = vlaneseq
    %v583 = vshrl.u32 %v582, 7
    %v584 = vsub.s32 7, %v583
    %v585 = vrot.slane %v552, %v584
    %v986 = vunpack.c.l.b16 %v160
    %v987 = vunpack.c.h.b16 %v160
    %v988 = vunpack.c.l.b16 %v161
    %v989 = vunpack.c.h.b16 %v161
    %v990 = vunpack.c.l.b16 %v162
    %v991 = vunpack.c.h.b16 %v162
    %v992 = vunpack.c.l.b16 %v163
    %v993 = vunpack.c.h.b16 %v163
    %v994 = vunpack.c.l.b16 %v164
    %v995 = vunpack.c.h.b16 %v164
    %v996 = vunpack.c.l.b16 %v165
    %v997 = vunpack.c.h.b16 %v165
    %v998 = vunpack.c.l.b16 %v166
    %v999 = vunpack.c.h.b16 %v166
    %v1000 = vunpack.c.l.b16 %v167
    %v1001 = vunpack.c.h.b16 %v167
    %v1002 = vunpack.c.l.b16 %v168
    %v1003 = vunpack.c.h.b16 %v168
    %v1004 = vunpack.c.l.b16 %v169
    %v1005 = vunpack.c.h.b16 %v169
    %v1006 = vunpack.c.l.b16 %v170
    %v1007 = vunpack.c.h.b16 %v170
    %v1008 = vunpack.c.l.b16 %v171
    %v1009 = vunpack.c.h.b16 %v171
    %v1010 = vunpack.c.l.b16 %v172
    %v1011 = vunpack.c.h.b16 %v172
    %v1012 = vunpack.c.l.b16 %v173
    %v1013 = vunpack.c.h.b16 %v173
    %v1014 = vunpack.c.l.b16 %v174
    %v1015 = vunpack.c.h.b16 %v174
    %v1016 = vunpack.c.l.b16 %v175
    %v1017 = vunpack.c.h.b16 %v175
    %v1018 = vunpack.c.l.b16 %v176
    %v1019 = vunpack.c.h.b16 %v176
    %v1020 = vunpack.c.l.b16 %v177
    %v1021 = vunpack.c.h.b16 %v177
    %v1022 = vunpack.c.l.b16 %v178
    %v1023 = vunpack.c.h.b16 %v178
    %v1024 = vunpack.c.l.b16 %v179
    %v1025 = vunpack.c.h.b16 %v179
    %v1026 = vunpack.c.l.b16 %v180
    %v1027 = vunpack.c.h.b16 %v180
    %v1028 = vunpack.c.l.b16 %v181
    %v1029 = vunpack.c.h.b16 %v181
    %v1030 = vunpack.c.l.b16 %v182
    %v1031 = vunpack.c.h.b16 %v182
    %v1032 = vunpack.c.l.b16 %v183
    %v1033 = vunpack.c.h.b16 %v183
    %v1034 = vunpack.c.l.b16 %v184
    %v1035 = vunpack.c.h.b16 %v184
    %v1036 = vunpack.c.l.b16 %v185
    %v1037 = vunpack.c.h.b16 %v185
    %v1038 = vunpack.c.l.b16 %v186
    %v1039 = vunpack.c.h.b16 %v186
    %v1040 = vunpack.c.l.b16 %v187
    %v1041 = vunpack.c.h.b16 %v187
    %v1042 = vunpack.c.l.b16 %v188
    %v1043 = vunpack.c.h.b16 %v188
    %v1044 = vunpack.c.l.b16 %v189
    %v1045 = vunpack.c.h.b16 %v189
    %v1046 = vunpack.c.l.b16 %v190
    %v1047 = vunpack.c.h.b16 %v190
    %v1048 = vunpack.c.l.b16 %v191
    %v1049 = vunpack.c.h.b16 %v191
    %v1050 = vunpack.c.l.b16 %v192
    %v1051 = vunpack.c.h.b16 %v192
    %v1052 = vunpack.c.l.b16 %v193
    %v1053 = vunpack.c.h.b16 %v193
    %v1054 = vunpack.c.l.b16 %v194
    %v1055 = vunpack.c.h.b16 %v194
    %v1056 = vunpack.c.l.b16 %v195
    %v1057 = vunpack.c.h.b16 %v195
    %v1058 = vunpack.c.l.b16 %v196
    %v1059 = vunpack.c.h.b16 %v196
    %v1060 = vunpack.c.l.b16 %v197
    %v1061 = vunpack.c.h.b16 %v197
    %v1062 = vunpack.c.l.b16 %v198
    %v1063 = vunpack.c.h.b16 %v198
    %v1064 = vunpack.c.l.b16 %v199
    %v1065 = vunpack.c.h.b16 %v199
    %v1066 = vunpack.c.l.b16 %v200
    %v1067 = vunpack.c.h.b16 %v200
    %v1068 = vunpack.c.l.b16 %v201
    %v1069 = vunpack.c.h.b16 %v201
    %v1070 = vunpack.c.l.b16 %v202
    %v1071 = vunpack.c.h.b16 %v202
    %v1072 = vunpack.c.l.b16 %v203
    %v1073 = vunpack.c.h.b16 %v203
    %v1074 = vunpack.c.l.b16 %v204
    %v1075 = vunpack.c.h.b16 %v204
    %v1076 = vunpack.c.l.b16 %v205
    %v1077 = vunpack.c.h.b16 %v205
    %v1078 = vunpack.c.l.b16 %v206
    %v1079 = vunpack.c.h.b16 %v206
    %v1080 = vunpack.c.l.b16 %v207
    %v1081 = vunpack.c.h.b16 %v207
    %v1082 = vunpack.c.l.b16 %v208
    %v1083 = vunpack.c.h.b16 %v208
    %v1084 = vunpack.c.l.b16 %v209
    %v1085 = vunpack.c.h.b16 %v209
    %v1086 = vunpack.c.l.b16 %v210
    %v1087 = vunpack.c.h.b16 %v210
    %v1088 = vunpack.c.l.b16 %v211
    %v1089 = vunpack.c.h.b16 %v211
    %v1090 = vunpack.c.l.b16 %v212
    %v1091 = vunpack.c.h.b16 %v212
    %v1092 = vunpack.c.l.b16 %v213
    %v1093 = vunpack.c.h.b16 %v213
    %v1094 = vunpack.c.l.b16 %v214
    %v1095 = vunpack.c.h.b16 %v214
    %v1096 = vunpack.c.l.b16 %v215
    %v1097 = vunpack.c.h.b16 %v215
    %v1098 = vunpack.c.l.b16 %v216
    %v1099 = vunpack.c.h.b16 %v216
    %v1100 = vunpack.c.l.b16 %v217
    %v1101 = vunpack.c.h.b16 %v217
    %v1102 = vunpack.c.l.b16 %v218
    %v1103 = vunpack.c.h.b16 %v218
    %v1104 = vunpack.c.l.b16 %v219
    %v1105 = vunpack.c.h.b16 %v219
    %v1106 = vunpack.c.l.b16 %v220
    %v1107 = vunpack.c.h.b16 %v220
    %v1108 = vunpack.c.l.b16 %v221
    %v1109 = vunpack.c.h.b16 %v221
    %v1110 = vunpack.c.l.b16 %v222
    %v1111 = vunpack.c.h.b16 %v222
    %v1112 = vunpack.c.l.b16 %v223
    %v1113 = vunpack.c.h.b16 %v223
    %v1114 = vunpack.c.l.b16 %v224
    %v1115 = vunpack.c.h.b16 %v224
    %v1116 = vunpack.c.l.b16 %v225
    %v1117 = vunpack.c.h.b16 %v225
    %v1118 = vunpack.c.l.b16 %v226
    %v1119 = vunpack.c.h.b16 %v226
    %v1120 = vunpack.c.l.b16 %v227
    %v1121 = vunpack.c.h.b16 %v227
    %v1122 = vunpack.c.l.b16 %v228
    %v1123 = vunpack.c.h.b16 %v228
    %v1124 = vunpack.c.l.b16 %v229
    %v1125 = vunpack.c.h.b16 %v229
    %v1126 = vunpack.c.l.b16 %v230
    %v1127 = vunpack.c.h.b16 %v230
    %v1128 = vunpack.c.l.b16 %v231
    %v1129 = vunpack.c.h.b16 %v231
    %v1130 = vunpack.c.l.b16 %v232
    %v1131 = vunpack.c.h.b16 %v232
    %v1132 = vunpack.c.l.b16 %v233
    %v1133 = vunpack.c.h.b16 %v233
    %v1134 = vunpack.c.l.b16 %v234
    %v1135 = vunpack.c.h.b16 %v234
    %v1136 = vunpack.c.l.b16 %v235
    %v1137 = vunpack.c.h.b16 %v235
    %v1138 = vunpack.c.l.b16 %v236
    %v1139 = vunpack.c.h.b16 %v236
    %v1140 = vunpack.c.l.b16 %v237
    %v1141 = vunpack.c.h.b16 %v237
    %v1142 = vunpack.c.l.b16 %v238
    %v1143 = vunpack.c.h.b16 %v238
    %v1144 = vunpack.c.l.b16 %v239
    %v1145 = vunpack.c.h.b16 %v239
    %v1146 = vunpack.c.l.b16 %v240
    %v1147 = vunpack.c.h.b16 %v240
    %v1148 = vunpack.c.l.b16 %v241
    %v1149 = vunpack.c.h.b16 %v241
    %v1150 = vunpack.c.l.b16 %v242
    %v1151 = vunpack.c.h.b16 %v242
    %v1152 = vunpack.c.l.b16 %v243
    %v1153 = vunpack.c.h.b16 %v243
    %v1154 = vunpack.c.l.b16 %v244
    %v1155 = vunpack.c.h.b16 %v244
    %v1156 = vunpack.c.l.b16 %v245
    %v1157 = vunpack.c.h.b16 %v245
    %v1158 = vunpack.c.l.b16 %v246
    %v1159 = vunpack.c.h.b16 %v246
    %v1160 = vunpack.c.l.b16 %v247
    %v1161 = vunpack.c.h.b16 %v247
    %v1162 = vunpack.c.l.b16 %v248
    %v1163 = vunpack.c.h.b16 %v248
    %v1164 = vunpack.c.l.b16 %v249
    %v1165 = vunpack.c.h.b16 %v249
    %v1166 = vunpack.c.l.b16 %v250
    %v1167 = vunpack.c.h.b16 %v250
    %v1168 = vunpack.c.l.b16 %v251
    %v1169 = vunpack.c.h.b16 %v251
    %v1170 = vunpack.c.l.b16 %v252
    %v1171 = vunpack.c.h.b16 %v252
    %v1172 = vunpack.c.l.b16 %v253
    %v1173 = vunpack.c.h.b16 %v253
    %v1174 = vunpack.c.l.b16 %v254
    %v1175 = vunpack.c.h.b16 %v254
    %v1176 = vunpack.c.l.b16 %v255
    %v1177 = vunpack.c.h.b16 %v255
    %v1178 = vunpack.c.l.b16 %v256
    %v1179 = vunpack.c.h.b16 %v256
    %v1180 = vunpack.c.l.b16 %v257
    %v1181 = vunpack.c.h.b16 %v257
    %v1182 = vunpack.c.l.b16 %v258
    %v1183 = vunpack.c.h.b16 %v258
    %v1184 = vunpack.c.l.b16 %v259
    %v1185 = vunpack.c.h.b16 %v259
    %v1186 = vunpack.c.l.b16 %v260
    %v1187 = vunpack.c.h.b16 %v260
    %v1188 = vunpack.c.l.b16 %v261
    %v1189 = vunpack.c.h.b16 %v261
    %v1190 = vunpack.c.l.b16 %v262
    %v1191 = vunpack.c.h.b16 %v262
    %v1192 = vunpack.c.l.b16 %v263
    %v1193 = vunpack.c.h.b16 %v263
    %v1194 = vunpack.c.l.b16 %v264
    %v1195 = vunpack.c.h.b16 %v264
    %v1196 = vunpack.c.l.b16 %v265
    %v1197 = vunpack.c.h.b16 %v265
    %v1198 = vunpack.c.l.b16 %v266
    %v1199 = vunpack.c.h.b16 %v266
    %v1200 = vunpack.c.l.b16 %v267
    %v1201 = vunpack.c.h.b16 %v267
    %v1202 = vunpack.c.l.b16 %v268
    %v1203 = vunpack.c.h.b16 %v268
    %v1204 = vunpack.c.l.b16 %v269
    %v1205 = vunpack.c.h.b16 %v269
    %v1206 = vunpack.c.l.b16 %v270
    %v1207 = vunpack.c.h.b16 %v270
    %v1208 = vunpack.c.l.b16 %v271
    %v1209 = vunpack.c.h.b16 %v271
    %v1210 = vunpack.c.l.b16 %v272
    %v1211 = vunpack.c.h.b16 %v272
    %v1212 = vunpack.c.l.b16 %v273
    %v1213 = vunpack.c.h.b16 %v273
    %v1214 = vunpack.c.l.b16 %v274
    %v1215 = vunpack.c.h.b16 %v274
    %v1216 = vunpack.c.l.b16 %v275
    %v1217 = vunpack.c.h.b16 %v275
    %v1218 = vunpack.c.l.b16 %v276
    %v1219 = vunpack.c.h.b16 %v276
    %v1220 = vunpack.c.l.b16 %v277
    %v1221 = vunpack.c.h.b16 %v277
    %v1222 = vunpack.c.l.b16 %v278
    %v1223 = vunpack.c.h.b16 %v278
    %v1224 = vunpack.c.l.b16 %v279
    %v1225 = vunpack.c.h.b16 %v279
    %v1226 = vunpack.c.l.b16 %v280
    %v1227 = vunpack.c.h.b16 %v280
    %v1228 = vunpack.c.l.b16 %v281
    %v1229 = vunpack.c.h.b16 %v281
    %v1230 = vunpack.c.l.b16 %v282
    %v1231 = vunpack.c.h.b16 %v282
    %v1232 = vunpack.c.l.b16 %v283
    %v1233 = vunpack.c.h.b16 %v283
    %v1234 = vunpack.c.l.b16 %v284
    %v1235 = vunpack.c.h.b16 %v284
    %v1236 = vunpack.c.l.b16 %v285
    %v1237 = vunpack.c.h.b16 %v285
    %v1238 = vunpack.c.l.b16 %v286
    %v1239 = vunpack.c.h.b16 %v286
    %v1240 = vunpack.c.l.b16 %v287
    %v1241 = vunpack.c.h.b16 %v287
    %v1242 = vunpack.c.l.b16 %v288
    %v1243 = vunpack.c.h.b16 %v288
    %v1244 = vunpack.c.l.b16 %v289
    %v1245 = vunpack.c.h.b16 %v289
    %v1246 = vunpack.c.l.b16 %v290
    %v1247 = vunpack.c.h.b16 %v290
    %v1248 = vunpack.c.l.b16 %v291
    %v1249 = vunpack.c.h.b16 %v291
    %v1250 = vunpack.c.l.b16 %v292
    %v1251 = vunpack.c.h.b16 %v292
    %v1252 = vunpack.c.l.b16 %v293
    %v1253 = vunpack.c.h.b16 %v293
    %v1254 = vunpack.c.l.b16 %v294
    %v1255 = vunpack.c.h.b16 %v294
    %v1256 = vunpack.c.l.b16 %v295
    %v1257 = vunpack.c.h.b16 %v295
    %v1258 = vunpack.c.l.b16 %v296
    %v1259 = vunpack.c.h.b16 %v296
    %v1260 = vunpack.c.l.b16 %v297
    %v1261 = vunpack.c.h.b16 %v297
    %v1262 = vunpack.c.l.b16 %v298
    %v1263 = vunpack.c.h.b16 %v298
    %v1264 = vunpack.c.l.b16 %v299
    %v1265 = vunpack.c.h.b16 %v299
    %v1266 = vunpack.c.l.b16 %v300
    %v1267 = vunpack.c.h.b16 %v300
    %v1268 = vunpack.c.l.b16 %v301
    %v1269 = vunpack.c.h.b16 %v301
    %v1270 = vunpack.c.l.b16 %v302
    %v1271 = vunpack.c.h.b16 %v302
    %v1272 = vunpack.c.l.b16 %v303
    %v1273 = vunpack.c.h.b16 %v303
    %v1274 = vunpack.c.l.b16 %v304
    %v1275 = vunpack.c.h.b16 %v304
    %v1276 = vunpack.c.l.b16 %v305
    %v1277 = vunpack.c.h.b16 %v305
    %v1278 = vunpack.c.l.b16 %v306
    %v1279 = vunpack.c.h.b16 %v306
    %v1280 = vunpack.c.l.b16 %v307
    %v1281 = vunpack.c.h.b16 %v307
    %v1282 = vunpack.c.l.b16 %v308
    %v1283 = vunpack.c.h.b16 %v308
    %v1284 = vunpack.c.l.b16 %v309
    %v1285 = vunpack.c.h.b16 %v309
    %v1286 = vunpack.c.l.b16 %v310
    %v1287 = vunpack.c.h.b16 %v310
    %v1288 = vunpack.c.l.b16 %v311
    %v1289 = vunpack.c.h.b16 %v311
    %v1290 = vunpack.c.l.b16 %v312
    %v1291 = vunpack.c.h.b16 %v312
    %v1292 = vunpack.c.l.b16 %v313
    %v1293 = vunpack.c.h.b16 %v313
    %v1294 = vunpack.c.l.b16 %v314
    %v1295 = vunpack.c.h.b16 %v314
    %v1296 = vunpack.c.l.b16 %v315
    %v1297 = vunpack.c.h.b16 %v315
    %v1298 = vunpack.c.l.b16 %v316
    %v1299 = vunpack.c.h.b16 %v316
    %v1300 = vunpack.c.l.b16 %v317
    %v1301 = vunpack.c.h.b16 %v317
    %v1302 = vunpack.c.l.b16 %v318
    %v1303 = vunpack.c.h.b16 %v318
    %v1304 = vunpack.c.l.b16 %v319
    %v1305 = vunpack.c.h.b16 %v319
    %v1306 = vunpack.c.l.b16 %v320
    %v1307 = vunpack.c.h.b16 %v320
    %v1308 = vunpack.c.l.b16 %v321
    %v1309 = vunpack.c.h.b16 %v321
    %v1310 = vunpack.c.l.b16 %v322
    %v1311 = vunpack.c.h.b16 %v322
    %v1312 = vunpack.c.l.b16 %v323
    %v1313 = vunpack.c.h.b16 %v323
    %v1314 = vunpack.c.l.b16 %v324
    %v1315 = vunpack.c.h.b16 %v324
    %v1316 = vunpack.c.l.b16 %v325
    %v1317 = vunpack.c.h.b16 %v325
    %v1318 = vunpack.c.l.b16 %v326
    %v1319 = vunpack.c.h.b16 %v326
    %v1320 = vunpack.c.l.b16 %v327
    %v1321 = vunpack.c.h.b16 %v327
    %v1322 = vunpack.c.l.b16 %v328
    %v1323 = vunpack.c.h.b16 %v328
    %v1324 = vunpack.c.l.b16 %v329
    %v1325 = vunpack.c.h.b16 %v329
    %v1326 = vunpack.c.l.b16 %v330
    %v1327 = vunpack.c.h.b16 %v330
    %v1328 = vunpack.c.l.b16 %v331
    %v1329 = vunpack.c.h.b16 %v331
    %v1330 = vunpack.c.l.b16 %v332
    %v1331 = vunpack.c.h.b16 %v332
    %v1332 = vunpack.c.l.b16 %v333
    %v1333 = vunpack.c.h.b16 %v333
    %v1334 = vunpack.c.l.b16 %v334
    %v1335 = vunpack.c.h.b16 %v334
    %v1336 = vunpack.c.l.b16 %v335
    %v1337 = vunpack.c.h.b16 %v335
    %v1338 = vunpack.c.l.b16 %v336
    %v1339 = vunpack.c.h.b16 %v336
    %v1340 = vunpack.c.l.b16 %v337
    %v1341 = vunpack.c.h.b16 %v337
    %v1342 = vunpack.c.l.b16 %v338
    %v1343 = vunpack.c.h.b16 %v338
    %v1344 = vunpack.c.l.b16 %v339
    %v1345 = vunpack.c.h.b16 %v339
    %v1346 = vunpack.c.l.b16 %v340
    %v1347 = vunpack.c.h.b16 %v340
    %v1348 = vunpack.c.l.b16 %v341
    %v1349 = vunpack.c.h.b16 %v341
    %v1350 = vunpack.c.l.b16 %v342
    %v1351 = vunpack.c.h.b16 %v342
    %v1352 = vunpack.c.l.b16 %v343
    %v1353 = vunpack.c.h.b16 %v343
    %v1354 = vunpack.c.l.b16 %v344
    %v1355 = vunpack.c.h.b16 %v344
    %v1356 = vunpack.c.l.b16 %v345
    %v1357 = vunpack.c.h.b16 %v345
    %v1358 = vunpack.c.l.b16 %v346
    %v1359 = vunpack.c.h.b16 %v346
    %v1360 = vunpack.c.l.b16 %v347
    %v1361 = vunpack.c.h.b16 %v347
    %v1362 = vunpack.c.l.b16 %v348
    %v1363 = vunpack.c.h.b16 %v348
    %v1364 = vunpack.c.l.b16 %v349
    %v1365 = vunpack.c.h.b16 %v349
    %v1366 = vunpack.c.l.b16 %v350
    %v1367 = vunpack.c.h.b16 %v350
    %v1368 = vunpack.c.l.b16 %v351
    %v1369 = vunpack.c.h.b16 %v351
    %v1370 = vunpack.c.l.b16 %v352
    %v1371 = vunpack.c.h.b16 %v352
    %v1372 = vunpack.c.l.b16 %v353
    %v1373 = vunpack.c.h.b16 %v353
    %v1374 = vunpack.c.l.b16 %v354
    %v1375 = vunpack.c.h.b16 %v354
    %v1376 = vunpack.c.l.b16 %v355
    %v1377 = vunpack.c.h.b16 %v355
    %v1378 = vunpack.c.l.b16 %v356
    %v1379 = vunpack.c.h.b16 %v356
    %v1380 = vunpack.c.l.b16 %v357
    %v1381 = vunpack.c.h.b16 %v357
    %v1382 = vunpack.c.l.b16 %v358
    %v1383 = vunpack.c.h.b16 %v358
    %v1384 = vunpack.c.l.b16 %v359
    %v1385 = vunpack.c.h.b16 %v359
    %v1386 = vunpack.c.l.b16 %v360
    %v1387 = vunpack.c.h.b16 %v360
    %v1388 = vunpack.c.l.b16 %v361
    %v1389 = vunpack.c.h.b16 %v361
    %v1390 = vunpack.c.l.b16 %v362
    %v1391 = vunpack.c.h.b16 %v362
    %v1392 = vunpack.c.l.b16 %v363
    %v1393 = vunpack.c.h.b16 %v363
    %v1394 = vunpack.c.l.b16 %v364
    %v1395 = vunpack.c.h.b16 %v364
    %v1396 = vunpack.c.l.b16 %v365
    %v1397 = vunpack.c.h.b16 %v365
    %v1398 = vunpack.c.l.b16 %v366
    %v1399 = vunpack.c.h.b16 %v366
    %v1400 = vunpack.c.l.b16 %v367
    %v1401 = vunpack.c.h.b16 %v367
    %v1402 = vunpack.c.l.b16 %v368
    %v1403 = vunpack.c.h.b16 %v368
    %v1404 = vunpack.c.l.b16 %v369
    %v1405 = vunpack.c.h.b16 %v369
    %v1406 = vunpack.c.l.b16 %v370
    %v1407 = vunpack.c.h.b16 %v370
    %v1408 = vunpack.c.l.b16 %v371
    %v1409 = vunpack.c.h.b16 %v371
    %v1410 = vunpack.c.l.b16 %v372
    %v1411 = vunpack.c.h.b16 %v372
    %v1412 = vunpack.c.l.b16 %v373
    %v1413 = vunpack.c.h.b16 %v373
    %v1414 = vunpack.c.l.b16 %v374
    %v1415 = vunpack.c.h.b16 %v374
    %v1416 = vunpack.c.l.b16 %v375
    %v1417 = vunpack.c.h.b16 %v375
    %v1418 = vunpack.c.l.b16 %v376
    %v1419 = vunpack.c.h.b16 %v376
    %v1420 = vunpack.c.l.b16 %v377
    %v1421 = vunpack.c.h.b16 %v377
    %v1422 = vunpack.c.l.b16 %v378
    %v1423 = vunpack.c.h.b16 %v378
    %v1424 = vunpack.c.l.b16 %v379
    %v1425 = vunpack.c.h.b16 %v379
    %v1426 = vunpack.c.l.b16 %v380
    %v1427 = vunpack.c.h.b16 %v380
    %v1428 = vunpack.c.l.b16 %v381
    %v1429 = vunpack.c.h.b16 %v381
    %v1430 = vunpack.c.l.b16 %v382
    %v1431 = vunpack.c.h.b16 %v382
    %v1432 = vunpack.c.l.b16 %v383
    %v1433 = vunpack.c.h.b16 %v383
    %v1434 = vunpack.c.l.b16 %v384
    %v1435 = vunpack.c.h.b16 %v384
    %v1436 = vunpack.c.l.b16 %v385
    %v1437 = vunpack.c.h.b16 %v385
    %v1438 = vunpack.c.l.b16 %v386
    %v1439 = vunpack.c.h.b16 %v386
    %v1440 = vunpack.c.l.b16 %v387
    %v1441 = vunpack.c.h.b16 %v387
    %v1442 = vunpack.c.l.b16 %v388
    %v1443 = vunpack.c.h.b16 %v388
    %v1444 = vunpack.c.l.b16 %v389
    %v1445 = vunpack.c.h.b16 %v389
    %v1446 = vunpack.c.l.b16 %v390
    %v1447 = vunpack.c.h.b16 %v390
    %v1448 = vunpack.c.l.b16 %v391
    %v1449 = vunpack.c.h.b16 %v391
    %v1450 = vunpack.c.l.b16 %v392
    %v1451 = vunpack.c.h.b16 %v392
    %v1452 = vunpack.c.l.b16 %v393
    %v1453 = vunpack.c.h.b16 %v393
    %v1454 = vunpack.c.l.b16 %v394
    %v1455 = vunpack.c.h.b16 %v394
    %v1456 = vunpack.c.l.b16 %v395
    %v1457 = vunpack.c.h.b16 %v395
    %v1458 = vunpack.c.l.b16 %v396
    %v1459 = vunpack.c.h.b16 %v396
    %v1460 = vunpack.c.l.b16 %v397
    %v1461 = vunpack.c.h.b16 %v397
    %v1462 = vunpack.c.l.b16 %v398
    %v1463 = vunpack.c.h.b16 %v398
    %v1464 = vunpack.c.l.b16 %v399
    %v1465 = vunpack.c.h.b16 %v399
    %v1466 = vunpack.c.l.b16 %v400
    %v1467 = vunpack.c.h.b16 %v400
    %v1468 = vunpack.c.l.b16 %v401
    %v1469 = vunpack.c.h.b16 %v401
    %v1470 = vunpack.c.l.b16 %v402
    %v1471 = vunpack.c.h.b16 %v402
    %v1472 = vunpack.c.l.b16 %v403
    %v1473 = vunpack.c.h.b16 %v403
    %v1474 = vunpack.c.l.b16 %v404
    %v1475 = vunpack.c.h.b16 %v404
    %v1476 = vunpack.c.l.b16 %v405
    %v1477 = vunpack.c.h.b16 %v405
    %v1478 = vunpack.c.l.b16 %v406
    %v1479 = vunpack.c.h.b16 %v406
    %v1480 = vunpack.c.l.b16 %v407
    %v1481 = vunpack.c.h.b16 %v407
    %v1482 = vunpack.c.l.b16 %v408
    %v1483 = vunpack.c.h.b16 %v408
    %v1484 = vunpack.c.l.b16 %v409
    %v1485 = vunpack.c.h.b16 %v409
    %v1486 = vunpack.c.l.b16 %v410
    %v1487 = vunpack.c.h.b16 %v410
    %v1488 = vunpack.c.l.b16 %v411
    %v1489 = vunpack.c.h.b16 %v411
    %v1490 = vunpack.c.l.b16 %v412
    %v1491 = vunpack.c.h.b16 %v412
    %v1492 = vunpack.c.l.b16 %v413
    %v1493 = vunpack.c.h.b16 %v413
    %v1494 = vunpack.c.l.b16 %v414
    %v1495 = vunpack.c.h.b16 %v414
    %v1496 = vunpack.c.l.b16 %v415
    %v1497 = vunpack.c.h.b16 %v415
    %v1498 = vunpack.c.l.b16 %v416
    %v1499 = vunpack.c.h.b16 %v416
    %v1500 = vunpack.c.l.b16 %v417
    %v1501 = vunpack.c.h.b16 %v417
    %v1502 = vunpack.c.l.b16 %v418
    %v1503 = vunpack.c.h.b16 %v418
    %v1504 = vunpack.c.l.b16 %v419
    %v1505 = vunpack.c.h.b16 %v419
    %v1506 = vunpack.c.l.b16 %v420
    %v1507 = vunpack.c.h.b16 %v420
    %v1508 = vunpack.c.l.b16 %v421
    %v1509 = vunpack.c.h.b16 %v421
    %v1510 = vunpack.c.l.b16 %v422
    %v1511 = vunpack.c.h.b16 %v422
    %v1512 = vunpack.c.l.b16 %v423
    %v1513 = vunpack.c.h.b16 %v423
    %v1514 = vunpack.c.l.b16 %v424
    %v1515 = vunpack.c.h.b16 %v424
    %v1516 = vunpack.c.l.b16 %v425
    %v1517 = vunpack.c.h.b16 %v425
    %v1518 = vunpack.c.l.b16 %v426
    %v1519 = vunpack.c.h.b16 %v426
    %v1520 = vunpack.c.l.b16 %v427
    %v1521 = vunpack.c.h.b16 %v427
    %v1522 = vunpack.c.l.b16 %v428
    %v1523 = vunpack.c.h.b16 %v428
    %v1524 = vunpack.c.l.b16 %v429
    %v1525 = vunpack.c.h.b16 %v429
    %v1526 = vunpack.c.l.b16 %v430
    %v1527 = vunpack.c.h.b16 %v430
    %v1528 = vunpack.c.l.b16 %v431
    %v1529 = vunpack.c.h.b16 %v431
    %v1530 = vunpack.c.l.b16 %v432
    %v1531 = vunpack.c.h.b16 %v432
    %v1532 = vunpack.c.l.b16 %v433
    %v1533 = vunpack.c.h.b16 %v433
    %v1534 = vunpack.c.l.b16 %v434
    %v1535 = vunpack.c.h.b16 %v434
    %v1536 = vunpack.c.l.b16 %v435
    %v1537 = vunpack.c.h.b16 %v435
    %v1538 = vunpack.c.l.b16 %v436
    %v1539 = vunpack.c.h.b16 %v436
    %v1540 = vunpack.c.l.b16 %v437
    %v1541 = vunpack.c.h.b16 %v437
    %v1542 = vunpack.c.l.b16 %v438
    %v1543 = vunpack.c.h.b16 %v438
    %v1544 = vunpack.c.l.b16 %v439
    %v1545 = vunpack.c.h.b16 %v439
    %v1546 = vunpack.c.l.b16 %v440
    %v1547 = vunpack.c.h.b16 %v440
    %v1548 = vunpack.c.l.b16 %v441
    %v1549 = vunpack.c.h.b16 %v441
    %v1550 = vunpack.c.l.b16 %v442
    %v1551 = vunpack.c.h.b16 %v442
    %v1552 = vunpack.c.l.b16 %v443
    %v1553 = vunpack.c.h.b16 %v443
    %v1554 = vunpack.c.l.b16 %v444
    %v1555 = vunpack.c.h.b16 %v444
    %v1556 = vunpack.c.l.b16 %v445
    %v1557 = vunpack.c.h.b16 %v445
    %v1558 = vunpack.c.l.b16 %v446
    %v1559 = vunpack.c.h.b16 %v446
    %v1560 = vunpack.c.l.b16 %v447
    %v1561 = vunpack.c.h.b16 %v447
    %v1562 = vunpack.c.l.b16 %v448
    %v1563 = vunpack.c.h.b16 %v448
    %v1564 = vunpack.c.l.b16 %v449
    %v1565 = vunpack.c.h.b16 %v449
    %v1566 = vunpack.c.l.b16 %v450
    %v1567 = vunpack.c.h.b16 %v450
    %v1568 = vunpack.c.l.b16 %v451
    %v1569 = vunpack.c.h.b16 %v451
    %v1570 = vunpack.c.l.b16 %v452
    %v1571 = vunpack.c.h.b16 %v452
    %v1572 = vunpack.c.l.b16 %v453
    %v1573 = vunpack.c.h.b16 %v453
    %v1574 = vunpack.c.l.b16 %v454
    %v1575 = vunpack.c.h.b16 %v454
    %v1576 = vunpack.c.l.b16 %v455
    %v1577 = vunpack.c.h.b16 %v455
    %v1578 = vunpack.c.l.b16 %v456
    %v1579 = vunpack.c.h.b16 %v456
    %v1580 = vunpack.c.l.b16 %v457
    %v1581 = vunpack.c.h.b16 %v457
    %v1582 = vunpack.c.l.b16 %v458
    %v1583 = vunpack.c.h.b16 %v458
    %v1584 = vunpack.c.l.b16 %v459
    %v1585 = vunpack.c.h.b16 %v459
    %v1586 = vunpack.c.l.b16 %v460
    %v1587 = vunpack.c.h.b16 %v460
    %v1588 = vunpack.c.l.b16 %v461
    %v1589 = vunpack.c.h.b16 %v461
    %v1590 = vunpack.c.l.b16 %v462
    %v1591 = vunpack.c.h.b16 %v462
    %v1592 = vunpack.c.l.b16 %v463
    %v1593 = vunpack.c.h.b16 %v463
    %v1594 = vunpack.c.l.b16 %v464
    %v1595 = vunpack.c.h.b16 %v464
    %v1596 = vunpack.c.l.b16 %v465
    %v1597 = vunpack.c.h.b16 %v465
    %v1598 = vunpack.c.l.b16 %v466
    %v1599 = vunpack.c.h.b16 %v466
    %v1600 = vunpack.c.l.b16 %v467
    %v1601 = vunpack.c.h.b16 %v467
    %v1602 = vunpack.c.l.b16 %v468
    %v1603 = vunpack.c.h.b16 %v468
    %v1604 = vunpack.c.l.b16 %v469
    %v1605 = vunpack.c.h.b16 %v469
    %v1606 = vunpack.c.l.b16 %v470
    %v1607 = vunpack.c.h.b16 %v470
    %v1608 = vunpack.c.l.b16 %v471
    %v1609 = vunpack.c.h.b16 %v471
    %v1610 = vunpack.c.l.b16 %v472
    %v1611 = vunpack.c.h.b16 %v472
    %v1612 = vunpack.c.l.b16 %v473
    %v1613 = vunpack.c.h.b16 %v473
    %v1614 = vunpack.c.l.b16 %v474
    %v1615 = vunpack.c.h.b16 %v474
    %v1616 = vunpack.c.l.b16 %v475
    %v1617 = vunpack.c.h.b16 %v475
    %v1618 = vunpack.c.l.b16 %v476
    %v1619 = vunpack.c.h.b16 %v476
    %v1620 = vunpack.c.l.b16 %v477
    %v1621 = vunpack.c.h.b16 %v477
    %v1622 = vunpack.c.l.b16 %v478
    %v1623 = vunpack.c.h.b16 %v478
    %v1624 = vunpack.c.l.b16 %v479
    %v1625 = vunpack.c.h.b16 %v479
    %v1626 = vunpack.c.l.b16 %v480
    %v1627 = vunpack.c.h.b16 %v480
    %v1628 = vunpack.c.l.b16 %v481
    %v1629 = vunpack.c.h.b16 %v481
    %v1630 = vunpack.c.l.b16 %v482
    %v1631 = vunpack.c.h.b16 %v482
    %v1632 = vunpack.c.l.b16 %v483
    %v1633 = vunpack.c.h.b16 %v483
    %v1634 = vunpack.c.l.b16 %v484
    %v1635 = vunpack.c.h.b16 %v484
    %v1636 = vunpack.c.l.b16 %v485
    %v1637 = vunpack.c.h.b16 %v485
    %v1638 = vunpack.c.l.b16 %v486
    %v1639 = vunpack.c.h.b16 %v486
    %v1640 = vunpack.c.l.b16 %v487
    %v1641 = vunpack.c.h.b16 %v487
    %v1642 = vunpack.c.l.b16 %v488
    %v1643 = vunpack.c.h.b16 %v488
    %v1644 = vunpack.c.l.b16 %v489
    %v1645 = vunpack.c.h.b16 %v489
    %v1646 = vunpack.c.l.b16 %v490
    %v1647 = vunpack.c.h.b16 %v490
    %v1648 = vunpack.c.l.b16 %v491
    %v1649 = vunpack.c.h.b16 %v491
    %v1650 = vunpack.c.l.b16 %v492
    %v1651 = vunpack.c.h.b16 %v492
    %v1652 = vunpack.c.l.b16 %v493
    %v1653 = vunpack.c.h.b16 %v493
    %v1654 = vunpack.c.l.b16 %v494
    %v1655 = vunpack.c.h.b16 %v494
    %v1656 = vunpack.c.l.b16 %v495
    %v1657 = vunpack.c.h.b16 %v495
    %v1658 = vunpack.c.l.b16 %v496
    %v1659 = vunpack.c.h.b16 %v496
    %v1660 = vunpack.c.l.b16 %v497
    %v1661 = vunpack.c.h.b16 %v497
    %v1662 = vunpack.c.l.b16 %v498
    %v1663 = vunpack.c.h.b16 %v498
    %v1664 = vunpack.c.l.b16 %v499
    %v1665 = vunpack.c.h.b16 %v499
    %v1666 = vunpack.c.l.b16 %v500
    %v1667 = vunpack.c.h.b16 %v500
    %v1668 = vunpack.c.l.b16 %v501
    %v1669 = vunpack.c.h.b16 %v501
    %v1670 = vunpack.c.l.b16 %v502
    %v1671 = vunpack.c.h.b16 %v502
    %v1672 = vunpack.c.l.b16 %v503
    %v1673 = vunpack.c.h.b16 %v503
    %v1674 = vunpack.c.l.b16 %v504
    %v1675 = vunpack.c.h.b16 %v504
    %v1676 = vunpack.c.l.b16 %v505
    %v1677 = vunpack.c.h.b16 %v505
    %v1678 = vunpack.c.l.b16 %v506
    %v1679 = vunpack.c.h.b16 %v506
    %v1680 = vunpack.c.l.b16 %v507
    %v1681 = vunpack.c.h.b16 %v507
    %v1682 = vunpack.c.l.b16 %v508
    %v1683 = vunpack.c.h.b16 %v508
    %v1684 = vunpack.c.l.b16 %v509
    %v1685 = vunpack.c.h.b16 %v509
    %v1686 = vunpack.c.l.b16 %v510
    %v1687 = vunpack.c.h.b16 %v510
    %v1688 = vunpack.c.l.b16 %v511
    %v1689 = vunpack.c.h.b16 %v511
    %v1690 = vunpack.c.l.b16 %v512
    %v1691 = vunpack.c.h.b16 %v512
    %v1692 = vunpack.c.l.b16 %v513
    %v1693 = vunpack.c.h.b16 %v513
    %v1694 = vunpack.c.l.b16 %v514
    %v1695 = vunpack.c.h.b16 %v514
    %v1696 = vunpack.c.l.b16 %v515
    %v1697 = vunpack.c.h.b16 %v515
    %v1698 = vunpack.c.l.b16 %v516
    %v1699 = vunpack.c.h.b16 %v516
    %v1700 = vunpack.c.l.b16 %v517
    %v1701 = vunpack.c.h.b16 %v517
    %v1702 = vunpack.c.l.b16 %v518
    %v1703 = vunpack.c.h.b16 %v518
    %v1704 = vunpack.c.l.b16 %v519
    %v1705 = vunpack.c.h.b16 %v519
    %v1706 = vunpack.c.l.b16 %v520
    %v1707 = vunpack.c.h.b16 %v520
    %v1708 = vunpack.c.l.b16 %v521
    %v1709 = vunpack.c.h.b16 %v521
    %v1710 = vunpack.c.l.b16 %v522
    %v1711 = vunpack.c.h.b16 %v522
    %v1712 = vunpack.c.l.b16 %v523
    %v1713 = vunpack.c.h.b16 %v523
    %v1714 = vunpack.c.l.b16 %v524
    %v1715 = vunpack.c.h.b16 %v524
    %v1716 = vunpack.c.l.b16 %v525
    %v1717 = vunpack.c.h.b16 %v525
    %v1718 = vunpack.c.l.b16 %v526
    %v1719 = vunpack.c.h.b16 %v526
    %v1720 = vunpack.c.l.b16 %v527
    %v1721 = vunpack.c.h.b16 %v527
    %v1722 = vunpack.c.l.b16 %v528
    %v1723 = vunpack.c.h.b16 %v528
    %v1724 = vunpack.c.l.b16 %v529
    %v1725 = vunpack.c.h.b16 %v529
    %v1726 = vunpack.c.l.b16 %v530
    %v1727 = vunpack.c.h.b16 %v530
    %v1728 = vunpack.c.l.b16 %v531
    %v1729 = vunpack.c.h.b16 %v531
    %v1730 = vunpack.c.l.b16 %v532
    %v1731 = vunpack.c.h.b16 %v532
    %v1732 = vunpack.c.l.b16 %v533
    %v1733 = vunpack.c.h.b16 %v533
    %v1734 = vunpack.c.l.b16 %v534
    %v1735 = vunpack.c.h.b16 %v534
    %v1736 = vunpack.c.l.b16 %v535
    %v1737 = vunpack.c.h.b16 %v535
    %v1738 = vunpack.c.l.b16 %v536
    %v1739 = vunpack.c.h.b16 %v536
    %v1740 = vunpack.c.l.b16 %v537
    %v1741 = vunpack.c.h.b16 %v537
    %v1742 = vunpack.c.l.b16 %v538
    %v1743 = vunpack.c.h.b16 %v538
    %v1744 = vunpack.c.l.b16 %v539
    %v1745 = vunpack.c.h.b16 %v539
    %v1746 = vunpack.c.l.b16 %v540
    %v1747 = vunpack.c.h.b16 %v540
    %v1748 = vunpack.c.l.b16 %v541
    %v1749 = vunpack.c.h.b16 %v541
    %v1750 = vunpack.c.l.b16 %v542
    %v1751 = vunpack.c.h.b16 %v542
    %v1752 = vunpack.c.l.b16 %v543
    %v1753 = vunpack.c.h.b16 %v543
    %v1754 = vunpack.c.l.b16 %v544
    %v1755 = vunpack.c.h.b16 %v544
    %v1756 = vunpack.c.l.b16 %v545
    %v1757 = vunpack.c.h.b16 %v545
    %v1758 = vunpack.c.l.b16 %v546
    %v1759 = vunpack.c.h.b16 %v546
    %v1760 = vunpack.c.l.b16 %v547
    %v1761 = vunpack.c.h.b16 %v547
    %v1762 = vunpack.c.l.b16 %v548
    %v1763 = vunpack.c.h.b16 %v548
    %v1764 = vunpack.c.l.b16 %v549
    %v1765 = vunpack.c.h.b16 %v549
    %v1766 = vunpack.c.l.b16 %v550
    %v1767 = vunpack.c.h.b16 %v550
    %v1768 = vunpack.c.l.b16 %v551
    %v1769 = vunpack.c.h.b16 %v551
    %v1770 = vpack.c.b16 %v994, %v986
    %v1771 = vpack.c.b16 %v995, %v987
    %v1772 = vpack.c.b16 %v996, %v988
    %v1773 = vpack.c.b16 %v997, %v989
    %v1774 = vpack.c.b16 %v998, %v990
    %v1775 = vpack.c.b16 %v999, %v991
    %v1776 = vpack.c.b16 %v1000, %v992
    %v1777 = vpack.c.b16 %v1001, %v993
    %v1778 = vpack.c.b16 %v1010, %v1002
    %v1779 = vpack.c.b16 %v1011, %v1003
    %v1780 = vpack.c.b16 %v1012, %v1004
    %v1781 = vpack.c.b16 %v1013, %v1005
    %v1782 = vpack.c.b16 %v1014, %v1006
    %v1783 = vpack.c.b16 %v1015, %v1007
    %v1784 = vpack.c.b16 %v1016, %v1008
    %v1785 = vpack.c.b16 %v1017, %v1009
    %v1786 = vpack.c.b16 %v1026, %v1018
    %v1787 = vpack.c.b16 %v1027, %v1019
    %v1788 = vpack.c.b16 %v1028, %v1020
    %v1789 = vpack.c.b16 %v1029, %v1021
    %v1790 = vpack.c.b16 %v1030, %v1022
    %v1791 = vpack.c.b16 %v1031, %v1023
    %v1792 = vpack.c.b16 %v1032, %v1024
    %v1793 = vpack.c.b16 %v1033, %v1025
    %v1794 = vpack.c.b16 %v1042, %v1034
    %v1795 = vpack.c.b16 %v1043, %v1035
    %v1796 = vpack.c.b16 %v1044, %v1036
    %v1797 = vpack.c.b16 %v1045, %v1037
    %v1798 = vpack.c.b16 %v1046, %v1038
    %v1799 = vpack.c.b16 %v1047, %v1039
    %v1800 = vpack.c.b16 %v1048, %v1040
    %v1801 = vpack.c.b16 %v1049, %v1041
    %v1802 = vpack.c.b16 %v1058, %v1050
    %v1803 = vpack.c.b16 %v1059, %v1051
    %v1804 = vpack.c.b16 %v1060, %v1052
    %v1805 = vpack.c.b16 %v1061, %v1053
    %v1806 = vpack.c.b16 %v1062, %v1054
    %v1807 = vpack.c.b16 %v1063, %v1055
    %v1808 = vpack.c.b16 %v1064, %v1056
    %v1809 = vpack.c.b16 %v1065, %v1057
    %v1810 = vpack.c.b16 %v1074, %v1066
    %v1811 = vpack.c.b16 %v1075, %v1067
    %v1812 = vpack.c.b16 %v1076, %v1068
    %v1813 = vpack.c.b16 %v1077, %v1069
    %v1814 = vpack.c.b16 %v1078, %v1070
    %v1815 = vpack.c.b16 %v1079, %v1071
    %v1816 = vpack.c.b16 %v1080, %v1072
    %v1817 = vpack.c.b16 %v1081, %v1073
    %v1818 = vpack.c.b16 %v1090, %v1082
    %v1819 = vpack.c.b16 %v1091, %v1083
    %v1820 = vpack.c.b16 %v1092, %v1084
    %v1821 = vpack.c.b16 %v1093, %v1085
    %v1822 = vpack.c.b16 %v1094, %v1086
    %v1823 = vpack.c.b16 %v1095, %v1087
    %v1824 = vpack.c.b16 %v1096, %v1088
    %v1825 = vpack.c.b16 %v1097, %v1089
    %v1826 = vpack.c.b16 %v1106, %v1098
    %v1827 = vpack.c.b16 %v1107, %v1099
    %v1828 = vpack.c.b16 %v1108, %v1100
    %v1829 = vpack.c.b16 %v1109, %v1101
    %v1830 = vpack.c.b16 %v1110, %v1102
    %v1831 = vpack.c.b16 %v1111, %v1103
    %v1832 = vpack.c.b16 %v1112, %v1104
    %v1833 = vpack.c.b16 %v1113, %v1105
    %v1834 = vpack.c.b16 %v1122, %v1114
    %v1835 = vpack.c.b16 %v1123, %v1115
    %v1836 = vpack.c.b16 %v1124, %v1116
    %v1837 = vpack.c.b16 %v1125, %v1117
    %v1838 = vpack.c.b16 %v1126, %v1118
    %v1839 = vpack.c.b16 %v1127, %v1119
    %v1840 = vpack.c.b16 %v1128, %v1120
    %v1841 = vpack.c.b16 %v1129, %v1121
    %v1842 = vpack.c.b16 %v1138, %v1130
    %v1843 = vpack.c.b16 %v1139, %v1131
    %v1844 = vpack.c.b16 %v1140, %v1132
    %v1845 = vpack.c.b16 %v1141, %v1133
    %v1846 = vpack.c.b16 %v1142, %v1134
    %v1847 = vpack.c.b16 %v1143, %v1135
    %v1848 = vpack.c.b16 %v1144, %v1136
    %v1849 = vpack.c.b16 %v1145, %v1137
    %v1850 = vpack.c.b16 %v1154, %v1146
    %v1851 = vpack.c.b16 %v1155, %v1147
    %v1852 = vpack.c.b16 %v1156, %v1148
    %v1853 = vpack.c.b16 %v1157, %v1149
    %v1854 = vpack.c.b16 %v1158, %v1150
    %v1855 = vpack.c.b16 %v1159, %v1151
    %v1856 = vpack.c.b16 %v1160, %v1152
    %v1857 = vpack.c.b16 %v1161, %v1153
    %v1858 = vpack.c.b16 %v1170, %v1162
    %v1859 = vpack.c.b16 %v1171, %v1163
    %v1860 = vpack.c.b16 %v1172, %v1164
    %v1861 = vpack.c.b16 %v1173, %v1165
    %v1862 = vpack.c.b16 %v1174, %v1166
    %v1863 = vpack.c.b16 %v1175, %v1167
    %v1864 = vpack.c.b16 %v1176, %v1168
    %v1865 = vpack.c.b16 %v1177, %v1169
    %v1866 = vpack.c.b16 %v1186, %v1178
    %v1867 = vpack.c.b16 %v1187, %v1179
    %v1868 = vpack.c.b16 %v1188, %v1180
    %v1869 = vpack.c.b16 %v1189, %v1181
    %v1870 = vpack.c.b16 %v1190, %v1182
    %v1871 = vpack.c.b16 %v1191, %v1183
    %v1872 = vpack.c.b16 %v1192, %v1184
    %v1873 = vpack.c.b16 %v1193, %v1185
    %v1874 = vpack.c.b16 %v1202, %v1194
    %v1875 = vpack.c.b16 %v1203, %v1195
    %v1876 = vpack.c.b16 %v1204, %v1196
    %v1877 = vpack.c.b16 %v1205, %v1197
    %v1878 = vpack.c.b16 %v1206, %v1198
    %v1879 = vpack.c.b16 %v1207, %v1199
    %v1880 = vpack.c.b16 %v1208, %v1200
    %v1881 = vpack.c.b16 %v1209, %v1201
    %v1882 = vpack.c.b16 %v1218, %v1210
    %v1883 = vpack.c.b16 %v1219, %v1211
    %v1884 = vpack.c.b16 %v1220, %v1212
    %v1885 = vpack.c.b16 %v1221, %v1213
    %v1886 = vpack.c.b16 %v1222, %v1214
    %v1887 = vpack.c.b16 %v1223, %v1215
    %v1888 = vpack.c.b16 %v1224, %v1216
    %v1889 = vpack.c.b16 %v1225, %v1217
    %v1890 = vpack.c.b16 %v1234, %v1226
    %v1891 = vpack.c.b16 %v1235, %v1227
    %v1892 = vpack.c.b16 %v1236, %v1228
    %v1893 = vpack.c.b16 %v1237, %v1229
    %v1894 = vpack.c.b16 %v1238, %v1230
    %v1895 = vpack.c.b16 %v1239, %v1231
    %v1896 = vpack.c.b16 %v1240, %v1232
    %v1897 = vpack.c.b16 %v1241, %v1233
    %v1898 = vpack.c.b16 %v1250, %v1242
    %v1899 = vpack.c.b16 %v1251, %v1243
    %v1900 = vpack.c.b16 %v1252, %v1244
    %v1901 = vpack.c.b16 %v1253, %v1245
    %v1902 = vpack.c.b16 %v1254, %v1246
    %v1903 = vpack.c.b16 %v1255, %v1247
    %v1904 = vpack.c.b16 %v1256, %v1248
    %v1905 = vpack.c.b16 %v1257, %v1249
    %v1906 = vpack.c.b16 %v1266, %v1258
    %v1907 = vpack.c.b16 %v1267, %v1259
    %v1908 = vpack.c.b16 %v1268, %v1260
    %v1909 = vpack.c.b16 %v1269, %v1261
    %v1910 = vpack.c.b16 %v1270, %v1262
    %v1911 = vpack.c.b16 %v1271, %v1263
    %v1912 = vpack.c.b16 %v1272, %v1264
    %v1913 = vpack.c.b16 %v1273, %v1265
    %v1914 = vpack.c.b16 %v1282, %v1274
    %v1915 = vpack.c.b16 %v1283, %v1275
    %v1916 = vpack.c.b16 %v1284, %v1276
    %v1917 = vpack.c.b16 %v1285, %v1277
    %v1918 = vpack.c.b16 %v1286, %v1278
    %v1919 = vpack.c.b16 %v1287, %v1279
    %v1920 = vpack.c.b16 %v1288, %v1280
    %v1921 = vpack.c.b16 %v1289, %v1281
    %v1922 = vpack.c.b16 %v1298, %v1290
    %v1923 = vpack.c.b16 %v1299, %v1291
    %v1924 = vpack.c.b16 %v1300, %v1292
    %v1925 = vpack.c.b16 %v1301, %v1293
    %v1926 = vpack.c.b16 %v1302, %v1294
    %v1927 = vpack.c.b16 %v1303, %v1295
    %v1928 = vpack.c.b16 %v1304, %v1296
    %v1929 = vpack.c.b16 %v1305, %v1297
    %v1930 = vpack.c.b16 %v1314, %v1306
    %v1931 = vpack.c.b16 %v1315, %v1307
    %v1932 = vpack.c.b16 %v1316, %v1308
    %v1933 = vpack.c.b16 %v1317, %v1309
    %v1934 = vpack.c.b16 %v1318, %v1310
    %v1935 = vpack.c.b16 %v1319, %v1311
    %v1936 = vpack.c.b16 %v1320, %v1312
    %v1937 = vpack.c.b16 %v1321, %v1313
    %v1938 = vpack.c.b16 %v1330, %v1322
    %v1939 = vpack.c.b16 %v1331, %v1323
    %v1940 = vpack.c.b16 %v1332, %v1324
    %v1941 = vpack.c.b16 %v1333, %v1325
    %v1942 = vpack.c.b16 %v1334, %v1326
    %v1943 = vpack.c.b16 %v1335, %v1327
    %v1944 = vpack.c.b16 %v1336, %v1328
    %v1945 = vpack.c.b16 %v1337, %v1329
    %v1946 = vpack.c.b16 %v1346, %v1338
    %v1947 = vpack.c.b16 %v1347, %v1339
    %v1948 = vpack.c.b16 %v1348, %v1340
    %v1949 = vpack.c.b16 %v1349, %v1341
    %v1950 = vpack.c.b16 %v1350, %v1342
    %v1951 = vpack.c.b16 %v1351, %v1343
    %v1952 = vpack.c.b16 %v1352, %v1344
    %v1953 = vpack.c.b16 %v1353, %v1345
    %v1954 = vpack.c.b16 %v1362, %v1354
    %v1955 = vpack.c.b16 %v1363, %v1355
    %v1956 = vpack.c.b16 %v1364, %v1356
    %v1957 = vpack.c.b16 %v1365, %v1357
    %v1958 = vpack.c.b16 %v1366, %v1358
    %v1959 = vpack.c.b16 %v1367, %v1359
    %v1960 = vpack.c.b16 %v1368, %v1360
    %v1961 = vpack.c.b16 %v1369, %v1361
    %v1962 = vpack.c.b16 %v1378, %v1370
    %v1963 = vpack.c.b16 %v1379, %v1371
    %v1964 = vpack.c.b16 %v1380, %v1372
    %v1965 = vpack.c.b16 %v1381, %v1373
    %v1966 = vpack.c.b16 %v1382, %v1374
    %v1967 = vpack.c.b16 %v1383, %v1375
    %v1968 = vpack.c.b16 %v1384, %v1376
    %v1969 = vpack.c.b16 %v1385, %v1377
    %v1970 = vpack.c.b16 %v1394, %v1386
    %v1971 = vpack.c.b16 %v1395, %v1387
    %v1972 = vpack.c.b16 %v1396, %v1388
    %v1973 = vpack.c.b16 %v1397, %v1389
    %v1974 = vpack.c.b16 %v1398, %v1390
    %v1975 = vpack.c.b16 %v1399, %v1391
    %v1976 = vpack.c.b16 %v1400, %v1392
    %v1977 = vpack.c.b16 %v1401, %v1393
    %v1978 = vpack.c.b16 %v1410, %v1402
    %v1979 = vpack.c.b16 %v1411, %v1403
    %v1980 = vpack.c.b16 %v1412, %v1404
    %v1981 = vpack.c.b16 %v1413, %v1405
    %v1982 = vpack.c.b16 %v1414, %v1406
    %v1983 = vpack.c.b16 %v1415, %v1407
    %v1984 = vpack.c.b16 %v1416, %v1408
    %v1985 = vpack.c.b16 %v1417, %v1409
    %v1986 = vpack.c.b16 %v1426, %v1418
    %v1987 = vpack.c.b16 %v1427, %v1419
    %v1988 = vpack.c.b16 %v1428, %v1420
    %v1989 = vpack.c.b16 %v1429, %v1421
    %v1990 = vpack.c.b16 %v1430, %v1422
    %v1991 = vpack.c.b16 %v1431, %v1423
    %v1992 = vpack.c.b16 %v1432, %v1424
    %v1993 = vpack.c.b16 %v1433, %v1425
    %v1994 = vpack.c.b16 %v1442, %v1434
    %v1995 = vpack.c.b16 %v1443, %v1435
    %v1996 = vpack.c.b16 %v1444, %v1436
    %v1997 = vpack.c.b16 %v1445, %v1437
    %v1998 = vpack.c.b16 %v1446, %v1438
    %v1999 = vpack.c.b16 %v1447, %v1439
    %v2000 = vpack.c.b16 %v1448, %v1440
    %v2001 = vpack.c.b16 %v1449, %v1441
    %v2002 = vpack.c.b16 %v1458, %v1450
    %v2003 = vpack.c.b16 %v1459, %v1451
    %v2004 = vpack.c.b16 %v1460, %v1452
    %v2005 = vpack.c.b16 %v1461, %v1453
    %v2006 = vpack.c.b16 %v1462, %v1454
    %v2007 = vpack.c.b16 %v1463, %v1455
    %v2008 = vpack.c.b16 %v1464, %v1456
    %v2009 = vpack.c.b16 %v1465, %v1457
    %v2010 = vpack.c.b16 %v1474, %v1466
    %v2011 = vpack.c.b16 %v1475, %v1467
    %v2012 = vpack.c.b16 %v1476, %v1468
    %v2013 = vpack.c.b16 %v1477, %v1469
    %v2014 = vpack.c.b16 %v1478, %v1470
    %v2015 = vpack.c.b16 %v1479, %v1471
    %v2016 = vpack.c.b16 %v1480, %v1472
    %v2017 = vpack.c.b16 %v1481, %v1473
    %v2018 = vpack.c.b16 %v1490, %v1482
    %v2019 = vpack.c.b16 %v1491, %v1483
    %v2020 = vpack.c.b16 %v1492, %v1484
    %v2021 = vpack.c.b16 %v1493, %v1485
    %v2022 = vpack.c.b16 %v1494, %v1486
    %v2023 = vpack.c.b16 %v1495, %v1487
    %v2024 = vpack.c.b16 %v1496, %v1488
    %v2025 = vpack.c.b16 %v1497, %v1489
    %v2026 = vpack.c.b16 %v1506, %v1498
    %v2027 = vpack.c.b16 %v1507, %v1499
    %v2028 = vpack.c.b16 %v1508, %v1500
    %v2029 = vpack.c.b16 %v1509, %v1501
    %v2030 = vpack.c.b16 %v1510, %v1502
    %v2031 = vpack.c.b16 %v1511, %v1503
    %v2032 = vpack.c.b16 %v1512, %v1504
    %v2033 = vpack.c.b16 %v1513, %v1505
    %v2034 = vpack.c.b16 %v1522, %v1514
    %v2035 = vpack.c.b16 %v1523, %v1515
    %v2036 = vpack.c.b16 %v1524, %v1516
    %v2037 = vpack.c.b16 %v1525, %v1517
    %v2038 = vpack.c.b16 %v1526, %v1518
    %v2039 = vpack.c.b16 %v1527, %v1519
    %v2040 = vpack.c.b16 %v1528, %v1520
    %v2041 = vpack.c.b16 %v1529, %v1521
    %v2042 = vpack.c.b16 %v1538, %v1530
    %v2043 = vpack.c.b16 %v1539, %v1531
    %v2044 = vpack.c.b16 %v1540, %v1532
    %v2045 = vpack.c.b16 %v1541, %v1533
    %v2046 = vpack.c.b16 %v1542, %v1534
    %v2047 = vpack.c.b16 %v1543, %v1535
    %v2048 = vpack.c.b16 %v1544, %v1536
    %v2049 = vpack.c.b16 %v1545, %v1537
    %v2050 = vpack.c.b16 %v1554, %v1546
    %v2051 = vpack.c.b16 %v1555, %v1547
    %v2052 = vpack.c.b16 %v1556, %v1548
    %v2053 = vpack.c.b16 %v1557, %v1549
    %v2054 = vpack.c.b16 %v1558, %v1550
    %v2055 = vpack.c.b16 %v1559, %v1551
    %v2056 = vpack.c.b16 %v1560, %v1552
    %v2057 = vpack.c.b16 %v1561, %v1553
    %v2058 = vpack.c.b16 %v1570, %v1562
    %v2059 = vpack.c.b16 %v1571, %v1563
    %v2060 = vpack.c.b16 %v1572, %v1564
    %v2061 = vpack.c.b16 %v1573, %v1565
    %v2062 = vpack.c.b16 %v1574, %v1566
    %v2063 = vpack.c.b16 %v1575, %v1567
    %v2064 = vpack.c.b16 %v1576, %v1568
    %v2065 = vpack.c.b16 %v1577, %v1569
    %v2066 = vpack.c.b16 %v1586, %v1578
    %v2067 = vpack.c.b16 %v1587, %v1579
    %v2068 = vpack.c.b16 %v1588, %v1580
    %v2069 = vpack.c.b16 %v1589, %v1581
    %v2070 = vpack.c.b16 %v1590, %v1582
    %v2071 = vpack.c.b16 %v1591, %v1583
    %v2072 = vpack.c.b16 %v1592, %v1584
    %v2073 = vpack.c.b16 %v1593, %v1585
    %v2074 = vpack.c.b16 %v1602, %v1594
    %v2075 = vpack.c.b16 %v1603, %v1595
    %v2076 = vpack.c.b16 %v1604, %v1596
    %v2077 = vpack.c.b16 %v1605, %v1597
    %v2078 = vpack.c.b16 %v1606, %v1598
    %v2079 = vpack.c.b16 %v1607, %v1599
    %v2080 = vpack.c.b16 %v1608, %v1600
    %v2081 = vpack.c.b16 %v1609, %v1601
    %v2082 = vpack.c.b16 %v1618, %v1610
    %v2083 = vpack.c.b16 %v1619, %v1611
    %v2084 = vpack.c.b16 %v1620, %v1612
    %v2085 = vpack.c.b16 %v1621, %v1613
    %v2086 = vpack.c.b16 %v1622, %v1614
    %v2087 = vpack.c.b16 %v1623, %v1615
    %v2088 = vpack.c.b16 %v1624, %v1616
    %v2089 = vpack.c.b16 %v1625, %v1617
    %v2090 = vpack.c.b16 %v1634, %v1626
    %v2091 = vpack.c.b16 %v1635, %v1627
    %v2092 = vpack.c.b16 %v1636, %v1628
    %v2093 = vpack.c.b16 %v1637, %v1629
    %v2094 = vpack.c.b16 %v1638, %v1630
    %v2095 = vpack.c.b16 %v1639, %v1631
    %v2096 = vpack.c.b16 %v1640, %v1632
    %v2097 = vpack.c.b16 %v1641, %v1633
    %v2098 = vpack.c.b16 %v1650, %v1642
    %v2099 = vpack.c.b16 %v1651, %v1643
    %v2100 = vpack.c.b16 %v1652, %v1644
    %v2101 = vpack.c.b16 %v1653, %v1645
    %v2102 = vpack.c.b16 %v1654, %v1646
    %v2103 = vpack.c.b16 %v1655, %v1647
    %v2104 = vpack.c.b16 %v1656, %v1648
    %v2105 = vpack.c.b16 %v1657, %v1649
    %v2106 = vpack.c.b16 %v1666, %v1658
    %v2107 = vpack.c.b16 %v1667, %v1659
    %v2108 = vpack.c.b16 %v1668, %v1660
    %v2109 = vpack.c.b16 %v1669, %v1661
    %v2110 = vpack.c.b16 %v1670, %v1662
    %v2111 = vpack.c.b16 %v1671, %v1663
    %v2112 = vpack.c.b16 %v1672, %v1664
    %v2113 = vpack.c.b16 %v1673, %v1665
    %v2114 = vpack.c.b16 %v1682, %v1674
    %v2115 = vpack.c.b16 %v1683, %v1675
    %v2116 = vpack.c.b16 %v1684, %v1676
    %v2117 = vpack.c.b16 %v1685, %v1677
    %v2118 = vpack.c.b16 %v1686, %v1678
    %v2119 = vpack.c.b16 %v1687, %v1679
    %v2120 = vpack.c.b16 %v1688, %v1680
    %v2121 = vpack.c.b16 %v1689, %v1681
    %v2122 = vpack.c.b16 %v1698, %v1690
    %v2123 = vpack.c.b16 %v1699, %v1691
    %v2124 = vpack.c.b16 %v1700, %v1692
    %v2125 = vpack.c.b16 %v1701, %v1693
    %v2126 = vpack.c.b16 %v1702, %v1694
    %v2127 = vpack.c.b16 %v1703, %v1695
    %v2128 = vpack.c.b16 %v1704, %v1696
    %v2129 = vpack.c.b16 %v1705, %v1697
    %v2130 = vpack.c.b16 %v1714, %v1706
    %v2131 = vpack.c.b16 %v1715, %v1707
    %v2132 = vpack.c.b16 %v1716, %v1708
    %v2133 = vpack.c.b16 %v1717, %v1709
    %v2134 = vpack.c.b16 %v1718, %v1710
    %v2135 = vpack.c.b16 %v1719, %v1711
    %v2136 = vpack.c.b16 %v1720, %v1712
    %v2137 = vpack.c.b16 %v1721, %v1713
    %v2138 = vpack.c.b16 %v1730, %v1722
    %v2139 = vpack.c.b16 %v1731, %v1723
    %v2140 = vpack.c.b16 %v1732, %v1724
    %v2141 = vpack.c.b16 %v1733, %v1725
    %v2142 = vpack.c.b16 %v1734, %v1726
    %v2143 = vpack.c.b16 %v1735, %v1727
    %v2144 = vpack.c.b16 %v1736, %v1728
    %v2145 = vpack.c.b16 %v1737, %v1729
    %v2146 = vpack.c.b16 %v1746, %v1738
    %v2147 = vpack.c.b16 %v1747, %v1739
    %v2148 = vpack.c.b16 %v1748, %v1740
    %v2149 = vpack.c.b16 %v1749, %v1741
    %v2150 = vpack.c.b16 %v1750, %v1742
    %v2151 = vpack.c.b16 %v1751, %v1743
    %v2152 = vpack.c.b16 %v1752, %v1744
    %v2153 = vpack.c.b16 %v1753, %v1745
    %v2154 = vpack.c.b16 %v1762, %v1754
    %v2155 = vpack.c.b16 %v1763, %v1755
    %v2156 = vpack.c.b16 %v1764, %v1756
    %v2157 = vpack.c.b16 %v1765, %v1757
    %v2158 = vpack.c.b16 %v1766, %v1758
    %v2159 = vpack.c.b16 %v1767, %v1759
    %v2160 = vpack.c.b16 %v1768, %v1760
    %v2161 = vpack.c.b16 %v1769, %v1761
    %vm2554 = vcmask 130048
    %v2556 = vsel %vm2554, %v159, 0
    %2558 = vmatprep.subr.bf16.mxu0 %v1771
    %2559 = vmatpush1.bf16.msra.mxu0 %v1770
    %2560 = vmatprep.subr.bf16.mxu0 %v1779
    %2561 = vmatpush1.bf16.msra.mxu0 %v1778
    %2562 = vmatprep.subr.bf16.mxu0 %v1787
    %2563 = vmatpush1.bf16.msra.mxu0 %v1786
    %2564 = vmatprep.subr.bf16.mxu0 %v1795
    %2565 = vmatpush1.bf16.msra.mxu0 %v1794
    %2566 = vmatprep.subr.bf16.mxu0 %v1803
    %2567 = vmatpush1.bf16.msra.mxu0 %v1802
    %2568 = vmatprep.subr.bf16.mxu0 %v1811
    %2569 = vmatpush1.bf16.msra.mxu0 %v1810
    %2570 = vmatprep.subr.bf16.mxu0 %v1819
    %2571 = vmatpush1.bf16.msra.mxu0 %v1818
    %2572 = vmatprep.subr.bf16.mxu0 %v1827
    %2573 = vmatpush1.bf16.msra.mxu0 %v1826
    %2574 = vmatprep.subr.bf16.mxu0 %v1835
    %2575 = vmatpush1.bf16.msra.mxu0 %v1834
    %2576 = vmatprep.subr.bf16.mxu0 %v1843
    %2577 = vmatpush1.bf16.msra.mxu0 %v1842
    %2578 = vmatprep.subr.bf16.mxu0 %v1851
    %2579 = vmatpush1.bf16.msra.mxu0 %v1850
    %2580 = vmatprep.subr.bf16.mxu0 %v1859
    %2581 = vmatpush1.bf16.msra.mxu0 %v1858
    %2582 = vmatprep.subr.bf16.mxu0 %v1867
    %2583 = vmatpush1.bf16.msra.mxu0 %v1866
    %2584 = vmatprep.subr.bf16.mxu0 %v1875
    %2585 = vmatpush1.bf16.msra.mxu0 %v1874
    %2586 = vmatprep.subr.bf16.mxu0 %v1883
    %2587 = vmatpush1.bf16.msra.mxu0 %v1882
    %2588 = vmatprep.subr.bf16.mxu0 %v1891
    %2589 = vmatpush1.bf16.msra.mxu0 %v1890
    %2590 = vmatprep.mubr.bf16.mxu0 %v154
    %2591 = vmatmul.mubr.bf16.gmra.mrb[0].mxu0 %v153
    %v2592 = vpop.f32.mrb[0].mxu0
    %v2593 = vadd.f32 %v557, %v2592
    %v2594 = vpop.f32.mrb[0].mxu0
    %v2595 = vadd.f32 %v561, %v2594
    %v2596 = vpop.f32.mrb[0].mxu0
    %v2597 = vpop.f32.mrb[0].mxu0
    %2598 = vdwg.mxu0
    %2599 = vmatprep.subr.bf16.mxu0 %v1899
    %2600 = vmatpush1.bf16.msra.mxu0 %v1898
    %2601 = vmatprep.subr.bf16.mxu0 %v1907
    %2602 = vmatpush1.bf16.msra.mxu0 %v1906
    %2603 = vmatprep.subr.bf16.mxu0 %v1915
    %2604 = vmatpush1.bf16.msra.mxu0 %v1914
    %2605 = vmatprep.subr.bf16.mxu0 %v1923
    %2606 = vmatpush1.bf16.msra.mxu0 %v1922
    %2607 = vmatprep.subr.bf16.mxu0 %v1931
    %2608 = vmatpush1.bf16.msra.mxu0 %v1930
    %2609 = vmatprep.subr.bf16.mxu0 %v1939
    %2610 = vmatpush1.bf16.msra.mxu0 %v1938
    %2611 = vmatprep.subr.bf16.mxu0 %v1947
    %2612 = vmatpush1.bf16.msra.mxu0 %v1946
    %2613 = vmatprep.subr.bf16.mxu0 %v1955
    %2614 = vmatpush1.bf16.msra.mxu0 %v1954
    %2615 = vmatprep.subr.bf16.mxu0 %v1963
    %2616 = vmatpush1.bf16.msra.mxu0 %v1962
    %2617 = vmatprep.subr.bf16.mxu0 %v1971
    %2618 = vmatpush1.bf16.msra.mxu0 %v1970
    %2619 = vmatprep.subr.bf16.mxu0 %v1979
    %2620 = vmatpush1.bf16.msra.mxu0 %v1978
    %2621 = vmatprep.subr.bf16.mxu0 %v1987
    %2622 = vmatpush1.bf16.msra.mxu0 %v1986
    %2623 = vmatprep.subr.bf16.mxu0 %v1995
    %2624 = vmatpush1.bf16.msra.mxu0 %v1994
    %2625 = vmatprep.subr.bf16.mxu0 %v2003
    %2626 = vmatpush1.bf16.msra.mxu0 %v2002
    %2627 = vmatprep.subr.bf16.mxu0 %v2011
    %2628 = vmatpush1.bf16.msra.mxu0 %v2010
    %2629 = vmatprep.subr.bf16.mxu0 %v2019
    %2630 = vmatpush1.bf16.msra.mxu0 %v2018
    %2631 = vmatprep.mubr.bf16.mxu0 %v156
    %2632 = vmatmul.mubr.bf16.gmra.mrb[0].mxu0 %v155
    %v2633 = vpop.f32.mrb[0].mxu0
    %v2634 = vadd.f32 %v2593, %v2633
    %v2635 = vpop.f32.mrb[0].mxu0
    %v2636 = vadd.f32 %v2595, %v2635
    %v2637 = vpop.f32.mrb[0].mxu0
    %v2638 = vpop.f32.mrb[0].mxu0
    %2639 = vdwg.mxu0
    %2640 = vmatprep.subr.bf16.mxu0 %v2027
    %2641 = vmatpush1.bf16.msra.mxu0 %v2026
    %2642 = vmatprep.subr.bf16.mxu0 %v2035
    %2643 = vmatpush1.bf16.msra.mxu0 %v2034
    %2644 = vmatprep.subr.bf16.mxu0 %v2043
    %2645 = vmatpush1.bf16.msra.mxu0 %v2042
    %2646 = vmatprep.subr.bf16.mxu0 %v2051
    %2647 = vmatpush1.bf16.msra.mxu0 %v2050
    %2648 = vmatprep.subr.bf16.mxu0 %v2059
    %2649 = vmatpush1.bf16.msra.mxu0 %v2058
    %2650 = vmatprep.subr.bf16.mxu0 %v2067
    %2651 = vmatpush1.bf16.msra.mxu0 %v2066
    %2652 = vmatprep.subr.bf16.mxu0 %v2075
    %2653 = vmatpush1.bf16.msra.mxu0 %v2074
    %2654 = vmatprep.subr.bf16.mxu0 %v2083
    %2655 = vmatpush1.bf16.msra.mxu0 %v2082
    %2656 = vmatprep.subr.bf16.mxu0 %v2091
    %2657 = vmatpush1.bf16.msra.mxu0 %v2090
    %2658 = vmatprep.subr.bf16.mxu0 %v2099
    %2659 = vmatpush1.bf16.msra.mxu0 %v2098
    %2660 = vmatprep.subr.bf16.mxu0 %v2107
    %2661 = vmatpush1.bf16.msra.mxu0 %v2106
    %2662 = vmatprep.subr.bf16.mxu0 %v2115
    %2663 = vmatpush1.bf16.msra.mxu0 %v2114
    %2664 = vmatprep.subr.bf16.mxu0 %v2123
    %2665 = vmatpush1.bf16.msra.mxu0 %v2122
    %2666 = vmatprep.subr.bf16.mxu0 %v2131
    %2667 = vmatpush1.bf16.msra.mxu0 %v2130
    %2668 = vmatprep.subr.bf16.mxu0 %v2139
    %2669 = vmatpush1.bf16.msra.mxu0 %v2138
    %2670 = vmatprep.subr.bf16.mxu0 %v2147
    %2671 = vmatpush1.bf16.msra.mxu0 %v2146
    %2672 = vmatprep.mubr.bf16.mxu0 %v158
    %2673 = vmatmul.mubr.bf16.gmra.mrb[0].mxu0 %v157
    %v2674 = vpop.f32.mrb[0].mxu0
    %v2675 = vadd.f32 %v2634, %v2674
    %v2676 = vpop.f32.mrb[0].mxu0
    %v2677 = vadd.f32 %v2636, %v2676
    %v2678 = vpop.f32.mrb[0].mxu0
    %v2679 = vpop.f32.mrb[0].mxu0
    %2680 = vdwg.mxu0
    %2681 = vmatprep.subr.bf16.mxu0 %v2155
    %2682 = vmatpush1.bf16.msra.mxu0 %v2154
    %2683 = vmatprep.subr.bf16.mxu0 0
    %2684 = vmatpush1.bf16.msra.mxu0 0
    %2685 = vmatprep.subr.bf16.mxu0 0
    %2686 = vmatpush1.bf16.msra.mxu0 0
    %2687 = vmatprep.subr.bf16.mxu0 0
    %2688 = vmatpush1.bf16.msra.mxu0 0
    %2689 = vmatprep.subr.bf16.mxu0 0
    %2690 = vmatpush1.bf16.msra.mxu0 0
    %2691 = vmatprep.subr.bf16.mxu0 0
    %2692 = vmatpush1.bf16.msra.mxu0 0
    %2693 = vmatprep.subr.bf16.mxu0 0
    %2694 = vmatpush1.bf16.msra.mxu0 0
    %2695 = vmatprep.subr.bf16.mxu0 0
    %2696 = vmatpush1.bf16.msra.mxu0 0
    %2697 = vmatprep.subr.bf16.mxu0 0
    %2698 = vmatpush1.bf16.msra.mxu0 0
    %2699 = vmatprep.subr.bf16.mxu0 0
    %2700 = vmatpush1.bf16.msra.mxu0 0
    %2701 = vmatprep.subr.bf16.mxu0 0
    %2702 = vmatpush1.bf16.msra.mxu0 0
    %2703 = vmatprep.subr.bf16.mxu0 0
    %2704 = vmatpush1.bf16.msra.mxu0 0
    %2705 = vmatprep.subr.bf16.mxu0 0
    %2706 = vmatpush1.bf16.msra.mxu0 0
    %2707 = vmatprep.subr.bf16.mxu0 0
    %2708 = vmatpush1.bf16.msra.mxu0 0
    %2709 = vmatprep.subr.bf16.mxu0 0
    %2710 = vmatpush1.bf16.msra.mxu0 0
    %2711 = vmatprep.subr.bf16.mxu0 0
    %2712 = vmatpush1.bf16.msra.mxu0 0
    %2713 = vmatprep.mubr.bf16.mxu0 0
    %2714 = vmatmul.mubr.bf16.gmra.mrb[0].mxu0 %v2556
    %v2715 = vpop.f32.mrb[0].mxu0
    %v2716 = vadd.f32 %v2675, %v2715
    %v2717 = vpop.f32.mrb[0].mxu0
    %v2718 = vadd.f32 %v2677, %v2717
    %v2719 = vpop.f32.mrb[0].mxu0
    %v2720 = vpop.f32.mrb[0].mxu0
    %2721 = vdwg.mxu0
    %2722 = vmatprep.subr.bf16.mxu0 %v1773
    %2723 = vmatpush1.bf16.msra.mxu0 %v1772
    %2724 = vmatprep.subr.bf16.mxu0 %v1781
    %2725 = vmatpush1.bf16.msra.mxu0 %v1780
    %2726 = vmatprep.subr.bf16.mxu0 %v1789
    %2727 = vmatpush1.bf16.msra.mxu0 %v1788
    %2728 = vmatprep.subr.bf16.mxu0 %v1797
    %2729 = vmatpush1.bf16.msra.mxu0 %v1796
    %2730 = vmatprep.subr.bf16.mxu0 %v1805
    %2731 = vmatpush1.bf16.msra.mxu0 %v1804
    %2732 = vmatprep.subr.bf16.mxu0 %v1813
    %2733 = vmatpush1.bf16.msra.mxu0 %v1812
    %2734 = vmatprep.subr.bf16.mxu0 %v1821
    %2735 = vmatpush1.bf16.msra.mxu0 %v1820
    %2736 = vmatprep.subr.bf16.mxu0 %v1829
    %2737 = vmatpush1.bf16.msra.mxu0 %v1828
    %2738 = vmatprep.subr.bf16.mxu0 %v1837
    %2739 = vmatpush1.bf16.msra.mxu0 %v1836
    %2740 = vmatprep.subr.bf16.mxu0 %v1845
    %2741 = vmatpush1.bf16.msra.mxu0 %v1844
    %2742 = vmatprep.subr.bf16.mxu0 %v1853
    %2743 = vmatpush1.bf16.msra.mxu0 %v1852
    %2744 = vmatprep.subr.bf16.mxu0 %v1861
    %2745 = vmatpush1.bf16.msra.mxu0 %v1860
    %2746 = vmatprep.subr.bf16.mxu0 %v1869
    %2747 = vmatpush1.bf16.msra.mxu0 %v1868
    %2748 = vmatprep.subr.bf16.mxu0 %v1877
    %2749 = vmatpush1.bf16.msra.mxu0 %v1876
    %2750 = vmatprep.subr.bf16.mxu0 %v1885
    %2751 = vmatpush1.bf16.msra.mxu0 %v1884
    %2752 = vmatprep.subr.bf16.mxu0 %v1893
    %2753 = vmatpush1.bf16.msra.mxu0 %v1892
    %2754 = vmatprep.mubr.bf16.mxu0 %v154
    %2755 = vmatmul.mubr.bf16.gmra.mrb[0].mxu0 %v153
    %v2756 = vpop.f32.mrb[0].mxu0
    %v2757 = vadd.f32 %v565, %v2756
    %v2758 = vpop.f32.mrb[0].mxu0
    %v2759 = vadd.f32 %v569, %v2758
    %v2760 = vpop.f32.mrb[0].mxu0
    %v2761 = vpop.f32.mrb[0].mxu0
    %2762 = vdwg.mxu0
    %2763 = vmatprep.subr.bf16.mxu0 %v1901
    %2764 = vmatpush1.bf16.msra.mxu0 %v1900
    %2765 = vmatprep.subr.bf16.mxu0 %v1909
    %2766 = vmatpush1.bf16.msra.mxu0 %v1908
    %2767 = vmatprep.subr.bf16.mxu0 %v1917
    %2768 = vmatpush1.bf16.msra.mxu0 %v1916
    %2769 = vmatprep.subr.bf16.mxu0 %v1925
    %2770 = vmatpush1.bf16.msra.mxu0 %v1924
    %2771 = vmatprep.subr.bf16.mxu0 %v1933
    %2772 = vmatpush1.bf16.msra.mxu0 %v1932
    %2773 = vmatprep.subr.bf16.mxu0 %v1941
    %2774 = vmatpush1.bf16.msra.mxu0 %v1940
    %2775 = vmatprep.subr.bf16.mxu0 %v1949
    %2776 = vmatpush1.bf16.msra.mxu0 %v1948
    %2777 = vmatprep.subr.bf16.mxu0 %v1957
    %2778 = vmatpush1.bf16.msra.mxu0 %v1956
    %2779 = vmatprep.subr.bf16.mxu0 %v1965
    %2780 = vmatpush1.bf16.msra.mxu0 %v1964
    %2781 = vmatprep.subr.bf16.mxu0 %v1973
    %2782 = vmatpush1.bf16.msra.mxu0 %v1972
    %2783 = vmatprep.subr.bf16.mxu0 %v1981
    %2784 = vmatpush1.bf16.msra.mxu0 %v1980
    %2785 = vmatprep.subr.bf16.mxu0 %v1989
    %2786 = vmatpush1.bf16.msra.mxu0 %v1988
    %2787 = vmatprep.subr.bf16.mxu0 %v1997
    %2788 = vmatpush1.bf16.msra.mxu0 %v1996
    %2789 = vmatprep.subr.bf16.mxu0 %v2005
    %2790 = vmatpush1.bf16.msra.mxu0 %v2004
    %2791 = vmatprep.subr.bf16.mxu0 %v2013
    %2792 = vmatpush1.bf16.msra.mxu0 %v2012
    %2793 = vmatprep.subr.bf16.mxu0 %v2021
    %2794 = vmatpush1.bf16.msra.mxu0 %v2020
    %2795 = vmatprep.mubr.bf16.mxu0 %v156
    %2796 = vmatmul.mubr.bf16.gmra.mrb[0].mxu0 %v155
    %v2797 = vpop.f32.mrb[0].mxu0
    %v2798 = vadd.f32 %v2757, %v2797
    %v2799 = vpop.f32.mrb[0].mxu0
    %v2800 = vadd.f32 %v2759, %v2799
    %v2801 = vpop.f32.mrb[0].mxu0
    %v2802 = vpop.f32.mrb[0].mxu0
    %2803 = vdwg.mxu0
    %2804 = vmatprep.subr.bf16.mxu0 %v2029
    %2805 = vmatpush1.bf16.msra.mxu0 %v2028
    %2806 = vmatprep.subr.bf16.mxu0 %v2037
    %2807 = vmatpush1.bf16.msra.mxu0 %v2036
    %2808 = vmatprep.subr.bf16.mxu0 %v2045
    %2809 = vmatpush1.bf16.msra.mxu0 %v2044
    %2810 = vmatprep.subr.bf16.mxu0 %v2053
    %2811 = vmatpush1.bf16.msra.mxu0 %v2052
    %2812 = vmatprep.subr.bf16.mxu0 %v2061
    %2813 = vmatpush1.bf16.msra.mxu0 %v2060
    %2814 = vmatprep.subr.bf16.mxu0 %v2069
    %2815 = vmatpush1.bf16.msra.mxu0 %v2068
    %2816 = vmatprep.subr.bf16.mxu0 %v2077
    %2817 = vmatpush1.bf16.msra.mxu0 %v2076
    %2818 = vmatprep.subr.bf16.mxu0 %v2085
    %2819 = vmatpush1.bf16.msra.mxu0 %v2084
    %2820 = vmatprep.subr.bf16.mxu0 %v2093
    %2821 = vmatpush1.bf16.msra.mxu0 %v2092
    %2822 = vmatprep.subr.bf16.mxu0 %v2101
    %2823 = vmatpush1.bf16.msra.mxu0 %v2100
    %2824 = vmatprep.subr.bf16.mxu0 %v2109
    %2825 = vmatpush1.bf16.msra.mxu0 %v2108
    %2826 = vmatprep.subr.bf16.mxu0 %v2117
    %2827 = vmatpush1.bf16.msra.mxu0 %v2116
    %2828 = vmatprep.subr.bf16.mxu0 %v2125
    %2829 = vmatpush1.bf16.msra.mxu0 %v2124
    %2830 = vmatprep.subr.bf16.mxu0 %v2133
    %2831 = vmatpush1.bf16.msra.mxu0 %v2132
    %2832 = vmatprep.subr.bf16.mxu0 %v2141
    %2833 = vmatpush1.bf16.msra.mxu0 %v2140
    %2834 = vmatprep.subr.bf16.mxu0 %v2149
    %2835 = vmatpush1.bf16.msra.mxu0 %v2148
    %2836 = vmatprep.mubr.bf16.mxu0 %v158
    %2837 = vmatmul.mubr.bf16.gmra.mrb[0].mxu0 %v157
    %v2838 = vpop.f32.mrb[0].mxu0
    %v2839 = vadd.f32 %v2798, %v2838
    %v2840 = vpop.f32.mrb[0].mxu0
    %v2841 = vadd.f32 %v2800, %v2840
    %v2842 = vpop.f32.mrb[0].mxu0
    %v2843 = vpop.f32.mrb[0].mxu0
    %2844 = vdwg.mxu0
    %2845 = vmatprep.subr.bf16.mxu0 %v2157
    %2846 = vmatpush1.bf16.msra.mxu0 %v2156
    %2847 = vmatprep.subr.bf16.mxu0 0
    %2848 = vmatpush1.bf16.msra.mxu0 0
    %2849 = vmatprep.subr.bf16.mxu0 0
    %2850 = vmatpush1.bf16.msra.mxu0 0
    %2851 = vmatprep.subr.bf16.mxu0 0
    %2852 = vmatpush1.bf16.msra.mxu0 0
    %2853 = vmatprep.subr.bf16.mxu0 0
    %2854 = vmatpush1.bf16.msra.mxu0 0
    %2855 = vmatprep.subr.bf16.mxu0 0
    %2856 = vmatpush1.bf16.msra.mxu0 0
    %2857 = vmatprep.subr.bf16.mxu0 0
    %2858 = vmatpush1.bf16.msra.mxu0 0
    %2859 = vmatprep.subr.bf16.mxu0 0
    %2860 = vmatpush1.bf16.msra.mxu0 0
    %2861 = vmatprep.subr.bf16.mxu0 0
    %2862 = vmatpush1.bf16.msra.mxu0 0
    %2863 = vmatprep.subr.bf16.mxu0 0
    %2864 = vmatpush1.bf16.msra.mxu0 0
    %2865 = vmatprep.subr.bf16.mxu0 0
    %2866 = vmatpush1.bf16.msra.mxu0 0
    %2867 = vmatprep.subr.bf16.mxu0 0
    %2868 = vmatpush1.bf16.msra.mxu0 0
    %2869 = vmatprep.subr.bf16.mxu0 0
    %2870 = vmatpush1.bf16.msra.mxu0 0
    %2871 = vmatprep.subr.bf16.mxu0 0
    %2872 = vmatpush1.bf16.msra.mxu0 0
    %2873 = vmatprep.subr.bf16.mxu0 0
    %2874 = vmatpush1.bf16.msra.mxu0 0
    %2875 = vmatprep.subr.bf16.mxu0 0
    %2876 = vmatpush1.bf16.msra.mxu0 0
    %2877 = vmatprep.mubr.bf16.mxu0 0
    %2878 = vmatmul.mubr.bf16.gmra.mrb[0].mxu0 %v2556
    %v2879 = vpop.f32.mrb[0].mxu0
    %v2880 = vadd.f32 %v2839, %v2879
    %v2881 = vpop.f32.mrb[0].mxu0
    %v2882 = vadd.f32 %v2841, %v2881
    %v2883 = vpop.f32.mrb[0].mxu0
    %v2884 = vpop.f32.mrb[0].mxu0
    %2885 = vdwg.mxu0
    %2886 = vmatprep.subr.bf16.mxu0 %v1775
    %2887 = vmatpush1.bf16.msra.mxu0 %v1774
    %2888 = vmatprep.subr.bf16.mxu0 %v1783
    %2889 = vmatpush1.bf16.msra.mxu0 %v1782
    %2890 = vmatprep.subr.bf16.mxu0 %v1791
    %2891 = vmatpush1.bf16.msra.mxu0 %v1790
    %2892 = vmatprep.subr.bf16.mxu0 %v1799
    %2893 = vmatpush1.bf16.msra.mxu0 %v1798
    %2894 = vmatprep.subr.bf16.mxu0 %v1807
    %2895 = vmatpush1.bf16.msra.mxu0 %v1806
    %2896 = vmatprep.subr.bf16.mxu0 %v1815
    %2897 = vmatpush1.bf16.msra.mxu0 %v1814
    %2898 = vmatprep.subr.bf16.mxu0 %v1823
    %2899 = vmatpush1.bf16.msra.mxu0 %v1822
    %2900 = vmatprep.subr.bf16.mxu0 %v1831
    %2901 = vmatpush1.bf16.msra.mxu0 %v1830
    %2902 = vmatprep.subr.bf16.mxu0 %v1839
    %2903 = vmatpush1.bf16.msra.mxu0 %v1838
    %2904 = vmatprep.subr.bf16.mxu0 %v1847
    %2905 = vmatpush1.bf16.msra.mxu0 %v1846
    %2906 = vmatprep.subr.bf16.mxu0 %v1855
    %2907 = vmatpush1.bf16.msra.mxu0 %v1854
    %2908 = vmatprep.subr.bf16.mxu0 %v1863
    %2909 = vmatpush1.bf16.msra.mxu0 %v1862
    %2910 = vmatprep.subr.bf16.mxu0 %v1871
    %2911 = vmatpush1.bf16.msra.mxu0 %v1870
    %2912 = vmatprep.subr.bf16.mxu0 %v1879
    %2913 = vmatpush1.bf16.msra.mxu0 %v1878
    %2914 = vmatprep.subr.bf16.mxu0 %v1887
    %2915 = vmatpush1.bf16.msra.mxu0 %v1886
    %2916 = vmatprep.subr.bf16.mxu0 %v1895
    %2917 = vmatpush1.bf16.msra.mxu0 %v1894
    %2918 = vmatprep.mubr.bf16.mxu0 %v154
    %2919 = vmatmul.mubr.bf16.gmra.mrb[0].mxu0 %v153
    %v2920 = vpop.f32.mrb[0].mxu0
    %v2921 = vadd.f32 %v573, %v2920
    %v2922 = vpop.f32.mrb[0].mxu0
    %v2923 = vadd.f32 %v577, %v2922
    %v2924 = vpop.f32.mrb[0].mxu0
    %v2925 = vpop.f32.mrb[0].mxu0
    %2926 = vdwg.mxu0
    %2927 = vmatprep.subr.bf16.mxu0 %v1903
    %2928 = vmatpush1.bf16.msra.mxu0 %v1902
    %2929 = vmatprep.subr.bf16.mxu0 %v1911
    %2930 = vmatpush1.bf16.msra.mxu0 %v1910
    %2931 = vmatprep.subr.bf16.mxu0 %v1919
    %2932 = vmatpush1.bf16.msra.mxu0 %v1918
    %2933 = vmatprep.subr.bf16.mxu0 %v1927
    %2934 = vmatpush1.bf16.msra.mxu0 %v1926
    %2935 = vmatprep.subr.bf16.mxu0 %v1935
    %2936 = vmatpush1.bf16.msra.mxu0 %v1934
    %2937 = vmatprep.subr.bf16.mxu0 %v1943
    %2938 = vmatpush1.bf16.msra.mxu0 %v1942
    %2939 = vmatprep.subr.bf16.mxu0 %v1951
    %2940 = vmatpush1.bf16.msra.mxu0 %v1950
    %2941 = vmatprep.subr.bf16.mxu0 %v1959
    %2942 = vmatpush1.bf16.msra.mxu0 %v1958
    %2943 = vmatprep.subr.bf16.mxu0 %v1967
    %2944 = vmatpush1.bf16.msra.mxu0 %v1966
    %2945 = vmatprep.subr.bf16.mxu0 %v1975
    %2946 = vmatpush1.bf16.msra.mxu0 %v1974
    %2947 = vmatprep.subr.bf16.mxu0 %v1983
    %2948 = vmatpush1.bf16.msra.mxu0 %v1982
    %2949 = vmatprep.subr.bf16.mxu0 %v1991
    %2950 = vmatpush1.bf16.msra.mxu0 %v1990
    %2951 = vmatprep.subr.bf16.mxu0 %v1999
    %2952 = vmatpush1.bf16.msra.mxu0 %v1998
    %2953 = vmatprep.subr.bf16.mxu0 %v2007
    %2954 = vmatpush1.bf16.msra.mxu0 %v2006
    %2955 = vmatprep.subr.bf16.mxu0 %v2015
    %2956 = vmatpush1.bf16.msra.mxu0 %v2014
    %2957 = vmatprep.subr.bf16.mxu0 %v2023
    %2958 = vmatpush1.bf16.msra.mxu0 %v2022
    %2959 = vmatprep.mubr.bf16.mxu0 %v156
    %2960 = vmatmul.mubr.bf16.gmra.mrb[0].mxu0 %v155
    %v2961 = vpop.f32.mrb[0].mxu0
    %v2962 = vadd.f32 %v2921, %v2961
    %v2963 = vpop.f32.mrb[0].mxu0
    %v2964 = vadd.f32 %v2923, %v2963
    %v2965 = vpop.f32.mrb[0].mxu0
    %v2966 = vpop.f32.mrb[0].mxu0
    %2967 = vdwg.mxu0
    %2968 = vmatprep.subr.bf16.mxu0 %v2031
    %2969 = vmatpush1.bf16.msra.mxu0 %v2030
    %2970 = vmatprep.subr.bf16.mxu0 %v2039
    %2971 = vmatpush1.bf16.msra.mxu0 %v2038
    %2972 = vmatprep.subr.bf16.mxu0 %v2047
    %2973 = vmatpush1.bf16.msra.mxu0 %v2046
    %2974 = vmatprep.subr.bf16.mxu0 %v2055
    %2975 = vmatpush1.bf16.msra.mxu0 %v2054
    %2976 = vmatprep.subr.bf16.mxu0 %v2063
    %2977 = vmatpush1.bf16.msra.mxu0 %v2062
    %2978 = vmatprep.subr.bf16.mxu0 %v2071
    %2979 = vmatpush1.bf16.msra.mxu0 %v2070
    %2980 = vmatprep.subr.bf16.mxu0 %v2079
    %2981 = vmatpush1.bf16.msra.mxu0 %v2078
    %2982 = vmatprep.subr.bf16.mxu0 %v2087
    %2983 = vmatpush1.bf16.msra.mxu0 %v2086
    %2984 = vmatprep.subr.bf16.mxu0 %v2095
    %2985 = vmatpush1.bf16.msra.mxu0 %v2094
    %2986 = vmatprep.subr.bf16.mxu0 %v2103
    %2987 = vmatpush1.bf16.msra.mxu0 %v2102
    %2988 = vmatprep.subr.bf16.mxu0 %v2111
    %2989 = vmatpush1.bf16.msra.mxu0 %v2110
    %2990 = vmatprep.subr.bf16.mxu0 %v2119
    %2991 = vmatpush1.bf16.msra.mxu0 %v2118
    %2992 = vmatprep.subr.bf16.mxu0 %v2127
    %2993 = vmatpush1.bf16.msra.mxu0 %v2126
    %2994 = vmatprep.subr.bf16.mxu0 %v2135
    %2995 = vmatpush1.bf16.msra.mxu0 %v2134
    %2996 = vmatprep.subr.bf16.mxu0 %v2143
    %2997 = vmatpush1.bf16.msra.mxu0 %v2142
    %2998 = vmatprep.subr.bf16.mxu0 %v2151
    %2999 = vmatpush1.bf16.msra.mxu0 %v2150
    %3000 = vmatprep.mubr.bf16.mxu0 %v158
    %3001 = vmatmul.mubr.bf16.gmra.mrb[0].mxu0 %v157
    %v3002 = vpop.f32.mrb[0].mxu0
    %v3003 = vadd.f32 %v2962, %v3002
    %v3004 = vpop.f32.mrb[0].mxu0
    %v3005 = vadd.f32 %v2964, %v3004
    %v3006 = vpop.f32.mrb[0].mxu0
    %v3007 = vpop.f32.mrb[0].mxu0
    %3008 = vdwg.mxu0
    %3009 = vmatprep.subr.bf16.mxu0 %v2159
    %3010 = vmatpush1.bf16.msra.mxu0 %v2158
    %3011 = vmatprep.subr.bf16.mxu0 0
    %3012 = vmatpush1.bf16.msra.mxu0 0
    %3013 = vmatprep.subr.bf16.mxu0 0
    %3014 = vmatpush1.bf16.msra.mxu0 0
    %3015 = vmatprep.subr.bf16.mxu0 0
    %3016 = vmatpush1.bf16.msra.mxu0 0
    %3017 = vmatprep.subr.bf16.mxu0 0
    %3018 = vmatpush1.bf16.msra.mxu0 0
    %3019 = vmatprep.subr.bf16.mxu0 0
    %3020 = vmatpush1.bf16.msra.mxu0 0
    %3021 = vmatprep.subr.bf16.mxu0 0
    %3022 = vmatpush1.bf16.msra.mxu0 0
    %3023 = vmatprep.subr.bf16.mxu0 0
    %3024 = vmatpush1.bf16.msra.mxu0 0
    %3025 = vmatprep.subr.bf16.mxu0 0
    %3026 = vmatpush1.bf16.msra.mxu0 0
    %3027 = vmatprep.subr.bf16.mxu0 0
    %3028 = vmatpush1.bf16.msra.mxu0 0
    %3029 = vmatprep.subr.bf16.mxu0 0
    %3030 = vmatpush1.bf16.msra.mxu0 0
    %3031 = vmatprep.subr.bf16.mxu0 0
    %3032 = vmatpush1.bf16.msra.mxu0 0
    %3033 = vmatprep.subr.bf16.mxu0 0
    %3034 = vmatpush1.bf16.msra.mxu0 0
    %3035 = vmatprep.subr.bf16.mxu0 0
    %3036 = vmatpush1.bf16.msra.mxu0 0
    %3037 = vmatprep.subr.bf16.mxu0 0
    %3038 = vmatpush1.bf16.msra.mxu0 0
    %3039 = vmatprep.subr.bf16.mxu0 0
    %3040 = vmatpush1.bf16.msra.mxu0 0
    %3041 = vmatprep.mubr.bf16.mxu0 0
    %3042 = vmatmul.mubr.bf16.gmra.mrb[0].mxu0 %v2556
    %v3043 = vpop.f32.mrb[0].mxu0
    %v3044 = vadd.f32 %v3003, %v3043
    %v3045 = vpop.f32.mrb[0].mxu0
    %v3046 = vadd.f32 %v3005, %v3045
    %v3047 = vpop.f32.mrb[0].mxu0
    %v3048 = vpop.f32.mrb[0].mxu0
    %3049 = vdwg.mxu0
    %3050 = vmatprep.subr.bf16.mxu0 %v1777
    %3051 = vmatpush1.bf16.msra.mxu0 %v1776
    %3052 = vmatprep.subr.bf16.mxu0 %v1785
    %3053 = vmatpush1.bf16.msra.mxu0 %v1784
    %3054 = vmatprep.subr.bf16.mxu0 %v1793
    %3055 = vmatpush1.bf16.msra.mxu0 %v1792
    %3056 = vmatprep.subr.bf16.mxu0 %v1801
    %3057 = vmatpush1.bf16.msra.mxu0 %v1800
    %3058 = vmatprep.subr.bf16.mxu0 %v1809
    %3059 = vmatpush1.bf16.msra.mxu0 %v1808
    %3060 = vmatprep.subr.bf16.mxu0 %v1817
    %3061 = vmatpush1.bf16.msra.mxu0 %v1816
    %3062 = vmatprep.subr.bf16.mxu0 %v1825
    %3063 = vmatpush1.bf16.msra.mxu0 %v1824
    %3064 = vmatprep.subr.bf16.mxu0 %v1833
    %3065 = vmatpush1.bf16.msra.mxu0 %v1832
    %3066 = vmatprep.subr.bf16.mxu0 %v1841
    %3067 = vmatpush1.bf16.msra.mxu0 %v1840
    %3068 = vmatprep.subr.bf16.mxu0 %v1849
    %3069 = vmatpush1.bf16.msra.mxu0 %v1848
    %3070 = vmatprep.subr.bf16.mxu0 %v1857
    %3071 = vmatpush1.bf16.msra.mxu0 %v1856
    %3072 = vmatprep.subr.bf16.mxu0 %v1865
    %3073 = vmatpush1.bf16.msra.mxu0 %v1864
    %3074 = vmatprep.subr.bf16.mxu0 %v1873
    %3075 = vmatpush1.bf16.msra.mxu0 %v1872
    %3076 = vmatprep.subr.bf16.mxu0 %v1881
    %3077 = vmatpush1.bf16.msra.mxu0 %v1880
    %3078 = vmatprep.subr.bf16.mxu0 %v1889
    %3079 = vmatpush1.bf16.msra.mxu0 %v1888
    %3080 = vmatprep.subr.bf16.mxu0 %v1897
    %3081 = vmatpush1.bf16.msra.mxu0 %v1896
    %3082 = vmatprep.mubr.bf16.mxu0 %v154
    %3083 = vmatmul.mubr.bf16.gmra.mrb[0].mxu0 %v153
    %v3084 = vpop.f32.mrb[0].mxu0
    %v3085 = vadd.f32 %v581, %v3084
    %v3086 = vpop.f32.mrb[0].mxu0
    %v3087 = vadd.f32 %v585, %v3086
    %v3088 = vpop.f32.mrb[0].mxu0
    %v3089 = vpop.f32.mrb[0].mxu0
    %3090 = vdwg.mxu0
    %3091 = vmatprep.subr.bf16.mxu0 %v1905
    %3092 = vmatpush1.bf16.msra.mxu0 %v1904
    %3093 = vmatprep.subr.bf16.mxu0 %v1913
    %3094 = vmatpush1.bf16.msra.mxu0 %v1912
    %3095 = vmatprep.subr.bf16.mxu0 %v1921
    %3096 = vmatpush1.bf16.msra.mxu0 %v1920
    %3097 = vmatprep.subr.bf16.mxu0 %v1929
    %3098 = vmatpush1.bf16.msra.mxu0 %v1928
    %3099 = vmatprep.subr.bf16.mxu0 %v1937
    %3100 = vmatpush1.bf16.msra.mxu0 %v1936
    %3101 = vmatprep.subr.bf16.mxu0 %v1945
    %3102 = vmatpush1.bf16.msra.mxu0 %v1944
    %3103 = vmatprep.subr.bf16.mxu0 %v1953
    %3104 = vmatpush1.bf16.msra.mxu0 %v1952
    %3105 = vmatprep.subr.bf16.mxu0 %v1961
    %3106 = vmatpush1.bf16.msra.mxu0 %v1960
    %3107 = vmatprep.subr.bf16.mxu0 %v1969
    %3108 = vmatpush1.bf16.msra.mxu0 %v1968
    %3109 = vmatprep.subr.bf16.mxu0 %v1977
    %3110 = vmatpush1.bf16.msra.mxu0 %v1976
    %3111 = vmatprep.subr.bf16.mxu0 %v1985
    %3112 = vmatpush1.bf16.msra.mxu0 %v1984
    %3113 = vmatprep.subr.bf16.mxu0 %v1993
    %3114 = vmatpush1.bf16.msra.mxu0 %v1992
    %3115 = vmatprep.subr.bf16.mxu0 %v2001
    %3116 = vmatpush1.bf16.msra.mxu0 %v2000
    %3117 = vmatprep.subr.bf16.mxu0 %v2009
    %3118 = vmatpush1.bf16.msra.mxu0 %v2008
    %3119 = vmatprep.subr.bf16.mxu0 %v2017
    %3120 = vmatpush1.bf16.msra.mxu0 %v2016
    %3121 = vmatprep.subr.bf16.mxu0 %v2025
    %3122 = vmatpush1.bf16.msra.mxu0 %v2024
    %3123 = vmatprep.mubr.bf16.mxu0 %v156
    %3124 = vmatmul.mubr.bf16.gmra.mrb[0].mxu0 %v155
    %v3125 = vpop.f32.mrb[0].mxu0
    %v3126 = vadd.f32 %v3085, %v3125
    %v3127 = vpop.f32.mrb[0].mxu0
    %v3128 = vadd.f32 %v3087, %v3127
    %v3129 = vpop.f32.mrb[0].mxu0
    %v3130 = vpop.f32.mrb[0].mxu0
    %3131 = vdwg.mxu0
    %3132 = vmatprep.subr.bf16.mxu0 %v2033
    %3133 = vmatpush1.bf16.msra.mxu0 %v2032
    %3134 = vmatprep.subr.bf16.mxu0 %v2041
    %3135 = vmatpush1.bf16.msra.mxu0 %v2040
    %3136 = vmatprep.subr.bf16.mxu0 %v2049
    %3137 = vmatpush1.bf16.msra.mxu0 %v2048
    %3138 = vmatprep.subr.bf16.mxu0 %v2057
    %3139 = vmatpush1.bf16.msra.mxu0 %v2056
    %3140 = vmatprep.subr.bf16.mxu0 %v2065
    %3141 = vmatpush1.bf16.msra.mxu0 %v2064
    %3142 = vmatprep.subr.bf16.mxu0 %v2073
    %3143 = vmatpush1.bf16.msra.mxu0 %v2072
    %3144 = vmatprep.subr.bf16.mxu0 %v2081
    %3145 = vmatpush1.bf16.msra.mxu0 %v2080
    %3146 = vmatprep.subr.bf16.mxu0 %v2089
    %3147 = vmatpush1.bf16.msra.mxu0 %v2088
    %3148 = vmatprep.subr.bf16.mxu0 %v2097
    %3149 = vmatpush1.bf16.msra.mxu0 %v2096
    %3150 = vmatprep.subr.bf16.mxu0 %v2105
    %3151 = vmatpush1.bf16.msra.mxu0 %v2104
    %3152 = vmatprep.subr.bf16.mxu0 %v2113
    %3153 = vmatpush1.bf16.msra.mxu0 %v2112
    %3154 = vmatprep.subr.bf16.mxu0 %v2121
    %3155 = vmatpush1.bf16.msra.mxu0 %v2120
    %3156 = vmatprep.subr.bf16.mxu0 %v2129
    %3157 = vmatpush1.bf16.msra.mxu0 %v2128
    %3158 = vmatprep.subr.bf16.mxu0 %v2137
    %3159 = vmatpush1.bf16.msra.mxu0 %v2136
    %3160 = vmatprep.subr.bf16.mxu0 %v2145
    %3161 = vmatpush1.bf16.msra.mxu0 %v2144
    %3162 = vmatprep.subr.bf16.mxu0 %v2153
    %3163 = vmatpush1.bf16.msra.mxu0 %v2152
    %3164 = vmatprep.mubr.bf16.mxu0 %v158
    %3165 = vmatmul.mubr.bf16.gmra.mrb[0].mxu0 %v157
    %v3166 = vpop.f32.mrb[0].mxu0
    %v3167 = vadd.f32 %v3126, %v3166
    %v3168 = vpop.f32.mrb[0].mxu0
    %v3169 = vadd.f32 %v3128, %v3168
    %v3170 = vpop.f32.mrb[0].mxu0
    %v3171 = vpop.f32.mrb[0].mxu0
    %3172 = vdwg.mxu0
    %3173 = vmatprep.subr.bf16.mxu0 %v2161
    %3174 = vmatpush1.bf16.msra.mxu0 %v2160
    %3175 = vmatprep.subr.bf16.mxu0 0
    %3176 = vmatpush1.bf16.msra.mxu0 0
    %3177 = vmatprep.subr.bf16.mxu0 0
    %3178 = vmatpush1.bf16.msra.mxu0 0
    %3179 = vmatprep.subr.bf16.mxu0 0
    %3180 = vmatpush1.bf16.msra.mxu0 0
    %3181 = vmatprep.subr.bf16.mxu0 0
    %3182 = vmatpush1.bf16.msra.mxu0 0
    %3183 = vmatprep.subr.bf16.mxu0 0
    %3184 = vmatpush1.bf16.msra.mxu0 0
    %3185 = vmatprep.subr.bf16.mxu0 0
    %3186 = vmatpush1.bf16.msra.mxu0 0
    %3187 = vmatprep.subr.bf16.mxu0 0
    %3188 = vmatpush1.bf16.msra.mxu0 0
    %3189 = vmatprep.subr.bf16.mxu0 0
    %3190 = vmatpush1.bf16.msra.mxu0 0
    %3191 = vmatprep.subr.bf16.mxu0 0
    %3192 = vmatpush1.bf16.msra.mxu0 0
    %3193 = vmatprep.subr.bf16.mxu0 0
    %3194 = vmatpush1.bf16.msra.mxu0 0
    %3195 = vmatprep.subr.bf16.mxu0 0
    %3196 = vmatpush1.bf16.msra.mxu0 0
    %3197 = vmatprep.subr.bf16.mxu0 0
    %3198 = vmatpush1.bf16.msra.mxu0 0
    %3199 = vmatprep.subr.bf16.mxu0 0
    %3200 = vmatpush1.bf16.msra.mxu0 0
    %3201 = vmatprep.subr.bf16.mxu0 0
    %3202 = vmatpush1.bf16.msra.mxu0 0
    %3203 = vmatprep.subr.bf16.mxu0 0
    %3204 = vmatpush1.bf16.msra.mxu0 0
    %3205 = vmatprep.mubr.bf16.mxu0 0
    %3206 = vmatmul.mubr.bf16.gmra.mrb[0].mxu0 %v2556
    %v3207 = vpop.f32.mrb[0].mxu0
    %v3208 = vadd.f32 %v3167, %v3207
    %v3209 = vpop.f32.mrb[0].mxu0
    %v3210 = vadd.f32 %v3169, %v3209
    %v3211 = vpop.f32.mrb[0].mxu0
    %v3212 = vpop.f32.mrb[0].mxu0
    %3213 = vdwg.mxu0
    %v3214 = vpack.c.bf16 %v2716, %v2716
    %v3215 = vpack.c.bf16 %v2718, %v2718
    %v3216 = vpack.c.bf16 %v2880, %v2880
    %v3217 = vpack.c.bf16 %v2882, %v2882
    %v3218 = vpack.c.bf16 %v3044, %v3044
    %v3219 = vpack.c.bf16 %v3046, %v3046
    %v3220 = vpack.c.bf16 %v3208, %v3208
    %v3221 = vpack.c.bf16 %v3210, %v3210
    %v3222 = vld [vmem:[#allocation8] sm:$0xff]
    %v3223 = vld [vmem:[#allocation8 + $0x8] sm:$0xff]
    %v3224 = vld [vmem:[#allocation8 + $0x10] sm:$0xff]
    %v3225 = vld [vmem:[#allocation8 + $0x18] sm:$0xff]
    %v3226 = vld [vmem:[#allocation8 + $0x20] sm:$0xff]
    %v3227 = vld [vmem:[#allocation8 + $0x28] sm:$0xff]
    %v3228 = vld [vmem:[#allocation8 + $0x30] sm:$0xff]
    %v3229 = vld [vmem:[#allocation8 + $0x38] sm:$0xff]
    %v3230 = vld [vmem:[#allocation8 + $0x40] sm:$0xff]
    %v3231 = vld [vmem:[#allocation8 + $0x48] sm:$0xff]
    %v3232 = vld [vmem:[#allocation8 + $0x50] sm:$0xff]
    %v3233 = vld [vmem:[#allocation8 + $0x58] sm:$0xff]
    %v3234 = vld [vmem:[#allocation8 + $0x60] sm:$0xff]
    %v3235 = vld [vmem:[#allocation8 + $0x68] sm:$0xff]
    %v3236 = vld [vmem:[#allocation8 + $0x70] sm:$0xff]
    %v3237 = vld [vmem:[#allocation8 + $0x78] sm:$0xff]
    %v3238 = vld [vmem:[#allocation8 + $0x80] sm:$0xff]
    %v3239 = vld [vmem:[#allocation8 + $0x88] sm:$0xff]
    %v3240 = vld [vmem:[#allocation8 + $0x90] sm:$0xff]
    %v3241 = vld [vmem:[#allocation8 + $0x98] sm:$0xff]
    %v3242 = vld [vmem:[#allocation8 + $0xa0] sm:$0xff]
    %v3243 = vld [vmem:[#allocation8 + $0xa8] sm:$0xff]
    %v3244 = vld [vmem:[#allocation8 + $0xb0] sm:$0xff]
    %v3245 = vld [vmem:[#allocation8 + $0xb8] sm:$0xff]
    %v3246 = vld [vmem:[#allocation8 + $0xc0] sm:$0xff]
    %v3247 = vld [vmem:[#allocation8 + $0xc8] sm:$0xff]
    %v3248 = vld [vmem:[#allocation8 + $0xd0] sm:$0xff]
    %v3249 = vld [vmem:[#allocation8 + $0xd8] sm:$0xff]
    %v3250 = vld [vmem:[#allocation8 + $0xe0] sm:$0xff]
    %v3251 = vld [vmem:[#allocation8 + $0xe8] sm:$0xff]
    %v3252 = vld [vmem:[#allocation8 + $0xf0] sm:$0xff]
    %v3253 = vld [vmem:[#allocation8 + $0xf8] sm:$0xff]
    %v3254 = vld [vmem:[#allocation8 + $0x100] sm:$0xff]
    %v3255 = vld [vmem:[#allocation8 + $0x108] sm:$0xff]
    %v3256 = vld [vmem:[#allocation8 + $0x110] sm:$0xff]
    %v3257 = vld [vmem:[#allocation8 + $0x118] sm:$0xff]
    %v3258 = vld [vmem:[#allocation8 + $0x120] sm:$0xff]
    %v3259 = vld [vmem:[#allocation8 + $0x128] sm:$0xff]
    %v3260 = vld [vmem:[#allocation8 + $0x130] sm:$0xff]
    %v3261 = vld [vmem:[#allocation8 + $0x138] sm:$0xff]
    %v3262 = vld [vmem:[#allocation8 + $0x140] sm:$0xff]
    %v3263 = vld [vmem:[#allocation8 + $0x148] sm:$0xff]
    %v3264 = vld [vmem:[#allocation8 + $0x150] sm:$0xff]
    %v3265 = vld [vmem:[#allocation8 + $0x158] sm:$0xff]
    %v3266 = vld [vmem:[#allocation8 + $0x160] sm:$0xff]
    %v3267 = vld [vmem:[#allocation8 + $0x168] sm:$0xff]
    %v3268 = vld [vmem:[#allocation8 + $0x170] sm:$0xff]
    %v3269 = vld [vmem:[#allocation8 + $0x178] sm:$0xff]
    %v3270 = vld [vmem:[#allocation8 + $0x180] sm:$0xff]
    %v3271 = vld [vmem:[#allocation8 + $0x188] sm:$0xff]
    %v3272 = vld [vmem:[#allocation8 + $0x190] sm:$0xff]
    %v3273 = vld [vmem:[#allocation8 + $0x198] sm:$0xff]
    %v3274 = vld [vmem:[#allocation8 + $0x1a0] sm:$0xff]
    %v3275 = vld [vmem:[#allocation8 + $0x1a8] sm:$0xff]
    %v3276 = vld [vmem:[#allocation8 + $0x1b0] sm:$0xff]
    %v3277 = vld [vmem:[#allocation8 + $0x1b8] sm:$0xff]
    %v3278 = vld [vmem:[#allocation8 + $0x1c0] sm:$0xff]
    %v3279 = vld [vmem:[#allocation8 + $0x1c8] sm:$0xff]
    %v3280 = vld [vmem:[#allocation8 + $0x1d0] sm:$0xff]
    %v3281 = vld [vmem:[#allocation8 + $0x1d8] sm:$0xff]
    %v3282 = vld [vmem:[#allocation8 + $0x1e0] sm:$0xff]
    %v3283 = vld [vmem:[#allocation8 + $0x1e8] sm:$0xff]
    %v3284 = vld [vmem:[#allocation8 + $0x1f0] sm:$0xff]
    %v3285 = vld [vmem:[#allocation8 + $0x1f8] sm:$0xff]
    %v3286 = vld [vmem:[#allocation8 + $0x200] sm:$0xff]
    %v3287 = vld [vmem:[#allocation8 + $0x208] sm:$0xff]
    %v3288 = vld [vmem:[#allocation8 + $0x210] sm:$0xff]
    %v3289 = vld [vmem:[#allocation8 + $0x218] sm:$0xff]
    %v3290 = vld [vmem:[#allocation8 + $0x220] sm:$0xff]
    %v3291 = vld [vmem:[#allocation8 + $0x228] sm:$0xff]
    %v3292 = vld [vmem:[#allocation8 + $0x230] sm:$0xff]
    %v3293 = vld [vmem:[#allocation8 + $0x238] sm:$0xff]
    %v3294 = vld [vmem:[#allocation8 + $0x240] sm:$0xff]
    %v3295 = vld [vmem:[#allocation8 + $0x248] sm:$0xff]
    %v3296 = vld [vmem:[#allocation8 + $0x250] sm:$0xff]
    %v3297 = vld [vmem:[#allocation8 + $0x258] sm:$0xff]
    %v3298 = vld [vmem:[#allocation8 + $0x260] sm:$0xff]
    %v3299 = vld [vmem:[#allocation8 + $0x268] sm:$0xff]
    %v3300 = vld [vmem:[#allocation8 + $0x270] sm:$0xff]
    %v3301 = vld [vmem:[#allocation8 + $0x278] sm:$0xff]
    %v3302 = vld [vmem:[#allocation8 + $0x280] sm:$0xff]
    %v3303 = vld [vmem:[#allocation8 + $0x288] sm:$0xff]
    %v3304 = vld [vmem:[#allocation8 + $0x290] sm:$0xff]
    %v3305 = vld [vmem:[#allocation8 + $0x298] sm:$0xff]
    %v3306 = vld [vmem:[#allocation8 + $0x2a0] sm:$0xff]
    %v3307 = vld [vmem:[#allocation8 + $0x2a8] sm:$0xff]
    %v3308 = vld [vmem:[#allocation8 + $0x2b0] sm:$0xff]
    %v3309 = vld [vmem:[#allocation8 + $0x2b8] sm:$0xff]
    %v3310 = vld [vmem:[#allocation8 + $0x2c0] sm:$0xff]
    %v3311 = vld [vmem:[#allocation8 + $0x2c8] sm:$0xff]
    %v3312 = vld [vmem:[#allocation8 + $0x2d0] sm:$0xff]
    %v3313 = vld [vmem:[#allocation8 + $0x2d8] sm:$0xff]
    %v3314 = vld [vmem:[#allocation8 + $0x2e0] sm:$0xff]
    %v3315 = vld [vmem:[#allocation8 + $0x2e8] sm:$0xff]
    %v3316 = vld [vmem:[#allocation8 + $0x2f0] sm:$0xff]
    %v3317 = vld [vmem:[#allocation8 + $0x2f8] sm:$0xff]
    %v3318 = vld [vmem:[#allocation8 + $0x300] sm:$0xff]
    %v3319 = vld [vmem:[#allocation8 + $0x308] sm:$0xff]
    %v3320 = vld [vmem:[#allocation8 + $0x310] sm:$0xff]
    %v3321 = vld [vmem:[#allocation8 + $0x318] sm:$0xff]
    %v3322 = vld [vmem:[#allocation8 + $0x320] sm:$0xff]
    %v3323 = vld [vmem:[#allocation8 + $0x328] sm:$0xff]
    %v3324 = vld [vmem:[#allocation8 + $0x330] sm:$0xff]
    %v3325 = vld [vmem:[#allocation8 + $0x338] sm:$0xff]
    %v3326 = vld [vmem:[#allocation8 + $0x340] sm:$0xff]
    %v3327 = vld [vmem:[#allocation8 + $0x348] sm:$0xff]
    %v3328 = vld [vmem:[#allocation8 + $0x350] sm:$0xff]
    %v3329 = vld [vmem:[#allocation8 + $0x358] sm:$0xff]
    %v3330 = vld [vmem:[#allocation8 + $0x360] sm:$0xff]
    %v3331 = vld [vmem:[#allocation8 + $0x368] sm:$0xff]
    %v3332 = vld [vmem:[#allocation8 + $0x370] sm:$0xff]
    %v3333 = vld [vmem:[#allocation8 + $0x378] sm:$0xff]
    %v3334 = vld [vmem:[#allocation8 + $0x380] sm:$0xff]
    %v3335 = vld [vmem:[#allocation8 + $0x388] sm:$0xff]
    %v3336 = vld [vmem:[#allocation8 + $0x390] sm:$0xff]
    %v3337 = vld [vmem:[#allocation8 + $0x398] sm:$0xff]
    %v3338 = vld [vmem:[#allocation8 + $0x3a0] sm:$0xff]
    %v3339 = vld [vmem:[#allocation8 + $0x3a8] sm:$0xff]
    %v3340 = vld [vmem:[#allocation8 + $0x3b0] sm:$0xff]
    %v3341 = vld [vmem:[#allocation8 + $0x3b8] sm:$0xff]
    %v3342 = vld [vmem:[#allocation8 + $0x3c0] sm:$0xff]
    %v3343 = vld [vmem:[#allocation8 + $0x3c8] sm:$0xff]
    %v3344 = vld [vmem:[#allocation8 + $0x3d0] sm:$0xff]
    %v3345 = vld [vmem:[#allocation8 + $0x3d8] sm:$0xff]
    %v3346 = vld [vmem:[#allocation8 + $0x3e0] sm:$0xff]
    %v3347 = vld [vmem:[#allocation8 + $0x3e8] sm:$0xff]
    %v3348 = vld [vmem:[#allocation8 + $0x3f0] sm:$0xff]
    %v3349 = vld [vmem:[#allocation8 + $0x3f8] sm:$0xff]
    %v3350 = vld [vmem:[#allocation8 + $0x400] sm:$0xff]
    %v3351 = vld [vmem:[#allocation8 + $0x408] sm:$0xff]
    %v3352 = vld [vmem:[#allocation8 + $0x410] sm:$0xff]
    %v3353 = vld [vmem:[#allocation8 + $0x418] sm:$0xff]
    %v3354 = vld [vmem:[#allocation8 + $0x420] sm:$0xff]
    %v3355 = vld [vmem:[#allocation8 + $0x428] sm:$0xff]
    %v3356 = vld [vmem:[#allocation8 + $0x430] sm:$0xff]
    %v3357 = vld [vmem:[#allocation8 + $0x438] sm:$0xff]
    %v3358 = vld [vmem:[#allocation8 + $0x440] sm:$0xff]
    %v3359 = vld [vmem:[#allocation8 + $0x448] sm:$0xff]
    %v3360 = vld [vmem:[#allocation8 + $0x450] sm:$0xff]
    %v3361 = vld [vmem:[#allocation8 + $0x458] sm:$0xff]
    %v3362 = vld [vmem:[#allocation8 + $0x460] sm:$0xff]
    %v3363 = vld [vmem:[#allocation8 + $0x468] sm:$0xff]
    %v3364 = vld [vmem:[#allocation8 + $0x470] sm:$0xff]
    %v3365 = vld [vmem:[#allocation8 + $0x478] sm:$0xff]
    %v3366 = vld [vmem:[#allocation8 + $0x480] sm:$0xff]
    %v3367 = vld [vmem:[#allocation8 + $0x488] sm:$0xff]
    %v3368 = vld [vmem:[#allocation8 + $0x490] sm:$0xff]
    %v3369 = vld [vmem:[#allocation8 + $0x498] sm:$0xff]
    %v3370 = vld [vmem:[#allocation8 + $0x4a0] sm:$0xff]
    %v3371 = vld [vmem:[#allocation8 + $0x4a8] sm:$0xff]
    %v3372 = vld [vmem:[#allocation8 + $0x4b0] sm:$0xff]
    %v3373 = vld [vmem:[#allocation8 + $0x4b8] sm:$0xff]
    %v3374 = vld [vmem:[#allocation8 + $0x4c0] sm:$0xff]
    %v3375 = vld [vmem:[#allocation8 + $0x4c8] sm:$0xff]
    %v3376 = vld [vmem:[#allocation8 + $0x4d0] sm:$0xff]
    %v3377 = vld [vmem:[#allocation8 + $0x4d8] sm:$0xff]
    %v3378 = vld [vmem:[#allocation8 + $0x4e0] sm:$0xff]
    %v3379 = vld [vmem:[#allocation8 + $0x4e8] sm:$0xff]
    %v3380 = vld [vmem:[#allocation8 + $0x4f0] sm:$0xff]
    %v3381 = vld [vmem:[#allocation8 + $0x4f8] sm:$0xff]
    %v3382 = vld [vmem:[#allocation8 + $0x500] sm:$0xff]
    %v3383 = vld [vmem:[#allocation8 + $0x508] sm:$0xff]
    %v3384 = vld [vmem:[#allocation8 + $0x510] sm:$0xff]
    %v3385 = vld [vmem:[#allocation8 + $0x518] sm:$0xff]
    %v3386 = vld [vmem:[#allocation8 + $0x520] sm:$0xff]
    %v3387 = vld [vmem:[#allocation8 + $0x528] sm:$0xff]
    %v3388 = vld [vmem:[#allocation8 + $0x530] sm:$0xff]
    %v3389 = vld [vmem:[#allocation8 + $0x538] sm:$0xff]
    %v3390 = vld [vmem:[#allocation8 + $0x540] sm:$0xff]
    %v3391 = vld [vmem:[#allocation8 + $0x548] sm:$0xff]
    %v3392 = vld [vmem:[#allocation8 + $0x550] sm:$0xff]
    %v3393 = vld [vmem:[#allocation8 + $0x558] sm:$0xff]
    %v3394 = vld [vmem:[#allocation8 + $0x560] sm:$0xff]
    %v3395 = vld [vmem:[#allocation8 + $0x568] sm:$0xff]
    %v3396 = vld [vmem:[#allocation8 + $0x570] sm:$0xff]
    %v3397 = vld [vmem:[#allocation8 + $0x578] sm:$0xff]
    %v3398 = vld [vmem:[#allocation8 + $0x580] sm:$0xff]
    %v3399 = vld [vmem:[#allocation8 + $0x588] sm:$0xff]
    %v3400 = vld [vmem:[#allocation8 + $0x590] sm:$0xff]
    %v3401 = vld [vmem:[#allocation8 + $0x598] sm:$0xff]
    %v3402 = vld [vmem:[#allocation8 + $0x5a0] sm:$0xff]
    %v3403 = vld [vmem:[#allocation8 + $0x5a8] sm:$0xff]
    %v3404 = vld [vmem:[#allocation8 + $0x5b0] sm:$0xff]
    %v3405 = vld [vmem:[#allocation8 + $0x5b8] sm:$0xff]
    %v3406 = vld [vmem:[#allocation8 + $0x5c0] sm:$0xff]
    %v3407 = vld [vmem:[#allocation8 + $0x5c8] sm:$0xff]
    %v3408 = vld [vmem:[#allocation8 + $0x5d0] sm:$0xff]
    %v3409 = vld [vmem:[#allocation8 + $0x5d8] sm:$0xff]
    %v3410 = vld [vmem:[#allocation8 + $0x5e0] sm:$0xff]
    %v3411 = vld [vmem:[#allocation8 + $0x5e8] sm:$0xff]
    %v3412 = vld [vmem:[#allocation8 + $0x5f0] sm:$0xff]
    %v3413 = vld [vmem:[#allocation8 + $0x5f8] sm:$0xff]
    %v3414 = vld [vmem:[#allocation8 + $0x600] sm:$0xff]
    %v3415 = vld [vmem:[#allocation8 + $0x608] sm:$0xff]
    %v3416 = vld [vmem:[#allocation8 + $0x610] sm:$0xff]
    %v3417 = vld [vmem:[#allocation8 + $0x618] sm:$0xff]
    %v3418 = vld [vmem:[#allocation8 + $0x620] sm:$0xff]
    %v3419 = vld [vmem:[#allocation8 + $0x628] sm:$0xff]
    %v3420 = vld [vmem:[#allocation8 + $0x630] sm:$0xff]
    %v3421 = vld [vmem:[#allocation8 + $0x638] sm:$0xff]
    %v3422 = vld [vmem:[#allocation8 + $0x640] sm:$0xff]
    %v3423 = vld [vmem:[#allocation8 + $0x648] sm:$0xff]
    %v3424 = vld [vmem:[#allocation8 + $0x650] sm:$0xff]
    %v3425 = vld [vmem:[#allocation8 + $0x658] sm:$0xff]
    %v3426 = vld [vmem:[#allocation8 + $0x660] sm:$0xff]
    %v3427 = vld [vmem:[#allocation8 + $0x668] sm:$0xff]
    %v3428 = vld [vmem:[#allocation8 + $0x670] sm:$0xff]
    %v3429 = vld [vmem:[#allocation8 + $0x678] sm:$0xff]
    %v3430 = vld [vmem:[#allocation8 + $0x680] sm:$0xff]
    %v3431 = vld [vmem:[#allocation8 + $0x688] sm:$0xff]
    %v3432 = vld [vmem:[#allocation8 + $0x690] sm:$0xff]
    %v3433 = vld [vmem:[#allocation8 + $0x698] sm:$0xff]
    %v3434 = vld [vmem:[#allocation8 + $0x6a0] sm:$0xff]
    %v3435 = vld [vmem:[#allocation8 + $0x6a8] sm:$0xff]
    %v3436 = vld [vmem:[#allocation8 + $0x6b0] sm:$0xff]
    %v3437 = vld [vmem:[#allocation8 + $0x6b8] sm:$0xff]
    %v3438 = vld [vmem:[#allocation8 + $0x6c0] sm:$0xff]
    %v3439 = vld [vmem:[#allocation8 + $0x6c8] sm:$0xff]
    %v3440 = vld [vmem:[#allocation8 + $0x6d0] sm:$0xff]
    %v3441 = vld [vmem:[#allocation8 + $0x6d8] sm:$0xff]
    %v3442 = vld [vmem:[#allocation8 + $0x6e0] sm:$0xff]
    %v3443 = vld [vmem:[#allocation8 + $0x6e8] sm:$0xff]
    %v3444 = vld [vmem:[#allocation8 + $0x6f0] sm:$0xff]
    %v3445 = vld [vmem:[#allocation8 + $0x6f8] sm:$0xff]
    %v3446 = vld [vmem:[#allocation8 + $0x700] sm:$0xff]
    %v3447 = vld [vmem:[#allocation8 + $0x708] sm:$0xff]
    %v3448 = vld [vmem:[#allocation8 + $0x710] sm:$0xff]
    %v3449 = vld [vmem:[#allocation8 + $0x718] sm:$0xff]
    %v3450 = vld [vmem:[#allocation8 + $0x720] sm:$0xff]
    %v3451 = vld [vmem:[#allocation8 + $0x728] sm:$0xff]
    %v3452 = vld [vmem:[#allocation8 + $0x730] sm:$0xff]
    %v3453 = vld [vmem:[#allocation8 + $0x738] sm:$0xff]
    %v3454 = vld [vmem:[#allocation8 + $0x740] sm:$0xff]
    %v3455 = vld [vmem:[#allocation8 + $0x748] sm:$0xff]
    %v3456 = vld [vmem:[#allocation8 + $0x750] sm:$0xff]
    %v3457 = vld [vmem:[#allocation8 + $0x758] sm:$0xff]
    %v3458 = vld [vmem:[#allocation8 + $0x760] sm:$0xff]
    %v3459 = vld [vmem:[#allocation8 + $0x768] sm:$0xff]
    %v3460 = vld [vmem:[#allocation8 + $0x770] sm:$0xff]
    %v3461 = vld [vmem:[#allocation8 + $0x778] sm:$0xff]
    %v3462 = vld [vmem:[#allocation8 + $0x780] sm:$0xff]
    %v3463 = vld [vmem:[#allocation8 + $0x788] sm:$0xff]
    %v3464 = vld [vmem:[#allocation8 + $0x790] sm:$0xff]
    %v3465 = vld [vmem:[#allocation8 + $0x798] sm:$0xff]
    %v3466 = vld [vmem:[#allocation8 + $0x7a0] sm:$0xff]
    %v3467 = vld [vmem:[#allocation8 + $0x7a8] sm:$0xff]
    %v3468 = vld [vmem:[#allocation8 + $0x7b0] sm:$0xff]
    %v3469 = vld [vmem:[#allocation8 + $0x7b8] sm:$0xff]
    %v3470 = vld [vmem:[#allocation8 + $0x7c0] sm:$0xff]
    %v3471 = vld [vmem:[#allocation8 + $0x7c8] sm:$0xff]
    %v3472 = vld [vmem:[#allocation8 + $0x7d0] sm:$0xff]
    %v3473 = vld [vmem:[#allocation8 + $0x7d8] sm:$0xff]
    %v3474 = vld [vmem:[#allocation8 + $0x7e0] sm:$0xff]
    %v3475 = vld [vmem:[#allocation8 + $0x7e8] sm:$0xff]
    %v3476 = vld [vmem:[#allocation8 + $0x7f0] sm:$0xff]
    %v3477 = vld [vmem:[#allocation8 + $0x7f8] sm:$0xff]
    %v3478 = vld [vmem:[#allocation8 + $0x800] sm:$0xff]
    %v3479 = vld [vmem:[#allocation8 + $0x808] sm:$0xff]
    %v3480 = vld [vmem:[#allocation8 + $0x810] sm:$0xff]
    %v3481 = vld [vmem:[#allocation8 + $0x818] sm:$0xff]
    %v3482 = vld [vmem:[#allocation8 + $0x820] sm:$0xff]
    %v3483 = vld [vmem:[#allocation8 + $0x828] sm:$0xff]
    %v3484 = vld [vmem:[#allocation8 + $0x830] sm:$0xff]
    %v3485 = vld [vmem:[#allocation8 + $0x838] sm:$0xff]
    %v3486 = vld [vmem:[#allocation8 + $0x840] sm:$0xff]
    %v3487 = vld [vmem:[#allocation8 + $0x848] sm:$0xff]
    %v3488 = vld [vmem:[#allocation8 + $0x850] sm:$0xff]
    %v3489 = vld [vmem:[#allocation8 + $0x858] sm:$0xff]
    %v3490 = vld [vmem:[#allocation8 + $0x860] sm:$0xff]
    %v3491 = vld [vmem:[#allocation8 + $0x868] sm:$0xff]
    %v3492 = vld [vmem:[#allocation8 + $0x870] sm:$0xff]
    %v3493 = vld [vmem:[#allocation8 + $0x878] sm:$0xff]
    %v3494 = vld [vmem:[#allocation8 + $0x880] sm:$0xff]
    %v3495 = vld [vmem:[#allocation8 + $0x888] sm:$0xff]
    %v3496 = vld [vmem:[#allocation8 + $0x890] sm:$0xff]
    %v3497 = vld [vmem:[#allocation8 + $0x898] sm:$0xff]
    %v3498 = vld [vmem:[#allocation8 + $0x8a0] sm:$0xff]
    %v3499 = vld [vmem:[#allocation8 + $0x8a8] sm:$0xff]
    %v3500 = vld [vmem:[#allocation8 + $0x8b0] sm:$0xff]
    %v3501 = vld [vmem:[#allocation8 + $0x8b8] sm:$0xff]
    %v3502 = vld [vmem:[#allocation8 + $0x8c0] sm:$0xff]
    %v3503 = vld [vmem:[#allocation8 + $0x8c8] sm:$0xff]
    %v3504 = vld [vmem:[#allocation8 + $0x8d0] sm:$0xff]
    %v3505 = vld [vmem:[#allocation8 + $0x8d8] sm:$0xff]
    %v3506 = vld [vmem:[#allocation8 + $0x8e0] sm:$0xff]
    %v3507 = vld [vmem:[#allocation8 + $0x8e8] sm:$0xff]
    %v3508 = vld [vmem:[#allocation8 + $0x8f0] sm:$0xff]
    %v3509 = vld [vmem:[#allocation8 + $0x8f8] sm:$0xff]
    %v3510 = vld [vmem:[#allocation8 + $0x900] sm:$0xff]
    %v3511 = vld [vmem:[#allocation8 + $0x908] sm:$0xff]
    %v3512 = vld [vmem:[#allocation8 + $0x910] sm:$0xff]
    %v3513 = vld [vmem:[#allocation8 + $0x918] sm:$0xff]
    %v3514 = vld [vmem:[#allocation8 + $0x920] sm:$0xff]
    %v3515 = vld [vmem:[#allocation8 + $0x928] sm:$0xff]
    %v3516 = vld [vmem:[#allocation8 + $0x930] sm:$0xff]
    %v3517 = vld [vmem:[#allocation8 + $0x938] sm:$0xff]
    %v3518 = vld [vmem:[#allocation8 + $0x940] sm:$0xff]
    %v3519 = vld [vmem:[#allocation8 + $0x948] sm:$0xff]
    %v3520 = vld [vmem:[#allocation8 + $0x950] sm:$0xff]
    %v3521 = vld [vmem:[#allocation8 + $0x958] sm:$0xff]
    %v3522 = vld [vmem:[#allocation8 + $0x960] sm:$0xff]
    %v3523 = vld [vmem:[#allocation8 + $0x968] sm:$0xff]
    %v3524 = vld [vmem:[#allocation8 + $0x970] sm:$0xff]
    %v3525 = vld [vmem:[#allocation8 + $0x978] sm:$0xff]
    %v3526 = vld [vmem:[#allocation8 + $0x980] sm:$0xff]
    %v3527 = vld [vmem:[#allocation8 + $0x988] sm:$0xff]
    %v3528 = vld [vmem:[#allocation8 + $0x990] sm:$0xff]
    %v3529 = vld [vmem:[#allocation8 + $0x998] sm:$0xff]
    %v3530 = vld [vmem:[#allocation8 + $0x9a0] sm:$0xff]
    %v3531 = vld [vmem:[#allocation8 + $0x9a8] sm:$0xff]
    %v3532 = vld [vmem:[#allocation8 + $0x9b0] sm:$0xff]
    %v3533 = vld [vmem:[#allocation8 + $0x9b8] sm:$0xff]
    %v3534 = vld [vmem:[#allocation8 + $0x9c0] sm:$0xff]
    %v3535 = vld [vmem:[#allocation8 + $0x9c8] sm:$0xff]
    %v3536 = vld [vmem:[#allocation8 + $0x9d0] sm:$0xff]
    %v3537 = vld [vmem:[#allocation8 + $0x9d8] sm:$0xff]
    %v3538 = vld [vmem:[#allocation8 + $0x9e0] sm:$0xff]
    %v3539 = vld [vmem:[#allocation8 + $0x9e8] sm:$0xff]
    %v3540 = vld [vmem:[#allocation8 + $0x9f0] sm:$0xff]
    %v3541 = vld [vmem:[#allocation8 + $0x9f8] sm:$0xff]
    %v3542 = vld [vmem:[#allocation8 + $0xa00] sm:$0xff]
    %v3543 = vld [vmem:[#allocation8 + $0xa08] sm:$0xff]
    %v3544 = vld [vmem:[#allocation8 + $0xa10] sm:$0xff]
    %v3545 = vld [vmem:[#allocation8 + $0xa18] sm:$0xff]
    %v3546 = vld [vmem:[#allocation8 + $0xa20] sm:$0xff]
    %v3547 = vld [vmem:[#allocation8 + $0xa28] sm:$0xff]
    %v3548 = vld [vmem:[#allocation8 + $0xa30] sm:$0xff]
    %v3549 = vld [vmem:[#allocation8 + $0xa38] sm:$0xff]
    %v3550 = vld [vmem:[#allocation8 + $0xa40] sm:$0xff]
    %v3551 = vld [vmem:[#allocation8 + $0xa48] sm:$0xff]
    %v3552 = vld [vmem:[#allocation8 + $0xa50] sm:$0xff]
    %v3553 = vld [vmem:[#allocation8 + $0xa58] sm:$0xff]
    %v3554 = vld [vmem:[#allocation8 + $0xa60] sm:$0xff]
    %v3555 = vld [vmem:[#allocation8 + $0xa68] sm:$0xff]
    %v3556 = vld [vmem:[#allocation8 + $0xa70] sm:$0xff]
    %v3557 = vld [vmem:[#allocation8 + $0xa78] sm:$0xff]
    %v3558 = vld [vmem:[#allocation8 + $0xa80] sm:$0xff]
    %v3559 = vld [vmem:[#allocation8 + $0xa88] sm:$0xff]
    %v3560 = vld [vmem:[#allocation8 + $0xa90] sm:$0xff]
    %v3561 = vld [vmem:[#allocation8 + $0xa98] sm:$0xff]
    %v3562 = vld [vmem:[#allocation8 + $0xaa0] sm:$0xff]
    %v3563 = vld [vmem:[#allocation8 + $0xaa8] sm:$0xff]
    %v3564 = vld [vmem:[#allocation8 + $0xab0] sm:$0xff]
    %v3565 = vld [vmem:[#allocation8 + $0xab8] sm:$0xff]
    %v3566 = vld [vmem:[#allocation8 + $0xac0] sm:$0xff]
    %v3567 = vld [vmem:[#allocation8 + $0xac8] sm:$0xff]
    %v3568 = vld [vmem:[#allocation8 + $0xad0] sm:$0xff]
    %v3569 = vld [vmem:[#allocation8 + $0xad8] sm:$0xff]
    %v3570 = vld [vmem:[#allocation8 + $0xae0] sm:$0xff]
    %v3571 = vld [vmem:[#allocation8 + $0xae8] sm:$0xff]
    %v3572 = vld [vmem:[#allocation8 + $0xaf0] sm:$0xff]
    %v3573 = vld [vmem:[#allocation8 + $0xaf8] sm:$0xff]
    %v3574 = vld [vmem:[#allocation8 + $0xb00] sm:$0xff]
    %v3575 = vld [vmem:[#allocation8 + $0xb08] sm:$0xff]
    %v3576 = vld [vmem:[#allocation8 + $0xb10] sm:$0xff]
    %v3577 = vld [vmem:[#allocation8 + $0xb18] sm:$0xff]
    %v3578 = vld [vmem:[#allocation8 + $0xb20] sm:$0xff]
    %v3579 = vld [vmem:[#allocation8 + $0xb28] sm:$0xff]
    %v3580 = vld [vmem:[#allocation8 + $0xb30] sm:$0xff]
    %v3581 = vld [vmem:[#allocation8 + $0xb38] sm:$0xff]
    %v3582 = vld [vmem:[#allocation8 + $0xb40] sm:$0xff]
    %v3583 = vld [vmem:[#allocation8 + $0xb48] sm:$0xff]
    %v3584 = vld [vmem:[#allocation8 + $0xb50] sm:$0xff]
    %v3585 = vld [vmem:[#allocation8 + $0xb58] sm:$0xff]
    %v3586 = vld [vmem:[#allocation8 + $0xb60] sm:$0xff]
    %v3587 = vld [vmem:[#allocation8 + $0xb68] sm:$0xff]
    %v3588 = vld [vmem:[#allocation8 + $0xb70] sm:$0xff]
    %v3589 = vld [vmem:[#allocation8 + $0xb78] sm:$0xff]
    %v3590 = vld [vmem:[#allocation8 + $0xb80] sm:$0xff]
    %v3591 = vld [vmem:[#allocation8 + $0xb88] sm:$0xff]
    %v3592 = vld [vmem:[#allocation8 + $0xb90] sm:$0xff]
    %v3593 = vld [vmem:[#allocation8 + $0xb98] sm:$0xff]
    %v3594 = vld [vmem:[#allocation8 + $0xba0] sm:$0xff]
    %v3595 = vld [vmem:[#allocation8 + $0xba8] sm:$0xff]
    %v3596 = vld [vmem:[#allocation8 + $0xbb0] sm:$0xff]
    %v3597 = vld [vmem:[#allocation8 + $0xbb8] sm:$0xff]
    %v3598 = vld [vmem:[#allocation8 + $0xbc0] sm:$0xff]
    %v3599 = vld [vmem:[#allocation8 + $0xbc8] sm:$0xff]
    %v3600 = vld [vmem:[#allocation8 + $0xbd0] sm:$0xff]
    %v3601 = vld [vmem:[#allocation8 + $0xbd8] sm:$0xff]
    %v3602 = vld [vmem:[#allocation8 + $0xbe0] sm:$0xff]
    %v3603 = vld [vmem:[#allocation8 + $0xbe8] sm:$0xff]
    %v3604 = vld [vmem:[#allocation8 + $0xbf0] sm:$0xff]
    %v3605 = vld [vmem:[#allocation8 + $0xbf8] sm:$0xff]
    %v3606 = vld [vmem:[#allocation10] sm:$0x3f]
    %v3608 = vlaneseq
    %v3609 = vshrl.u32 %v3608, 7
    %v3610 = vsub.s32 0, %v3609
    %v3611 = vrot.slane %v3606, %v3610
    %v3612 = vlaneseq
    %v3613 = vshrl.u32 %v3612, 7
    %v3614 = vsub.s32 1, %v3613
    %v3615 = vrot.slane %v3606, %v3614
    %v3616 = vlaneseq
    %v3617 = vshrl.u32 %v3616, 7
    %v3618 = vsub.s32 2, %v3617
    %v3619 = vrot.slane %v3606, %v3618
    %v3620 = vlaneseq
    %v3621 = vshrl.u32 %v3620, 7
    %v3622 = vsub.s32 3, %v3621
    %v3623 = vrot.slane %v3606, %v3622
    %v3624 = vlaneseq
    %v3625 = vshrl.u32 %v3624, 7
    %v3626 = vsub.s32 4, %v3625
    %v3627 = vrot.slane %v3606, %v3626
    %v3628 = vlaneseq
    %v3629 = vshrl.u32 %v3628, 7
    %v3630 = vsub.s32 5, %v3629
    %v3631 = vrot.slane %v3606, %v3630
    %v4022 = vunpack.c.l.b16 %v3222
    %v4023 = vunpack.c.h.b16 %v3222
    %v4024 = vunpack.c.l.b16 %v3223
    %v4025 = vunpack.c.h.b16 %v3223
    %v4026 = vunpack.c.l.b16 %v3224
    %v4027 = vunpack.c.h.b16 %v3224
    %v4028 = vunpack.c.l.b16 %v3225
    %v4029 = vunpack.c.h.b16 %v3225
    %v4030 = vunpack.c.l.b16 %v3226
    %v4031 = vunpack.c.h.b16 %v3226
    %v4032 = vunpack.c.l.b16 %v3227
    %v4033 = vunpack.c.h.b16 %v3227
    %v4034 = vunpack.c.l.b16 %v3228
    %v4035 = vunpack.c.h.b16 %v3228
    %v4036 = vunpack.c.l.b16 %v3229
    %v4037 = vunpack.c.h.b16 %v3229
    %v4038 = vunpack.c.l.b16 %v3230
    %v4039 = vunpack.c.h.b16 %v3230
    %v4040 = vunpack.c.l.b16 %v3231
    %v4041 = vunpack.c.h.b16 %v3231
    %v4042 = vunpack.c.l.b16 %v3232
    %v4043 = vunpack.c.h.b16 %v3232
    %v4044 = vunpack.c.l.b16 %v3233
    %v4045 = vunpack.c.h.b16 %v3233
    %v4046 = vunpack.c.l.b16 %v3234
    %v4047 = vunpack.c.h.b16 %v3234
    %v4048 = vunpack.c.l.b16 %v3235
    %v4049 = vunpack.c.h.b16 %v3235
    %v4050 = vunpack.c.l.b16 %v3236
    %v4051 = vunpack.c.h.b16 %v3236
    %v4052 = vunpack.c.l.b16 %v3237
    %v4053 = vunpack.c.h.b16 %v3237
    %v4054 = vunpack.c.l.b16 %v3238
    %v4055 = vunpack.c.h.b16 %v3238
    %v4056 = vunpack.c.l.b16 %v3239
    %v4057 = vunpack.c.h.b16 %v3239
    %v4058 = vunpack.c.l.b16 %v3240
    %v4059 = vunpack.c.h.b16 %v3240
    %v4060 = vunpack.c.l.b16 %v3241
    %v4061 = vunpack.c.h.b16 %v3241
    %v4062 = vunpack.c.l.b16 %v3242
    %v4063 = vunpack.c.h.b16 %v3242
    %v4064 = vunpack.c.l.b16 %v3243
    %v4065 = vunpack.c.h.b16 %v3243
    %v4066 = vunpack.c.l.b16 %v3244
    %v4067 = vunpack.c.h.b16 %v3244
    %v4068 = vunpack.c.l.b16 %v3245
    %v4069 = vunpack.c.h.b16 %v3245
    %v4070 = vunpack.c.l.b16 %v3246
    %v4071 = vunpack.c.h.b16 %v3246
    %v4072 = vunpack.c.l.b16 %v3247
    %v4073 = vunpack.c.h.b16 %v3247
    %v4074 = vunpack.c.l.b16 %v3248
    %v4075 = vunpack.c.h.b16 %v3248
    %v4076 = vunpack.c.l.b16 %v3249
    %v4077 = vunpack.c.h.b16 %v3249
    %v4078 = vunpack.c.l.b16 %v3250
    %v4079 = vunpack.c.h.b16 %v3250
    %v4080 = vunpack.c.l.b16 %v3251
    %v4081 = vunpack.c.h.b16 %v3251
    %v4082 = vunpack.c.l.b16 %v3252
    %v4083 = vunpack.c.h.b16 %v3252
    %v4084 = vunpack.c.l.b16 %v3253
    %v4085 = vunpack.c.h.b16 %v3253
    %v4086 = vunpack.c.l.b16 %v3254
    %v4087 = vunpack.c.h.b16 %v3254
    %v4088 = vunpack.c.l.b16 %v3255
    %v4089 = vunpack.c.h.b16 %v3255
    %v4090 = vunpack.c.l.b16 %v3256
    %v4091 = vunpack.c.h.b16 %v3256
    %v4092 = vunpack.c.l.b16 %v3257
    %v4093 = vunpack.c.h.b16 %v3257
    %v4094 = vunpack.c.l.b16 %v3258
    %v4095 = vunpack.c.h.b16 %v3258
    %v4096 = vunpack.c.l.b16 %v3259
    %v4097 = vunpack.c.h.b16 %v3259
    %v4098 = vunpack.c.l.b16 %v3260
    %v4099 = vunpack.c.h.b16 %v3260
    %v4100 = vunpack.c.l.b16 %v3261
    %v4101 = vunpack.c.h.b16 %v3261
    %v4102 = vunpack.c.l.b16 %v3262
    %v4103 = vunpack.c.h.b16 %v3262
    %v4104 = vunpack.c.l.b16 %v3263
    %v4105 = vunpack.c.h.b16 %v3263
    %v4106 = vunpack.c.l.b16 %v3264
    %v4107 = vunpack.c.h.b16 %v3264
    %v4108 = vunpack.c.l.b16 %v3265
    %v4109 = vunpack.c.h.b16 %v3265
    %v4110 = vunpack.c.l.b16 %v3266
    %v4111 = vunpack.c.h.b16 %v3266
    %v4112 = vunpack.c.l.b16 %v3267
    %v4113 = vunpack.c.h.b16 %v3267
    %v4114 = vunpack.c.l.b16 %v3268
    %v4115 = vunpack.c.h.b16 %v3268
    %v4116 = vunpack.c.l.b16 %v3269
    %v4117 = vunpack.c.h.b16 %v3269
    %v4118 = vunpack.c.l.b16 %v3270
    %v4119 = vunpack.c.h.b16 %v3270
    %v4120 = vunpack.c.l.b16 %v3271
    %v4121 = vunpack.c.h.b16 %v3271
    %v4122 = vunpack.c.l.b16 %v3272
    %v4123 = vunpack.c.h.b16 %v3272
    %v4124 = vunpack.c.l.b16 %v3273
    %v4125 = vunpack.c.h.b16 %v3273
    %v4126 = vunpack.c.l.b16 %v3274
    %v4127 = vunpack.c.h.b16 %v3274
    %v4128 = vunpack.c.l.b16 %v3275
    %v4129 = vunpack.c.h.b16 %v3275
    %v4130 = vunpack.c.l.b16 %v3276
    %v4131 = vunpack.c.h.b16 %v3276
    %v4132 = vunpack.c.l.b16 %v3277
    %v4133 = vunpack.c.h.b16 %v3277
    %v4134 = vunpack.c.l.b16 %v3278
    %v4135 = vunpack.c.h.b16 %v3278
    %v4136 = vunpack.c.l.b16 %v3279
    %v4137 = vunpack.c.h.b16 %v3279
    %v4138 = vunpack.c.l.b16 %v3280
    %v4139 = vunpack.c.h.b16 %v3280
    %v4140 = vunpack.c.l.b16 %v3281
    %v4141 = vunpack.c.h.b16 %v3281
    %v4142 = vunpack.c.l.b16 %v3282
    %v4143 = vunpack.c.h.b16 %v3282
    %v4144 = vunpack.c.l.b16 %v3283
    %v4145 = vunpack.c.h.b16 %v3283
    %v4146 = vunpack.c.l.b16 %v3284
    %v4147 = vunpack.c.h.b16 %v3284
    %v4148 = vunpack.c.l.b16 %v3285
    %v4149 = vunpack.c.h.b16 %v3285
    %v4150 = vunpack.c.l.b16 %v3286
    %v4151 = vunpack.c.h.b16 %v3286
    %v4152 = vunpack.c.l.b16 %v3287
    %v4153 = vunpack.c.h.b16 %v3287
    %v4154 = vunpack.c.l.b16 %v3288
    %v4155 = vunpack.c.h.b16 %v3288
    %v4156 = vunpack.c.l.b16 %v3289
    %v4157 = vunpack.c.h.b16 %v3289
    %v4158 = vunpack.c.l.b16 %v3290
    %v4159 = vunpack.c.h.b16 %v3290
    %v4160 = vunpack.c.l.b16 %v3291
    %v4161 = vunpack.c.h.b16 %v3291
    %v4162 = vunpack.c.l.b16 %v3292
    %v4163 = vunpack.c.h.b16 %v3292
    %v4164 = vunpack.c.l.b16 %v3293
    %v4165 = vunpack.c.h.b16 %v3293
    %v4166 = vunpack.c.l.b16 %v3294
    %v4167 = vunpack.c.h.b16 %v3294
    %v4168 = vunpack.c.l.b16 %v3295
    %v4169 = vunpack.c.h.b16 %v3295
    %v4170 = vunpack.c.l.b16 %v3296
    %v4171 = vunpack.c.h.b16 %v3296
    %v4172 = vunpack.c.l.b16 %v3297
    %v4173 = vunpack.c.h.b16 %v3297
    %v4174 = vunpack.c.l.b16 %v3298
    %v4175 = vunpack.c.h.b16 %v3298
    %v4176 = vunpack.c.l.b16 %v3299
    %v4177 = vunpack.c.h.b16 %v3299
    %v4178 = vunpack.c.l.b16 %v3300
    %v4179 = vunpack.c.h.b16 %v3300
    %v4180 = vunpack.c.l.b16 %v3301
    %v4181 = vunpack.c.h.b16 %v3301
    %v4182 = vunpack.c.l.b16 %v3302
    %v4183 = vunpack.c.h.b16 %v3302
    %v4184 = vunpack.c.l.b16 %v3303
    %v4185 = vunpack.c.h.b16 %v3303
    %v4186 = vunpack.c.l.b16 %v3304
    %v4187 = vunpack.c.h.b16 %v3304
    %v4188 = vunpack.c.l.b16 %v3305
    %v4189 = vunpack.c.h.b16 %v3305
    %v4190 = vunpack.c.l.b16 %v3306
    %v4191 = vunpack.c.h.b16 %v3306
    %v4192 = vunpack.c.l.b16 %v3307
    %v4193 = vunpack.c.h.b16 %v3307
    %v4194 = vunpack.c.l.b16 %v3308
    %v4195 = vunpack.c.h.b16 %v3308
    %v4196 = vunpack.c.l.b16 %v3309
    %v4197 = vunpack.c.h.b16 %v3309
    %v4198 = vunpack.c.l.b16 %v3310
    %v4199 = vunpack.c.h.b16 %v3310
    %v4200 = vunpack.c.l.b16 %v3311
    %v4201 = vunpack.c.h.b16 %v3311
    %v4202 = vunpack.c.l.b16 %v3312
    %v4203 = vunpack.c.h.b16 %v3312
    %v4204 = vunpack.c.l.b16 %v3313
    %v4205 = vunpack.c.h.b16 %v3313
    %v4206 = vunpack.c.l.b16 %v3314
    %v4207 = vunpack.c.h.b16 %v3314
    %v4208 = vunpack.c.l.b16 %v3315
    %v4209 = vunpack.c.h.b16 %v3315
    %v4210 = vunpack.c.l.b16 %v3316
    %v4211 = vunpack.c.h.b16 %v3316
    %v4212 = vunpack.c.l.b16 %v3317
    %v4213 = vunpack.c.h.b16 %v3317
    %v4214 = vunpack.c.l.b16 %v3318
    %v4215 = vunpack.c.h.b16 %v3318
    %v4216 = vunpack.c.l.b16 %v3319
    %v4217 = vunpack.c.h.b16 %v3319
    %v4218 = vunpack.c.l.b16 %v3320
    %v4219 = vunpack.c.h.b16 %v3320
    %v4220 = vunpack.c.l.b16 %v3321
    %v4221 = vunpack.c.h.b16 %v3321
    %v4222 = vunpack.c.l.b16 %v3322
    %v4223 = vunpack.c.h.b16 %v3322
    %v4224 = vunpack.c.l.b16 %v3323
    %v4225 = vunpack.c.h.b16 %v3323
    %v4226 = vunpack.c.l.b16 %v3324
    %v4227 = vunpack.c.h.b16 %v3324
    %v4228 = vunpack.c.l.b16 %v3325
    %v4229 = vunpack.c.h.b16 %v3325
    %v4230 = vunpack.c.l.b16 %v3326
    %v4231 = vunpack.c.h.b16 %v3326
    %v4232 = vunpack.c.l.b16 %v3327
    %v4233 = vunpack.c.h.b16 %v3327
    %v4234 = vunpack.c.l.b16 %v3328
    %v4235 = vunpack.c.h.b16 %v3328
    %v4236 = vunpack.c.l.b16 %v3329
    %v4237 = vunpack.c.h.b16 %v3329
    %v4238 = vunpack.c.l.b16 %v3330
    %v4239 = vunpack.c.h.b16 %v3330
    %v4240 = vunpack.c.l.b16 %v3331
    %v4241 = vunpack.c.h.b16 %v3331
    %v4242 = vunpack.c.l.b16 %v3332
    %v4243 = vunpack.c.h.b16 %v3332
    %v4244 = vunpack.c.l.b16 %v3333
    %v4245 = vunpack.c.h.b16 %v3333
    %v4246 = vunpack.c.l.b16 %v3334
    %v4247 = vunpack.c.h.b16 %v3334
    %v4248 = vunpack.c.l.b16 %v3335
    %v4249 = vunpack.c.h.b16 %v3335
    %v4250 = vunpack.c.l.b16 %v3336
    %v4251 = vunpack.c.h.b16 %v3336
    %v4252 = vunpack.c.l.b16 %v3337
    %v4253 = vunpack.c.h.b16 %v3337
    %v4254 = vunpack.c.l.b16 %v3338
    %v4255 = vunpack.c.h.b16 %v3338
    %v4256 = vunpack.c.l.b16 %v3339
    %v4257 = vunpack.c.h.b16 %v3339
    %v4258 = vunpack.c.l.b16 %v3340
    %v4259 = vunpack.c.h.b16 %v3340
    %v4260 = vunpack.c.l.b16 %v3341
    %v4261 = vunpack.c.h.b16 %v3341
    %v4262 = vunpack.c.l.b16 %v3342
    %v4263 = vunpack.c.h.b16 %v3342
    %v4264 = vunpack.c.l.b16 %v3343
    %v4265 = vunpack.c.h.b16 %v3343
    %v4266 = vunpack.c.l.b16 %v3344
    %v4267 = vunpack.c.h.b16 %v3344
    %v4268 = vunpack.c.l.b16 %v3345
    %v4269 = vunpack.c.h.b16 %v3345
    %v4270 = vunpack.c.l.b16 %v3346
    %v4271 = vunpack.c.h.b16 %v3346
    %v4272 = vunpack.c.l.b16 %v3347
    %v4273 = vunpack.c.h.b16 %v3347
    %v4274 = vunpack.c.l.b16 %v3348
    %v4275 = vunpack.c.h.b16 %v3348
    %v4276 = vunpack.c.l.b16 %v3349
    %v4277 = vunpack.c.h.b16 %v3349
    %v4278 = vunpack.c.l.b16 %v3350
    %v4279 = vunpack.c.h.b16 %v3350
    %v4280 = vunpack.c.l.b16 %v3351
    %v4281 = vunpack.c.h.b16 %v3351
    %v4282 = vunpack.c.l.b16 %v3352
    %v4283 = vunpack.c.h.b16 %v3352
    %v4284 = vunpack.c.l.b16 %v3353
    %v4285 = vunpack.c.h.b16 %v3353
    %v4286 = vunpack.c.l.b16 %v3354
    %v4287 = vunpack.c.h.b16 %v3354
    %v4288 = vunpack.c.l.b16 %v3355
    %v4289 = vunpack.c.h.b16 %v3355
    %v4290 = vunpack.c.l.b16 %v3356
    %v4291 = vunpack.c.h.b16 %v3356
    %v4292 = vunpack.c.l.b16 %v3357
    %v4293 = vunpack.c.h.b16 %v3357
    %v4294 = vunpack.c.l.b16 %v3358
    %v4295 = vunpack.c.h.b16 %v3358
    %v4296 = vunpack.c.l.b16 %v3359
    %v4297 = vunpack.c.h.b16 %v3359
    %v4298 = vunpack.c.l.b16 %v3360
    %v4299 = vunpack.c.h.b16 %v3360
    %v4300 = vunpack.c.l.b16 %v3361
    %v4301 = vunpack.c.h.b16 %v3361
    %v4302 = vunpack.c.l.b16 %v3362
    %v4303 = vunpack.c.h.b16 %v3362
    %v4304 = vunpack.c.l.b16 %v3363
    %v4305 = vunpack.c.h.b16 %v3363
    %v4306 = vunpack.c.l.b16 %v3364
    %v4307 = vunpack.c.h.b16 %v3364
    %v4308 = vunpack.c.l.b16 %v3365
    %v4309 = vunpack.c.h.b16 %v3365
    %v4310 = vunpack.c.l.b16 %v3366
    %v4311 = vunpack.c.h.b16 %v3366
    %v4312 = vunpack.c.l.b16 %v3367
    %v4313 = vunpack.c.h.b16 %v3367
    %v4314 = vunpack.c.l.b16 %v3368
    %v4315 = vunpack.c.h.b16 %v3368
    %v4316 = vunpack.c.l.b16 %v3369
    %v4317 = vunpack.c.h.b16 %v3369
    %v4318 = vunpack.c.l.b16 %v3370
    %v4319 = vunpack.c.h.b16 %v3370
    %v4320 = vunpack.c.l.b16 %v3371
    %v4321 = vunpack.c.h.b16 %v3371
    %v4322 = vunpack.c.l.b16 %v3372
    %v4323 = vunpack.c.h.b16 %v3372
    %v4324 = vunpack.c.l.b16 %v3373
    %v4325 = vunpack.c.h.b16 %v3373
    %v4326 = vunpack.c.l.b16 %v3374
    %v4327 = vunpack.c.h.b16 %v3374
    %v4328 = vunpack.c.l.b16 %v3375
    %v4329 = vunpack.c.h.b16 %v3375
    %v4330 = vunpack.c.l.b16 %v3376
    %v4331 = vunpack.c.h.b16 %v3376
    %v4332 = vunpack.c.l.b16 %v3377
    %v4333 = vunpack.c.h.b16 %v3377
    %v4334 = vunpack.c.l.b16 %v3378
    %v4335 = vunpack.c.h.b16 %v3378
    %v4336 = vunpack.c.l.b16 %v3379
    %v4337 = vunpack.c.h.b16 %v3379
    %v4338 = vunpack.c.l.b16 %v3380
    %v4339 = vunpack.c.h.b16 %v3380
    %v4340 = vunpack.c.l.b16 %v3381
    %v4341 = vunpack.c.h.b16 %v3381
    %v4342 = vunpack.c.l.b16 %v3382
    %v4343 = vunpack.c.h.b16 %v3382
    %v4344 = vunpack.c.l.b16 %v3383
    %v4345 = vunpack.c.h.b16 %v3383
    %v4346 = vunpack.c.l.b16 %v3384
    %v4347 = vunpack.c.h.b16 %v3384
    %v4348 = vunpack.c.l.b16 %v3385
    %v4349 = vunpack.c.h.b16 %v3385
    %v4350 = vunpack.c.l.b16 %v3386
    %v4351 = vunpack.c.h.b16 %v3386
    %v4352 = vunpack.c.l.b16 %v3387
    %v4353 = vunpack.c.h.b16 %v3387
    %v4354 = vunpack.c.l.b16 %v3388
    %v4355 = vunpack.c.h.b16 %v3388
    %v4356 = vunpack.c.l.b16 %v3389
    %v4357 = vunpack.c.h.b16 %v3389
    %v4358 = vunpack.c.l.b16 %v3390
    %v4359 = vunpack.c.h.b16 %v3390
    %v4360 = vunpack.c.l.b16 %v3391
    %v4361 = vunpack.c.h.b16 %v3391
    %v4362 = vunpack.c.l.b16 %v3392
    %v4363 = vunpack.c.h.b16 %v3392
    %v4364 = vunpack.c.l.b16 %v3393
    %v4365 = vunpack.c.h.b16 %v3393
    %v4366 = vunpack.c.l.b16 %v3394
    %v4367 = vunpack.c.h.b16 %v3394
    %v4368 = vunpack.c.l.b16 %v3395
    %v4369 = vunpack.c.h.b16 %v3395
    %v4370 = vunpack.c.l.b16 %v3396
    %v4371 = vunpack.c.h.b16 %v3396
    %v4372 = vunpack.c.l.b16 %v3397
    %v4373 = vunpack.c.h.b16 %v3397
    %v4374 = vunpack.c.l.b16 %v3398
    %v4375 = vunpack.c.h.b16 %v3398
    %v4376 = vunpack.c.l.b16 %v3399
    %v4377 = vunpack.c.h.b16 %v3399
    %v4378 = vunpack.c.l.b16 %v3400
    %v4379 = vunpack.c.h.b16 %v3400
    %v4380 = vunpack.c.l.b16 %v3401
    %v4381 = vunpack.c.h.b16 %v3401
    %v4382 = vunpack.c.l.b16 %v3402
    %v4383 = vunpack.c.h.b16 %v3402
    %v4384 = vunpack.c.l.b16 %v3403
    %v4385 = vunpack.c.h.b16 %v3403
    %v4386 = vunpack.c.l.b16 %v3404
    %v4387 = vunpack.c.h.b16 %v3404
    %v4388 = vunpack.c.l.b16 %v3405
    %v4389 = vunpack.c.h.b16 %v3405
    %v4390 = vunpack.c.l.b16 %v3406
    %v4391 = vunpack.c.h.b16 %v3406
    %v4392 = vunpack.c.l.b16 %v3407
    %v4393 = vunpack.c.h.b16 %v3407
    %v4394 = vunpack.c.l.b16 %v3408
    %v4395 = vunpack.c.h.b16 %v3408
    %v4396 = vunpack.c.l.b16 %v3409
    %v4397 = vunpack.c.h.b16 %v3409
    %v4398 = vunpack.c.l.b16 %v3410
    %v4399 = vunpack.c.h.b16 %v3410
    %v4400 = vunpack.c.l.b16 %v3411
    %v4401 = vunpack.c.h.b16 %v3411
    %v4402 = vunpack.c.l.b16 %v3412
    %v4403 = vunpack.c.h.b16 %v3412
    %v4404 = vunpack.c.l.b16 %v3413
    %v4405 = vunpack.c.h.b16 %v3413
    %v4406 = vunpack.c.l.b16 %v3414
    %v4407 = vunpack.c.h.b16 %v3414
    %v4408 = vunpack.c.l.b16 %v3415
    %v4409 = vunpack.c.h.b16 %v3415
    %v4410 = vunpack.c.l.b16 %v3416
    %v4411 = vunpack.c.h.b16 %v3416
    %v4412 = vunpack.c.l.b16 %v3417
    %v4413 = vunpack.c.h.b16 %v3417
    %v4414 = vunpack.c.l.b16 %v3418
    %v4415 = vunpack.c.h.b16 %v3418
    %v4416 = vunpack.c.l.b16 %v3419
    %v4417 = vunpack.c.h.b16 %v3419
    %v4418 = vunpack.c.l.b16 %v3420
    %v4419 = vunpack.c.h.b16 %v3420
    %v4420 = vunpack.c.l.b16 %v3421
    %v4421 = vunpack.c.h.b16 %v3421
    %v4422 = vunpack.c.l.b16 %v3422
    %v4423 = vunpack.c.h.b16 %v3422
    %v4424 = vunpack.c.l.b16 %v3423
    %v4425 = vunpack.c.h.b16 %v3423
    %v4426 = vunpack.c.l.b16 %v3424
    %v4427 = vunpack.c.h.b16 %v3424
    %v4428 = vunpack.c.l.b16 %v3425
    %v4429 = vunpack.c.h.b16 %v3425
    %v4430 = vunpack.c.l.b16 %v3426
    %v4431 = vunpack.c.h.b16 %v3426
    %v4432 = vunpack.c.l.b16 %v3427
    %v4433 = vunpack.c.h.b16 %v3427
    %v4434 = vunpack.c.l.b16 %v3428
    %v4435 = vunpack.c.h.b16 %v3428
    %v4436 = vunpack.c.l.b16 %v3429
    %v4437 = vunpack.c.h.b16 %v3429
    %v4438 = vunpack.c.l.b16 %v3430
    %v4439 = vunpack.c.h.b16 %v3430
    %v4440 = vunpack.c.l.b16 %v3431
    %v4441 = vunpack.c.h.b16 %v3431
    %v4442 = vunpack.c.l.b16 %v3432
    %v4443 = vunpack.c.h.b16 %v3432
    %v4444 = vunpack.c.l.b16 %v3433
    %v4445 = vunpack.c.h.b16 %v3433
    %v4446 = vunpack.c.l.b16 %v3434
    %v4447 = vunpack.c.h.b16 %v3434
    %v4448 = vunpack.c.l.b16 %v3435
    %v4449 = vunpack.c.h.b16 %v3435
    %v4450 = vunpack.c.l.b16 %v3436
    %v4451 = vunpack.c.h.b16 %v3436
    %v4452 = vunpack.c.l.b16 %v3437
    %v4453 = vunpack.c.h.b16 %v3437
    %v4454 = vunpack.c.l.b16 %v3438
    %v4455 = vunpack.c.h.b16 %v3438
    %v4456 = vunpack.c.l.b16 %v3439
    %v4457 = vunpack.c.h.b16 %v3439
    %v4458 = vunpack.c.l.b16 %v3440
    %v4459 = vunpack.c.h.b16 %v3440
    %v4460 = vunpack.c.l.b16 %v3441
    %v4461 = vunpack.c.h.b16 %v3441
    %v4462 = vunpack.c.l.b16 %v3442
    %v4463 = vunpack.c.h.b16 %v3442
    %v4464 = vunpack.c.l.b16 %v3443
    %v4465 = vunpack.c.h.b16 %v3443
    %v4466 = vunpack.c.l.b16 %v3444
    %v4467 = vunpack.c.h.b16 %v3444
    %v4468 = vunpack.c.l.b16 %v3445
    %v4469 = vunpack.c.h.b16 %v3445
    %v4470 = vunpack.c.l.b16 %v3446
    %v4471 = vunpack.c.h.b16 %v3446
    %v4472 = vunpack.c.l.b16 %v3447
    %v4473 = vunpack.c.h.b16 %v3447
    %v4474 = vunpack.c.l.b16 %v3448
    %v4475 = vunpack.c.h.b16 %v3448
    %v4476 = vunpack.c.l.b16 %v3449
    %v4477 = vunpack.c.h.b16 %v3449
    %v4478 = vunpack.c.l.b16 %v3450
    %v4479 = vunpack.c.h.b16 %v3450
    %v4480 = vunpack.c.l.b16 %v3451
    %v4481 = vunpack.c.h.b16 %v3451
    %v4482 = vunpack.c.l.b16 %v3452
    %v4483 = vunpack.c.h.b16 %v3452
    %v4484 = vunpack.c.l.b16 %v3453
    %v4485 = vunpack.c.h.b16 %v3453
    %v4486 = vunpack.c.l.b16 %v3454
    %v4487 = vunpack.c.h.b16 %v3454
    %v4488 = vunpack.c.l.b16 %v3455
    %v4489 = vunpack.c.h.b16 %v3455
    %v4490 = vunpack.c.l.b16 %v3456
    %v4491 = vunpack.c.h.b16 %v3456
    %v4492 = vunpack.c.l.b16 %v3457
    %v4493 = vunpack.c.h.b16 %v3457
    %v4494 = vunpack.c.l.b16 %v3458
    %v4495 = vunpack.c.h.b16 %v3458
    %v4496 = vunpack.c.l.b16 %v3459
    %v4497 = vunpack.c.h.b16 %v3459
    %v4498 = vunpack.c.l.b16 %v3460
    %v4499 = vunpack.c.h.b16 %v3460
    %v4500 = vunpack.c.l.b16 %v3461
    %v4501 = vunpack.c.h.b16 %v3461
    %v4502 = vunpack.c.l.b16 %v3462
    %v4503 = vunpack.c.h.b16 %v3462
    %v4504 = vunpack.c.l.b16 %v3463
    %v4505 = vunpack.c.h.b16 %v3463
    %v4506 = vunpack.c.l.b16 %v3464
    %v4507 = vunpack.c.h.b16 %v3464
    %v4508 = vunpack.c.l.b16 %v3465
    %v4509 = vunpack.c.h.b16 %v3465
    %v4510 = vunpack.c.l.b16 %v3466
    %v4511 = vunpack.c.h.b16 %v3466
    %v4512 = vunpack.c.l.b16 %v3467
    %v4513 = vunpack.c.h.b16 %v3467
    %v4514 = vunpack.c.l.b16 %v3468
    %v4515 = vunpack.c.h.b16 %v3468
    %v4516 = vunpack.c.l.b16 %v3469
    %v4517 = vunpack.c.h.b16 %v3469
    %v4518 = vunpack.c.l.b16 %v3470
    %v4519 = vunpack.c.h.b16 %v3470
    %v4520 = vunpack.c.l.b16 %v3471
    %v4521 = vunpack.c.h.b16 %v3471
    %v4522 = vunpack.c.l.b16 %v3472
    %v4523 = vunpack.c.h.b16 %v3472
    %v4524 = vunpack.c.l.b16 %v3473
    %v4525 = vunpack.c.h.b16 %v3473
    %v4526 = vunpack.c.l.b16 %v3474
    %v4527 = vunpack.c.h.b16 %v3474
    %v4528 = vunpack.c.l.b16 %v3475
    %v4529 = vunpack.c.h.b16 %v3475
    %v4530 = vunpack.c.l.b16 %v3476
    %v4531 = vunpack.c.h.b16 %v3476
    %v4532 = vunpack.c.l.b16 %v3477
    %v4533 = vunpack.c.h.b16 %v3477
    %v4534 = vunpack.c.l.b16 %v3478
    %v4535 = vunpack.c.h.b16 %v3478
    %v4536 = vunpack.c.l.b16 %v3479
    %v4537 = vunpack.c.h.b16 %v3479
    %v4538 = vunpack.c.l.b16 %v3480
    %v4539 = vunpack.c.h.b16 %v3480
    %v4540 = vunpack.c.l.b16 %v3481
    %v4541 = vunpack.c.h.b16 %v3481
    %v4542 = vunpack.c.l.b16 %v3482
    %v4543 = vunpack.c.h.b16 %v3482
    %v4544 = vunpack.c.l.b16 %v3483
    %v4545 = vunpack.c.h.b16 %v3483
    %v4546 = vunpack.c.l.b16 %v3484
    %v4547 = vunpack.c.h.b16 %v3484
    %v4548 = vunpack.c.l.b16 %v3485
    %v4549 = vunpack.c.h.b16 %v3485
    %v4550 = vunpack.c.l.b16 %v3486
    %v4551 = vunpack.c.h.b16 %v3486
    %v4552 = vunpack.c.l.b16 %v3487
    %v4553 = vunpack.c.h.b16 %v3487
    %v4554 = vunpack.c.l.b16 %v3488
    %v4555 = vunpack.c.h.b16 %v3488
    %v4556 = vunpack.c.l.b16 %v3489
    %v4557 = vunpack.c.h.b16 %v3489
    %v4558 = vunpack.c.l.b16 %v3490
    %v4559 = vunpack.c.h.b16 %v3490
    %v4560 = vunpack.c.l.b16 %v3491
    %v4561 = vunpack.c.h.b16 %v3491
    %v4562 = vunpack.c.l.b16 %v3492
    %v4563 = vunpack.c.h.b16 %v3492
    %v4564 = vunpack.c.l.b16 %v3493
    %v4565 = vunpack.c.h.b16 %v3493
    %v4566 = vunpack.c.l.b16 %v3494
    %v4567 = vunpack.c.h.b16 %v3494
    %v4568 = vunpack.c.l.b16 %v3495
    %v4569 = vunpack.c.h.b16 %v3495
    %v4570 = vunpack.c.l.b16 %v3496
    %v4571 = vunpack.c.h.b16 %v3496
    %v4572 = vunpack.c.l.b16 %v3497
    %v4573 = vunpack.c.h.b16 %v3497
    %v4574 = vunpack.c.l.b16 %v3498
    %v4575 = vunpack.c.h.b16 %v3498
    %v4576 = vunpack.c.l.b16 %v3499
    %v4577 = vunpack.c.h.b16 %v3499
    %v4578 = vunpack.c.l.b16 %v3500
    %v4579 = vunpack.c.h.b16 %v3500
    %v4580 = vunpack.c.l.b16 %v3501
    %v4581 = vunpack.c.h.b16 %v3501
    %v4582 = vunpack.c.l.b16 %v3502
    %v4583 = vunpack.c.h.b16 %v3502
    %v4584 = vunpack.c.l.b16 %v3503
    %v4585 = vunpack.c.h.b16 %v3503
    %v4586 = vunpack.c.l.b16 %v3504
    %v4587 = vunpack.c.h.b16 %v3504
    %v4588 = vunpack.c.l.b16 %v3505
    %v4589 = vunpack.c.h.b16 %v3505
    %v4590 = vunpack.c.l.b16 %v3506
    %v4591 = vunpack.c.h.b16 %v3506
    %v4592 = vunpack.c.l.b16 %v3507
    %v4593 = vunpack.c.h.b16 %v3507
    %v4594 = vunpack.c.l.b16 %v3508
    %v4595 = vunpack.c.h.b16 %v3508
    %v4596 = vunpack.c.l.b16 %v3509
    %v4597 = vunpack.c.h.b16 %v3509
    %v4598 = vunpack.c.l.b16 %v3510
    %v4599 = vunpack.c.h.b16 %v3510
    %v4600 = vunpack.c.l.b16 %v3511
    %v4601 = vunpack.c.h.b16 %v3511
    %v4602 = vunpack.c.l.b16 %v3512
    %v4603 = vunpack.c.h.b16 %v3512
    %v4604 = vunpack.c.l.b16 %v3513
    %v4605 = vunpack.c.h.b16 %v3513
    %v4606 = vunpack.c.l.b16 %v3514
    %v4607 = vunpack.c.h.b16 %v3514
    %v4608 = vunpack.c.l.b16 %v3515
    %v4609 = vunpack.c.h.b16 %v3515
    %v4610 = vunpack.c.l.b16 %v3516
    %v4611 = vunpack.c.h.b16 %v3516
    %v4612 = vunpack.c.l.b16 %v3517
    %v4613 = vunpack.c.h.b16 %v3517
    %v4614 = vunpack.c.l.b16 %v3518
    %v4615 = vunpack.c.h.b16 %v3518
    %v4616 = vunpack.c.l.b16 %v3519
    %v4617 = vunpack.c.h.b16 %v3519
    %v4618 = vunpack.c.l.b16 %v3520
    %v4619 = vunpack.c.h.b16 %v3520
    %v4620 = vunpack.c.l.b16 %v3521
    %v4621 = vunpack.c.h.b16 %v3521
    %v4622 = vunpack.c.l.b16 %v3522
    %v4623 = vunpack.c.h.b16 %v3522
    %v4624 = vunpack.c.l.b16 %v3523
    %v4625 = vunpack.c.h.b16 %v3523
    %v4626 = vunpack.c.l.b16 %v3524
    %v4627 = vunpack.c.h.b16 %v3524
    %v4628 = vunpack.c.l.b16 %v3525
    %v4629 = vunpack.c.h.b16 %v3525
    %v4630 = vunpack.c.l.b16 %v3526
    %v4631 = vunpack.c.h.b16 %v3526
    %v4632 = vunpack.c.l.b16 %v3527
    %v4633 = vunpack.c.h.b16 %v3527
    %v4634 = vunpack.c.l.b16 %v3528
    %v4635 = vunpack.c.h.b16 %v3528
    %v4636 = vunpack.c.l.b16 %v3529
    %v4637 = vunpack.c.h.b16 %v3529
    %v4638 = vunpack.c.l.b16 %v3530
    %v4639 = vunpack.c.h.b16 %v3530
    %v4640 = vunpack.c.l.b16 %v3531
    %v4641 = vunpack.c.h.b16 %v3531
    %v4642 = vunpack.c.l.b16 %v3532
    %v4643 = vunpack.c.h.b16 %v3532
    %v4644 = vunpack.c.l.b16 %v3533
    %v4645 = vunpack.c.h.b16 %v3533
    %v4646 = vunpack.c.l.b16 %v3534
    %v4647 = vunpack.c.h.b16 %v3534
    %v4648 = vunpack.c.l.b16 %v3535
    %v4649 = vunpack.c.h.b16 %v3535
    %v4650 = vunpack.c.l.b16 %v3536
    %v4651 = vunpack.c.h.b16 %v3536
    %v4652 = vunpack.c.l.b16 %v3537
    %v4653 = vunpack.c.h.b16 %v3537
    %v4654 = vunpack.c.l.b16 %v3538
    %v4655 = vunpack.c.h.b16 %v3538
    %v4656 = vunpack.c.l.b16 %v3539
    %v4657 = vunpack.c.h.b16 %v3539
    %v4658 = vunpack.c.l.b16 %v3540
    %v4659 = vunpack.c.h.b16 %v3540
    %v4660 = vunpack.c.l.b16 %v3541
    %v4661 = vunpack.c.h.b16 %v3541
    %v4662 = vunpack.c.l.b16 %v3542
    %v4663 = vunpack.c.h.b16 %v3542
    %v4664 = vunpack.c.l.b16 %v3543
    %v4665 = vunpack.c.h.b16 %v3543
    %v4666 = vunpack.c.l.b16 %v3544
    %v4667 = vunpack.c.h.b16 %v3544
    %v4668 = vunpack.c.l.b16 %v3545
    %v4669 = vunpack.c.h.b16 %v3545
    %v4670 = vunpack.c.l.b16 %v3546
    %v4671 = vunpack.c.h.b16 %v3546
    %v4672 = vunpack.c.l.b16 %v3547
    %v4673 = vunpack.c.h.b16 %v3547
    %v4674 = vunpack.c.l.b16 %v3548
    %v4675 = vunpack.c.h.b16 %v3548
    %v4676 = vunpack.c.l.b16 %v3549
    %v4677 = vunpack.c.h.b16 %v3549
    %v4678 = vunpack.c.l.b16 %v3550
    %v4679 = vunpack.c.h.b16 %v3550
    %v4680 = vunpack.c.l.b16 %v3551
    %v4681 = vunpack.c.h.b16 %v3551
    %v4682 = vunpack.c.l.b16 %v3552
    %v4683 = vunpack.c.h.b16 %v3552
    %v4684 = vunpack.c.l.b16 %v3553
    %v4685 = vunpack.c.h.b16 %v3553
    %v4686 = vunpack.c.l.b16 %v3554
    %v4687 = vunpack.c.h.b16 %v3554
    %v4688 = vunpack.c.l.b16 %v3555
    %v4689 = vunpack.c.h.b16 %v3555
    %v4690 = vunpack.c.l.b16 %v3556
    %v4691 = vunpack.c.h.b16 %v3556
    %v4692 = vunpack.c.l.b16 %v3557
    %v4693 = vunpack.c.h.b16 %v3557
    %v4694 = vunpack.c.l.b16 %v3558
    %v4695 = vunpack.c.h.b16 %v3558
    %v4696 = vunpack.c.l.b16 %v3559
    %v4697 = vunpack.c.h.b16 %v3559
    %v4698 = vunpack.c.l.b16 %v3560
    %v4699 = vunpack.c.h.b16 %v3560
    %v4700 = vunpack.c.l.b16 %v3561
    %v4701 = vunpack.c.h.b16 %v3561
    %v4702 = vunpack.c.l.b16 %v3562
    %v4703 = vunpack.c.h.b16 %v3562
    %v4704 = vunpack.c.l.b16 %v3563
    %v4705 = vunpack.c.h.b16 %v3563
    %v4706 = vunpack.c.l.b16 %v3564
    %v4707 = vunpack.c.h.b16 %v3564
    %v4708 = vunpack.c.l.b16 %v3565
    %v4709 = vunpack.c.h.b16 %v3565
    %v4710 = vunpack.c.l.b16 %v3566
    %v4711 = vunpack.c.h.b16 %v3566
    %v4712 = vunpack.c.l.b16 %v3567
    %v4713 = vunpack.c.h.b16 %v3567
    %v4714 = vunpack.c.l.b16 %v3568
    %v4715 = vunpack.c.h.b16 %v3568
    %v4716 = vunpack.c.l.b16 %v3569
    %v4717 = vunpack.c.h.b16 %v3569
    %v4718 = vunpack.c.l.b16 %v3570
    %v4719 = vunpack.c.h.b16 %v3570
    %v4720 = vunpack.c.l.b16 %v3571
    %v4721 = vunpack.c.h.b16 %v3571
    %v4722 = vunpack.c.l.b16 %v3572
    %v4723 = vunpack.c.h.b16 %v3572
    %v4724 = vunpack.c.l.b16 %v3573
    %v4725 = vunpack.c.h.b16 %v3573
    %v4726 = vunpack.c.l.b16 %v3574
    %v4727 = vunpack.c.h.b16 %v3574
    %v4728 = vunpack.c.l.b16 %v3575
    %v4729 = vunpack.c.h.b16 %v3575
    %v4730 = vunpack.c.l.b16 %v3576
    %v4731 = vunpack.c.h.b16 %v3576
    %v4732 = vunpack.c.l.b16 %v3577
    %v4733 = vunpack.c.h.b16 %v3577
    %v4734 = vunpack.c.l.b16 %v3578
    %v4735 = vunpack.c.h.b16 %v3578
    %v4736 = vunpack.c.l.b16 %v3579
    %v4737 = vunpack.c.h.b16 %v3579
    %v4738 = vunpack.c.l.b16 %v3580
    %v4739 = vunpack.c.h.b16 %v3580
    %v4740 = vunpack.c.l.b16 %v3581
    %v4741 = vunpack.c.h.b16 %v3581
    %v4742 = vunpack.c.l.b16 %v3582
    %v4743 = vunpack.c.h.b16 %v3582
    %v4744 = vunpack.c.l.b16 %v3583
    %v4745 = vunpack.c.h.b16 %v3583
    %v4746 = vunpack.c.l.b16 %v3584
    %v4747 = vunpack.c.h.b16 %v3584
    %v4748 = vunpack.c.l.b16 %v3585
    %v4749 = vunpack.c.h.b16 %v3585
    %v4750 = vunpack.c.l.b16 %v3586
    %v4751 = vunpack.c.h.b16 %v3586
    %v4752 = vunpack.c.l.b16 %v3587
    %v4753 = vunpack.c.h.b16 %v3587
    %v4754 = vunpack.c.l.b16 %v3588
    %v4755 = vunpack.c.h.b16 %v3588
    %v4756 = vunpack.c.l.b16 %v3589
    %v4757 = vunpack.c.h.b16 %v3589
    %v4758 = vunpack.c.l.b16 %v3590
    %v4759 = vunpack.c.h.b16 %v3590
    %v4760 = vunpack.c.l.b16 %v3591
    %v4761 = vunpack.c.h.b16 %v3591
    %v4762 = vunpack.c.l.b16 %v3592
    %v4763 = vunpack.c.h.b16 %v3592
    %v4764 = vunpack.c.l.b16 %v3593
    %v4765 = vunpack.c.h.b16 %v3593
    %v4766 = vunpack.c.l.b16 %v3594
    %v4767 = vunpack.c.h.b16 %v3594
    %v4768 = vunpack.c.l.b16 %v3595
    %v4769 = vunpack.c.h.b16 %v3595
    %v4770 = vunpack.c.l.b16 %v3596
    %v4771 = vunpack.c.h.b16 %v3596
    %v4772 = vunpack.c.l.b16 %v3597
    %v4773 = vunpack.c.h.b16 %v3597
    %v4774 = vunpack.c.l.b16 %v3598
    %v4775 = vunpack.c.h.b16 %v3598
    %v4776 = vunpack.c.l.b16 %v3599
    %v4777 = vunpack.c.h.b16 %v3599
    %v4778 = vunpack.c.l.b16 %v3600
    %v4779 = vunpack.c.h.b16 %v3600
    %v4780 = vunpack.c.l.b16 %v3601
    %v4781 = vunpack.c.h.b16 %v3601
    %v4782 = vunpack.c.l.b16 %v3602
    %v4783 = vunpack.c.h.b16 %v3602
    %v4784 = vunpack.c.l.b16 %v3603
    %v4785 = vunpack.c.h.b16 %v3603
    %v4786 = vunpack.c.l.b16 %v3604
    %v4787 = vunpack.c.h.b16 %v3604
    %v4788 = vunpack.c.l.b16 %v3605
    %v4789 = vunpack.c.h.b16 %v3605
    %v4790 = vpack.c.b16 %v4028, %v4022
    %v4791 = vpack.c.b16 %v4029, %v4023
    %v4792 = vpack.c.b16 %v4030, %v4024
    %v4793 = vpack.c.b16 %v4031, %v4025
    %v4794 = vpack.c.b16 %v4032, %v4026
    %v4795 = vpack.c.b16 %v4033, %v4027
    %v4796 = vpack.c.b16 %v4040, %v4034
    %v4797 = vpack.c.b16 %v4041, %v4035
    %v4798 = vpack.c.b16 %v4042, %v4036
    %v4799 = vpack.c.b16 %v4043, %v4037
    %v4800 = vpack.c.b16 %v4044, %v4038
    %v4801 = vpack.c.b16 %v4045, %v4039
    %v4802 = vpack.c.b16 %v4052, %v4046
    %v4803 = vpack.c.b16 %v4053, %v4047
    %v4804 = vpack.c.b16 %v4054, %v4048
    %v4805 = vpack.c.b16 %v4055, %v4049
    %v4806 = vpack.c.b16 %v4056, %v4050
    %v4807 = vpack.c.b16 %v4057, %v4051
    %v4808 = vpack.c.b16 %v4064, %v4058
    %v4809 = vpack.c.b16 %v4065, %v4059
    %v4810 = vpack.c.b16 %v4066, %v4060
    %v4811 = vpack.c.b16 %v4067, %v4061
    %v4812 = vpack.c.b16 %v4068, %v4062
    %v4813 = vpack.c.b16 %v4069, %v4063
    %v4814 = vpack.c.b16 %v4076, %v4070
    %v4815 = vpack.c.b16 %v4077, %v4071
    %v4816 = vpack.c.b16 %v4078, %v4072
    %v4817 = vpack.c.b16 %v4079, %v4073
    %v4818 = vpack.c.b16 %v4080, %v4074
    %v4819 = vpack.c.b16 %v4081, %v4075
    %v4820 = vpack.c.b16 %v4088, %v4082
    %v4821 = vpack.c.b16 %v4089, %v4083
    %v4822 = vpack.c.b16 %v4090, %v4084
    %v4823 = vpack.c.b16 %v4091, %v4085
    %v4824 = vpack.c.b16 %v4092, %v4086
    %v4825 = vpack.c.b16 %v4093, %v4087
    %v4826 = vpack.c.b16 %v4100, %v4094
    %v4827 = vpack.c.b16 %v4101, %v4095
    %v4828 = vpack.c.b16 %v4102, %v4096
    %v4829 = vpack.c.b16 %v4103, %v4097
    %v4830 = vpack.c.b16 %v4104, %v4098
    %v4831 = vpack.c.b16 %v4105, %v4099
    %v4832 = vpack.c.b16 %v4112, %v4106
    %v4833 = vpack.c.b16 %v4113, %v4107
    %v4834 = vpack.c.b16 %v4114, %v4108
    %v4835 = vpack.c.b16 %v4115, %v4109
    %v4836 = vpack.c.b16 %v4116, %v4110
    %v4837 = vpack.c.b16 %v4117, %v4111
    %v4838 = vpack.c.b16 %v4124, %v4118
    %v4839 = vpack.c.b16 %v4125, %v4119
    %v4840 = vpack.c.b16 %v4126, %v4120
    %v4841 = vpack.c.b16 %v4127, %v4121
    %v4842 = vpack.c.b16 %v4128, %v4122
    %v4843 = vpack.c.b16 %v4129, %v4123
    %v4844 = vpack.c.b16 %v4136, %v4130
    %v4845 = vpack.c.b16 %v4137, %v4131
    %v4846 = vpack.c.b16 %v4138, %v4132
    %v4847 = vpack.c.b16 %v4139, %v4133
    %v4848 = vpack.c.b16 %v4140, %v4134
    %v4849 = vpack.c.b16 %v4141, %v4135
    %v4850 = vpack.c.b16 %v4148, %v4142
    %v4851 = vpack.c.b16 %v4149, %v4143
    %v4852 = vpack.c.b16 %v4150, %v4144
    %v4853 = vpack.c.b16 %v4151, %v4145
    %v4854 = vpack.c.b16 %v4152, %v4146
    %v4855 = vpack.c.b16 %v4153, %v4147
    %v4856 = vpack.c.b16 %v4160, %v4154
    %v4857 = vpack.c.b16 %v4161, %v4155
    %v4858 = vpack.c.b16 %v4162, %v4156
    %v4859 = vpack.c.b16 %v4163, %v4157
    %v4860 = vpack.c.b16 %v4164, %v4158
    %v4861 = vpack.c.b16 %v4165, %v4159
    %v4862 = vpack.c.b16 %v4172, %v4166
    %v4863 = vpack.c.b16 %v4173, %v4167
    %v4864 = vpack.c.b16 %v4174, %v4168
    %v4865 = vpack.c.b16 %v4175, %v4169
    %v4866 = vpack.c.b16 %v4176, %v4170
    %v4867 = vpack.c.b16 %v4177, %v4171
    %v4868 = vpack.c.b16 %v4184, %v4178
    %v4869 = vpack.c.b16 %v4185, %v4179
    %v4870 = vpack.c.b16 %v4186, %v4180
    %v4871 = vpack.c.b16 %v4187, %v4181
    %v4872 = vpack.c.b16 %v4188, %v4182
    %v4873 = vpack.c.b16 %v4189, %v4183
    %v4874 = vpack.c.b16 %v4196, %v4190
    %v4875 = vpack.c.b16 %v4197, %v4191
    %v4876 = vpack.c.b16 %v4198, %v4192
    %v4877 = vpack.c.b16 %v4199, %v4193
    %v4878 = vpack.c.b16 %v4200, %v4194
    %v4879 = vpack.c.b16 %v4201, %v4195
    %v4880 = vpack.c.b16 %v4208, %v4202
    %v4881 = vpack.c.b16 %v4209, %v4203
    %v4882 = vpack.c.b16 %v4210, %v4204
    %v4883 = vpack.c.b16 %v4211, %v4205
    %v4884 = vpack.c.b16 %v4212, %v4206
    %v4885 = vpack.c.b16 %v4213, %v4207
    %v4886 = vpack.c.b16 %v4220, %v4214
    %v4887 = vpack.c.b16 %v4221, %v4215
    %v4888 = vpack.c.b16 %v4222, %v4216
    %v4889 = vpack.c.b16 %v4223, %v4217
    %v4890 = vpack.c.b16 %v4224, %v4218
    %v4891 = vpack.c.b16 %v4225, %v4219
    %v4892 = vpack.c.b16 %v4232, %v4226
    %v4893 = vpack.c.b16 %v4233, %v4227
    %v4894 = vpack.c.b16 %v4234, %v4228
    %v4895 = vpack.c.b16 %v4235, %v4229
    %v4896 = vpack.c.b16 %v4236, %v4230
    %v4897 = vpack.c.b16 %v4237, %v4231
    %v4898 = vpack.c.b16 %v4244, %v4238
    %v4899 = vpack.c.b16 %v4245, %v4239
    %v4900 = vpack.c.b16 %v4246, %v4240
    %v4901 = vpack.c.b16 %v4247, %v4241
    %v4902 = vpack.c.b16 %v4248, %v4242
    %v4903 = vpack.c.b16 %v4249, %v4243
    %v4904 = vpack.c.b16 %v4256, %v4250
    %v4905 = vpack.c.b16 %v4257, %v4251
    %v4906 = vpack.c.b16 %v4258, %v4252
    %v4907 = vpack.c.b16 %v4259, %v4253
    %v4908 = vpack.c.b16 %v4260, %v4254
    %v4909 = vpack.c.b16 %v4261, %v4255
    %v4910 = vpack.c.b16 %v4268, %v4262
    %v4911 = vpack.c.b16 %v4269, %v4263
    %v4912 = vpack.c.b16 %v4270, %v4264
    %v4913 = vpack.c.b16 %v4271, %v4265
    %v4914 = vpack.c.b16 %v4272, %v4266
    %v4915 = vpack.c.b16 %v4273, %v4267
    %v4916 = vpack.c.b16 %v4280, %v4274
    %v4917 = vpack.c.b16 %v4281, %v4275
    %v4918 = vpack.c.b16 %v4282, %v4276
    %v4919 = vpack.c.b16 %v4283, %v4277
    %v4920 = vpack.c.b16 %v4284, %v4278
    %v4921 = vpack.c.b16 %v4285, %v4279
    %v4922 = vpack.c.b16 %v4292, %v4286
    %v4923 = vpack.c.b16 %v4293, %v4287
    %v4924 = vpack.c.b16 %v4294, %v4288
    %v4925 = vpack.c.b16 %v4295, %v4289
    %v4926 = vpack.c.b16 %v4296, %v4290
    %v4927 = vpack.c.b16 %v4297, %v4291
    %v4928 = vpack.c.b16 %v4304, %v4298
    %v4929 = vpack.c.b16 %v4305, %v4299
    %v4930 = vpack.c.b16 %v4306, %v4300
    %v4931 = vpack.c.b16 %v4307, %v4301
    %v4932 = vpack.c.b16 %v4308, %v4302
    %v4933 = vpack.c.b16 %v4309, %v4303
    %v4934 = vpack.c.b16 %v4316, %v4310
    %v4935 = vpack.c.b16 %v4317, %v4311
    %v4936 = vpack.c.b16 %v4318, %v4312
    %v4937 = vpack.c.b16 %v4319, %v4313
    %v4938 = vpack.c.b16 %v4320, %v4314
    %v4939 = vpack.c.b16 %v4321, %v4315
    %v4940 = vpack.c.b16 %v4328, %v4322
    %v4941 = vpack.c.b16 %v4329, %v4323
    %v4942 = vpack.c.b16 %v4330, %v4324
    %v4943 = vpack.c.b16 %v4331, %v4325
    %v4944 = vpack.c.b16 %v4332, %v4326
    %v4945 = vpack.c.b16 %v4333, %v4327
    %v4946 = vpack.c.b16 %v4340, %v4334
    %v4947 = vpack.c.b16 %v4341, %v4335
    %v4948 = vpack.c.b16 %v4342, %v4336
    %v4949 = vpack.c.b16 %v4343, %v4337
    %v4950 = vpack.c.b16 %v4344, %v4338
    %v4951 = vpack.c.b16 %v4345, %v4339
    %v4952 = vpack.c.b16 %v4352, %v4346
    %v4953 = vpack.c.b16 %v4353, %v4347
    %v4954 = vpack.c.b16 %v4354, %v4348
    %v4955 = vpack.c.b16 %v4355, %v4349
    %v4956 = vpack.c.b16 %v4356, %v4350
    %v4957 = vpack.c.b16 %v4357, %v4351
    %v4958 = vpack.c.b16 %v4364, %v4358
    %v4959 = vpack.c.b16 %v4365, %v4359
    %v4960 = vpack.c.b16 %v4366, %v4360
    %v4961 = vpack.c.b16 %v4367, %v4361
    %v4962 = vpack.c.b16 %v4368, %v4362
    %v4963 = vpack.c.b16 %v4369, %v4363
    %v4964 = vpack.c.b16 %v4376, %v4370
    %v4965 = vpack.c.b16 %v4377, %v4371
    %v4966 = vpack.c.b16 %v4378, %v4372
    %v4967 = vpack.c.b16 %v4379, %v4373
    %v4968 = vpack.c.b16 %v4380, %v4374
    %v4969 = vpack.c.b16 %v4381, %v4375
    %v4970 = vpack.c.b16 %v4388, %v4382
    %v4971 = vpack.c.b16 %v4389, %v4383
    %v4972 = vpack.c.b16 %v4390, %v4384
    %v4973 = vpack.c.b16 %v4391, %v4385
    %v4974 = vpack.c.b16 %v4392, %v4386
    %v4975 = vpack.c.b16 %v4393, %v4387
    %v4976 = vpack.c.b16 %v4400, %v4394
    %v4977 = vpack.c.b16 %v4401, %v4395
    %v4978 = vpack.c.b16 %v4402, %v4396
    %v4979 = vpack.c.b16 %v4403, %v4397
    %v4980 = vpack.c.b16 %v4404, %v4398
    %v4981 = vpack.c.b16 %v4405, %v4399
    %v4982 = vpack.c.b16 %v4412, %v4406
    %v4983 = vpack.c.b16 %v4413, %v4407
    %v4984 = vpack.c.b16 %v4414, %v4408
    %v4985 = vpack.c.b16 %v4415, %v4409
    %v4986 = vpack.c.b16 %v4416, %v4410
    %v4987 = vpack.c.b16 %v4417, %v4411
    %v4988 = vpack.c.b16 %v4424, %v4418
    %v4989 = vpack.c.b16 %v4425, %v4419
    %v4990 = vpack.c.b16 %v4426, %v4420
    %v4991 = vpack.c.b16 %v4427, %v4421
    %v4992 = vpack.c.b16 %v4428, %v4422
    %v4993 = vpack.c.b16 %v4429, %v4423
    %v4994 = vpack.c.b16 %v4436, %v4430
    %v4995 = vpack.c.b16 %v4437, %v4431
    %v4996 = vpack.c.b16 %v4438, %v4432
    %v4997 = vpack.c.b16 %v4439, %v4433
    %v4998 = vpack.c.b16 %v4440, %v4434
    %v4999 = vpack.c.b16 %v4441, %v4435
    %v5000 = vpack.c.b16 %v4448, %v4442
    %v5001 = vpack.c.b16 %v4449, %v4443
    %v5002 = vpack.c.b16 %v4450, %v4444
    %v5003 = vpack.c.b16 %v4451, %v4445
    %v5004 = vpack.c.b16 %v4452, %v4446
    %v5005 = vpack.c.b16 %v4453, %v4447
    %v5006 = vpack.c.b16 %v4460, %v4454
    %v5007 = vpack.c.b16 %v4461, %v4455
    %v5008 = vpack.c.b16 %v4462, %v4456
    %v5009 = vpack.c.b16 %v4463, %v4457
    %v5010 = vpack.c.b16 %v4464, %v4458
    %v5011 = vpack.c.b16 %v4465, %v4459
    %v5012 = vpack.c.b16 %v4472, %v4466
    %v5013 = vpack.c.b16 %v4473, %v4467
    %v5014 = vpack.c.b16 %v4474, %v4468
    %v5015 = vpack.c.b16 %v4475, %v4469
    %v5016 = vpack.c.b16 %v4476, %v4470
    %v5017 = vpack.c.b16 %v4477, %v4471
    %v5018 = vpack.c.b16 %v4484, %v4478
    %v5019 = vpack.c.b16 %v4485, %v4479
    %v5020 = vpack.c.b16 %v4486, %v4480
    %v5021 = vpack.c.b16 %v4487, %v4481
    %v5022 = vpack.c.b16 %v4488, %v4482
    %v5023 = vpack.c.b16 %v4489, %v4483
    %v5024 = vpack.c.b16 %v4496, %v4490
    %v5025 = vpack.c.b16 %v4497, %v4491
    %v5026 = vpack.c.b16 %v4498, %v4492
    %v5027 = vpack.c.b16 %v4499, %v4493
    %v5028 = vpack.c.b16 %v4500, %v4494
    %v5029 = vpack.c.b16 %v4501, %v4495
    %v5030 = vpack.c.b16 %v4508, %v4502
    %v5031 = vpack.c.b16 %v4509, %v4503
    %v5032 = vpack.c.b16 %v4510, %v4504
    %v5033 = vpack.c.b16 %v4511, %v4505
    %v5034 = vpack.c.b16 %v4512, %v4506
    %v5035 = vpack.c.b16 %v4513, %v4507
    %v5036 = vpack.c.b16 %v4520, %v4514
    %v5037 = vpack.c.b16 %v4521, %v4515
    %v5038 = vpack.c.b16 %v4522, %v4516
    %v5039 = vpack.c.b16 %v4523, %v4517
    %v5040 = vpack.c.b16 %v4524, %v4518
    %v5041 = vpack.c.b16 %v4525, %v4519
    %v5042 = vpack.c.b16 %v4532, %v4526
    %v5043 = vpack.c.b16 %v4533, %v4527
    %v5044 = vpack.c.b16 %v4534, %v4528
    %v5045 = vpack.c.b16 %v4535, %v4529
    %v5046 = vpack.c.b16 %v4536, %v4530
    %v5047 = vpack.c.b16 %v4537, %v4531
    %v5048 = vpack.c.b16 %v4544, %v4538
    %v5049 = vpack.c.b16 %v4545, %v4539
    %v5050 = vpack.c.b16 %v4546, %v4540
    %v5051 = vpack.c.b16 %v4547, %v4541
    %v5052 = vpack.c.b16 %v4548, %v4542
    %v5053 = vpack.c.b16 %v4549, %v4543
    %v5054 = vpack.c.b16 %v4556, %v4550
    %v5055 = vpack.c.b16 %v4557, %v4551
    %v5056 = vpack.c.b16 %v4558, %v4552
    %v5057 = vpack.c.b16 %v4559, %v4553
    %v5058 = vpack.c.b16 %v4560, %v4554
    %v5059 = vpack.c.b16 %v4561, %v4555
    %v5060 = vpack.c.b16 %v4568, %v4562
    %v5061 = vpack.c.b16 %v4569, %v4563
    %v5062 = vpack.c.b16 %v4570, %v4564
    %v5063 = vpack.c.b16 %v4571, %v4565
    %v5064 = vpack.c.b16 %v4572, %v4566
    %v5065 = vpack.c.b16 %v4573, %v4567
    %v5066 = vpack.c.b16 %v4580, %v4574
    %v5067 = vpack.c.b16 %v4581, %v4575
    %v5068 = vpack.c.b16 %v4582, %v4576
    %v5069 = vpack.c.b16 %v4583, %v4577
    %v5070 = vpack.c.b16 %v4584, %v4578
    %v5071 = vpack.c.b16 %v4585, %v4579
    %v5072 = vpack.c.b16 %v4592, %v4586
    %v5073 = vpack.c.b16 %v4593, %v4587
    %v5074 = vpack.c.b16 %v4594, %v4588
    %v5075 = vpack.c.b16 %v4595, %v4589
    %v5076 = vpack.c.b16 %v4596, %v4590
    %v5077 = vpack.c.b16 %v4597, %v4591
    %v5078 = vpack.c.b16 %v4604, %v4598
    %v5079 = vpack.c.b16 %v4605, %v4599
    %v5080 = vpack.c.b16 %v4606, %v4600
    %v5081 = vpack.c.b16 %v4607, %v4601
    %v5082 = vpack.c.b16 %v4608, %v4602
    %v5083 = vpack.c.b16 %v4609, %v4603
    %v5084 = vpack.c.b16 %v4616, %v4610
    %v5085 = vpack.c.b16 %v4617, %v4611
    %v5086 = vpack.c.b16 %v4618, %v4612
    %v5087 = vpack.c.b16 %v4619, %v4613
    %v5088 = vpack.c.b16 %v4620, %v4614
    %v5089 = vpack.c.b16 %v4621, %v4615
    %v5090 = vpack.c.b16 %v4628, %v4622
    %v5091 = vpack.c.b16 %v4629, %v4623
    %v5092 = vpack.c.b16 %v4630, %v4624
    %v5093 = vpack.c.b16 %v4631, %v4625
    %v5094 = vpack.c.b16 %v4632, %v4626
    %v5095 = vpack.c.b16 %v4633, %v4627
    %v5096 = vpack.c.b16 %v4640, %v4634
    %v5097 = vpack.c.b16 %v4641, %v4635
    %v5098 = vpack.c.b16 %v4642, %v4636
    %v5099 = vpack.c.b16 %v4643, %v4637
    %v5100 = vpack.c.b16 %v4644, %v4638
    %v5101 = vpack.c.b16 %v4645, %v4639
    %v5102 = vpack.c.b16 %v4652, %v4646
    %v5103 = vpack.c.b16 %v4653, %v4647
    %v5104 = vpack.c.b16 %v4654, %v4648
    %v5105 = vpack.c.b16 %v4655, %v4649
    %v5106 = vpack.c.b16 %v4656, %v4650
    %v5107 = vpack.c.b16 %v4657, %v4651
    %v5108 = vpack.c.b16 %v4664, %v4658
    %v5109 = vpack.c.b16 %v4665, %v4659
    %v5110 = vpack.c.b16 %v4666, %v4660
    %v5111 = vpack.c.b16 %v4667, %v4661
    %v5112 = vpack.c.b16 %v4668, %v4662
    %v5113 = vpack.c.b16 %v4669, %v4663
    %v5114 = vpack.c.b16 %v4676, %v4670
    %v5115 = vpack.c.b16 %v4677, %v4671
    %v5116 = vpack.c.b16 %v4678, %v4672
    %v5117 = vpack.c.b16 %v4679, %v4673
    %v5118 = vpack.c.b16 %v4680, %v4674
    %v5119 = vpack.c.b16 %v4681, %v4675
    %v5120 = vpack.c.b16 %v4688, %v4682
    %v5121 = vpack.c.b16 %v4689, %v4683
    %v5122 = vpack.c.b16 %v4690, %v4684
    %v5123 = vpack.c.b16 %v4691, %v4685
    %v5124 = vpack.c.b16 %v4692, %v4686
    %v5125 = vpack.c.b16 %v4693, %v4687
    %v5126 = vpack.c.b16 %v4700, %v4694
    %v5127 = vpack.c.b16 %v4701, %v4695
    %v5128 = vpack.c.b16 %v4702, %v4696
    %v5129 = vpack.c.b16 %v4703, %v4697
    %v5130 = vpack.c.b16 %v4704, %v4698
    %v5131 = vpack.c.b16 %v4705, %v4699
    %v5132 = vpack.c.b16 %v4712, %v4706
    %v5133 = vpack.c.b16 %v4713, %v4707
    %v5134 = vpack.c.b16 %v4714, %v4708
    %v5135 = vpack.c.b16 %v4715, %v4709
    %v5136 = vpack.c.b16 %v4716, %v4710
    %v5137 = vpack.c.b16 %v4717, %v4711
    %v5138 = vpack.c.b16 %v4724, %v4718
    %v5139 = vpack.c.b16 %v4725, %v4719
    %v5140 = vpack.c.b16 %v4726, %v4720
    %v5141 = vpack.c.b16 %v4727, %v4721
    %v5142 = vpack.c.b16 %v4728, %v4722
    %v5143 = vpack.c.b16 %v4729, %v4723
    %v5144 = vpack.c.b16 %v4736, %v4730
    %v5145 = vpack.c.b16 %v4737, %v4731
    %v5146 = vpack.c.b16 %v4738, %v4732
    %v5147 = vpack.c.b16 %v4739, %v4733
    %v5148 = vpack.c.b16 %v4740, %v4734
    %v5149 = vpack.c.b16 %v4741, %v4735
    %v5150 = vpack.c.b16 %v4748, %v4742
    %v5151 = vpack.c.b16 %v4749, %v4743
    %v5152 = vpack.c.b16 %v4750, %v4744
    %v5153 = vpack.c.b16 %v4751, %v4745
    %v5154 = vpack.c.b16 %v4752, %v4746
    %v5155 = vpack.c.b16 %v4753, %v4747
    %v5156 = vpack.c.b16 %v4760, %v4754
    %v5157 = vpack.c.b16 %v4761, %v4755
    %v5158 = vpack.c.b16 %v4762, %v4756
    %v5159 = vpack.c.b16 %v4763, %v4757
    %v5160 = vpack.c.b16 %v4764, %v4758
    %v5161 = vpack.c.b16 %v4765, %v4759
    %v5162 = vpack.c.b16 %v4772, %v4766
    %v5163 = vpack.c.b16 %v4773, %v4767
    %v5164 = vpack.c.b16 %v4774, %v4768
    %v5165 = vpack.c.b16 %v4775, %v4769
    %v5166 = vpack.c.b16 %v4776, %v4770
    %v5167 = vpack.c.b16 %v4777, %v4771
    %v5168 = vpack.c.b16 %v4784, %v4778
    %v5169 = vpack.c.b16 %v4785, %v4779
    %v5170 = vpack.c.b16 %v4786, %v4780
    %v5171 = vpack.c.b16 %v4787, %v4781
    %v5172 = vpack.c.b16 %v4788, %v4782
    %v5173 = vpack.c.b16 %v4789, %v4783
    %5558 = vmatprep.subr.bf16.mxu0 %v4791
    %5559 = vmatpush1.bf16.msra.mxu0 %v4790
    %5560 = vmatprep.subr.bf16.mxu0 %v4797
    %5561 = vmatpush1.bf16.msra.mxu0 %v4796
    %5562 = vmatprep.subr.bf16.mxu0 %v4803
    %5563 = vmatpush1.bf16.msra.mxu0 %v4802
    %5564 = vmatprep.subr.bf16.mxu0 %v4809
    %5565 = vmatpush1.bf16.msra.mxu0 %v4808
    %5566 = vmatprep.subr.bf16.mxu0 %v4815
    %5567 = vmatpush1.bf16.msra.mxu0 %v4814
    %5568 = vmatprep.subr.bf16.mxu0 %v4821
    %5569 = vmatpush1.bf16.msra.mxu0 %v4820
    %5570 = vmatprep.subr.bf16.mxu0 %v4827
    %5571 = vmatpush1.bf16.msra.mxu0 %v4826
    %5572 = vmatprep.subr.bf16.mxu0 %v4833
    %5573 = vmatpush1.bf16.msra.mxu0 %v4832
    %5574 = vmatprep.subr.bf16.mxu0 %v4839
    %5575 = vmatpush1.bf16.msra.mxu0 %v4838
    %5576 = vmatprep.subr.bf16.mxu0 %v4845
    %5577 = vmatpush1.bf16.msra.mxu0 %v4844
    %5578 = vmatprep.subr.bf16.mxu0 %v4851
    %5579 = vmatpush1.bf16.msra.mxu0 %v4850
    %5580 = vmatprep.subr.bf16.mxu0 %v4857
    %5581 = vmatpush1.bf16.msra.mxu0 %v4856
    %5582 = vmatprep.subr.bf16.mxu0 %v4863
    %5583 = vmatpush1.bf16.msra.mxu0 %v4862
    %5584 = vmatprep.subr.bf16.mxu0 %v4869
    %5585 = vmatpush1.bf16.msra.mxu0 %v4868
    %5586 = vmatprep.subr.bf16.mxu0 %v4875
    %5587 = vmatpush1.bf16.msra.mxu0 %v4874
    %5588 = vmatprep.subr.bf16.mxu0 %v4881
    %5589 = vmatpush1.bf16.msra.mxu0 %v4880
    %5590 = vmatprep.mubr.bf16.mxu0 %v3215
    %5591 = vmatmul.mubr.bf16.gmra.mrb[0].mxu0 %v3214
    %v5592 = vpop.f32.mrb[0].mxu0
    %v5593 = vadd.f32 %v3611, %v5592
    %v5594 = vpop.f32.mrb[0].mxu0
    %v5595 = vadd.f32 %v3615, %v5594
    %v5596 = vpop.f32.mrb[0].mxu0
    %v5597 = vpop.f32.mrb[0].mxu0
    %5598 = vdwg.mxu0
    %5599 = vmatprep.subr.bf16.mxu0 %v4887
    %5600 = vmatpush1.bf16.msra.mxu0 %v4886
    %5601 = vmatprep.subr.bf16.mxu0 %v4893
    %5602 = vmatpush1.bf16.msra.mxu0 %v4892
    %5603 = vmatprep.subr.bf16.mxu0 %v4899
    %5604 = vmatpush1.bf16.msra.mxu0 %v4898
    %5605 = vmatprep.subr.bf16.mxu0 %v4905
    %5606 = vmatpush1.bf16.msra.mxu0 %v4904
    %5607 = vmatprep.subr.bf16.mxu0 %v4911
    %5608 = vmatpush1.bf16.msra.mxu0 %v4910
    %5609 = vmatprep.subr.bf16.mxu0 %v4917
    %5610 = vmatpush1.bf16.msra.mxu0 %v4916
    %5611 = vmatprep.subr.bf16.mxu0 %v4923
    %5612 = vmatpush1.bf16.msra.mxu0 %v4922
    %5613 = vmatprep.subr.bf16.mxu0 %v4929
    %5614 = vmatpush1.bf16.msra.mxu0 %v4928
    %5615 = vmatprep.subr.bf16.mxu0 %v4935
    %5616 = vmatpush1.bf16.msra.mxu0 %v4934
    %5617 = vmatprep.subr.bf16.mxu0 %v4941
    %5618 = vmatpush1.bf16.msra.mxu0 %v4940
    %5619 = vmatprep.subr.bf16.mxu0 %v4947
    %5620 = vmatpush1.bf16.msra.mxu0 %v4946
    %5621 = vmatprep.subr.bf16.mxu0 %v4953
    %5622 = vmatpush1.bf16.msra.mxu0 %v4952
    %5623 = vmatprep.subr.bf16.mxu0 %v4959
    %5624 = vmatpush1.bf16.msra.mxu0 %v4958
    %5625 = vmatprep.subr.bf16.mxu0 %v4965
    %5626 = vmatpush1.bf16.msra.mxu0 %v4964
    %5627 = vmatprep.subr.bf16.mxu0 %v4971
    %5628 = vmatpush1.bf16.msra.mxu0 %v4970
    %5629 = vmatprep.subr.bf16.mxu0 %v4977
    %5630 = vmatpush1.bf16.msra.mxu0 %v4976
    %5631 = vmatprep.mubr.bf16.mxu0 %v3217
    %5632 = vmatmul.mubr.bf16.gmra.mrb[0].mxu0 %v3216
    %v5633 = vpop.f32.mrb[0].mxu0
    %v5634 = vadd.f32 %v5593, %v5633
    %v5635 = vpop.f32.mrb[0].mxu0
    %v5636 = vadd.f32 %v5595, %v5635
    %v5637 = vpop.f32.mrb[0].mxu0
    %v5638 = vpop.f32.mrb[0].mxu0
    %5639 = vdwg.mxu0
    %5640 = vmatprep.subr.bf16.mxu0 %v4983
    %5641 = vmatpush1.bf16.msra.mxu0 %v4982
    %5642 = vmatprep.subr.bf16.mxu0 %v4989
    %5643 = vmatpush1.bf16.msra.mxu0 %v4988
    %5644 = vmatprep.subr.bf16.mxu0 %v4995
    %5645 = vmatpush1.bf16.msra.mxu0 %v4994
    %5646 = vmatprep.subr.bf16.mxu0 %v5001
    %5647 = vmatpush1.bf16.msra.mxu0 %v5000
    %5648 = vmatprep.subr.bf16.mxu0 %v5007
    %5649 = vmatpush1.bf16.msra.mxu0 %v5006
    %5650 = vmatprep.subr.bf16.mxu0 %v5013
    %5651 = vmatpush1.bf16.msra.mxu0 %v5012
    %5652 = vmatprep.subr.bf16.mxu0 %v5019
    %5653 = vmatpush1.bf16.msra.mxu0 %v5018
    %5654 = vmatprep.subr.bf16.mxu0 %v5025
    %5655 = vmatpush1.bf16.msra.mxu0 %v5024
    %5656 = vmatprep.subr.bf16.mxu0 %v5031
    %5657 = vmatpush1.bf16.msra.mxu0 %v5030
    %5658 = vmatprep.subr.bf16.mxu0 %v5037
    %5659 = vmatpush1.bf16.msra.mxu0 %v5036
    %5660 = vmatprep.subr.bf16.mxu0 %v5043
    %5661 = vmatpush1.bf16.msra.mxu0 %v5042
    %5662 = vmatprep.subr.bf16.mxu0 %v5049
    %5663 = vmatpush1.bf16.msra.mxu0 %v5048
    %5664 = vmatprep.subr.bf16.mxu0 %v5055
    %5665 = vmatpush1.bf16.msra.mxu0 %v5054
    %5666 = vmatprep.subr.bf16.mxu0 %v5061
    %5667 = vmatpush1.bf16.msra.mxu0 %v5060
    %5668 = vmatprep.subr.bf16.mxu0 %v5067
    %5669 = vmatpush1.bf16.msra.mxu0 %v5066
    %5670 = vmatprep.subr.bf16.mxu0 %v5073
    %5671 = vmatpush1.bf16.msra.mxu0 %v5072
    %5672 = vmatprep.mubr.bf16.mxu0 %v3219
    %5673 = vmatmul.mubr.bf16.gmra.mrb[0].mxu0 %v3218
    %v5674 = vpop.f32.mrb[0].mxu0
    %v5675 = vadd.f32 %v5634, %v5674
    %v5676 = vpop.f32.mrb[0].mxu0
    %v5677 = vadd.f32 %v5636, %v5676
    %v5678 = vpop.f32.mrb[0].mxu0
    %v5679 = vpop.f32.mrb[0].mxu0
    %5680 = vdwg.mxu0
    %5681 = vmatprep.subr.bf16.mxu0 %v5079
    %5682 = vmatpush1.bf16.msra.mxu0 %v5078
    %5683 = vmatprep.subr.bf16.mxu0 %v5085
    %5684 = vmatpush1.bf16.msra.mxu0 %v5084
    %5685 = vmatprep.subr.bf16.mxu0 %v5091
    %5686 = vmatpush1.bf16.msra.mxu0 %v5090
    %5687 = vmatprep.subr.bf16.mxu0 %v5097
    %5688 = vmatpush1.bf16.msra.mxu0 %v5096
    %5689 = vmatprep.subr.bf16.mxu0 %v5103
    %5690 = vmatpush1.bf16.msra.mxu0 %v5102
    %5691 = vmatprep.subr.bf16.mxu0 %v5109
    %5692 = vmatpush1.bf16.msra.mxu0 %v5108
    %5693 = vmatprep.subr.bf16.mxu0 %v5115
    %5694 = vmatpush1.bf16.msra.mxu0 %v5114
    %5695 = vmatprep.subr.bf16.mxu0 %v5121
    %5696 = vmatpush1.bf16.msra.mxu0 %v5120
    %5697 = vmatprep.subr.bf16.mxu0 %v5127
    %5698 = vmatpush1.bf16.msra.mxu0 %v5126
    %5699 = vmatprep.subr.bf16.mxu0 %v5133
    %5700 = vmatpush1.bf16.msra.mxu0 %v5132
    %5701 = vmatprep.subr.bf16.mxu0 %v5139
    %5702 = vmatpush1.bf16.msra.mxu0 %v5138
    %5703 = vmatprep.subr.bf16.mxu0 %v5145
    %5704 = vmatpush1.bf16.msra.mxu0 %v5144
    %5705 = vmatprep.subr.bf16.mxu0 %v5151
    %5706 = vmatpush1.bf16.msra.mxu0 %v5150
    %5707 = vmatprep.subr.bf16.mxu0 %v5157
    %5708 = vmatpush1.bf16.msra.mxu0 %v5156
    %5709 = vmatprep.subr.bf16.mxu0 %v5163
    %5710 = vmatpush1.bf16.msra.mxu0 %v5162
    %5711 = vmatprep.subr.bf16.mxu0 %v5169
    %5712 = vmatpush1.bf16.msra.mxu0 %v5168
    %5713 = vmatprep.mubr.bf16.mxu0 %v3221
    %5714 = vmatmul.mubr.bf16.gmra.mrb[0].mxu0 %v3220
    %v5715 = vpop.f32.mrb[0].mxu0
    %v5716 = vadd.f32 %v5675, %v5715
    %v5717 = vpop.f32.mrb[0].mxu0
    %v5718 = vadd.f32 %v5677, %v5717
    %v5719 = vpop.f32.mrb[0].mxu0
    %v5720 = vpop.f32.mrb[0].mxu0
    %5721 = vdwg.mxu0
    %5722 = vmatprep.subr.bf16.mxu0 %v4793
    %5723 = vmatpush1.bf16.msra.mxu0 %v4792
    %5724 = vmatprep.subr.bf16.mxu0 %v4799
    %5725 = vmatpush1.bf16.msra.mxu0 %v4798
    %5726 = vmatprep.subr.bf16.mxu0 %v4805
    %5727 = vmatpush1.bf16.msra.mxu0 %v4804
    %5728 = vmatprep.subr.bf16.mxu0 %v4811
    %5729 = vmatpush1.bf16.msra.mxu0 %v4810
    %5730 = vmatprep.subr.bf16.mxu0 %v4817
    %5731 = vmatpush1.bf16.msra.mxu0 %v4816
    %5732 = vmatprep.subr.bf16.mxu0 %v4823
    %5733 = vmatpush1.bf16.msra.mxu0 %v4822
    %5734 = vmatprep.subr.bf16.mxu0 %v4829
    %5735 = vmatpush1.bf16.msra.mxu0 %v4828
    %5736 = vmatprep.subr.bf16.mxu0 %v4835
    %5737 = vmatpush1.bf16.msra.mxu0 %v4834
    %5738 = vmatprep.subr.bf16.mxu0 %v4841
    %5739 = vmatpush1.bf16.msra.mxu0 %v4840
    %5740 = vmatprep.subr.bf16.mxu0 %v4847
    %5741 = vmatpush1.bf16.msra.mxu0 %v4846
    %5742 = vmatprep.subr.bf16.mxu0 %v4853
    %5743 = vmatpush1.bf16.msra.mxu0 %v4852
    %5744 = vmatprep.subr.bf16.mxu0 %v4859
    %5745 = vmatpush1.bf16.msra.mxu0 %v4858
    %5746 = vmatprep.subr.bf16.mxu0 %v4865
    %5747 = vmatpush1.bf16.msra.mxu0 %v4864
    %5748 = vmatprep.subr.bf16.mxu0 %v4871
    %5749 = vmatpush1.bf16.msra.mxu0 %v4870
    %5750 = vmatprep.subr.bf16.mxu0 %v4877
    %5751 = vmatpush1.bf16.msra.mxu0 %v4876
    %5752 = vmatprep.subr.bf16.mxu0 %v4883
    %5753 = vmatpush1.bf16.msra.mxu0 %v4882
    %5754 = vmatprep.mubr.bf16.mxu0 %v3215
    %5755 = vmatmul.mubr.bf16.gmra.mrb[0].mxu0 %v3214
    %v5756 = vpop.f32.mrb[0].mxu0
    %v5757 = vadd.f32 %v3619, %v5756
    %v5758 = vpop.f32.mrb[0].mxu0
    %v5759 = vadd.f32 %v3623, %v5758
    %v5760 = vpop.f32.mrb[0].mxu0
    %v5761 = vpop.f32.mrb[0].mxu0
    %5762 = vdwg.mxu0
    %5763 = vmatprep.subr.bf16.mxu0 %v4889
    %5764 = vmatpush1.bf16.msra.mxu0 %v4888
    %5765 = vmatprep.subr.bf16.mxu0 %v4895
    %5766 = vmatpush1.bf16.msra.mxu0 %v4894
    %5767 = vmatprep.subr.bf16.mxu0 %v4901
    %5768 = vmatpush1.bf16.msra.mxu0 %v4900
    %5769 = vmatprep.subr.bf16.mxu0 %v4907
    %5770 = vmatpush1.bf16.msra.mxu0 %v4906
    %5771 = vmatprep.subr.bf16.mxu0 %v4913
    %5772 = vmatpush1.bf16.msra.mxu0 %v4912
    %5773 = vmatprep.subr.bf16.mxu0 %v4919
    %5774 = vmatpush1.bf16.msra.mxu0 %v4918
    %5775 = vmatprep.subr.bf16.mxu0 %v4925
    %5776 = vmatpush1.bf16.msra.mxu0 %v4924
    %5777 = vmatprep.subr.bf16.mxu0 %v4931
    %5778 = vmatpush1.bf16.msra.mxu0 %v4930
    %5779 = vmatprep.subr.bf16.mxu0 %v4937
    %5780 = vmatpush1.bf16.msra.mxu0 %v4936
    %5781 = vmatprep.subr.bf16.mxu0 %v4943
    %5782 = vmatpush1.bf16.msra.mxu0 %v4942
    %5783 = vmatprep.subr.bf16.mxu0 %v4949
    %5784 = vmatpush1.bf16.msra.mxu0 %v4948
    %5785 = vmatprep.subr.bf16.mxu0 %v4955
    %5786 = vmatpush1.bf16.msra.mxu0 %v4954
    %5787 = vmatprep.subr.bf16.mxu0 %v4961
    %5788 = vmatpush1.bf16.msra.mxu0 %v4960
    %5789 = vmatprep.subr.bf16.mxu0 %v4967
    %5790 = vmatpush1.bf16.msra.mxu0 %v4966
    %5791 = vmatprep.subr.bf16.mxu0 %v4973
    %5792 = vmatpush1.bf16.msra.mxu0 %v4972
    %5793 = vmatprep.subr.bf16.mxu0 %v4979
    %5794 = vmatpush1.bf16.msra.mxu0 %v4978
    %5795 = vmatprep.mubr.bf16.mxu0 %v3217
    %5796 = vmatmul.mubr.bf16.gmra.mrb[0].mxu0 %v3216
    %v5797 = vpop.f32.mrb[0].mxu0
    %v5798 = vadd.f32 %v5757, %v5797
    %v5799 = vpop.f32.mrb[0].mxu0
    %v5800 = vadd.f32 %v5759, %v5799
    %v5801 = vpop.f32.mrb[0].mxu0
    %v5802 = vpop.f32.mrb[0].mxu0
    %5803 = vdwg.mxu0
    %5804 = vmatprep.subr.bf16.mxu0 %v4985
    %5805 = vmatpush1.bf16.msra.mxu0 %v4984
    %5806 = vmatprep.subr.bf16.mxu0 %v4991
    %5807 = vmatpush1.bf16.msra.mxu0 %v4990
    %5808 = vmatprep.subr.bf16.mxu0 %v4997
    %5809 = vmatpush1.bf16.msra.mxu0 %v4996
    %5810 = vmatprep.subr.bf16.mxu0 %v5003
    %5811 = vmatpush1.bf16.msra.mxu0 %v5002
    %5812 = vmatprep.subr.bf16.mxu0 %v5009
    %5813 = vmatpush1.bf16.msra.mxu0 %v5008
    %5814 = vmatprep.subr.bf16.mxu0 %v5015
    %5815 = vmatpush1.bf16.msra.mxu0 %v5014
    %5816 = vmatprep.subr.bf16.mxu0 %v5021
    %5817 = vmatpush1.bf16.msra.mxu0 %v5020
    %5818 = vmatprep.subr.bf16.mxu0 %v5027
    %5819 = vmatpush1.bf16.msra.mxu0 %v5026
    %5820 = vmatprep.subr.bf16.mxu0 %v5033
    %5821 = vmatpush1.bf16.msra.mxu0 %v5032
    %5822 = vmatprep.subr.bf16.mxu0 %v5039
    %5823 = vmatpush1.bf16.msra.mxu0 %v5038
    %5824 = vmatprep.subr.bf16.mxu0 %v5045
    %5825 = vmatpush1.bf16.msra.mxu0 %v5044
    %5826 = vmatprep.subr.bf16.mxu0 %v5051
    %5827 = vmatpush1.bf16.msra.mxu0 %v5050
    %5828 = vmatprep.subr.bf16.mxu0 %v5057
    %5829 = vmatpush1.bf16.msra.mxu0 %v5056
    %5830 = vmatprep.subr.bf16.mxu0 %v5063
    %5831 = vmatpush1.bf16.msra.mxu0 %v5062
    %5832 = vmatprep.subr.bf16.mxu0 %v5069
    %5833 = vmatpush1.bf16.msra.mxu0 %v5068
    %5834 = vmatprep.subr.bf16.mxu0 %v5075
    %5835 = vmatpush1.bf16.msra.mxu0 %v5074
    %5836 = vmatprep.mubr.bf16.mxu0 %v3219
    %5837 = vmatmul.mubr.bf16.gmra.mrb[0].mxu0 %v3218
    %v5838 = vpop.f32.mrb[0].mxu0
    %v5839 = vadd.f32 %v5798, %v5838
    %v5840 = vpop.f32.mrb[0].mxu0
    %v5841 = vadd.f32 %v5800, %v5840
    %v5842 = vpop.f32.mrb[0].mxu0
    %v5843 = vpop.f32.mrb[0].mxu0
    %5844 = vdwg.mxu0
    %5845 = vmatprep.subr.bf16.mxu0 %v5081
    %5846 = vmatpush1.bf16.msra.mxu0 %v5080
    %5847 = vmatprep.subr.bf16.mxu0 %v5087
    %5848 = vmatpush1.bf16.msra.mxu0 %v5086
    %5849 = vmatprep.subr.bf16.mxu0 %v5093
    %5850 = vmatpush1.bf16.msra.mxu0 %v5092
    %5851 = vmatprep.subr.bf16.mxu0 %v5099
    %5852 = vmatpush1.bf16.msra.mxu0 %v5098
    %5853 = vmatprep.subr.bf16.mxu0 %v5105
    %5854 = vmatpush1.bf16.msra.mxu0 %v5104
    %5855 = vmatprep.subr.bf16.mxu0 %v5111
    %5856 = vmatpush1.bf16.msra.mxu0 %v5110
    %5857 = vmatprep.subr.bf16.mxu0 %v5117
    %5858 = vmatpush1.bf16.msra.mxu0 %v5116
    %5859 = vmatprep.subr.bf16.mxu0 %v5123
    %5860 = vmatpush1.bf16.msra.mxu0 %v5122
    %5861 = vmatprep.subr.bf16.mxu0 %v5129
    %5862 = vmatpush1.bf16.msra.mxu0 %v5128
    %5863 = vmatprep.subr.bf16.mxu0 %v5135
    %5864 = vmatpush1.bf16.msra.mxu0 %v5134
    %5865 = vmatprep.subr.bf16.mxu0 %v5141
    %5866 = vmatpush1.bf16.msra.mxu0 %v5140
    %5867 = vmatprep.subr.bf16.mxu0 %v5147
    %5868 = vmatpush1.bf16.msra.mxu0 %v5146
    %5869 = vmatprep.subr.bf16.mxu0 %v5153
    %5870 = vmatpush1.bf16.msra.mxu0 %v5152
    %5871 = vmatprep.subr.bf16.mxu0 %v5159
    %5872 = vmatpush1.bf16.msra.mxu0 %v5158
    %5873 = vmatprep.subr.bf16.mxu0 %v5165
    %5874 = vmatpush1.bf16.msra.mxu0 %v5164
    %5875 = vmatprep.subr.bf16.mxu0 %v5171
    %5876 = vmatpush1.bf16.msra.mxu0 %v5170
    %5877 = vmatprep.mubr.bf16.mxu0 %v3221
    %5878 = vmatmul.mubr.bf16.gmra.mrb[0].mxu0 %v3220
    %v5879 = vpop.f32.mrb[0].mxu0
    %v5880 = vadd.f32 %v5839, %v5879
    %v5881 = vpop.f32.mrb[0].mxu0
    %v5882 = vadd.f32 %v5841, %v5881
    %v5883 = vpop.f32.mrb[0].mxu0
    %v5884 = vpop.f32.mrb[0].mxu0
    %5885 = vdwg.mxu0
    %5886 = vmatprep.subr.bf16.mxu0 %v4795
    %5887 = vmatpush1.bf16.msra.mxu0 %v4794
    %5888 = vmatprep.subr.bf16.mxu0 %v4801
    %5889 = vmatpush1.bf16.msra.mxu0 %v4800
    %5890 = vmatprep.subr.bf16.mxu0 %v4807
    %5891 = vmatpush1.bf16.msra.mxu0 %v4806
    %5892 = vmatprep.subr.bf16.mxu0 %v4813
    %5893 = vmatpush1.bf16.msra.mxu0 %v4812
    %5894 = vmatprep.subr.bf16.mxu0 %v4819
    %5895 = vmatpush1.bf16.msra.mxu0 %v4818
    %5896 = vmatprep.subr.bf16.mxu0 %v4825
    %5897 = vmatpush1.bf16.msra.mxu0 %v4824
    %5898 = vmatprep.subr.bf16.mxu0 %v4831
    %5899 = vmatpush1.bf16.msra.mxu0 %v4830
    %5900 = vmatprep.subr.bf16.mxu0 %v4837
    %5901 = vmatpush1.bf16.msra.mxu0 %v4836
    %5902 = vmatprep.subr.bf16.mxu0 %v4843
    %5903 = vmatpush1.bf16.msra.mxu0 %v4842
    %5904 = vmatprep.subr.bf16.mxu0 %v4849
    %5905 = vmatpush1.bf16.msra.mxu0 %v4848
    %5906 = vmatprep.subr.bf16.mxu0 %v4855
    %5907 = vmatpush1.bf16.msra.mxu0 %v4854
    %5908 = vmatprep.subr.bf16.mxu0 %v4861
    %5909 = vmatpush1.bf16.msra.mxu0 %v4860
    %5910 = vmatprep.subr.bf16.mxu0 %v4867
    %5911 = vmatpush1.bf16.msra.mxu0 %v4866
    %5912 = vmatprep.subr.bf16.mxu0 %v4873
    %5913 = vmatpush1.bf16.msra.mxu0 %v4872
    %5914 = vmatprep.subr.bf16.mxu0 %v4879
    %5915 = vmatpush1.bf16.msra.mxu0 %v4878
    %5916 = vmatprep.subr.bf16.mxu0 %v4885
    %5917 = vmatpush1.bf16.msra.mxu0 %v4884
    %5918 = vmatprep.mubr.bf16.mxu0 %v3215
    %5919 = vmatmul.mubr.bf16.gmra.mrb[0].mxu0 %v3214
    %v5920 = vpop.f32.mrb[0].mxu0
    %v5921 = vadd.f32 %v3627, %v5920
    %v5922 = vpop.f32.mrb[0].mxu0
    %v5923 = vadd.f32 %v3631, %v5922
    %v5924 = vpop.f32.mrb[0].mxu0
    %v5925 = vpop.f32.mrb[0].mxu0
    %5926 = vdwg.mxu0
    %5927 = vmatprep.subr.bf16.mxu0 %v4891
    %5928 = vmatpush1.bf16.msra.mxu0 %v4890
    %5929 = vmatprep.subr.bf16.mxu0 %v4897
    %5930 = vmatpush1.bf16.msra.mxu0 %v4896
    %5931 = vmatprep.subr.bf16.mxu0 %v4903
    %5932 = vmatpush1.bf16.msra.mxu0 %v4902
    %5933 = vmatprep.subr.bf16.mxu0 %v4909
    %5934 = vmatpush1.bf16.msra.mxu0 %v4908
    %5935 = vmatprep.subr.bf16.mxu0 %v4915
    %5936 = vmatpush1.bf16.msra.mxu0 %v4914
    %5937 = vmatprep.subr.bf16.mxu0 %v4921
    %5938 = vmatpush1.bf16.msra.mxu0 %v4920
    %5939 = vmatprep.subr.bf16.mxu0 %v4927
    %5940 = vmatpush1.bf16.msra.mxu0 %v4926
    %5941 = vmatprep.subr.bf16.mxu0 %v4933
    %5942 = vmatpush1.bf16.msra.mxu0 %v4932
    %5943 = vmatprep.subr.bf16.mxu0 %v4939
    %5944 = vmatpush1.bf16.msra.mxu0 %v4938
    %5945 = vmatprep.subr.bf16.mxu0 %v4945
    %5946 = vmatpush1.bf16.msra.mxu0 %v4944
    %5947 = vmatprep.subr.bf16.mxu0 %v4951
    %5948 = vmatpush1.bf16.msra.mxu0 %v4950
    %5949 = vmatprep.subr.bf16.mxu0 %v4957
    %5950 = vmatpush1.bf16.msra.mxu0 %v4956
    %5951 = vmatprep.subr.bf16.mxu0 %v4963
    %5952 = vmatpush1.bf16.msra.mxu0 %v4962
    %5953 = vmatprep.subr.bf16.mxu0 %v4969
    %5954 = vmatpush1.bf16.msra.mxu0 %v4968
    %5955 = vmatprep.subr.bf16.mxu0 %v4975
    %5956 = vmatpush1.bf16.msra.mxu0 %v4974
    %5957 = vmatprep.subr.bf16.mxu0 %v4981
    %5958 = vmatpush1.bf16.msra.mxu0 %v4980
    %5959 = vmatprep.mubr.bf16.mxu0 %v3217
    %5960 = vmatmul.mubr.bf16.gmra.mrb[0].mxu0 %v3216
    %v5961 = vpop.f32.mrb[0].mxu0
    %v5962 = vadd.f32 %v5921, %v5961
    %v5963 = vpop.f32.mrb[0].mxu0
    %v5964 = vadd.f32 %v5923, %v5963
    %v5965 = vpop.f32.mrb[0].mxu0
    %v5966 = vpop.f32.mrb[0].mxu0
    %5967 = vdwg.mxu0
    %5968 = vmatprep.subr.bf16.mxu0 %v4987
    %5969 = vmatpush1.bf16.msra.mxu0 %v4986
    %5970 = vmatprep.subr.bf16.mxu0 %v4993
    %5971 = vmatpush1.bf16.msra.mxu0 %v4992
    %5972 = vmatprep.subr.bf16.mxu0 %v4999
    %5973 = vmatpush1.bf16.msra.mxu0 %v4998
    %5974 = vmatprep.subr.bf16.mxu0 %v5005
    %5975 = vmatpush1.bf16.msra.mxu0 %v5004
    %5976 = vmatprep.subr.bf16.mxu0 %v5011
    %5977 = vmatpush1.bf16.msra.mxu0 %v5010
    %5978 = vmatprep.subr.bf16.mxu0 %v5017
    %5979 = vmatpush1.bf16.msra.mxu0 %v5016
    %5980 = vmatprep.subr.bf16.mxu0 %v5023
    %5981 = vmatpush1.bf16.msra.mxu0 %v5022
    %5982 = vmatprep.subr.bf16.mxu0 %v5029
    %5983 = vmatpush1.bf16.msra.mxu0 %v5028
    %5984 = vmatprep.subr.bf16.mxu0 %v5035
    %5985 = vmatpush1.bf16.msra.mxu0 %v5034
    %5986 = vmatprep.subr.bf16.mxu0 %v5041
    %5987 = vmatpush1.bf16.msra.mxu0 %v5040
    %5988 = vmatprep.subr.bf16.mxu0 %v5047
    %5989 = vmatpush1.bf16.msra.mxu0 %v5046
    %5990 = vmatprep.subr.bf16.mxu0 %v5053
    %5991 = vmatpush1.bf16.msra.mxu0 %v5052
    %5992 = vmatprep.subr.bf16.mxu0 %v5059
    %5993 = vmatpush1.bf16.msra.mxu0 %v5058
    %5994 = vmatprep.subr.bf16.mxu0 %v5065
    %5995 = vmatpush1.bf16.msra.mxu0 %v5064
    %5996 = vmatprep.subr.bf16.mxu0 %v5071
    %5997 = vmatpush1.bf16.msra.mxu0 %v5070
    %5998 = vmatprep.subr.bf16.mxu0 %v5077
    %5999 = vmatpush1.bf16.msra.mxu0 %v5076
    %6000 = vmatprep.mubr.bf16.mxu0 %v3219
    %6001 = vmatmul.mubr.bf16.gmra.mrb[0].mxu0 %v3218
    %v6002 = vpop.f32.mrb[0].mxu0
    %v6003 = vadd.f32 %v5962, %v6002
    %v6004 = vpop.f32.mrb[0].mxu0
    %v6005 = vadd.f32 %v5964, %v6004
    %v6006 = vpop.f32.mrb[0].mxu0
    %v6007 = vpop.f32.mrb[0].mxu0
    %6008 = vdwg.mxu0
    %6009 = vmatprep.subr.bf16.mxu0 %v5083
    %6010 = vmatpush1.bf16.msra.mxu0 %v5082
    %6011 = vmatprep.subr.bf16.mxu0 %v5089
    %6012 = vmatpush1.bf16.msra.mxu0 %v5088
    %6013 = vmatprep.subr.bf16.mxu0 %v5095
    %6014 = vmatpush1.bf16.msra.mxu0 %v5094
    %6015 = vmatprep.subr.bf16.mxu0 %v5101
    %6016 = vmatpush1.bf16.msra.mxu0 %v5100
    %6017 = vmatprep.subr.bf16.mxu0 %v5107
    %6018 = vmatpush1.bf16.msra.mxu0 %v5106
    %6019 = vmatprep.subr.bf16.mxu0 %v5113
    %6020 = vmatpush1.bf16.msra.mxu0 %v5112
    %6021 = vmatprep.subr.bf16.mxu0 %v5119
    %6022 = vmatpush1.bf16.msra.mxu0 %v5118
    %6023 = vmatprep.subr.bf16.mxu0 %v5125
    %6024 = vmatpush1.bf16.msra.mxu0 %v5124
    %6025 = vmatprep.subr.bf16.mxu0 %v5131
    %6026 = vmatpush1.bf16.msra.mxu0 %v5130
    %6027 = vmatprep.subr.bf16.mxu0 %v5137
    %6028 = vmatpush1.bf16.msra.mxu0 %v5136
    %6029 = vmatprep.subr.bf16.mxu0 %v5143
    %6030 = vmatpush1.bf16.msra.mxu0 %v5142
    %6031 = vmatprep.subr.bf16.mxu0 %v5149
    %6032 = vmatpush1.bf16.msra.mxu0 %v5148
    %6033 = vmatprep.subr.bf16.mxu0 %v5155
    %6034 = vmatpush1.bf16.msra.mxu0 %v5154
    %6035 = vmatprep.subr.bf16.mxu0 %v5161
    %6036 = vmatpush1.bf16.msra.mxu0 %v5160
    %6037 = vmatprep.subr.bf16.mxu0 %v5167
    %6038 = vmatpush1.bf16.msra.mxu0 %v5166
    %6039 = vmatprep.subr.bf16.mxu0 %v5173
    %6040 = vmatpush1.bf16.msra.mxu0 %v5172
    %6041 = vmatprep.mubr.bf16.mxu0 %v3221
    %6042 = vmatmul.mubr.bf16.gmra.mrb[0].mxu0 %v3220
    %v6043 = vpop.f32.mrb[0].mxu0
    %v6044 = vadd.f32 %v6003, %v6043
    %v6045 = vpop.f32.mrb[0].mxu0
    %v6046 = vadd.f32 %v6005, %v6045
    %v6047 = vpop.f32.mrb[0].mxu0
    %v6048 = vpop.f32.mrb[0].mxu0
    %6049 = vdwg.mxu0
    %v6050 = vmax.f32 %v5716, 0.0
    %v6051 = vmax.f32 %v5718, 0.0
    %v6052 = vmax.f32 %v5880, 0.0
    %v6053 = vmax.f32 %v5882, 0.0
    %v6054 = vmax.f32 %v6044, 0.0
    %v6055 = vmax.f32 %v6046, 0.0
    %v6056 = vpack.c.bf16 %v6050, %v6050
    %v6057 = vpack.c.bf16 %v6051, %v6051
    %v6058 = vpack.c.bf16 %v6052, %v6052
    %v6059 = vpack.c.bf16 %v6053, %v6053
    %v6060 = vpack.c.bf16 %v6054, %v6054
    %v6061 = vpack.c.bf16 %v6055, %v6055
    %v6062 = vld [vmem:[#allocation11] sm:$0xff]
    %v6063 = vld [vmem:[#allocation11 + $0x8] sm:$0xff]
    %v6064 = vld [vmem:[#allocation11 + $0x10] sm:$0xff]
    %v6065 = vld [vmem:[#allocation11 + $0x18] sm:$0xff]
    %v6066 = vld [vmem:[#allocation11 + $0x20] sm:$0xff]
    %v6067 = vld [vmem:[#allocation11 + $0x28] sm:$0xff]
    %v6068 = vld [vmem:[#allocation11 + $0x30] sm:$0xff]
    %v6069 = vld [vmem:[#allocation11 + $0x38] sm:$0xff]
    %v6070 = vld [vmem:[#allocation11 + $0x40] sm:$0xff]
    %v6071 = vld [vmem:[#allocation11 + $0x48] sm:$0xff]
    %v6072 = vld [vmem:[#allocation11 + $0x50] sm:$0xff]
    %v6073 = vld [vmem:[#allocation11 + $0x58] sm:$0xff]
    %v6074 = vld [vmem:[#allocation11 + $0x60] sm:$0xff]
    %v6075 = vld [vmem:[#allocation11 + $0x68] sm:$0xff]
    %v6076 = vld [vmem:[#allocation11 + $0x70] sm:$0xff]
    %v6077 = vld [vmem:[#allocation11 + $0x78] sm:$0xff]
    %v6078 = vld [vmem:[#allocation11 + $0x80] sm:$0xff]
    %v6079 = vld [vmem:[#allocation11 + $0x88] sm:$0xff]
    %v6080 = vld [vmem:[#allocation11 + $0x90] sm:$0xff]
    %v6081 = vld [vmem:[#allocation11 + $0x98] sm:$0xff]
    %v6082 = vld [vmem:[#allocation11 + $0xa0] sm:$0xff]
    %v6083 = vld [vmem:[#allocation11 + $0xa8] sm:$0xff]
    %v6084 = vld [vmem:[#allocation11 + $0xb0] sm:$0xff]
    %v6085 = vld [vmem:[#allocation11 + $0xb8] sm:$0xff]
    %v6086 = vld [vmem:[#allocation11 + $0xc0] sm:$0xff]
    %v6087 = vld [vmem:[#allocation11 + $0xc8] sm:$0xff]
    %v6088 = vld [vmem:[#allocation11 + $0xd0] sm:$0xff]
    %v6089 = vld [vmem:[#allocation11 + $0xd8] sm:$0xff]
    %v6090 = vld [vmem:[#allocation11 + $0xe0] sm:$0xff]
    %v6091 = vld [vmem:[#allocation11 + $0xe8] sm:$0xff]
    %v6092 = vld [vmem:[#allocation11 + $0xf0] sm:$0xff]
    %v6093 = vld [vmem:[#allocation11 + $0xf8] sm:$0xff]
    %v6094 = vld [vmem:[#allocation11 + $0x100] sm:$0xff]
    %v6095 = vld [vmem:[#allocation11 + $0x108] sm:$0xff]
    %v6096 = vld [vmem:[#allocation11 + $0x110] sm:$0xff]
    %v6097 = vld [vmem:[#allocation11 + $0x118] sm:$0xff]
    %v6098 = vld [vmem:[#allocation11 + $0x120] sm:$0xff]
    %v6099 = vld [vmem:[#allocation11 + $0x128] sm:$0xff]
    %v6100 = vld [vmem:[#allocation11 + $0x130] sm:$0xff]
    %v6101 = vld [vmem:[#allocation11 + $0x138] sm:$0xff]
    %v6102 = vld [vmem:[#allocation11 + $0x140] sm:$0xff]
    %v6103 = vld [vmem:[#allocation11 + $0x148] sm:$0xff]
    %v6104 = vld [vmem:[#allocation11 + $0x150] sm:$0xff]
    %v6105 = vld [vmem:[#allocation11 + $0x158] sm:$0xff]
    %v6106 = vld [vmem:[#allocation11 + $0x160] sm:$0xff]
    %v6107 = vld [vmem:[#allocation11 + $0x168] sm:$0xff]
    %v6108 = vld [vmem:[#allocation11 + $0x170] sm:$0xff]
    %v6109 = vld [vmem:[#allocation11 + $0x178] sm:$0xff]
    %v6110 = vld [vmem:[#allocation11 + $0x180] sm:$0xff]
    %v6111 = vld [vmem:[#allocation11 + $0x188] sm:$0xff]
    %v6112 = vld [vmem:[#allocation11 + $0x190] sm:$0xff]
    %v6113 = vld [vmem:[#allocation11 + $0x198] sm:$0xff]
    %v6114 = vld [vmem:[#allocation11 + $0x1a0] sm:$0xff]
    %v6115 = vld [vmem:[#allocation11 + $0x1a8] sm:$0xff]
    %v6116 = vld [vmem:[#allocation11 + $0x1b0] sm:$0xff]
    %v6117 = vld [vmem:[#allocation11 + $0x1b8] sm:$0xff]
    %v6118 = vld [vmem:[#allocation11 + $0x1c0] sm:$0xff]
    %v6119 = vld [vmem:[#allocation11 + $0x1c8] sm:$0xff]
    %v6120 = vld [vmem:[#allocation11 + $0x1d0] sm:$0xff]
    %v6121 = vld [vmem:[#allocation11 + $0x1d8] sm:$0xff]
    %v6122 = vld [vmem:[#allocation11 + $0x1e0] sm:$0xff]
    %v6123 = vld [vmem:[#allocation11 + $0x1e8] sm:$0xff]
    %v6124 = vld [vmem:[#allocation11 + $0x1f0] sm:$0xff]
    %v6125 = vld [vmem:[#allocation11 + $0x1f8] sm:$0xff]
    %v6126 = vld [vmem:[#allocation11 + $0x200] sm:$0xff]
    %v6127 = vld [vmem:[#allocation11 + $0x208] sm:$0xff]
    %v6128 = vld [vmem:[#allocation11 + $0x210] sm:$0xff]
    %v6129 = vld [vmem:[#allocation11 + $0x218] sm:$0xff]
    %v6130 = vld [vmem:[#allocation11 + $0x220] sm:$0xff]
    %v6131 = vld [vmem:[#allocation11 + $0x228] sm:$0xff]
    %v6132 = vld [vmem:[#allocation11 + $0x230] sm:$0xff]
    %v6133 = vld [vmem:[#allocation11 + $0x238] sm:$0xff]
    %v6134 = vld [vmem:[#allocation11 + $0x240] sm:$0xff]
    %v6135 = vld [vmem:[#allocation11 + $0x248] sm:$0xff]
    %v6136 = vld [vmem:[#allocation11 + $0x250] sm:$0xff]
    %v6137 = vld [vmem:[#allocation11 + $0x258] sm:$0xff]
    %v6138 = vld [vmem:[#allocation11 + $0x260] sm:$0xff]
    %v6139 = vld [vmem:[#allocation11 + $0x268] sm:$0xff]
    %v6140 = vld [vmem:[#allocation11 + $0x270] sm:$0xff]
    %v6141 = vld [vmem:[#allocation11 + $0x278] sm:$0xff]
    %v6142 = vld [vmem:[#allocation11 + $0x280] sm:$0xff]
    %v6143 = vld [vmem:[#allocation11 + $0x288] sm:$0xff]
    %v6144 = vld [vmem:[#allocation11 + $0x290] sm:$0xff]
    %v6145 = vld [vmem:[#allocation11 + $0x298] sm:$0xff]
    %v6146 = vld [vmem:[#allocation11 + $0x2a0] sm:$0xff]
    %v6147 = vld [vmem:[#allocation11 + $0x2a8] sm:$0xff]
    %v6148 = vld [vmem:[#allocation11 + $0x2b0] sm:$0xff]
    %v6149 = vld [vmem:[#allocation11 + $0x2b8] sm:$0xff]
    %v6150 = vld [vmem:[#allocation11 + $0x2c0] sm:$0xff]
    %v6151 = vld [vmem:[#allocation11 + $0x2c8] sm:$0xff]
    %v6152 = vld [vmem:[#allocation11 + $0x2d0] sm:$0xff]
    %v6153 = vld [vmem:[#allocation11 + $0x2d8] sm:$0xff]
    %v6154 = vld [vmem:[#allocation11 + $0x2e0] sm:$0xff]
    %v6155 = vld [vmem:[#allocation11 + $0x2e8] sm:$0xff]
    %v6156 = vld [vmem:[#allocation11 + $0x2f0] sm:$0xff]
    %v6157 = vld [vmem:[#allocation11 + $0x2f8] sm:$0xff]
    %v6158 = vld [vmem:[#allocation11 + $0x300] sm:$0xff]
    %v6159 = vld [vmem:[#allocation11 + $0x308] sm:$0xff]
    %v6160 = vld [vmem:[#allocation11 + $0x310] sm:$0xff]
    %v6161 = vld [vmem:[#allocation11 + $0x318] sm:$0xff]
    %v6162 = vld [vmem:[#allocation11 + $0x320] sm:$0xff]
    %v6163 = vld [vmem:[#allocation11 + $0x328] sm:$0xff]
    %v6164 = vld [vmem:[#allocation11 + $0x330] sm:$0xff]
    %v6165 = vld [vmem:[#allocation11 + $0x338] sm:$0xff]
    %v6166 = vld [vmem:[#allocation11 + $0x340] sm:$0xff]
    %v6167 = vld [vmem:[#allocation11 + $0x348] sm:$0xff]
    %v6168 = vld [vmem:[#allocation11 + $0x350] sm:$0xff]
    %v6169 = vld [vmem:[#allocation11 + $0x358] sm:$0xff]
    %v6170 = vld [vmem:[#allocation11 + $0x360] sm:$0xff]
    %v6171 = vld [vmem:[#allocation11 + $0x368] sm:$0xff]
    %v6172 = vld [vmem:[#allocation11 + $0x370] sm:$0xff]
    %v6173 = vld [vmem:[#allocation11 + $0x378] sm:$0xff]
    %v6174 = vld [vmem:[#allocation11 + $0x380] sm:$0xff]
    %v6175 = vld [vmem:[#allocation11 + $0x388] sm:$0xff]
    %v6176 = vld [vmem:[#allocation11 + $0x390] sm:$0xff]
    %v6177 = vld [vmem:[#allocation11 + $0x398] sm:$0xff]
    %v6178 = vld [vmem:[#allocation11 + $0x3a0] sm:$0xff]
    %v6179 = vld [vmem:[#allocation11 + $0x3a8] sm:$0xff]
    %v6180 = vld [vmem:[#allocation11 + $0x3b0] sm:$0xff]
    %v6181 = vld [vmem:[#allocation11 + $0x3b8] sm:$0xff]
    %v6182 = vld [vmem:[#allocation11 + $0x3c0] sm:$0xff]
    %v6183 = vld [vmem:[#allocation11 + $0x3c8] sm:$0xff]
    %v6184 = vld [vmem:[#allocation11 + $0x3d0] sm:$0xff]
    %v6185 = vld [vmem:[#allocation11 + $0x3d8] sm:$0xff]
    %v6186 = vld [vmem:[#allocation11 + $0x3e0] sm:$0xff]
    %v6187 = vld [vmem:[#allocation11 + $0x3e8] sm:$0xff]
    %v6188 = vld [vmem:[#allocation11 + $0x3f0] sm:$0xff]
    %v6189 = vld [vmem:[#allocation11 + $0x3f8] sm:$0xff]
    %v6190 = vld [vmem:[#allocation11 + $0x400] sm:$0xff]
    %v6191 = vld [vmem:[#allocation11 + $0x408] sm:$0xff]
    %v6192 = vld [vmem:[#allocation11 + $0x410] sm:$0xff]
    %v6193 = vld [vmem:[#allocation11 + $0x418] sm:$0xff]
    %v6194 = vld [vmem:[#allocation11 + $0x420] sm:$0xff]
    %v6195 = vld [vmem:[#allocation11 + $0x428] sm:$0xff]
    %v6196 = vld [vmem:[#allocation11 + $0x430] sm:$0xff]
    %v6197 = vld [vmem:[#allocation11 + $0x438] sm:$0xff]
    %v6198 = vld [vmem:[#allocation11 + $0x440] sm:$0xff]
    %v6199 = vld [vmem:[#allocation11 + $0x448] sm:$0xff]
    %v6200 = vld [vmem:[#allocation11 + $0x450] sm:$0xff]
    %v6201 = vld [vmem:[#allocation11 + $0x458] sm:$0xff]
    %v6202 = vld [vmem:[#allocation11 + $0x460] sm:$0xff]
    %v6203 = vld [vmem:[#allocation11 + $0x468] sm:$0xff]
    %v6204 = vld [vmem:[#allocation11 + $0x470] sm:$0xff]
    %v6205 = vld [vmem:[#allocation11 + $0x478] sm:$0xff]
    %v6206 = vld [vmem:[#allocation11 + $0x480] sm:$0xff]
    %v6207 = vld [vmem:[#allocation11 + $0x488] sm:$0xff]
    %v6208 = vld [vmem:[#allocation11 + $0x490] sm:$0xff]
    %v6209 = vld [vmem:[#allocation11 + $0x498] sm:$0xff]
    %v6210 = vld [vmem:[#allocation11 + $0x4a0] sm:$0xff]
    %v6211 = vld [vmem:[#allocation11 + $0x4a8] sm:$0xff]
    %v6212 = vld [vmem:[#allocation11 + $0x4b0] sm:$0xff]
    %v6213 = vld [vmem:[#allocation11 + $0x4b8] sm:$0xff]
    %v6214 = vld [vmem:[#allocation11 + $0x4c0] sm:$0xff]
    %v6215 = vld [vmem:[#allocation11 + $0x4c8] sm:$0xff]
    %v6216 = vld [vmem:[#allocation11 + $0x4d0] sm:$0xff]
    %v6217 = vld [vmem:[#allocation11 + $0x4d8] sm:$0xff]
    %v6218 = vld [vmem:[#allocation11 + $0x4e0] sm:$0xff]
    %v6219 = vld [vmem:[#allocation11 + $0x4e8] sm:$0xff]
    %v6220 = vld [vmem:[#allocation11 + $0x4f0] sm:$0xff]
    %v6221 = vld [vmem:[#allocation11 + $0x4f8] sm:$0xff]
    %v6222 = vld [vmem:[#allocation11 + $0x500] sm:$0xff]
    %v6223 = vld [vmem:[#allocation11 + $0x508] sm:$0xff]
    %v6224 = vld [vmem:[#allocation11 + $0x510] sm:$0xff]
    %v6225 = vld [vmem:[#allocation11 + $0x518] sm:$0xff]
    %v6226 = vld [vmem:[#allocation11 + $0x520] sm:$0xff]
    %v6227 = vld [vmem:[#allocation11 + $0x528] sm:$0xff]
    %v6228 = vld [vmem:[#allocation11 + $0x530] sm:$0xff]
    %v6229 = vld [vmem:[#allocation11 + $0x538] sm:$0xff]
    %v6230 = vld [vmem:[#allocation11 + $0x540] sm:$0xff]
    %v6231 = vld [vmem:[#allocation11 + $0x548] sm:$0xff]
    %v6232 = vld [vmem:[#allocation11 + $0x550] sm:$0xff]
    %v6233 = vld [vmem:[#allocation11 + $0x558] sm:$0xff]
    %v6234 = vld [vmem:[#allocation11 + $0x560] sm:$0xff]
    %v6235 = vld [vmem:[#allocation11 + $0x568] sm:$0xff]
    %v6236 = vld [vmem:[#allocation11 + $0x570] sm:$0xff]
    %v6237 = vld [vmem:[#allocation11 + $0x578] sm:$0xff]
    %v6238 = vld [vmem:[#allocation11 + $0x580] sm:$0xff]
    %v6239 = vld [vmem:[#allocation11 + $0x588] sm:$0xff]
    %v6240 = vld [vmem:[#allocation11 + $0x590] sm:$0xff]
    %v6241 = vld [vmem:[#allocation11 + $0x598] sm:$0xff]
    %v6242 = vld [vmem:[#allocation11 + $0x5a0] sm:$0xff]
    %v6243 = vld [vmem:[#allocation11 + $0x5a8] sm:$0xff]
    %v6244 = vld [vmem:[#allocation11 + $0x5b0] sm:$0xff]
    %v6245 = vld [vmem:[#allocation11 + $0x5b8] sm:$0xff]
    %v6246 = vld [vmem:[#allocation11 + $0x5c0] sm:$0xff]
    %v6247 = vld [vmem:[#allocation11 + $0x5c8] sm:$0xff]
    %v6248 = vld [vmem:[#allocation11 + $0x5d0] sm:$0xff]
    %v6249 = vld [vmem:[#allocation11 + $0x5d8] sm:$0xff]
    %v6250 = vld [vmem:[#allocation11 + $0x5e0] sm:$0xff]
    %v6251 = vld [vmem:[#allocation11 + $0x5e8] sm:$0xff]
    %v6252 = vld [vmem:[#allocation11 + $0x5f0] sm:$0xff]
    %v6253 = vld [vmem:[#allocation11 + $0x5f8] sm:$0xff]
    %v6254 = vld [vmem:[#allocation13] sm:$0xf]
    %v6256 = vlaneseq
    %v6257 = vshrl.u32 %v6256, 7
    %v6258 = vsub.s32 0, %v6257
    %v6259 = vrot.slane %v6254, %v6258
    %v6260 = vlaneseq
    %v6261 = vshrl.u32 %v6260, 7
    %v6262 = vsub.s32 1, %v6261
    %v6263 = vrot.slane %v6254, %v6262
    %v6264 = vlaneseq
    %v6265 = vshrl.u32 %v6264, 7
    %v6266 = vsub.s32 2, %v6265
    %v6267 = vrot.slane %v6254, %v6266
    %v6268 = vlaneseq
    %v6269 = vshrl.u32 %v6268, 7
    %v6270 = vsub.s32 3, %v6269
    %v6271 = vrot.slane %v6254, %v6270
    %v6468 = vunpack.c.l.b16 %v6062
    %v6469 = vunpack.c.h.b16 %v6062
    %v6470 = vunpack.c.l.b16 %v6063
    %v6471 = vunpack.c.h.b16 %v6063
    %v6472 = vunpack.c.l.b16 %v6064
    %v6473 = vunpack.c.h.b16 %v6064
    %v6474 = vunpack.c.l.b16 %v6065
    %v6475 = vunpack.c.h.b16 %v6065
    %v6476 = vunpack.c.l.b16 %v6066
    %v6477 = vunpack.c.h.b16 %v6066
    %v6478 = vunpack.c.l.b16 %v6067
    %v6479 = vunpack.c.h.b16 %v6067
    %v6480 = vunpack.c.l.b16 %v6068
    %v6481 = vunpack.c.h.b16 %v6068
    %v6482 = vunpack.c.l.b16 %v6069
    %v6483 = vunpack.c.h.b16 %v6069
    %v6484 = vunpack.c.l.b16 %v6070
    %v6485 = vunpack.c.h.b16 %v6070
    %v6486 = vunpack.c.l.b16 %v6071
    %v6487 = vunpack.c.h.b16 %v6071
    %v6488 = vunpack.c.l.b16 %v6072
    %v6489 = vunpack.c.h.b16 %v6072
    %v6490 = vunpack.c.l.b16 %v6073
    %v6491 = vunpack.c.h.b16 %v6073
    %v6492 = vunpack.c.l.b16 %v6074
    %v6493 = vunpack.c.h.b16 %v6074
    %v6494 = vunpack.c.l.b16 %v6075
    %v6495 = vunpack.c.h.b16 %v6075
    %v6496 = vunpack.c.l.b16 %v6076
    %v6497 = vunpack.c.h.b16 %v6076
    %v6498 = vunpack.c.l.b16 %v6077
    %v6499 = vunpack.c.h.b16 %v6077
    %v6500 = vunpack.c.l.b16 %v6078
    %v6501 = vunpack.c.h.b16 %v6078
    %v6502 = vunpack.c.l.b16 %v6079
    %v6503 = vunpack.c.h.b16 %v6079
    %v6504 = vunpack.c.l.b16 %v6080
    %v6505 = vunpack.c.h.b16 %v6080
    %v6506 = vunpack.c.l.b16 %v6081
    %v6507 = vunpack.c.h.b16 %v6081
    %v6508 = vunpack.c.l.b16 %v6082
    %v6509 = vunpack.c.h.b16 %v6082
    %v6510 = vunpack.c.l.b16 %v6083
    %v6511 = vunpack.c.h.b16 %v6083
    %v6512 = vunpack.c.l.b16 %v6084
    %v6513 = vunpack.c.h.b16 %v6084
    %v6514 = vunpack.c.l.b16 %v6085
    %v6515 = vunpack.c.h.b16 %v6085
    %v6516 = vunpack.c.l.b16 %v6086
    %v6517 = vunpack.c.h.b16 %v6086
    %v6518 = vunpack.c.l.b16 %v6087
    %v6519 = vunpack.c.h.b16 %v6087
    %v6520 = vunpack.c.l.b16 %v6088
    %v6521 = vunpack.c.h.b16 %v6088
    %v6522 = vunpack.c.l.b16 %v6089
    %v6523 = vunpack.c.h.b16 %v6089
    %v6524 = vunpack.c.l.b16 %v6090
    %v6525 = vunpack.c.h.b16 %v6090
    %v6526 = vunpack.c.l.b16 %v6091
    %v6527 = vunpack.c.h.b16 %v6091
    %v6528 = vunpack.c.l.b16 %v6092
    %v6529 = vunpack.c.h.b16 %v6092
    %v6530 = vunpack.c.l.b16 %v6093
    %v6531 = vunpack.c.h.b16 %v6093
    %v6532 = vunpack.c.l.b16 %v6094
    %v6533 = vunpack.c.h.b16 %v6094
    %v6534 = vunpack.c.l.b16 %v6095
    %v6535 = vunpack.c.h.b16 %v6095
    %v6536 = vunpack.c.l.b16 %v6096
    %v6537 = vunpack.c.h.b16 %v6096
    %v6538 = vunpack.c.l.b16 %v6097
    %v6539 = vunpack.c.h.b16 %v6097
    %v6540 = vunpack.c.l.b16 %v6098
    %v6541 = vunpack.c.h.b16 %v6098
    %v6542 = vunpack.c.l.b16 %v6099
    %v6543 = vunpack.c.h.b16 %v6099
    %v6544 = vunpack.c.l.b16 %v6100
    %v6545 = vunpack.c.h.b16 %v6100
    %v6546 = vunpack.c.l.b16 %v6101
    %v6547 = vunpack.c.h.b16 %v6101
    %v6548 = vunpack.c.l.b16 %v6102
    %v6549 = vunpack.c.h.b16 %v6102
    %v6550 = vunpack.c.l.b16 %v6103
    %v6551 = vunpack.c.h.b16 %v6103
    %v6552 = vunpack.c.l.b16 %v6104
    %v6553 = vunpack.c.h.b16 %v6104
    %v6554 = vunpack.c.l.b16 %v6105
    %v6555 = vunpack.c.h.b16 %v6105
    %v6556 = vunpack.c.l.b16 %v6106
    %v6557 = vunpack.c.h.b16 %v6106
    %v6558 = vunpack.c.l.b16 %v6107
    %v6559 = vunpack.c.h.b16 %v6107
    %v6560 = vunpack.c.l.b16 %v6108
    %v6561 = vunpack.c.h.b16 %v6108
    %v6562 = vunpack.c.l.b16 %v6109
    %v6563 = vunpack.c.h.b16 %v6109
    %v6564 = vunpack.c.l.b16 %v6110
    %v6565 = vunpack.c.h.b16 %v6110
    %v6566 = vunpack.c.l.b16 %v6111
    %v6567 = vunpack.c.h.b16 %v6111
    %v6568 = vunpack.c.l.b16 %v6112
    %v6569 = vunpack.c.h.b16 %v6112
    %v6570 = vunpack.c.l.b16 %v6113
    %v6571 = vunpack.c.h.b16 %v6113
    %v6572 = vunpack.c.l.b16 %v6114
    %v6573 = vunpack.c.h.b16 %v6114
    %v6574 = vunpack.c.l.b16 %v6115
    %v6575 = vunpack.c.h.b16 %v6115
    %v6576 = vunpack.c.l.b16 %v6116
    %v6577 = vunpack.c.h.b16 %v6116
    %v6578 = vunpack.c.l.b16 %v6117
    %v6579 = vunpack.c.h.b16 %v6117
    %v6580 = vunpack.c.l.b16 %v6118
    %v6581 = vunpack.c.h.b16 %v6118
    %v6582 = vunpack.c.l.b16 %v6119
    %v6583 = vunpack.c.h.b16 %v6119
    %v6584 = vunpack.c.l.b16 %v6120
    %v6585 = vunpack.c.h.b16 %v6120
    %v6586 = vunpack.c.l.b16 %v6121
    %v6587 = vunpack.c.h.b16 %v6121
    %v6588 = vunpack.c.l.b16 %v6122
    %v6589 = vunpack.c.h.b16 %v6122
    %v6590 = vunpack.c.l.b16 %v6123
    %v6591 = vunpack.c.h.b16 %v6123
    %v6592 = vunpack.c.l.b16 %v6124
    %v6593 = vunpack.c.h.b16 %v6124
    %v6594 = vunpack.c.l.b16 %v6125
    %v6595 = vunpack.c.h.b16 %v6125
    %v6596 = vunpack.c.l.b16 %v6126
    %v6597 = vunpack.c.h.b16 %v6126
    %v6598 = vunpack.c.l.b16 %v6127
    %v6599 = vunpack.c.h.b16 %v6127
    %v6600 = vunpack.c.l.b16 %v6128
    %v6601 = vunpack.c.h.b16 %v6128
    %v6602 = vunpack.c.l.b16 %v6129
    %v6603 = vunpack.c.h.b16 %v6129
    %v6604 = vunpack.c.l.b16 %v6130
    %v6605 = vunpack.c.h.b16 %v6130
    %v6606 = vunpack.c.l.b16 %v6131
    %v6607 = vunpack.c.h.b16 %v6131
    %v6608 = vunpack.c.l.b16 %v6132
    %v6609 = vunpack.c.h.b16 %v6132
    %v6610 = vunpack.c.l.b16 %v6133
    %v6611 = vunpack.c.h.b16 %v6133
    %v6612 = vunpack.c.l.b16 %v6134
    %v6613 = vunpack.c.h.b16 %v6134
    %v6614 = vunpack.c.l.b16 %v6135
    %v6615 = vunpack.c.h.b16 %v6135
    %v6616 = vunpack.c.l.b16 %v6136
    %v6617 = vunpack.c.h.b16 %v6136
    %v6618 = vunpack.c.l.b16 %v6137
    %v6619 = vunpack.c.h.b16 %v6137
    %v6620 = vunpack.c.l.b16 %v6138
    %v6621 = vunpack.c.h.b16 %v6138
    %v6622 = vunpack.c.l.b16 %v6139
    %v6623 = vunpack.c.h.b16 %v6139
    %v6624 = vunpack.c.l.b16 %v6140
    %v6625 = vunpack.c.h.b16 %v6140
    %v6626 = vunpack.c.l.b16 %v6141
    %v6627 = vunpack.c.h.b16 %v6141
    %v6628 = vunpack.c.l.b16 %v6142
    %v6629 = vunpack.c.h.b16 %v6142
    %v6630 = vunpack.c.l.b16 %v6143
    %v6631 = vunpack.c.h.b16 %v6143
    %v6632 = vunpack.c.l.b16 %v6144
    %v6633 = vunpack.c.h.b16 %v6144
    %v6634 = vunpack.c.l.b16 %v6145
    %v6635 = vunpack.c.h.b16 %v6145
    %v6636 = vunpack.c.l.b16 %v6146
    %v6637 = vunpack.c.h.b16 %v6146
    %v6638 = vunpack.c.l.b16 %v6147
    %v6639 = vunpack.c.h.b16 %v6147
    %v6640 = vunpack.c.l.b16 %v6148
    %v6641 = vunpack.c.h.b16 %v6148
    %v6642 = vunpack.c.l.b16 %v6149
    %v6643 = vunpack.c.h.b16 %v6149
    %v6644 = vunpack.c.l.b16 %v6150
    %v6645 = vunpack.c.h.b16 %v6150
    %v6646 = vunpack.c.l.b16 %v6151
    %v6647 = vunpack.c.h.b16 %v6151
    %v6648 = vunpack.c.l.b16 %v6152
    %v6649 = vunpack.c.h.b16 %v6152
    %v6650 = vunpack.c.l.b16 %v6153
    %v6651 = vunpack.c.h.b16 %v6153
    %v6652 = vunpack.c.l.b16 %v6154
    %v6653 = vunpack.c.h.b16 %v6154
    %v6654 = vunpack.c.l.b16 %v6155
    %v6655 = vunpack.c.h.b16 %v6155
    %v6656 = vunpack.c.l.b16 %v6156
    %v6657 = vunpack.c.h.b16 %v6156
    %v6658 = vunpack.c.l.b16 %v6157
    %v6659 = vunpack.c.h.b16 %v6157
    %v6660 = vunpack.c.l.b16 %v6158
    %v6661 = vunpack.c.h.b16 %v6158
    %v6662 = vunpack.c.l.b16 %v6159
    %v6663 = vunpack.c.h.b16 %v6159
    %v6664 = vunpack.c.l.b16 %v6160
    %v6665 = vunpack.c.h.b16 %v6160
    %v6666 = vunpack.c.l.b16 %v6161
    %v6667 = vunpack.c.h.b16 %v6161
    %v6668 = vunpack.c.l.b16 %v6162
    %v6669 = vunpack.c.h.b16 %v6162
    %v6670 = vunpack.c.l.b16 %v6163
    %v6671 = vunpack.c.h.b16 %v6163
    %v6672 = vunpack.c.l.b16 %v6164
    %v6673 = vunpack.c.h.b16 %v6164
    %v6674 = vunpack.c.l.b16 %v6165
    %v6675 = vunpack.c.h.b16 %v6165
    %v6676 = vunpack.c.l.b16 %v6166
    %v6677 = vunpack.c.h.b16 %v6166
    %v6678 = vunpack.c.l.b16 %v6167
    %v6679 = vunpack.c.h.b16 %v6167
    %v6680 = vunpack.c.l.b16 %v6168
    %v6681 = vunpack.c.h.b16 %v6168
    %v6682 = vunpack.c.l.b16 %v6169
    %v6683 = vunpack.c.h.b16 %v6169
    %v6684 = vunpack.c.l.b16 %v6170
    %v6685 = vunpack.c.h.b16 %v6170
    %v6686 = vunpack.c.l.b16 %v6171
    %v6687 = vunpack.c.h.b16 %v6171
    %v6688 = vunpack.c.l.b16 %v6172
    %v6689 = vunpack.c.h.b16 %v6172
    %v6690 = vunpack.c.l.b16 %v6173
    %v6691 = vunpack.c.h.b16 %v6173
    %v6692 = vunpack.c.l.b16 %v6174
    %v6693 = vunpack.c.h.b16 %v6174
    %v6694 = vunpack.c.l.b16 %v6175
    %v6695 = vunpack.c.h.b16 %v6175
    %v6696 = vunpack.c.l.b16 %v6176
    %v6697 = vunpack.c.h.b16 %v6176
    %v6698 = vunpack.c.l.b16 %v6177
    %v6699 = vunpack.c.h.b16 %v6177
    %v6700 = vunpack.c.l.b16 %v6178
    %v6701 = vunpack.c.h.b16 %v6178
    %v6702 = vunpack.c.l.b16 %v6179
    %v6703 = vunpack.c.h.b16 %v6179
    %v6704 = vunpack.c.l.b16 %v6180
    %v6705 = vunpack.c.h.b16 %v6180
    %v6706 = vunpack.c.l.b16 %v6181
    %v6707 = vunpack.c.h.b16 %v6181
    %v6708 = vunpack.c.l.b16 %v6182
    %v6709 = vunpack.c.h.b16 %v6182
    %v6710 = vunpack.c.l.b16 %v6183
    %v6711 = vunpack.c.h.b16 %v6183
    %v6712 = vunpack.c.l.b16 %v6184
    %v6713 = vunpack.c.h.b16 %v6184
    %v6714 = vunpack.c.l.b16 %v6185
    %v6715 = vunpack.c.h.b16 %v6185
    %v6716 = vunpack.c.l.b16 %v6186
    %v6717 = vunpack.c.h.b16 %v6186
    %v6718 = vunpack.c.l.b16 %v6187
    %v6719 = vunpack.c.h.b16 %v6187
    %v6720 = vunpack.c.l.b16 %v6188
    %v6721 = vunpack.c.h.b16 %v6188
    %v6722 = vunpack.c.l.b16 %v6189
    %v6723 = vunpack.c.h.b16 %v6189
    %v6724 = vunpack.c.l.b16 %v6190
    %v6725 = vunpack.c.h.b16 %v6190
    %v6726 = vunpack.c.l.b16 %v6191
    %v6727 = vunpack.c.h.b16 %v6191
    %v6728 = vunpack.c.l.b16 %v6192
    %v6729 = vunpack.c.h.b16 %v6192
    %v6730 = vunpack.c.l.b16 %v6193
    %v6731 = vunpack.c.h.b16 %v6193
    %v6732 = vunpack.c.l.b16 %v6194
    %v6733 = vunpack.c.h.b16 %v6194
    %v6734 = vunpack.c.l.b16 %v6195
    %v6735 = vunpack.c.h.b16 %v6195
    %v6736 = vunpack.c.l.b16 %v6196
    %v6737 = vunpack.c.h.b16 %v6196
    %v6738 = vunpack.c.l.b16 %v6197
    %v6739 = vunpack.c.h.b16 %v6197
    %v6740 = vunpack.c.l.b16 %v6198
    %v6741 = vunpack.c.h.b16 %v6198
    %v6742 = vunpack.c.l.b16 %v6199
    %v6743 = vunpack.c.h.b16 %v6199
    %v6744 = vunpack.c.l.b16 %v6200
    %v6745 = vunpack.c.h.b16 %v6200
    %v6746 = vunpack.c.l.b16 %v6201
    %v6747 = vunpack.c.h.b16 %v6201
    %v6748 = vunpack.c.l.b16 %v6202
    %v6749 = vunpack.c.h.b16 %v6202
    %v6750 = vunpack.c.l.b16 %v6203
    %v6751 = vunpack.c.h.b16 %v6203
    %v6752 = vunpack.c.l.b16 %v6204
    %v6753 = vunpack.c.h.b16 %v6204
    %v6754 = vunpack.c.l.b16 %v6205
    %v6755 = vunpack.c.h.b16 %v6205
    %v6756 = vunpack.c.l.b16 %v6206
    %v6757 = vunpack.c.h.b16 %v6206
    %v6758 = vunpack.c.l.b16 %v6207
    %v6759 = vunpack.c.h.b16 %v6207
    %v6760 = vunpack.c.l.b16 %v6208
    %v6761 = vunpack.c.h.b16 %v6208
    %v6762 = vunpack.c.l.b16 %v6209
    %v6763 = vunpack.c.h.b16 %v6209
    %v6764 = vunpack.c.l.b16 %v6210
    %v6765 = vunpack.c.h.b16 %v6210
    %v6766 = vunpack.c.l.b16 %v6211
    %v6767 = vunpack.c.h.b16 %v6211
    %v6768 = vunpack.c.l.b16 %v6212
    %v6769 = vunpack.c.h.b16 %v6212
    %v6770 = vunpack.c.l.b16 %v6213
    %v6771 = vunpack.c.h.b16 %v6213
    %v6772 = vunpack.c.l.b16 %v6214
    %v6773 = vunpack.c.h.b16 %v6214
    %v6774 = vunpack.c.l.b16 %v6215
    %v6775 = vunpack.c.h.b16 %v6215
    %v6776 = vunpack.c.l.b16 %v6216
    %v6777 = vunpack.c.h.b16 %v6216
    %v6778 = vunpack.c.l.b16 %v6217
    %v6779 = vunpack.c.h.b16 %v6217
    %v6780 = vunpack.c.l.b16 %v6218
    %v6781 = vunpack.c.h.b16 %v6218
    %v6782 = vunpack.c.l.b16 %v6219
    %v6783 = vunpack.c.h.b16 %v6219
    %v6784 = vunpack.c.l.b16 %v6220
    %v6785 = vunpack.c.h.b16 %v6220
    %v6786 = vunpack.c.l.b16 %v6221
    %v6787 = vunpack.c.h.b16 %v6221
    %v6788 = vunpack.c.l.b16 %v6222
    %v6789 = vunpack.c.h.b16 %v6222
    %v6790 = vunpack.c.l.b16 %v6223
    %v6791 = vunpack.c.h.b16 %v6223
    %v6792 = vunpack.c.l.b16 %v6224
    %v6793 = vunpack.c.h.b16 %v6224
    %v6794 = vunpack.c.l.b16 %v6225
    %v6795 = vunpack.c.h.b16 %v6225
    %v6796 = vunpack.c.l.b16 %v6226
    %v6797 = vunpack.c.h.b16 %v6226
    %v6798 = vunpack.c.l.b16 %v6227
    %v6799 = vunpack.c.h.b16 %v6227
    %v6800 = vunpack.c.l.b16 %v6228
    %v6801 = vunpack.c.h.b16 %v6228
    %v6802 = vunpack.c.l.b16 %v6229
    %v6803 = vunpack.c.h.b16 %v6229
    %v6804 = vunpack.c.l.b16 %v6230
    %v6805 = vunpack.c.h.b16 %v6230
    %v6806 = vunpack.c.l.b16 %v6231
    %v6807 = vunpack.c.h.b16 %v6231
    %v6808 = vunpack.c.l.b16 %v6232
    %v6809 = vunpack.c.h.b16 %v6232
    %v6810 = vunpack.c.l.b16 %v6233
    %v6811 = vunpack.c.h.b16 %v6233
    %v6812 = vunpack.c.l.b16 %v6234
    %v6813 = vunpack.c.h.b16 %v6234
    %v6814 = vunpack.c.l.b16 %v6235
    %v6815 = vunpack.c.h.b16 %v6235
    %v6816 = vunpack.c.l.b16 %v6236
    %v6817 = vunpack.c.h.b16 %v6236
    %v6818 = vunpack.c.l.b16 %v6237
    %v6819 = vunpack.c.h.b16 %v6237
    %v6820 = vunpack.c.l.b16 %v6238
    %v6821 = vunpack.c.h.b16 %v6238
    %v6822 = vunpack.c.l.b16 %v6239
    %v6823 = vunpack.c.h.b16 %v6239
    %v6824 = vunpack.c.l.b16 %v6240
    %v6825 = vunpack.c.h.b16 %v6240
    %v6826 = vunpack.c.l.b16 %v6241
    %v6827 = vunpack.c.h.b16 %v6241
    %v6828 = vunpack.c.l.b16 %v6242
    %v6829 = vunpack.c.h.b16 %v6242
    %v6830 = vunpack.c.l.b16 %v6243
    %v6831 = vunpack.c.h.b16 %v6243
    %v6832 = vunpack.c.l.b16 %v6244
    %v6833 = vunpack.c.h.b16 %v6244
    %v6834 = vunpack.c.l.b16 %v6245
    %v6835 = vunpack.c.h.b16 %v6245
    %v6836 = vunpack.c.l.b16 %v6246
    %v6837 = vunpack.c.h.b16 %v6246
    %v6838 = vunpack.c.l.b16 %v6247
    %v6839 = vunpack.c.h.b16 %v6247
    %v6840 = vunpack.c.l.b16 %v6248
    %v6841 = vunpack.c.h.b16 %v6248
    %v6842 = vunpack.c.l.b16 %v6249
    %v6843 = vunpack.c.h.b16 %v6249
    %v6844 = vunpack.c.l.b16 %v6250
    %v6845 = vunpack.c.h.b16 %v6250
    %v6846 = vunpack.c.l.b16 %v6251
    %v6847 = vunpack.c.h.b16 %v6251
    %v6848 = vunpack.c.l.b16 %v6252
    %v6849 = vunpack.c.h.b16 %v6252
    %v6850 = vunpack.c.l.b16 %v6253
    %v6851 = vunpack.c.h.b16 %v6253
    %v6852 = vpack.c.b16 %v6472, %v6468
    %v6853 = vpack.c.b16 %v6473, %v6469
    %v6854 = vpack.c.b16 %v6474, %v6470
    %v6855 = vpack.c.b16 %v6475, %v6471
    %v6856 = vpack.c.b16 %v6480, %v6476
    %v6857 = vpack.c.b16 %v6481, %v6477
    %v6858 = vpack.c.b16 %v6482, %v6478
    %v6859 = vpack.c.b16 %v6483, %v6479
    %v6860 = vpack.c.b16 %v6488, %v6484
    %v6861 = vpack.c.b16 %v6489, %v6485
    %v6862 = vpack.c.b16 %v6490, %v6486
    %v6863 = vpack.c.b16 %v6491, %v6487
    %v6864 = vpack.c.b16 %v6496, %v6492
    %v6865 = vpack.c.b16 %v6497, %v6493
    %v6866 = vpack.c.b16 %v6498, %v6494
    %v6867 = vpack.c.b16 %v6499, %v6495
    %v6868 = vpack.c.b16 %v6504, %v6500
    %v6869 = vpack.c.b16 %v6505, %v6501
    %v6870 = vpack.c.b16 %v6506, %v6502
    %v6871 = vpack.c.b16 %v6507, %v6503
    %v6872 = vpack.c.b16 %v6512, %v6508
    %v6873 = vpack.c.b16 %v6513, %v6509
    %v6874 = vpack.c.b16 %v6514, %v6510
    %v6875 = vpack.c.b16 %v6515, %v6511
    %v6876 = vpack.c.b16 %v6520, %v6516
    %v6877 = vpack.c.b16 %v6521, %v6517
    %v6878 = vpack.c.b16 %v6522, %v6518
    %v6879 = vpack.c.b16 %v6523, %v6519
    %v6880 = vpack.c.b16 %v6528, %v6524
    %v6881 = vpack.c.b16 %v6529, %v6525
    %v6882 = vpack.c.b16 %v6530, %v6526
    %v6883 = vpack.c.b16 %v6531, %v6527
    %v6884 = vpack.c.b16 %v6536, %v6532
    %v6885 = vpack.c.b16 %v6537, %v6533
    %v6886 = vpack.c.b16 %v6538, %v6534
    %v6887 = vpack.c.b16 %v6539, %v6535
    %v6888 = vpack.c.b16 %v6544, %v6540
    %v6889 = vpack.c.b16 %v6545, %v6541
    %v6890 = vpack.c.b16 %v6546, %v6542
    %v6891 = vpack.c.b16 %v6547, %v6543
    %v6892 = vpack.c.b16 %v6552, %v6548
    %v6893 = vpack.c.b16 %v6553, %v6549
    %v6894 = vpack.c.b16 %v6554, %v6550
    %v6895 = vpack.c.b16 %v6555, %v6551
    %v6896 = vpack.c.b16 %v6560, %v6556
    %v6897 = vpack.c.b16 %v6561, %v6557
    %v6898 = vpack.c.b16 %v6562, %v6558
    %v6899 = vpack.c.b16 %v6563, %v6559
    %v6900 = vpack.c.b16 %v6568, %v6564
    %v6901 = vpack.c.b16 %v6569, %v6565
    %v6902 = vpack.c.b16 %v6570, %v6566
    %v6903 = vpack.c.b16 %v6571, %v6567
    %v6904 = vpack.c.b16 %v6576, %v6572
    %v6905 = vpack.c.b16 %v6577, %v6573
    %v6906 = vpack.c.b16 %v6578, %v6574
    %v6907 = vpack.c.b16 %v6579, %v6575
    %v6908 = vpack.c.b16 %v6584, %v6580
    %v6909 = vpack.c.b16 %v6585, %v6581
    %v6910 = vpack.c.b16 %v6586, %v6582
    %v6911 = vpack.c.b16 %v6587, %v6583
    %v6912 = vpack.c.b16 %v6592, %v6588
    %v6913 = vpack.c.b16 %v6593, %v6589
    %v6914 = vpack.c.b16 %v6594, %v6590
    %v6915 = vpack.c.b16 %v6595, %v6591
    %v6916 = vpack.c.b16 %v6600, %v6596
    %v6917 = vpack.c.b16 %v6601, %v6597
    %v6918 = vpack.c.b16 %v6602, %v6598
    %v6919 = vpack.c.b16 %v6603, %v6599
    %v6920 = vpack.c.b16 %v6608, %v6604
    %v6921 = vpack.c.b16 %v6609, %v6605
    %v6922 = vpack.c.b16 %v6610, %v6606
    %v6923 = vpack.c.b16 %v6611, %v6607
    %v6924 = vpack.c.b16 %v6616, %v6612
    %v6925 = vpack.c.b16 %v6617, %v6613
    %v6926 = vpack.c.b16 %v6618, %v6614
    %v6927 = vpack.c.b16 %v6619, %v6615
    %v6928 = vpack.c.b16 %v6624, %v6620
    %v6929 = vpack.c.b16 %v6625, %v6621
    %v6930 = vpack.c.b16 %v6626, %v6622
    %v6931 = vpack.c.b16 %v6627, %v6623
    %v6932 = vpack.c.b16 %v6632, %v6628
    %v6933 = vpack.c.b16 %v6633, %v6629
    %v6934 = vpack.c.b16 %v6634, %v6630
    %v6935 = vpack.c.b16 %v6635, %v6631
    %v6936 = vpack.c.b16 %v6640, %v6636
    %v6937 = vpack.c.b16 %v6641, %v6637
    %v6938 = vpack.c.b16 %v6642, %v6638
    %v6939 = vpack.c.b16 %v6643, %v6639
    %v6940 = vpack.c.b16 %v6648, %v6644
    %v6941 = vpack.c.b16 %v6649, %v6645
    %v6942 = vpack.c.b16 %v6650, %v6646
    %v6943 = vpack.c.b16 %v6651, %v6647
    %v6944 = vpack.c.b16 %v6656, %v6652
    %v6945 = vpack.c.b16 %v6657, %v6653
    %v6946 = vpack.c.b16 %v6658, %v6654
    %v6947 = vpack.c.b16 %v6659, %v6655
    %v6948 = vpack.c.b16 %v6664, %v6660
    %v6949 = vpack.c.b16 %v6665, %v6661
    %v6950 = vpack.c.b16 %v6666, %v6662
    %v6951 = vpack.c.b16 %v6667, %v6663
    %v6952 = vpack.c.b16 %v6672, %v6668
    %v6953 = vpack.c.b16 %v6673, %v6669
    %v6954 = vpack.c.b16 %v6674, %v6670
    %v6955 = vpack.c.b16 %v6675, %v6671
    %v6956 = vpack.c.b16 %v6680, %v6676
    %v6957 = vpack.c.b16 %v6681, %v6677
    %v6958 = vpack.c.b16 %v6682, %v6678
    %v6959 = vpack.c.b16 %v6683, %v6679
    %v6960 = vpack.c.b16 %v6688, %v6684
    %v6961 = vpack.c.b16 %v6689, %v6685
    %v6962 = vpack.c.b16 %v6690, %v6686
    %v6963 = vpack.c.b16 %v6691, %v6687
    %v6964 = vpack.c.b16 %v6696, %v6692
    %v6965 = vpack.c.b16 %v6697, %v6693
    %v6966 = vpack.c.b16 %v6698, %v6694
    %v6967 = vpack.c.b16 %v6699, %v6695
    %v6968 = vpack.c.b16 %v6704, %v6700
    %v6969 = vpack.c.b16 %v6705, %v6701
    %v6970 = vpack.c.b16 %v6706, %v6702
    %v6971 = vpack.c.b16 %v6707, %v6703
    %v6972 = vpack.c.b16 %v6712, %v6708
    %v6973 = vpack.c.b16 %v6713, %v6709
    %v6974 = vpack.c.b16 %v6714, %v6710
    %v6975 = vpack.c.b16 %v6715, %v6711
    %v6976 = vpack.c.b16 %v6720, %v6716
    %v6977 = vpack.c.b16 %v6721, %v6717
    %v6978 = vpack.c.b16 %v6722, %v6718
    %v6979 = vpack.c.b16 %v6723, %v6719
    %v6980 = vpack.c.b16 %v6728, %v6724
    %v6981 = vpack.c.b16 %v6729, %v6725
    %v6982 = vpack.c.b16 %v6730, %v6726
    %v6983 = vpack.c.b16 %v6731, %v6727
    %v6984 = vpack.c.b16 %v6736, %v6732
    %v6985 = vpack.c.b16 %v6737, %v6733
    %v6986 = vpack.c.b16 %v6738, %v6734
    %v6987 = vpack.c.b16 %v6739, %v6735
    %v6988 = vpack.c.b16 %v6744, %v6740
    %v6989 = vpack.c.b16 %v6745, %v6741
    %v6990 = vpack.c.b16 %v6746, %v6742
    %v6991 = vpack.c.b16 %v6747, %v6743
    %v6992 = vpack.c.b16 %v6752, %v6748
    %v6993 = vpack.c.b16 %v6753, %v6749
    %v6994 = vpack.c.b16 %v6754, %v6750
    %v6995 = vpack.c.b16 %v6755, %v6751
    %v6996 = vpack.c.b16 %v6760, %v6756
    %v6997 = vpack.c.b16 %v6761, %v6757
    %v6998 = vpack.c.b16 %v6762, %v6758
    %v6999 = vpack.c.b16 %v6763, %v6759
    %v7000 = vpack.c.b16 %v6768, %v6764
    %v7001 = vpack.c.b16 %v6769, %v6765
    %v7002 = vpack.c.b16 %v6770, %v6766
    %v7003 = vpack.c.b16 %v6771, %v6767
    %v7004 = vpack.c.b16 %v6776, %v6772
    %v7005 = vpack.c.b16 %v6777, %v6773
    %v7006 = vpack.c.b16 %v6778, %v6774
    %v7007 = vpack.c.b16 %v6779, %v6775
    %v7008 = vpack.c.b16 %v6784, %v6780
    %v7009 = vpack.c.b16 %v6785, %v6781
    %v7010 = vpack.c.b16 %v6786, %v6782
    %v7011 = vpack.c.b16 %v6787, %v6783
    %v7012 = vpack.c.b16 %v6792, %v6788
    %v7013 = vpack.c.b16 %v6793, %v6789
    %v7014 = vpack.c.b16 %v6794, %v6790
    %v7015 = vpack.c.b16 %v6795, %v6791
    %v7016 = vpack.c.b16 %v6800, %v6796
    %v7017 = vpack.c.b16 %v6801, %v6797
    %v7018 = vpack.c.b16 %v6802, %v6798
    %v7019 = vpack.c.b16 %v6803, %v6799
    %v7020 = vpack.c.b16 %v6808, %v6804
    %v7021 = vpack.c.b16 %v6809, %v6805
    %v7022 = vpack.c.b16 %v6810, %v6806
    %v7023 = vpack.c.b16 %v6811, %v6807
    %v7024 = vpack.c.b16 %v6816, %v6812
    %v7025 = vpack.c.b16 %v6817, %v6813
    %v7026 = vpack.c.b16 %v6818, %v6814
    %v7027 = vpack.c.b16 %v6819, %v6815
    %v7028 = vpack.c.b16 %v6824, %v6820
    %v7029 = vpack.c.b16 %v6825, %v6821
    %v7030 = vpack.c.b16 %v6826, %v6822
    %v7031 = vpack.c.b16 %v6827, %v6823
    %v7032 = vpack.c.b16 %v6832, %v6828
    %v7033 = vpack.c.b16 %v6833, %v6829
    %v7034 = vpack.c.b16 %v6834, %v6830
    %v7035 = vpack.c.b16 %v6835, %v6831
    %v7036 = vpack.c.b16 %v6840, %v6836
    %v7037 = vpack.c.b16 %v6841, %v6837
    %v7038 = vpack.c.b16 %v6842, %v6838
    %v7039 = vpack.c.b16 %v6843, %v6839
    %v7040 = vpack.c.b16 %v6848, %v6844
    %v7041 = vpack.c.b16 %v6849, %v6845
    %v7042 = vpack.c.b16 %v6850, %v6846
    %v7043 = vpack.c.b16 %v6851, %v6847
    %7236 = vmatprep.subr.bf16.mxu0 %v6853
    %7237 = vmatpush1.bf16.msra.mxu0 %v6852
    %7238 = vmatprep.subr.bf16.mxu0 %v6857
    %7239 = vmatpush1.bf16.msra.mxu0 %v6856
    %7240 = vmatprep.subr.bf16.mxu0 %v6861
    %7241 = vmatpush1.bf16.msra.mxu0 %v6860
    %7242 = vmatprep.subr.bf16.mxu0 %v6865
    %7243 = vmatpush1.bf16.msra.mxu0 %v6864
    %7244 = vmatprep.subr.bf16.mxu0 %v6869
    %7245 = vmatpush1.bf16.msra.mxu0 %v6868
    %7246 = vmatprep.subr.bf16.mxu0 %v6873
    %7247 = vmatpush1.bf16.msra.mxu0 %v6872
    %7248 = vmatprep.subr.bf16.mxu0 %v6877
    %7249 = vmatpush1.bf16.msra.mxu0 %v6876
    %7250 = vmatprep.subr.bf16.mxu0 %v6881
    %7251 = vmatpush1.bf16.msra.mxu0 %v6880
    %7252 = vmatprep.subr.bf16.mxu0 %v6885
    %7253 = vmatpush1.bf16.msra.mxu0 %v6884
    %7254 = vmatprep.subr.bf16.mxu0 %v6889
    %7255 = vmatpush1.bf16.msra.mxu0 %v6888
    %7256 = vmatprep.subr.bf16.mxu0 %v6893
    %7257 = vmatpush1.bf16.msra.mxu0 %v6892
    %7258 = vmatprep.subr.bf16.mxu0 %v6897
    %7259 = vmatpush1.bf16.msra.mxu0 %v6896
    %7260 = vmatprep.subr.bf16.mxu0 %v6901
    %7261 = vmatpush1.bf16.msra.mxu0 %v6900
    %7262 = vmatprep.subr.bf16.mxu0 %v6905
    %7263 = vmatpush1.bf16.msra.mxu0 %v6904
    %7264 = vmatprep.subr.bf16.mxu0 %v6909
    %7265 = vmatpush1.bf16.msra.mxu0 %v6908
    %7266 = vmatprep.subr.bf16.mxu0 %v6913
    %7267 = vmatpush1.bf16.msra.mxu0 %v6912
    %7268 = vmatprep.mubr.bf16.mxu0 %v6057
    %7269 = vmatmul.mubr.bf16.gmra.mrb[0].mxu0 %v6056
    %v7270 = vpop.f32.mrb[0].mxu0
    %v7271 = vadd.f32 %v6259, %v7270
    %v7272 = vpop.f32.mrb[0].mxu0
    %v7273 = vadd.f32 %v6263, %v7272
    %v7274 = vpop.f32.mrb[0].mxu0
    %v7275 = vpop.f32.mrb[0].mxu0
    %7276 = vdwg.mxu0
    %7277 = vmatprep.subr.bf16.mxu0 %v6917
    %7278 = vmatpush1.bf16.msra.mxu0 %v6916
    %7279 = vmatprep.subr.bf16.mxu0 %v6921
    %7280 = vmatpush1.bf16.msra.mxu0 %v6920
    %7281 = vmatprep.subr.bf16.mxu0 %v6925
    %7282 = vmatpush1.bf16.msra.mxu0 %v6924
    %7283 = vmatprep.subr.bf16.mxu0 %v6929
    %7284 = vmatpush1.bf16.msra.mxu0 %v6928
    %7285 = vmatprep.subr.bf16.mxu0 %v6933
    %7286 = vmatpush1.bf16.msra.mxu0 %v6932
    %7287 = vmatprep.subr.bf16.mxu0 %v6937
    %7288 = vmatpush1.bf16.msra.mxu0 %v6936
    %7289 = vmatprep.subr.bf16.mxu0 %v6941
    %7290 = vmatpush1.bf16.msra.mxu0 %v6940
    %7291 = vmatprep.subr.bf16.mxu0 %v6945
    %7292 = vmatpush1.bf16.msra.mxu0 %v6944
    %7293 = vmatprep.subr.bf16.mxu0 %v6949
    %7294 = vmatpush1.bf16.msra.mxu0 %v6948
    %7295 = vmatprep.subr.bf16.mxu0 %v6953
    %7296 = vmatpush1.bf16.msra.mxu0 %v6952
    %7297 = vmatprep.subr.bf16.mxu0 %v6957
    %7298 = vmatpush1.bf16.msra.mxu0 %v6956
    %7299 = vmatprep.subr.bf16.mxu0 %v6961
    %7300 = vmatpush1.bf16.msra.mxu0 %v6960
    %7301 = vmatprep.subr.bf16.mxu0 %v6965
    %7302 = vmatpush1.bf16.msra.mxu0 %v6964
    %7303 = vmatprep.subr.bf16.mxu0 %v6969
    %7304 = vmatpush1.bf16.msra.mxu0 %v6968
    %7305 = vmatprep.subr.bf16.mxu0 %v6973
    %7306 = vmatpush1.bf16.msra.mxu0 %v6972
    %7307 = vmatprep.subr.bf16.mxu0 %v6977
    %7308 = vmatpush1.bf16.msra.mxu0 %v6976
    %7309 = vmatprep.mubr.bf16.mxu0 %v6059
    %7310 = vmatmul.mubr.bf16.gmra.mrb[0].mxu0 %v6058
    %v7311 = vpop.f32.mrb[0].mxu0
    %v7312 = vadd.f32 %v7271, %v7311
    %v7313 = vpop.f32.mrb[0].mxu0
    %v7314 = vadd.f32 %v7273, %v7313
    %v7315 = vpop.f32.mrb[0].mxu0
    %v7316 = vpop.f32.mrb[0].mxu0
    %7317 = vdwg.mxu0
    %7318 = vmatprep.subr.bf16.mxu0 %v6981
    %7319 = vmatpush1.bf16.msra.mxu0 %v6980
    %7320 = vmatprep.subr.bf16.mxu0 %v6985
    %7321 = vmatpush1.bf16.msra.mxu0 %v6984
    %7322 = vmatprep.subr.bf16.mxu0 %v6989
    %7323 = vmatpush1.bf16.msra.mxu0 %v6988
    %7324 = vmatprep.subr.bf16.mxu0 %v6993
    %7325 = vmatpush1.bf16.msra.mxu0 %v6992
    %7326 = vmatprep.subr.bf16.mxu0 %v6997
    %7327 = vmatpush1.bf16.msra.mxu0 %v6996
    %7328 = vmatprep.subr.bf16.mxu0 %v7001
    %7329 = vmatpush1.bf16.msra.mxu0 %v7000
    %7330 = vmatprep.subr.bf16.mxu0 %v7005
    %7331 = vmatpush1.bf16.msra.mxu0 %v7004
    %7332 = vmatprep.subr.bf16.mxu0 %v7009
    %7333 = vmatpush1.bf16.msra.mxu0 %v7008
    %7334 = vmatprep.subr.bf16.mxu0 %v7013
    %7335 = vmatpush1.bf16.msra.mxu0 %v7012
    %7336 = vmatprep.subr.bf16.mxu0 %v7017
    %7337 = vmatpush1.bf16.msra.mxu0 %v7016
    %7338 = vmatprep.subr.bf16.mxu0 %v7021
    %7339 = vmatpush1.bf16.msra.mxu0 %v7020
    %7340 = vmatprep.subr.bf16.mxu0 %v7025
    %7341 = vmatpush1.bf16.msra.mxu0 %v7024
    %7342 = vmatprep.subr.bf16.mxu0 %v7029
    %7343 = vmatpush1.bf16.msra.mxu0 %v7028
    %7344 = vmatprep.subr.bf16.mxu0 %v7033
    %7345 = vmatpush1.bf16.msra.mxu0 %v7032
    %7346 = vmatprep.subr.bf16.mxu0 %v7037
    %7347 = vmatpush1.bf16.msra.mxu0 %v7036
    %7348 = vmatprep.subr.bf16.mxu0 %v7041
    %7349 = vmatpush1.bf16.msra.mxu0 %v7040
    %7350 = vmatprep.mubr.bf16.mxu0 %v6061
    %7351 = vmatmul.mubr.bf16.gmra.mrb[0].mxu0 %v6060
    %v7352 = vpop.f32.mrb[0].mxu0
    %v7353 = vadd.f32 %v7312, %v7352
    %v7354 = vpop.f32.mrb[0].mxu0
    %v7355 = vadd.f32 %v7314, %v7354
    %v7356 = vpop.f32.mrb[0].mxu0
    %v7357 = vpop.f32.mrb[0].mxu0
    %7358 = vdwg.mxu0
    %7359 = vmatprep.subr.bf16.mxu0 %v6855
    %7360 = vmatpush1.bf16.msra.mxu0 %v6854
    %7361 = vmatprep.subr.bf16.mxu0 %v6859
    %7362 = vmatpush1.bf16.msra.mxu0 %v6858
    %7363 = vmatprep.subr.bf16.mxu0 %v6863
    %7364 = vmatpush1.bf16.msra.mxu0 %v6862
    %7365 = vmatprep.subr.bf16.mxu0 %v6867
    %7366 = vmatpush1.bf16.msra.mxu0 %v6866
    %7367 = vmatprep.subr.bf16.mxu0 %v6871
    %7368 = vmatpush1.bf16.msra.mxu0 %v6870
    %7369 = vmatprep.subr.bf16.mxu0 %v6875
    %7370 = vmatpush1.bf16.msra.mxu0 %v6874
    %7371 = vmatprep.subr.bf16.mxu0 %v6879
    %7372 = vmatpush1.bf16.msra.mxu0 %v6878
    %7373 = vmatprep.subr.bf16.mxu0 %v6883
    %7374 = vmatpush1.bf16.msra.mxu0 %v6882
    %7375 = vmatprep.subr.bf16.mxu0 %v6887
    %7376 = vmatpush1.bf16.msra.mxu0 %v6886
    %7377 = vmatprep.subr.bf16.mxu0 %v6891
    %7378 = vmatpush1.bf16.msra.mxu0 %v6890
    %7379 = vmatprep.subr.bf16.mxu0 %v6895
    %7380 = vmatpush1.bf16.msra.mxu0 %v6894
    %7381 = vmatprep.subr.bf16.mxu0 %v6899
    %7382 = vmatpush1.bf16.msra.mxu0 %v6898
    %7383 = vmatprep.subr.bf16.mxu0 %v6903
    %7384 = vmatpush1.bf16.msra.mxu0 %v6902
    %7385 = vmatprep.subr.bf16.mxu0 %v6907
    %7386 = vmatpush1.bf16.msra.mxu0 %v6906
    %7387 = vmatprep.subr.bf16.mxu0 %v6911
    %7388 = vmatpush1.bf16.msra.mxu0 %v6910
    %7389 = vmatprep.subr.bf16.mxu0 %v6915
    %7390 = vmatpush1.bf16.msra.mxu0 %v6914
    %7391 = vmatprep.mubr.bf16.mxu0 %v6057
    %7392 = vmatmul.mubr.bf16.gmra.mrb[0].mxu0 %v6056
    %v7393 = vpop.f32.mrb[0].mxu0
    %v7394 = vadd.f32 %v6267, %v7393
    %v7395 = vpop.f32.mrb[0].mxu0
    %v7396 = vadd.f32 %v6271, %v7395
    %v7397 = vpop.f32.mrb[0].mxu0
    %v7398 = vpop.f32.mrb[0].mxu0
    %7399 = vdwg.mxu0
    %7400 = vmatprep.subr.bf16.mxu0 %v6919
    %7401 = vmatpush1.bf16.msra.mxu0 %v6918
    %7402 = vmatprep.subr.bf16.mxu0 %v6923
    %7403 = vmatpush1.bf16.msra.mxu0 %v6922
    %7404 = vmatprep.subr.bf16.mxu0 %v6927
    %7405 = vmatpush1.bf16.msra.mxu0 %v6926
    %7406 = vmatprep.subr.bf16.mxu0 %v6931
    %7407 = vmatpush1.bf16.msra.mxu0 %v6930
    %7408 = vmatprep.subr.bf16.mxu0 %v6935
    %7409 = vmatpush1.bf16.msra.mxu0 %v6934
    %7410 = vmatprep.subr.bf16.mxu0 %v6939
    %7411 = vmatpush1.bf16.msra.mxu0 %v6938
    %7412 = vmatprep.subr.bf16.mxu0 %v6943
    %7413 = vmatpush1.bf16.msra.mxu0 %v6942
    %7414 = vmatprep.subr.bf16.mxu0 %v6947
    %7415 = vmatpush1.bf16.msra.mxu0 %v6946
    %7416 = vmatprep.subr.bf16.mxu0 %v6951
    %7417 = vmatpush1.bf16.msra.mxu0 %v6950
    %7418 = vmatprep.subr.bf16.mxu0 %v6955
    %7419 = vmatpush1.bf16.msra.mxu0 %v6954
    %7420 = vmatprep.subr.bf16.mxu0 %v6959
    %7421 = vmatpush1.bf16.msra.mxu0 %v6958
    %7422 = vmatprep.subr.bf16.mxu0 %v6963
    %7423 = vmatpush1.bf16.msra.mxu0 %v6962
    %7424 = vmatprep.subr.bf16.mxu0 %v6967
    %7425 = vmatpush1.bf16.msra.mxu0 %v6966
    %7426 = vmatprep.subr.bf16.mxu0 %v6971
    %7427 = vmatpush1.bf16.msra.mxu0 %v6970
    %7428 = vmatprep.subr.bf16.mxu0 %v6975
    %7429 = vmatpush1.bf16.msra.mxu0 %v6974
    %7430 = vmatprep.subr.bf16.mxu0 %v6979
    %7431 = vmatpush1.bf16.msra.mxu0 %v6978
    %7432 = vmatprep.mubr.bf16.mxu0 %v6059
    %7433 = vmatmul.mubr.bf16.gmra.mrb[0].mxu0 %v6058
    %v7434 = vpop.f32.mrb[0].mxu0
    %v7435 = vadd.f32 %v7394, %v7434
    %v7436 = vpop.f32.mrb[0].mxu0
    %v7437 = vadd.f32 %v7396, %v7436
    %v7438 = vpop.f32.mrb[0].mxu0
    %v7439 = vpop.f32.mrb[0].mxu0
    %7440 = vdwg.mxu0
    %7441 = vmatprep.subr.bf16.mxu0 %v6983
    %7442 = vmatpush1.bf16.msra.mxu0 %v6982
    %7443 = vmatprep.subr.bf16.mxu0 %v6987
    %7444 = vmatpush1.bf16.msra.mxu0 %v6986
    %7445 = vmatprep.subr.bf16.mxu0 %v6991
    %7446 = vmatpush1.bf16.msra.mxu0 %v6990
    %7447 = vmatprep.subr.bf16.mxu0 %v6995
    %7448 = vmatpush1.bf16.msra.mxu0 %v6994
    %7449 = vmatprep.subr.bf16.mxu0 %v6999
    %7450 = vmatpush1.bf16.msra.mxu0 %v6998
    %7451 = vmatprep.subr.bf16.mxu0 %v7003
    %7452 = vmatpush1.bf16.msra.mxu0 %v7002
    %7453 = vmatprep.subr.bf16.mxu0 %v7007
    %7454 = vmatpush1.bf16.msra.mxu0 %v7006
    %7455 = vmatprep.subr.bf16.mxu0 %v7011
    %7456 = vmatpush1.bf16.msra.mxu0 %v7010
    %7457 = vmatprep.subr.bf16.mxu0 %v7015
    %7458 = vmatpush1.bf16.msra.mxu0 %v7014
    %7459 = vmatprep.subr.bf16.mxu0 %v7019
    %7460 = vmatpush1.bf16.msra.mxu0 %v7018
    %7461 = vmatprep.subr.bf16.mxu0 %v7023
    %7462 = vmatpush1.bf16.msra.mxu0 %v7022
    %7463 = vmatprep.subr.bf16.mxu0 %v7027
    %7464 = vmatpush1.bf16.msra.mxu0 %v7026
    %7465 = vmatprep.subr.bf16.mxu0 %v7031
    %7466 = vmatpush1.bf16.msra.mxu0 %v7030
    %7467 = vmatprep.subr.bf16.mxu0 %v7035
    %7468 = vmatpush1.bf16.msra.mxu0 %v7034
    %7469 = vmatprep.subr.bf16.mxu0 %v7039
    %7470 = vmatpush1.bf16.msra.mxu0 %v7038
    %7471 = vmatprep.subr.bf16.mxu0 %v7043
    %7472 = vmatpush1.bf16.msra.mxu0 %v7042
    %7473 = vmatprep.mubr.bf16.mxu0 %v6061
    %7474 = vmatmul.mubr.bf16.gmra.mrb[0].mxu0 %v6060
    %v7475 = vpop.f32.mrb[0].mxu0
    %v7476 = vadd.f32 %v7435, %v7475
    %v7477 = vpop.f32.mrb[0].mxu0
    %v7478 = vadd.f32 %v7437, %v7477
    %v7479 = vpop.f32.mrb[0].mxu0
    %v7480 = vpop.f32.mrb[0].mxu0
    %7481 = vdwg.mxu0
    %v7482 = vmax.f32 %v7353, 0.0
    %v7483 = vmax.f32 %v7355, 0.0
    %v7484 = vmax.f32 %v7476, 0.0
    %v7485 = vmax.f32 %v7478, 0.0
    %v7486 = vpack.c.bf16 %v7482, %v7482
    %v7487 = vpack.c.bf16 %v7483, %v7483
    %v7488 = vpack.c.bf16 %v7484, %v7484
    %v7489 = vpack.c.bf16 %v7485, %v7485
    %v7490 = vld [vmem:[#allocation14] sm:$0xf]
    %v7491 = vld [vmem:[#allocation14 + $0x4] sm:$0xf]
    %v7492 = vld [vmem:[#allocation14 + $0x8] sm:$0xf]
    %v7493 = vld [vmem:[#allocation14 + $0xc] sm:$0xf]
    %v7494 = vld [vmem:[#allocation14 + $0x10] sm:$0xf]
    %v7495 = vld [vmem:[#allocation14 + $0x14] sm:$0xf]
    %v7496 = vld [vmem:[#allocation14 + $0x18] sm:$0xf]
    %v7497 = vld [vmem:[#allocation14 + $0x1c] sm:$0xf]
    %v7498 = vld [vmem:[#allocation14 + $0x20] sm:$0xf]
    %v7499 = vld [vmem:[#allocation14 + $0x24] sm:$0xf]
    %v7500 = vld [vmem:[#allocation14 + $0x28] sm:$0xf]
    %v7501 = vld [vmem:[#allocation14 + $0x2c] sm:$0xf]
    %v7502 = vld [vmem:[#allocation14 + $0x30] sm:$0xf]
    %v7503 = vld [vmem:[#allocation14 + $0x34] sm:$0xf]
    %v7504 = vld [vmem:[#allocation14 + $0x38] sm:$0xf]
    %v7505 = vld [vmem:[#allocation14 + $0x3c] sm:$0xf]
    %v7506 = vld [vmem:[#allocation14 + $0x40] sm:$0xf]
    %v7507 = vld [vmem:[#allocation14 + $0x44] sm:$0xf]
    %v7508 = vld [vmem:[#allocation14 + $0x48] sm:$0xf]
    %v7509 = vld [vmem:[#allocation14 + $0x4c] sm:$0xf]
    %v7510 = vld [vmem:[#allocation14 + $0x50] sm:$0xf]
    %v7511 = vld [vmem:[#allocation14 + $0x54] sm:$0xf]
    %v7512 = vld [vmem:[#allocation14 + $0x58] sm:$0xf]
    %v7513 = vld [vmem:[#allocation14 + $0x5c] sm:$0xf]
    %v7514 = vld [vmem:[#allocation14 + $0x60] sm:$0xf]
    %v7515 = vld [vmem:[#allocation14 + $0x64] sm:$0xf]
    %v7516 = vld [vmem:[#allocation14 + $0x68] sm:$0xf]
    %v7517 = vld [vmem:[#allocation14 + $0x6c] sm:$0xf]
    %v7518 = vld [vmem:[#allocation14 + $0x70] sm:$0xf]
    %v7519 = vld [vmem:[#allocation14 + $0x74] sm:$0xf]
    %v7520 = vld [vmem:[#allocation14 + $0x78] sm:$0xf]
    %v7521 = vld [vmem:[#allocation14 + $0x7c] sm:$0xf]
    %v7522 = vld [vmem:[#allocation14 + $0x80] sm:$0xf]
    %v7523 = vld [vmem:[#allocation14 + $0x84] sm:$0xf]
    %v7524 = vld [vmem:[#allocation14 + $0x88] sm:$0xf]
    %v7525 = vld [vmem:[#allocation14 + $0x8c] sm:$0xf]
    %v7526 = vld [vmem:[#allocation14 + $0x90] sm:$0xf]
    %v7527 = vld [vmem:[#allocation14 + $0x94] sm:$0xf]
    %v7528 = vld [vmem:[#allocation14 + $0x98] sm:$0xf]
    %v7529 = vld [vmem:[#allocation14 + $0x9c] sm:$0xf]
    %v7530 = vld [vmem:[#allocation14 + $0xa0] sm:$0xf]
    %v7531 = vld [vmem:[#allocation14 + $0xa4] sm:$0xf]
    %v7532 = vld [vmem:[#allocation14 + $0xa8] sm:$0xf]
    %v7533 = vld [vmem:[#allocation14 + $0xac] sm:$0xf]
    %v7534 = vld [vmem:[#allocation14 + $0xb0] sm:$0xf]
    %v7535 = vld [vmem:[#allocation14 + $0xb4] sm:$0xf]
    %v7536 = vld [vmem:[#allocation14 + $0xb8] sm:$0xf]
    %v7537 = vld [vmem:[#allocation14 + $0xbc] sm:$0xf]
    %v7538 = vld [vmem:[#allocation14 + $0xc0] sm:$0xf]
    %v7539 = vld [vmem:[#allocation14 + $0xc4] sm:$0xf]
    %v7540 = vld [vmem:[#allocation14 + $0xc8] sm:$0xf]
    %v7541 = vld [vmem:[#allocation14 + $0xcc] sm:$0xf]
    %v7542 = vld [vmem:[#allocation14 + $0xd0] sm:$0xf]
    %v7543 = vld [vmem:[#allocation14 + $0xd4] sm:$0xf]
    %v7544 = vld [vmem:[#allocation14 + $0xd8] sm:$0xf]
    %v7545 = vld [vmem:[#allocation14 + $0xdc] sm:$0xf]
    %v7546 = vld [vmem:[#allocation14 + $0xe0] sm:$0xf]
    %v7547 = vld [vmem:[#allocation14 + $0xe4] sm:$0xf]
    %v7548 = vld [vmem:[#allocation14 + $0xe8] sm:$0xf]
    %v7549 = vld [vmem:[#allocation14 + $0xec] sm:$0xf]
    %v7550 = vld [vmem:[#allocation14 + $0xf0] sm:$0xf]
    %v7551 = vld [vmem:[#allocation14 + $0xf4] sm:$0xf]
    %v7552 = vld [vmem:[#allocation14 + $0xf8] sm:$0xf]
    %v7553 = vld [vmem:[#allocation14 + $0xfc] sm:$0xf]
    %v7554 = vld [vmem:[#allocation16] sm:$0x1]
    %v7556 = vlaneseq
    %v7557 = vshrl.u32 %v7556, 7
    %v7558 = vsub.s32 0, %v7557
    %v7559 = vrot.slane %v7554, %v7558
    %v7625 = vunpack.c.l.b16 %v7490
    %v7626 = vunpack.c.l.b16 %v7491
    %v7627 = vunpack.c.l.b16 %v7492
    %v7628 = vunpack.c.l.b16 %v7493
    %v7629 = vunpack.c.l.b16 %v7494
    %v7630 = vunpack.c.l.b16 %v7495
    %v7631 = vunpack.c.l.b16 %v7496
    %v7632 = vunpack.c.l.b16 %v7497
    %v7633 = vunpack.c.l.b16 %v7498
    %v7634 = vunpack.c.l.b16 %v7499
    %v7635 = vunpack.c.l.b16 %v7500
    %v7636 = vunpack.c.l.b16 %v7501
    %v7637 = vunpack.c.l.b16 %v7502
    %v7638 = vunpack.c.l.b16 %v7503
    %v7639 = vunpack.c.l.b16 %v7504
    %v7640 = vunpack.c.l.b16 %v7505
    %v7641 = vunpack.c.l.b16 %v7506
    %v7642 = vunpack.c.l.b16 %v7507
    %v7643 = vunpack.c.l.b16 %v7508
    %v7644 = vunpack.c.l.b16 %v7509
    %v7645 = vunpack.c.l.b16 %v7510
    %v7646 = vunpack.c.l.b16 %v7511
    %v7647 = vunpack.c.l.b16 %v7512
    %v7648 = vunpack.c.l.b16 %v7513
    %v7649 = vunpack.c.l.b16 %v7514
    %v7650 = vunpack.c.l.b16 %v7515
    %v7651 = vunpack.c.l.b16 %v7516
    %v7652 = vunpack.c.l.b16 %v7517
    %v7653 = vunpack.c.l.b16 %v7518
    %v7654 = vunpack.c.l.b16 %v7519
    %v7655 = vunpack.c.l.b16 %v7520
    %v7656 = vunpack.c.l.b16 %v7521
    %v7657 = vunpack.c.l.b16 %v7522
    %v7658 = vunpack.c.l.b16 %v7523
    %v7659 = vunpack.c.l.b16 %v7524
    %v7660 = vunpack.c.l.b16 %v7525
    %v7661 = vunpack.c.l.b16 %v7526
    %v7662 = vunpack.c.l.b16 %v7527
    %v7663 = vunpack.c.l.b16 %v7528
    %v7664 = vunpack.c.l.b16 %v7529
    %v7665 = vunpack.c.l.b16 %v7530
    %v7666 = vunpack.c.l.b16 %v7531
    %v7667 = vunpack.c.l.b16 %v7532
    %v7668 = vunpack.c.l.b16 %v7533
    %v7669 = vunpack.c.l.b16 %v7534
    %v7670 = vunpack.c.l.b16 %v7535
    %v7671 = vunpack.c.l.b16 %v7536
    %v7672 = vunpack.c.l.b16 %v7537
    %v7673 = vunpack.c.l.b16 %v7538
    %v7674 = vunpack.c.l.b16 %v7539
    %v7675 = vunpack.c.l.b16 %v7540
    %v7676 = vunpack.c.l.b16 %v7541
    %v7677 = vunpack.c.l.b16 %v7542
    %v7678 = vunpack.c.l.b16 %v7543
    %v7679 = vunpack.c.l.b16 %v7544
    %v7680 = vunpack.c.l.b16 %v7545
    %v7681 = vunpack.c.l.b16 %v7546
    %v7682 = vunpack.c.l.b16 %v7547
    %v7683 = vunpack.c.l.b16 %v7548
    %v7684 = vunpack.c.l.b16 %v7549
    %v7685 = vunpack.c.l.b16 %v7550
    %v7686 = vunpack.c.l.b16 %v7551
    %v7687 = vunpack.c.l.b16 %v7552
    %v7688 = vunpack.c.l.b16 %v7553
    %v7689 = vpack.c.b16 %v7626, %v7625
    %v7690 = vpack.c.b16 %v7628, %v7627
    %v7691 = vpack.c.b16 %v7630, %v7629
    %v7692 = vpack.c.b16 %v7632, %v7631
    %v7693 = vpack.c.b16 %v7634, %v7633
    %v7694 = vpack.c.b16 %v7636, %v7635
    %v7695 = vpack.c.b16 %v7638, %v7637
    %v7696 = vpack.c.b16 %v7640, %v7639
    %v7697 = vpack.c.b16 %v7642, %v7641
    %v7698 = vpack.c.b16 %v7644, %v7643
    %v7699 = vpack.c.b16 %v7646, %v7645
    %v7700 = vpack.c.b16 %v7648, %v7647
    %v7701 = vpack.c.b16 %v7650, %v7649
    %v7702 = vpack.c.b16 %v7652, %v7651
    %v7703 = vpack.c.b16 %v7654, %v7653
    %v7704 = vpack.c.b16 %v7656, %v7655
    %v7705 = vpack.c.b16 %v7658, %v7657
    %v7706 = vpack.c.b16 %v7660, %v7659
    %v7707 = vpack.c.b16 %v7662, %v7661
    %v7708 = vpack.c.b16 %v7664, %v7663
    %v7709 = vpack.c.b16 %v7666, %v7665
    %v7710 = vpack.c.b16 %v7668, %v7667
    %v7711 = vpack.c.b16 %v7670, %v7669
    %v7712 = vpack.c.b16 %v7672, %v7671
    %v7713 = vpack.c.b16 %v7674, %v7673
    %v7714 = vpack.c.b16 %v7676, %v7675
    %v7715 = vpack.c.b16 %v7678, %v7677
    %v7716 = vpack.c.b16 %v7680, %v7679
    %v7717 = vpack.c.b16 %v7682, %v7681
    %v7718 = vpack.c.b16 %v7684, %v7683
    %v7719 = vpack.c.b16 %v7686, %v7685
    %v7720 = vpack.c.b16 %v7688, %v7687
    %7753 = vmatprep.subr.bf16.mxu0 0
    %7754 = vmatpush1.bf16.msra.mxu0 %v7689
    %7755 = vmatprep.subr.bf16.mxu0 0
    %7756 = vmatpush1.bf16.msra.mxu0 %v7690
    %7757 = vmatprep.subr.bf16.mxu0 0
    %7758 = vmatpush1.bf16.msra.mxu0 %v7691
    %7759 = vmatprep.subr.bf16.mxu0 0
    %7760 = vmatpush1.bf16.msra.mxu0 %v7692
    %7761 = vmatprep.subr.bf16.mxu0 0
    %7762 = vmatpush1.bf16.msra.mxu0 %v7693
    %7763 = vmatprep.subr.bf16.mxu0 0
    %7764 = vmatpush1.bf16.msra.mxu0 %v7694
    %7765 = vmatprep.subr.bf16.mxu0 0
    %7766 = vmatpush1.bf16.msra.mxu0 %v7695
    %7767 = vmatprep.subr.bf16.mxu0 0
    %7768 = vmatpush1.bf16.msra.mxu0 %v7696
    %7769 = vmatprep.subr.bf16.mxu0 0
    %7770 = vmatpush1.bf16.msra.mxu0 %v7697
    %7771 = vmatprep.subr.bf16.mxu0 0
    %7772 = vmatpush1.bf16.msra.mxu0 %v7698
    %7773 = vmatprep.subr.bf16.mxu0 0
    %7774 = vmatpush1.bf16.msra.mxu0 %v7699
    %7775 = vmatprep.subr.bf16.mxu0 0
    %7776 = vmatpush1.bf16.msra.mxu0 %v7700
    %7777 = vmatprep.subr.bf16.mxu0 0
    %7778 = vmatpush1.bf16.msra.mxu0 %v7701
    %7779 = vmatprep.subr.bf16.mxu0 0
    %7780 = vmatpush1.bf16.msra.mxu0 %v7702
    %7781 = vmatprep.subr.bf16.mxu0 0
    %7782 = vmatpush1.bf16.msra.mxu0 %v7703
    %7783 = vmatprep.subr.bf16.mxu0 0
    %7784 = vmatpush1.bf16.msra.mxu0 %v7704
    %7785 = vmatprep.mubr.bf16.mxu0 %v7487
    %7786 = vmatmul.mubr.bf16.gmra.mrb[0].mxu0 %v7486
    %v7787 = vpop.f32.mrb[0].mxu0
    %v7788 = vadd.f32 %v7559, %v7787
    %v7789 = vpop.f32.mrb[0].mxu0
    %v7790 = vpop.f32.mrb[0].mxu0
    %v7791 = vpop.f32.mrb[0].mxu0
    %7792 = vdwg.mxu0
    %7793 = vmatprep.subr.bf16.mxu0 0
    %7794 = vmatpush1.bf16.msra.mxu0 %v7705
    %7795 = vmatprep.subr.bf16.mxu0 0
    %7796 = vmatpush1.bf16.msra.mxu0 %v7706
    %7797 = vmatprep.subr.bf16.mxu0 0
    %7798 = vmatpush1.bf16.msra.mxu0 %v7707
    %7799 = vmatprep.subr.bf16.mxu0 0
    %7800 = vmatpush1.bf16.msra.mxu0 %v7708
    %7801 = vmatprep.subr.bf16.mxu0 0
    %7802 = vmatpush1.bf16.msra.mxu0 %v7709
    %7803 = vmatprep.subr.bf16.mxu0 0
    %7804 = vmatpush1.bf16.msra.mxu0 %v7710
    %7805 = vmatprep.subr.bf16.mxu0 0
    %7806 = vmatpush1.bf16.msra.mxu0 %v7711
    %7807 = vmatprep.subr.bf16.mxu0 0
    %7808 = vmatpush1.bf16.msra.mxu0 %v7712
    %7809 = vmatprep.subr.bf16.mxu0 0
    %7810 = vmatpush1.bf16.msra.mxu0 %v7713
    %7811 = vmatprep.subr.bf16.mxu0 0
    %7812 = vmatpush1.bf16.msra.mxu0 %v7714
    %7813 = vmatprep.subr.bf16.mxu0 0
    %7814 = vmatpush1.bf16.msra.mxu0 %v7715
    %7815 = vmatprep.subr.bf16.mxu0 0
    %7816 = vmatpush1.bf16.msra.mxu0 %v7716
    %7817 = vmatprep.subr.bf16.mxu0 0
    %7818 = vmatpush1.bf16.msra.mxu0 %v7717
    %7819 = vmatprep.subr.bf16.mxu0 0
    %7820 = vmatpush1.bf16.msra.mxu0 %v7718
    %7821 = vmatprep.subr.bf16.mxu0 0
    %7822 = vmatpush1.bf16.msra.mxu0 %v7719
    %7823 = vmatprep.subr.bf16.mxu0 0
    %7824 = vmatpush1.bf16.msra.mxu0 %v7720
    %7825 = vmatprep.mubr.bf16.mxu0 %v7489
    %7826 = vmatmul.mubr.bf16.gmra.mrb[0].mxu0 %v7488
    %v7827 = vpop.f32.mrb[0].mxu0
    %v7828 = vadd.f32 %v7788, %v7827
    %v7829 = vpop.f32.mrb[0].mxu0
    %v7830 = vpop.f32.mrb[0].mxu0
    %v7831 = vpop.f32.mrb[0].mxu0
    %7832 = vdwg.mxu0
    %7833 = vmax.xlane.f32.xlu0 %v7828
    %v7834 = vpop.xlane.xlu0 %7833
    %v7835 = vsub.f32 %v7828, %v7834
    %v7836 = vmul.f32 %v7835, 1.442695
    %v7837 = vpow.pop %v7836
    %7838 = vadd.xlane.f32.xlu0 %v7837
    %v7839 = vpop.xlane.xlu0 %7838
    %v7840 = vlog2.pop %v7839
    %v7841 = vmul.f32 %v7840, 0.6931472
    %v7842 = vsub.f32 %v7835, %v7841
    %7843 = vst [vmem:[#allocation17] sm:$0xff] %v7842
    // Predicated region
    $region74: #{net_forward.1} parent=1 // pred_check
      _
    $region75: #{net_forward.1} parent=1 // pred_check_branch
      %7845 = sbr.rel (0) target = $region77
    $region76: #{net_forward.1} parent=1 // pred_region
      %s7847 = ssub.s32 128, 128
      %7848 = vsyncadd [#allocation4], %s7847
      %s7850 = sshll.u32 [#allocation17], 4
      %s7851 = int_to_ptr.vmem [resolvable:$true] %s7850
      %7853 = dma.vmem_to_hbm [thread:$0]  %s7851, 128, %s9, [#allocation4]
    $region77: #{net_forward.1} parent=1 // pred_fallthru
      _
    // Predicated region
    $region78: #{net_forward.1} parent=1 // pred_check
      _
    $region79: #{net_forward.1} parent=1 // pred_check_branch
      %7855 = sbr.rel (0) target = $region81
    $region80: #{net_forward.1} parent=1 // pred_region
      %7856 = dma.done [#allocation4], 128
    $region81: #{net_forward.1} parent=1 // pred_fallthru
      _
    %7857 = vsyncpa [#allocation3], 1
    %7858 = vsyncpa [#allocation6], 1
    %7859 = vsyncpa [#allocation9], 1
    %7860 = vsyncpa [#allocation12], 1
    %7861 = vsyncpa [#allocation15], 1
    %7862 = vsyncpa [#allocation4], 1

</llo_original>
